<compile_context>
chip_gen: v7x
topology: tpu7x:2x2x1
jax: 0.10.0
libtpu: 0.0.40
codegen_flags: <defaults>
</compile_context>

<pallas_src>
import numpy as np
import jax
import jax.numpy as jnp
from jax.experimental import pallas as pl
from jax.experimental.pallas import tpu as pltpu


# ----------------------------------------------------------------------------
# Model dimensions
# ----------------------------------------------------------------------------
IMG_CH = 3
IMG = 16                      # image H = W
HID = 32                      # encoder / decoder hidden channels
NZ = 8                        # gen_B.noise_channels
ENC_SP = IMG // 2             # 8   encoder output rows/cols (stride-2 conv)
ROW_IN = IMG * IMG_CH         # 48  lanes of one NHWC-flat input image row
WIN = 3 * ROW_IN              # 144 lanes: the 3 input rows feeding 1 enc row
ENC_ROW = ENC_SP * HID        # 256 lanes: one encoder activation row (x, k)
FLAT = ENC_SP * ENC_ROW       # 2048 flattened encoder activation / fc width
DEC_ROW = IMG_CH * IMG        # 48  lanes: one output image row, (c_out, X)
IMG_FLAT = IMG_CH * IMG * IMG  # 768 NCHW-flat image per sample

# decoder row-matrix bank indices (which conv rows contribute to a coarse row)
A0, A01, B12, B2 = 0, 1, 2, 3


# ----------------------------------------------------------------------------
# Fused VAE-GAN forward kernel (single invocation, no grid — everything <1 MB
# and VMEM resident on every TPU generation).
# ----------------------------------------------------------------------------
def _vaegan_kernel(x_ref, eps_ref, ew_ref, eb_ref,
                   muw_ref, mub_ref, lvw_ref, lvb_ref,
                   fcw_ref, fcb_ref, drw_ref, db_ref,
                   ident_ref, fake_ref, mu_ref, lv_ref,
                   zcat_s):
    N = x_ref.shape[0]

    x = x_ref[...]                      # (N, 768)  NHWC-flat real_B
    eps = eps_ref[...]                  # (N, NZ)   noise
    ew = ew_ref[...]                    # (144, 256) folded encoder conv row map
    enc_b = eb_ref[...]                 # (1, 256)

    # ---- encoder 3x3/s2 conv + ReLU, one GEMM per output row, fused with the
    #      mu / logvar heads (256-wide slices of the K=2048 head weights).
    mu_acc = jnp.zeros((N, NZ), jnp.float32)
    lv_acc = jnp.zeros((N, NZ), jnp.float32)
    for y in range(ENC_SP):
        if y == 0:                                   # input row -1 is zero pad
            win = x[:, 0:2 * ROW_IN]                 # rows 0..1
            w = ew[ROW_IN:, :]
        else:
            win = x[:, (2 * y - 1) * ROW_IN:(2 * y + 2) * ROW_IN]  # rows 2y-1..2y+1
            w = ew
        row = jnp.dot(win, w, preferred_element_type=jnp.float32) + enc_b
        row = jnp.maximum(row, 0.0)                  # (N, 256) activation row y
        mu_acc = mu_acc + jnp.dot(
            row, muw_ref[y * ENC_ROW:(y + 1) * ENC_ROW, :],
            preferred_element_type=jnp.float32)
        lv_acc = lv_acc + jnp.dot(
            row, lvw_ref[y * ENC_ROW:(y + 1) * ENC_ROW, :],
            preferred_element_type=jnp.float32)
    mu = mu_acc + mub_ref[...]
    logvar = lv_acc + lvb_ref[...]
    mu_ref[...] = mu
    lv_ref[...] = logvar

    # ---- reparameterization (f32) + stacked decoder fc for BOTH latents.
    #      Rows [0, N) carry z (-> ident_B), rows [N, 2N) carry the raw noise
    #      (-> fake_B); one GEMM feeds both decode passes.
    z = mu + jnp.exp(0.5 * logvar) * eps
    zcat_s[0:N, :] = z
    zcat_s[N:2 * N, :] = eps
    zcat = zcat_s[...]                                          # (2N, NZ)
    hcat = jnp.dot(zcat, fcw_ref[...], preferred_element_type=jnp.float32)
    hcat = jnp.maximum(hcat + fcb_ref[...], 0.0)                # (2N, 2048)

    # ---- decoder: nearest-2x upsample + 3x3/p1 conv + bias + tanh, folded
    #      into 4 precomputed (256 -> 48) row matrices applied to the two
    #      coarse rows that feed each of the 16 output image rows.
    db = db_ref[...]                                            # (1, 48)
    for Y in range(IMG):
        y_lo = (Y - 1) // 2                # coarse row hit by conv row(s) "A"
        y_hi = (Y + 1) // 2                # coarse row hit by conv row(s) "B"
        idx_lo = A0 if Y % 2 == 0 else A01
        idx_hi = B12 if Y % 2 == 0 else B2
        terms = []
        if 0 <= y_lo < ENC_SP:
            terms.append(jnp.dot(
                hcat[:, y_lo * ENC_ROW:(y_lo + 1) * ENC_ROW], drw_ref[idx_lo],
                preferred_element_type=jnp.float32))
        if 0 <= y_hi < ENC_SP:
            terms.append(jnp.dot(
                hcat[:, y_hi * ENC_ROW:(y_hi + 1) * ENC_ROW], drw_ref[idx_hi],
                preferred_element_type=jnp.float32))
        acc = terms[0] if len(terms) == 1 else terms[0] + terms[1]
        res = jnp.tanh(acc + db)                                # (2N, 48)=(c,X)
        # scatter this image row into the NCHW-flat outputs (VMEM stores only;
        # the HBM writeback is one dense 768-lane block per image).
        for co in range(IMG_CH):
            dst = slice(co * IMG * IMG + Y * IMG,
                        co * IMG * IMG + (Y + 1) * IMG)
            ident_ref[:, dst] = res[0:N, co * IMG:(co + 1) * IMG]
            fake_ref[:, dst] = res[N:2 * N, co * IMG:(co + 1) * IMG]


def _forward_call(params, x_flat, noise):
    N = x_flat.shape[0]
    inputs = (x_flat, noise,
              params["enc_row_w"], params["enc_row_b"],
              params["mu_w"], params["mu_b"],
              params["lv_w"], params["lv_b"],
              params["fc_w"], params["fc_b"],
              params["dec_row_w"], params["dec_row_b"])

    def spec(a):
        return pl.BlockSpec(a.shape, lambda nd=a.ndim: (0,) * nd)

    # NOTE: at toy batch the whole working set (~0.6 MB) fits VMEM everywhere
    # (v5e/v6e/v7x); for large batches, tile the batch dim with a grid and set
    # vmem_limit_bytes — at batch=2 a grid would be pure per-step overhead.
    return pl.pallas_call(
        _vaegan_kernel,
        out_shape=(jax.ShapeDtypeStruct((N, IMG_FLAT), jnp.float32),
                   jax.ShapeDtypeStruct((N, IMG_FLAT), jnp.float32),
                   jax.ShapeDtypeStruct((N, NZ), jnp.float32),
                   jax.ShapeDtypeStruct((N, NZ), jnp.float32)),
        in_specs=[spec(a) for a in inputs],
        out_specs=(pl.BlockSpec((N, IMG_FLAT), lambda: (0, 0)),
                   pl.BlockSpec((N, IMG_FLAT), lambda: (0, 0)),
                   pl.BlockSpec((N, NZ), lambda: (0, 0)),
                   pl.BlockSpec((N, NZ), lambda: (0, 0))),
        scratch_shapes=[pltpu.VMEM((2 * N, NZ), jnp.float32)],
    )(*inputs)


# ----------------------------------------------------------------------------
# Synthetic generator parameters, pre-folded into GEMM form.
# NOTE: weights are defined in NHWC-flatten order; loading a real PyTorch NCHW
# checkpoint would require the corresponding row permutations.
# ----------------------------------------------------------------------------
def init_params(key):
    ks = jax.random.split(key, 10)
    s = 0.05

    def rnd(k, shape):
        return np.asarray(jax.random.normal(k, shape), np.float32) * s

    We = rnd(ks[0], (3, 3, IMG_CH, HID))         # encoder conv (di, dj, c_in, k)
    enc_b = rnd(ks[1], (HID,))
    mu_w = rnd(ks[2], (FLAT, NZ))
    mu_b = rnd(ks[3], (NZ,))
    lv_w = rnd(ks[4], (FLAT, NZ))
    lv_b = rnd(ks[5], (NZ,))
    fc_w = rnd(ks[6], (NZ, FLAT))
    fc_b = rnd(ks[7], (FLAT,))
    Wd = rnd(ks[8], (3, 3, HID, IMG_CH))         # decoder conv (di, dj, k, c_out)
    dec_b = rnd(ks[9], (IMG_CH,))

    # --- fold the 3x3/s2/p1 encoder conv into one per-output-row matrix:
    #     (3 input rows * 16 x * 3 c) -> (8 x * 32 k); x-stride/padding baked in.
    E = np.zeros((3, IMG, IMG_CH, ENC_SP, HID), np.float32)   # (di, xi, c, x, k)
    for di in range(3):
        for x in range(ENC_SP):
            for dj in range(3):
                xi = 2 * x + dj - 1
                if 0 <= xi < IMG:
                    E[di, xi, :, x, :] += We[di, dj]
    enc_row_w = E.reshape(WIN, ENC_ROW)
    enc_row_b = np.tile(enc_b, ENC_SP).reshape(1, ENC_ROW)

    # --- fold nearest-2x upsample + 3x3/p1 decoder conv into per-output-row
    #     matrices: coarse row (8 x * 32 k) -> image row (3 c_out * 16 X).
    def row_mat(wrow):                            # wrow (3, HID, IMG_CH): dj,k,c
        M = np.zeros((ENC_SP, HID, IMG_CH, IMG), np.float32)  # (x_in,k,c,X)
        for dj in range(3):
            for X in range(IMG):
                Xi = X + dj - 1
                if 0 <= Xi < IMG:
                    M[Xi // 2, :, :, X] += wrow[dj]
        return M.reshape(ENC_ROW, DEC_ROW)

    dec_row_w = np.stack([row_mat(Wd[0]),           # A0 : even Y, lower coarse row
                          row_mat(Wd[0] + Wd[1]),   # A01: odd Y,  lower coarse row
                          row_mat(Wd[1] + Wd[2]),   # B12: even Y, upper coarse row
                          row_mat(Wd[2])])          # B2 : odd Y,  upper coarse row
    dec_row_b = np.repeat(dec_b, IMG).reshape(1, DEC_ROW)

    f32 = jnp.float32
    return {
        "enc_row_w": jnp.asarray(enc_row_w, f32),
        "enc_row_b": jnp.asarray(enc_row_b, f32),
        "mu_w": jnp.asarray(mu_w, f32), "mu_b": jnp.asarray(mu_b.reshape(1, NZ), f32),
        "lv_w": jnp.asarray(lv_w, f32), "lv_b": jnp.asarray(lv_b.reshape(1, NZ), f32),
        "fc_w": jnp.asarray(fc_w, f32), "fc_b": jnp.asarray(fc_b.reshape(1, FLAT), f32),
        "dec_row_w": jnp.asarray(dec_row_w, f32),
        "dec_row_b": jnp.asarray(dec_row_b, f32),
    }


# ----------------------------------------------------------------------------
# Forward: Model.forward -> (ident_B, mu, logvar, fake_B)
# ----------------------------------------------------------------------------
def model_forward(params, real_B, noise):
    """opt.dis_type_names_B[0] assumed truthy -> fake_B = gen_B(noise); the same
    `noise` is used as reparameterization eps and as the fake_B latent,
    mirroring the reference call signature."""
    N = real_B.shape[0]
    x_flat = jnp.transpose(real_B, (0, 2, 3, 1)).reshape(N, IMG_FLAT)  # NHWC flat
    ident_f, fake_f, mu, logvar = _forward_call(params, x_flat, noise)
    ident_B = ident_f.reshape(N, IMG_CH, IMG, IMG)   # kernel emits NCHW-flat
    fake_B = fake_f.reshape(N, IMG_CH, IMG, IMG)
    # TODO(synk): discriminator / perceptual-encoder branches (dis_B, enc) are
    # external modules used only in backward_*; not part of forward compute.
    return ident_B, mu, logvar, fake_B


# ----------------------------------------------------------------------------
if __name__ == "__main__":
    key = jax.random.PRNGKey(0)
    k_param, k_img, k_noise = jax.random.split(key, 3)

    params = init_params(k_param)
    real_B = jax.random.normal(k_img, (2, IMG_CH, IMG, IMG), dtype=jnp.float32)
    noise = jax.random.normal(k_noise, (2, NZ), dtype=jnp.float32)

    fwd = jax.jit(model_forward)
    ident_B, mu, logvar, fake_B = fwd(params, real_B, noise)
    jax.block_until_ready((ident_B, mu, logvar, fake_B))

    assert ident_B.shape == (2, IMG_CH, IMG, IMG)
    assert fake_B.shape == (2, IMG_CH, IMG, IMG)
    assert mu.shape == (2, NZ) and logvar.shape == (2, NZ)
    assert bool(jnp.all(jnp.isfinite(ident_B))) and bool(jnp.all(jnp.isfinite(fake_B)))
    print("KERNEL_OK")
</pallas_src>

<mosaic_0001>
module attributes {stable_mosaic.version = 11 : i64} {
  func.func @_vaegan_kernel(%arg0: memref<2x768xf32, #tpu.memory_space<vmem>>, %arg1: memref<2x8xf32, #tpu.memory_space<vmem>>, %arg2: memref<144x256xf32, #tpu.memory_space<vmem>>, %arg3: memref<1x256xf32, #tpu.memory_space<vmem>>, %arg4: memref<2048x8xf32, #tpu.memory_space<vmem>>, %arg5: memref<1x8xf32, #tpu.memory_space<vmem>>, %arg6: memref<2048x8xf32, #tpu.memory_space<vmem>>, %arg7: memref<1x8xf32, #tpu.memory_space<vmem>>, %arg8: memref<8x2048xf32, #tpu.memory_space<vmem>>, %arg9: memref<1x2048xf32, #tpu.memory_space<vmem>>, %arg10: memref<4x256x48xf32, #tpu.memory_space<vmem>>, %arg11: memref<1x48xf32, #tpu.memory_space<vmem>>, %arg12: memref<2x768xf32, #tpu.memory_space<vmem>>, %arg13: memref<2x768xf32, #tpu.memory_space<vmem>>, %arg14: memref<2x8xf32, #tpu.memory_space<vmem>>, %arg15: memref<2x8xf32, #tpu.memory_space<vmem>>, %arg16: memref<4x8xf32, #tpu.memory_space<vmem>>) attributes {dimension_semantics = [], scalar_prefetch = 0 : i64, scratch_operands = 1 : i64, tpu.core_type = #tpu.core_type<tc>} {
    %c0 = arith.constant 0 : index
    %c0_0 = arith.constant 0 : index
    %0 = vector.load %arg0[%c0, %c0_0] : memref<2x768xf32, #tpu.memory_space<vmem>>, vector<2x768xf32>
    %c0_1 = arith.constant 0 : index
    %c0_2 = arith.constant 0 : index
    %1 = vector.load %arg1[%c0_1, %c0_2] : memref<2x8xf32, #tpu.memory_space<vmem>>, vector<2x8xf32>
    %c0_3 = arith.constant 0 : index
    %c0_4 = arith.constant 0 : index
    %2 = vector.load %arg2[%c0_3, %c0_4] : memref<144x256xf32, #tpu.memory_space<vmem>>, vector<144x256xf32>
    %c0_5 = arith.constant 0 : index
    %c0_6 = arith.constant 0 : index
    %3 = vector.load %arg3[%c0_5, %c0_6] : memref<1x256xf32, #tpu.memory_space<vmem>>, vector<1x256xf32>
    %cst = arith.constant 0.000000e+00 : f32
    %4 = vector.broadcast %cst : f32 to vector<2x8xf32>
    %cst_7 = arith.constant 0.000000e+00 : f32
    %5 = vector.broadcast %cst_7 : f32 to vector<2x8xf32>
    %6 = vector.extract_strided_slice %0 {offsets = [0, 0], sizes = [2, 96], strides = [1, 1]} : vector<2x768xf32> to vector<2x96xf32>
    %7 = vector.extract_strided_slice %2 {offsets = [48, 0], sizes = [96, 256], strides = [1, 1]} : vector<144x256xf32> to vector<96x256xf32>
    %cst_8 = arith.constant dense<0.000000e+00> : vector<2x256xf32>
    %8 = tpu.matmul %6, %7, %cst_8 {dimension_numbers = #tpu.dot_dimension_numbers<[1], [0], [0], [1], [0, 0, 1, 1], [], []>} : vector<2x96xf32>, vector<96x256xf32>, vector<2x256xf32> -> vector<2x256xf32>
    %9 = vector.broadcast %3 : vector<1x256xf32> to vector<2x256xf32>
    %10 = arith.addf %8, %9 : vector<2x256xf32>
    %cst_9 = arith.constant 0.000000e+00 : f32
    %11 = vector.broadcast %cst_9 : f32 to vector<2x256xf32>
    %12 = arith.maximumf %10, %11 : vector<2x256xf32>
    %c0_10 = arith.constant 0 : index
    %c0_11 = arith.constant 0 : index
    %13 = vector.load %arg4[%c0_10, %c0_11] : memref<2048x8xf32, #tpu.memory_space<vmem>>, vector<256x8xf32>
    %cst_12 = arith.constant dense<0.000000e+00> : vector<2x8xf32>
    %14 = tpu.matmul %12, %13, %cst_12 {dimension_numbers = #tpu.dot_dimension_numbers<[1], [0], [0], [1], [0, 0, 1, 1], [], []>} : vector<2x256xf32>, vector<256x8xf32>, vector<2x8xf32> -> vector<2x8xf32>
    %15 = arith.addf %4, %14 : vector<2x8xf32>
    %c0_13 = arith.constant 0 : index
    %c0_14 = arith.constant 0 : index
    %16 = vector.load %arg6[%c0_13, %c0_14] : memref<2048x8xf32, #tpu.memory_space<vmem>>, vector<256x8xf32>
    %cst_15 = arith.constant dense<0.000000e+00> : vector<2x8xf32>
    %17 = tpu.matmul %12, %16, %cst_15 {dimension_numbers = #tpu.dot_dimension_numbers<[1], [0], [0], [1], [0, 0, 1, 1], [], []>} : vector<2x256xf32>, vector<256x8xf32>, vector<2x8xf32> -> vector<2x8xf32>
    %18 = arith.addf %5, %17 : vector<2x8xf32>
    %19 = vector.extract_strided_slice %0 {offsets = [0, 48], sizes = [2, 144], strides = [1, 1]} : vector<2x768xf32> to vector<2x144xf32>
    %cst_16 = arith.constant dense<0.000000e+00> : vector<2x256xf32>
    %20 = tpu.matmul %19, %2, %cst_16 {dimension_numbers = #tpu.dot_dimension_numbers<[1], [0], [0], [1], [0, 0, 1, 1], [], []>} : vector<2x144xf32>, vector<144x256xf32>, vector<2x256xf32> -> vector<2x256xf32>
    %21 = vector.broadcast %3 : vector<1x256xf32> to vector<2x256xf32>
    %22 = arith.addf %20, %21 : vector<2x256xf32>
    %cst_17 = arith.constant 0.000000e+00 : f32
    %23 = vector.broadcast %cst_17 : f32 to vector<2x256xf32>
    %24 = arith.maximumf %22, %23 : vector<2x256xf32>
    %c256 = arith.constant 256 : index
    %c0_18 = arith.constant 0 : index
    %25 = vector.load %arg4[%c256, %c0_18] : memref<2048x8xf32, #tpu.memory_space<vmem>>, vector<256x8xf32>
    %cst_19 = arith.constant dense<0.000000e+00> : vector<2x8xf32>
    %26 = tpu.matmul %24, %25, %cst_19 {dimension_numbers = #tpu.dot_dimension_numbers<[1], [0], [0], [1], [0, 0, 1, 1], [], []>} : vector<2x256xf32>, vector<256x8xf32>, vector<2x8xf32> -> vector<2x8xf32>
    %27 = arith.addf %15, %26 : vector<2x8xf32>
    %c256_20 = arith.constant 256 : index
    %c0_21 = arith.constant 0 : index
    %28 = vector.load %arg6[%c256_20, %c0_21] : memref<2048x8xf32, #tpu.memory_space<vmem>>, vector<256x8xf32>
    %cst_22 = arith.constant dense<0.000000e+00> : vector<2x8xf32>
    %29 = tpu.matmul %24, %28, %cst_22 {dimension_numbers = #tpu.dot_dimension_numbers<[1], [0], [0], [1], [0, 0, 1, 1], [], []>} : vector<2x256xf32>, vector<256x8xf32>, vector<2x8xf32> -> vector<2x8xf32>
    %30 = arith.addf %18, %29 : vector<2x8xf32>
    %31 = vector.extract_strided_slice %0 {offsets = [0, 144], sizes = [2, 144], strides = [1, 1]} : vector<2x768xf32> to vector<2x144xf32>
    %cst_23 = arith.constant dense<0.000000e+00> : vector<2x256xf32>
    %32 = tpu.matmul %31, %2, %cst_23 {dimension_numbers = #tpu.dot_dimension_numbers<[1], [0], [0], [1], [0, 0, 1, 1], [], []>} : vector<2x144xf32>, vector<144x256xf32>, vector<2x256xf32> -> vector<2x256xf32>
    %33 = vector.broadcast %3 : vector<1x256xf32> to vector<2x256xf32>
    %34 = arith.addf %32, %33 : vector<2x256xf32>
    %cst_24 = arith.constant 0.000000e+00 : f32
    %35 = vector.broadcast %cst_24 : f32 to vector<2x256xf32>
    %36 = arith.maximumf %34, %35 : vector<2x256xf32>
    %c512 = arith.constant 512 : index
    %c0_25 = arith.constant 0 : index
    %37 = vector.load %arg4[%c512, %c0_25] : memref<2048x8xf32, #tpu.memory_space<vmem>>, vector<256x8xf32>
    %cst_26 = arith.constant dense<0.000000e+00> : vector<2x8xf32>
    %38 = tpu.matmul %36, %37, %cst_26 {dimension_numbers = #tpu.dot_dimension_numbers<[1], [0], [0], [1], [0, 0, 1, 1], [], []>} : vector<2x256xf32>, vector<256x8xf32>, vector<2x8xf32> -> vector<2x8xf32>
    %39 = arith.addf %27, %38 : vector<2x8xf32>
    %c512_27 = arith.constant 512 : index
    %c0_28 = arith.constant 0 : index
    %40 = vector.load %arg6[%c512_27, %c0_28] : memref<2048x8xf32, #tpu.memory_space<vmem>>, vector<256x8xf32>
    %cst_29 = arith.constant dense<0.000000e+00> : vector<2x8xf32>
    %41 = tpu.matmul %36, %40, %cst_29 {dimension_numbers = #tpu.dot_dimension_numbers<[1], [0], [0], [1], [0, 0, 1, 1], [], []>} : vector<2x256xf32>, vector<256x8xf32>, vector<2x8xf32> -> vector<2x8xf32>
    %42 = arith.addf %30, %41 : vector<2x8xf32>
    %43 = vector.extract_strided_slice %0 {offsets = [0, 240], sizes = [2, 144], strides = [1, 1]} : vector<2x768xf32> to vector<2x144xf32>
    %cst_30 = arith.constant dense<0.000000e+00> : vector<2x256xf32>
    %44 = tpu.matmul %43, %2, %cst_30 {dimension_numbers = #tpu.dot_dimension_numbers<[1], [0], [0], [1], [0, 0, 1, 1], [], []>} : vector<2x144xf32>, vector<144x256xf32>, vector<2x256xf32> -> vector<2x256xf32>
    %45 = vector.broadcast %3 : vector<1x256xf32> to vector<2x256xf32>
    %46 = arith.addf %44, %45 : vector<2x256xf32>
    %cst_31 = arith.constant 0.000000e+00 : f32
    %47 = vector.broadcast %cst_31 : f32 to vector<2x256xf32>
    %48 = arith.maximumf %46, %47 : vector<2x256xf32>
    %c768 = arith.constant 768 : index
    %c0_32 = arith.constant 0 : index
    %49 = vector.load %arg4[%c768, %c0_32] : memref<2048x8xf32, #tpu.memory_space<vmem>>, vector<256x8xf32>
    %cst_33 = arith.constant dense<0.000000e+00> : vector<2x8xf32>
    %50 = tpu.matmul %48, %49, %cst_33 {dimension_numbers = #tpu.dot_dimension_numbers<[1], [0], [0], [1], [0, 0, 1, 1], [], []>} : vector<2x256xf32>, vector<256x8xf32>, vector<2x8xf32> -> vector<2x8xf32>
    %51 = arith.addf %39, %50 : vector<2x8xf32>
    %c768_34 = arith.constant 768 : index
    %c0_35 = arith.constant 0 : index
    %52 = vector.load %arg6[%c768_34, %c0_35] : memref<2048x8xf32, #tpu.memory_space<vmem>>, vector<256x8xf32>
    %cst_36 = arith.constant dense<0.000000e+00> : vector<2x8xf32>
    %53 = tpu.matmul %48, %52, %cst_36 {dimension_numbers = #tpu.dot_dimension_numbers<[1], [0], [0], [1], [0, 0, 1, 1], [], []>} : vector<2x256xf32>, vector<256x8xf32>, vector<2x8xf32> -> vector<2x8xf32>
    %54 = arith.addf %42, %53 : vector<2x8xf32>
    %55 = vector.extract_strided_slice %0 {offsets = [0, 336], sizes = [2, 144], strides = [1, 1]} : vector<2x768xf32> to vector<2x144xf32>
    %cst_37 = arith.constant dense<0.000000e+00> : vector<2x256xf32>
    %56 = tpu.matmul %55, %2, %cst_37 {dimension_numbers = #tpu.dot_dimension_numbers<[1], [0], [0], [1], [0, 0, 1, 1], [], []>} : vector<2x144xf32>, vector<144x256xf32>, vector<2x256xf32> -> vector<2x256xf32>
    %57 = vector.broadcast %3 : vector<1x256xf32> to vector<2x256xf32>
    %58 = arith.addf %56, %57 : vector<2x256xf32>
    %cst_38 = arith.constant 0.000000e+00 : f32
    %59 = vector.broadcast %cst_38 : f32 to vector<2x256xf32>
    %60 = arith.maximumf %58, %59 : vector<2x256xf32>
    %c1024 = arith.constant 1024 : index
    %c0_39 = arith.constant 0 : index
    %61 = vector.load %arg4[%c1024, %c0_39] : memref<2048x8xf32, #tpu.memory_space<vmem>>, vector<256x8xf32>
    %cst_40 = arith.constant dense<0.000000e+00> : vector<2x8xf32>
    %62 = tpu.matmul %60, %61, %cst_40 {dimension_numbers = #tpu.dot_dimension_numbers<[1], [0], [0], [1], [0, 0, 1, 1], [], []>} : vector<2x256xf32>, vector<256x8xf32>, vector<2x8xf32> -> vector<2x8xf32>
    %63 = arith.addf %51, %62 : vector<2x8xf32>
    %c1024_41 = arith.constant 1024 : index
    %c0_42 = arith.constant 0 : index
    %64 = vector.load %arg6[%c1024_41, %c0_42] : memref<2048x8xf32, #tpu.memory_space<vmem>>, vector<256x8xf32>
    %cst_43 = arith.constant dense<0.000000e+00> : vector<2x8xf32>
    %65 = tpu.matmul %60, %64, %cst_43 {dimension_numbers = #tpu.dot_dimension_numbers<[1], [0], [0], [1], [0, 0, 1, 1], [], []>} : vector<2x256xf32>, vector<256x8xf32>, vector<2x8xf32> -> vector<2x8xf32>
    %66 = arith.addf %54, %65 : vector<2x8xf32>
    %67 = vector.extract_strided_slice %0 {offsets = [0, 432], sizes = [2, 144], strides = [1, 1]} : vector<2x768xf32> to vector<2x144xf32>
    %cst_44 = arith.constant dense<0.000000e+00> : vector<2x256xf32>
    %68 = tpu.matmul %67, %2, %cst_44 {dimension_numbers = #tpu.dot_dimension_numbers<[1], [0], [0], [1], [0, 0, 1, 1], [], []>} : vector<2x144xf32>, vector<144x256xf32>, vector<2x256xf32> -> vector<2x256xf32>
    %69 = vector.broadcast %3 : vector<1x256xf32> to vector<2x256xf32>
    %70 = arith.addf %68, %69 : vector<2x256xf32>
    %cst_45 = arith.constant 0.000000e+00 : f32
    %71 = vector.broadcast %cst_45 : f32 to vector<2x256xf32>
    %72 = arith.maximumf %70, %71 : vector<2x256xf32>
    %c1280 = arith.constant 1280 : index
    %c0_46 = arith.constant 0 : index
    %73 = vector.load %arg4[%c1280, %c0_46] : memref<2048x8xf32, #tpu.memory_space<vmem>>, vector<256x8xf32>
    %cst_47 = arith.constant dense<0.000000e+00> : vector<2x8xf32>
    %74 = tpu.matmul %72, %73, %cst_47 {dimension_numbers = #tpu.dot_dimension_numbers<[1], [0], [0], [1], [0, 0, 1, 1], [], []>} : vector<2x256xf32>, vector<256x8xf32>, vector<2x8xf32> -> vector<2x8xf32>
    %75 = arith.addf %63, %74 : vector<2x8xf32>
    %c1280_48 = arith.constant 1280 : index
    %c0_49 = arith.constant 0 : index
    %76 = vector.load %arg6[%c1280_48, %c0_49] : memref<2048x8xf32, #tpu.memory_space<vmem>>, vector<256x8xf32>
    %cst_50 = arith.constant dense<0.000000e+00> : vector<2x8xf32>
    %77 = tpu.matmul %72, %76, %cst_50 {dimension_numbers = #tpu.dot_dimension_numbers<[1], [0], [0], [1], [0, 0, 1, 1], [], []>} : vector<2x256xf32>, vector<256x8xf32>, vector<2x8xf32> -> vector<2x8xf32>
    %78 = arith.addf %66, %77 : vector<2x8xf32>
    %79 = vector.extract_strided_slice %0 {offsets = [0, 528], sizes = [2, 144], strides = [1, 1]} : vector<2x768xf32> to vector<2x144xf32>
    %cst_51 = arith.constant dense<0.000000e+00> : vector<2x256xf32>
    %80 = tpu.matmul %79, %2, %cst_51 {dimension_numbers = #tpu.dot_dimension_numbers<[1], [0], [0], [1], [0, 0, 1, 1], [], []>} : vector<2x144xf32>, vector<144x256xf32>, vector<2x256xf32> -> vector<2x256xf32>
    %81 = vector.broadcast %3 : vector<1x256xf32> to vector<2x256xf32>
    %82 = arith.addf %80, %81 : vector<2x256xf32>
    %cst_52 = arith.constant 0.000000e+00 : f32
    %83 = vector.broadcast %cst_52 : f32 to vector<2x256xf32>
    %84 = arith.maximumf %82, %83 : vector<2x256xf32>
    %c1536 = arith.constant 1536 : index
    %c0_53 = arith.constant 0 : index
    %85 = vector.load %arg4[%c1536, %c0_53] : memref<2048x8xf32, #tpu.memory_space<vmem>>, vector<256x8xf32>
    %cst_54 = arith.constant dense<0.000000e+00> : vector<2x8xf32>
    %86 = tpu.matmul %84, %85, %cst_54 {dimension_numbers = #tpu.dot_dimension_numbers<[1], [0], [0], [1], [0, 0, 1, 1], [], []>} : vector<2x256xf32>, vector<256x8xf32>, vector<2x8xf32> -> vector<2x8xf32>
    %87 = arith.addf %75, %86 : vector<2x8xf32>
    %c1536_55 = arith.constant 1536 : index
    %c0_56 = arith.constant 0 : index
    %88 = vector.load %arg6[%c1536_55, %c0_56] : memref<2048x8xf32, #tpu.memory_space<vmem>>, vector<256x8xf32>
    %cst_57 = arith.constant dense<0.000000e+00> : vector<2x8xf32>
    %89 = tpu.matmul %84, %88, %cst_57 {dimension_numbers = #tpu.dot_dimension_numbers<[1], [0], [0], [1], [0, 0, 1, 1], [], []>} : vector<2x256xf32>, vector<256x8xf32>, vector<2x8xf32> -> vector<2x8xf32>
    %90 = arith.addf %78, %89 : vector<2x8xf32>
    %91 = vector.extract_strided_slice %0 {offsets = [0, 624], sizes = [2, 144], strides = [1, 1]} : vector<2x768xf32> to vector<2x144xf32>
    %cst_58 = arith.constant dense<0.000000e+00> : vector<2x256xf32>
    %92 = tpu.matmul %91, %2, %cst_58 {dimension_numbers = #tpu.dot_dimension_numbers<[1], [0], [0], [1], [0, 0, 1, 1], [], []>} : vector<2x144xf32>, vector<144x256xf32>, vector<2x256xf32> -> vector<2x256xf32>
    %93 = vector.broadcast %3 : vector<1x256xf32> to vector<2x256xf32>
    %94 = arith.addf %92, %93 : vector<2x256xf32>
    %cst_59 = arith.constant 0.000000e+00 : f32
    %95 = vector.broadcast %cst_59 : f32 to vector<2x256xf32>
    %96 = arith.maximumf %94, %95 : vector<2x256xf32>
    %c1792 = arith.constant 1792 : index
    %c0_60 = arith.constant 0 : index
    %97 = vector.load %arg4[%c1792, %c0_60] : memref<2048x8xf32, #tpu.memory_space<vmem>>, vector<256x8xf32>
    %cst_61 = arith.constant dense<0.000000e+00> : vector<2x8xf32>
    %98 = tpu.matmul %96, %97, %cst_61 {dimension_numbers = #tpu.dot_dimension_numbers<[1], [0], [0], [1], [0, 0, 1, 1], [], []>} : vector<2x256xf32>, vector<256x8xf32>, vector<2x8xf32> -> vector<2x8xf32>
    %99 = arith.addf %87, %98 : vector<2x8xf32>
    %c1792_62 = arith.constant 1792 : index
    %c0_63 = arith.constant 0 : index
    %100 = vector.load %arg6[%c1792_62, %c0_63] : memref<2048x8xf32, #tpu.memory_space<vmem>>, vector<256x8xf32>
    %cst_64 = arith.constant dense<0.000000e+00> : vector<2x8xf32>
    %101 = tpu.matmul %96, %100, %cst_64 {dimension_numbers = #tpu.dot_dimension_numbers<[1], [0], [0], [1], [0, 0, 1, 1], [], []>} : vector<2x256xf32>, vector<256x8xf32>, vector<2x8xf32> -> vector<2x8xf32>
    %102 = arith.addf %90, %101 : vector<2x8xf32>
    %c0_65 = arith.constant 0 : index
    %c0_66 = arith.constant 0 : index
    %103 = vector.load %arg5[%c0_65, %c0_66] : memref<1x8xf32, #tpu.memory_space<vmem>>, vector<1x8xf32>
    %104 = vector.broadcast %103 : vector<1x8xf32> to vector<2x8xf32>
    %105 = arith.addf %99, %104 : vector<2x8xf32>
    %c0_67 = arith.constant 0 : index
    %c0_68 = arith.constant 0 : index
    %106 = vector.load %arg7[%c0_67, %c0_68] : memref<1x8xf32, #tpu.memory_space<vmem>>, vector<1x8xf32>
    %107 = vector.broadcast %106 : vector<1x8xf32> to vector<2x8xf32>
    %108 = arith.addf %102, %107 : vector<2x8xf32>
    %c0_69 = arith.constant 0 : index
    %c0_70 = arith.constant 0 : index
    %109 = vector.load %arg14[%c0_69, %c0_70] : memref<2x8xf32, #tpu.memory_space<vmem>>, vector<2x8xf32>
    tpu.vector_store %arg14[%c0_69, %c0_70], %105 {strides = array<i32>} : memref<2x8xf32, #tpu.memory_space<vmem>>, vector<2x8xf32>,
    %c0_71 = arith.constant 0 : index
    %c0_72 = arith.constant 0 : index
    %110 = vector.load %arg15[%c0_71, %c0_72] : memref<2x8xf32, #tpu.memory_space<vmem>>, vector<2x8xf32>
    tpu.vector_store %arg15[%c0_71, %c0_72], %108 {strides = array<i32>} : memref<2x8xf32, #tpu.memory_space<vmem>>, vector<2x8xf32>,
    %cst_73 = arith.constant 5.000000e-01 : f32
    %111 = vector.broadcast %cst_73 : f32 to vector<2x8xf32>
    %112 = arith.mulf %111, %108 : vector<2x8xf32>
    %113 = math.exp %112 : vector<2x8xf32>
    %114 = arith.mulf %113, %1 : vector<2x8xf32>
    %115 = arith.addf %105, %114 : vector<2x8xf32>
    %c0_74 = arith.constant 0 : index
    %c0_75 = arith.constant 0 : index
    %116 = vector.load %arg16[%c0_74, %c0_75] : memref<4x8xf32, #tpu.memory_space<vmem>>, vector<2x8xf32>
    tpu.vector_store %arg16[%c0_74, %c0_75], %115 {strides = array<i32>} : memref<4x8xf32, #tpu.memory_space<vmem>>, vector<2x8xf32>,
    %c2 = arith.constant 2 : index
    %c0_76 = arith.constant 0 : index
    %117 = vector.load %arg16[%c2, %c0_76] : memref<4x8xf32, #tpu.memory_space<vmem>>, vector<2x8xf32>
    tpu.vector_store %arg16[%c2, %c0_76], %1 {strides = array<i32>} : memref<4x8xf32, #tpu.memory_space<vmem>>, vector<2x8xf32>,
    %c0_77 = arith.constant 0 : index
    %c0_78 = arith.constant 0 : index
    %118 = vector.load %arg16[%c0_77, %c0_78] : memref<4x8xf32, #tpu.memory_space<vmem>>, vector<4x8xf32>
    %c0_79 = arith.constant 0 : index
    %c0_80 = arith.constant 0 : index
    %119 = vector.load %arg8[%c0_79, %c0_80] : memref<8x2048xf32, #tpu.memory_space<vmem>>, vector<8x2048xf32>
    %cst_81 = arith.constant dense<0.000000e+00> : vector<4x2048xf32>
    %120 = tpu.matmul %118, %119, %cst_81 {dimension_numbers = #tpu.dot_dimension_numbers<[1], [0], [0], [1], [0, 0, 1, 1], [], []>} : vector<4x8xf32>, vector<8x2048xf32>, vector<4x2048xf32> -> vector<4x2048xf32>
    %c0_82 = arith.constant 0 : index
    %c0_83 = arith.constant 0 : index
    %121 = vector.load %arg9[%c0_82, %c0_83] : memref<1x2048xf32, #tpu.memory_space<vmem>>, vector<1x2048xf32>
    %122 = vector.broadcast %121 : vector<1x2048xf32> to vector<4x2048xf32>
    %123 = arith.addf %120, %122 : vector<4x2048xf32>
    %cst_84 = arith.constant 0.000000e+00 : f32
    %124 = vector.broadcast %cst_84 : f32 to vector<4x2048xf32>
    %125 = arith.maximumf %123, %124 : vector<4x2048xf32>
    %c0_85 = arith.constant 0 : index
    %c0_86 = arith.constant 0 : index
    %126 = vector.load %arg11[%c0_85, %c0_86] : memref<1x48xf32, #tpu.memory_space<vmem>>, vector<1x48xf32>
    %127 = vector.extract_strided_slice %125 {offsets = [0, 0], sizes = [4, 256], strides = [1, 1]} : vector<4x2048xf32> to vector<4x256xf32>
    %c2_87 = arith.constant 2 : index
    %c0_88 = arith.constant 0 : index
    %c0_89 = arith.constant 0 : index
    %128 = vector.load %arg10[%c2_87, %c0_88, %c0_89] : memref<4x256x48xf32, #tpu.memory_space<vmem>>, vector<1x256x48xf32>
    %129 = vector.shape_cast %128 : vector<1x256x48xf32> to vector<256x48xf32>
    %cst_90 = arith.constant dense<0.000000e+00> : vector<4x48xf32>
    %130 = tpu.matmul %127, %129, %cst_90 {dimension_numbers = #tpu.dot_dimension_numbers<[1], [0], [0], [1], [0, 0, 1, 1], [], []>} : vector<4x256xf32>, vector<256x48xf32>, vector<4x48xf32> -> vector<4x48xf32>
    %131 = vector.broadcast %126 : vector<1x48xf32> to vector<4x48xf32>
    %132 = arith.addf %130, %131 : vector<4x48xf32>
    %133 = math.tanh %132 : vector<4x48xf32>
    %134 = vector.extract_strided_slice %133 {offsets = [0, 0], sizes = [2, 16], strides = [1, 1]} : vector<4x48xf32> to vector<2x16xf32>
    %c0_91 = arith.constant 0 : index
    %c0_92 = arith.constant 0 : index
    %135 = vector.load %arg12[%c0_91, %c0_92] : memref<2x768xf32, #tpu.memory_space<vmem>>, vector<2x16xf32>
    tpu.vector_store %arg12[%c0_91, %c0_92], %134 {strides = array<i32>} : memref<2x768xf32, #tpu.memory_space<vmem>>, vector<2x16xf32>,
    %136 = vector.extract_strided_slice %133 {offsets = [2, 0], sizes = [2, 16], strides = [1, 1]} : vector<4x48xf32> to vector<2x16xf32>
    %c0_93 = arith.constant 0 : index
    %c0_94 = arith.constant 0 : index
    %137 = vector.load %arg13[%c0_93, %c0_94] : memref<2x768xf32, #tpu.memory_space<vmem>>, vector<2x16xf32>
    tpu.vector_store %arg13[%c0_93, %c0_94], %136 {strides = array<i32>} : memref<2x768xf32, #tpu.memory_space<vmem>>, vector<2x16xf32>,
    %138 = vector.extract_strided_slice %133 {offsets = [0, 16], sizes = [2, 16], strides = [1, 1]} : vector<4x48xf32> to vector<2x16xf32>
    %c0_95 = arith.constant 0 : index
    %c256_96 = arith.constant 256 : index
    %139 = vector.load %arg12[%c0_95, %c256_96] : memref<2x768xf32, #tpu.memory_space<vmem>>, vector<2x16xf32>
    tpu.vector_store %arg12[%c0_95, %c256_96], %138 {strides = array<i32>} : memref<2x768xf32, #tpu.memory_space<vmem>>, vector<2x16xf32>,
    %140 = vector.extract_strided_slice %133 {offsets = [2, 16], sizes = [2, 16], strides = [1, 1]} : vector<4x48xf32> to vector<2x16xf32>
    %c0_97 = arith.constant 0 : index
    %c256_98 = arith.constant 256 : index
    %141 = vector.load %arg13[%c0_97, %c256_98] : memref<2x768xf32, #tpu.memory_space<vmem>>, vector<2x16xf32>
    tpu.vector_store %arg13[%c0_97, %c256_98], %140 {strides = array<i32>} : memref<2x768xf32, #tpu.memory_space<vmem>>, vector<2x16xf32>,
    %142 = vector.extract_strided_slice %133 {offsets = [0, 32], sizes = [2, 16], strides = [1, 1]} : vector<4x48xf32> to vector<2x16xf32>
    %c0_99 = arith.constant 0 : index
    %c512_100 = arith.constant 512 : index
    %143 = vector.load %arg12[%c0_99, %c512_100] : memref<2x768xf32, #tpu.memory_space<vmem>>, vector<2x16xf32>
    tpu.vector_store %arg12[%c0_99, %c512_100], %142 {strides = array<i32>} : memref<2x768xf32, #tpu.memory_space<vmem>>, vector<2x16xf32>,
    %144 = vector.extract_strided_slice %133 {offsets = [2, 32], sizes = [2, 16], strides = [1, 1]} : vector<4x48xf32> to vector<2x16xf32>
    %c0_101 = arith.constant 0 : index
    %c512_102 = arith.constant 512 : index
    %145 = vector.load %arg13[%c0_101, %c512_102] : memref<2x768xf32, #tpu.memory_space<vmem>>, vector<2x16xf32>
    tpu.vector_store %arg13[%c0_101, %c512_102], %144 {strides = array<i32>} : memref<2x768xf32, #tpu.memory_space<vmem>>, vector<2x16xf32>,
    %146 = vector.extract_strided_slice %125 {offsets = [0, 0], sizes = [4, 256], strides = [1, 1]} : vector<4x2048xf32> to vector<4x256xf32>
    %c1 = arith.constant 1 : index
    %c0_103 = arith.constant 0 : index
    %c0_104 = arith.constant 0 : index
    %147 = vector.load %arg10[%c1, %c0_103, %c0_104] : memref<4x256x48xf32, #tpu.memory_space<vmem>>, vector<1x256x48xf32>
    %148 = vector.shape_cast %147 : vector<1x256x48xf32> to vector<256x48xf32>
    %cst_105 = arith.constant dense<0.000000e+00> : vector<4x48xf32>
    %149 = tpu.matmul %146, %148, %cst_105 {dimension_numbers = #tpu.dot_dimension_numbers<[1], [0], [0], [1], [0, 0, 1, 1], [], []>} : vector<4x256xf32>, vector<256x48xf32>, vector<4x48xf32> -> vector<4x48xf32>
    %150 = vector.extract_strided_slice %125 {offsets = [0, 256], sizes = [4, 256], strides = [1, 1]} : vector<4x2048xf32> to vector<4x256xf32>
    %c3 = arith.constant 3 : index
    %c0_106 = arith.constant 0 : index
    %c0_107 = arith.constant 0 : index
    %151 = vector.load %arg10[%c3, %c0_106, %c0_107] : memref<4x256x48xf32, #tpu.memory_space<vmem>>, vector<1x256x48xf32>
    %152 = vector.shape_cast %151 : vector<1x256x48xf32> to vector<256x48xf32>
    %cst_108 = arith.constant dense<0.000000e+00> : vector<4x48xf32>
    %153 = tpu.matmul %150, %152, %cst_108 {dimension_numbers = #tpu.dot_dimension_numbers<[1], [0], [0], [1], [0, 0, 1, 1], [], []>} : vector<4x256xf32>, vector<256x48xf32>, vector<4x48xf32> -> vector<4x48xf32>
    %154 = arith.addf %149, %153 : vector<4x48xf32>
    %155 = vector.broadcast %126 : vector<1x48xf32> to vector<4x48xf32>
    %156 = arith.addf %154, %155 : vector<4x48xf32>
    %157 = math.tanh %156 : vector<4x48xf32>
    %158 = vector.extract_strided_slice %157 {offsets = [0, 0], sizes = [2, 16], strides = [1, 1]} : vector<4x48xf32> to vector<2x16xf32>
    %c0_109 = arith.constant 0 : index
    %c16 = arith.constant 16 : index
    %159 = vector.load %arg12[%c0_109, %c16] : memref<2x768xf32, #tpu.memory_space<vmem>>, vector<2x16xf32>
    tpu.vector_store %arg12[%c0_109, %c16], %158 {strides = array<i32>} : memref<2x768xf32, #tpu.memory_space<vmem>>, vector<2x16xf32>,
    %160 = vector.extract_strided_slice %157 {offsets = [2, 0], sizes = [2, 16], strides = [1, 1]} : vector<4x48xf32> to vector<2x16xf32>
    %c0_110 = arith.constant 0 : index
    %c16_111 = arith.constant 16 : index
    %161 = vector.load %arg13[%c0_110, %c16_111] : memref<2x768xf32, #tpu.memory_space<vmem>>, vector<2x16xf32>
    tpu.vector_store %arg13[%c0_110, %c16_111], %160 {strides = array<i32>} : memref<2x768xf32, #tpu.memory_space<vmem>>, vector<2x16xf32>,
    %162 = vector.extract_strided_slice %157 {offsets = [0, 16], sizes = [2, 16], strides = [1, 1]} : vector<4x48xf32> to vector<2x16xf32>
    %c0_112 = arith.constant 0 : index
    %c272 = arith.constant 272 : index
    %163 = vector.load %arg12[%c0_112, %c272] : memref<2x768xf32, #tpu.memory_space<vmem>>, vector<2x16xf32>
    tpu.vector_store %arg12[%c0_112, %c272], %162 {strides = array<i32>} : memref<2x768xf32, #tpu.memory_space<vmem>>, vector<2x16xf32>,
    %164 = vector.extract_strided_slice %157 {offsets = [2, 16], sizes = [2, 16], strides = [1, 1]} : vector<4x48xf32> to vector<2x16xf32>
    %c0_113 = arith.constant 0 : index
    %c272_114 = arith.constant 272 : index
    %165 = vector.load %arg13[%c0_113, %c272_114] : memref<2x768xf32, #tpu.memory_space<vmem>>, vector<2x16xf32>
    tpu.vector_store %arg13[%c0_113, %c272_114], %164 {strides = array<i32>} : memref<2x768xf32, #tpu.memory_space<vmem>>, vector<2x16xf32>,
    %166 = vector.extract_strided_slice %157 {offsets = [0, 32], sizes = [2, 16], strides = [1, 1]} : vector<4x48xf32> to vector<2x16xf32>
    %c0_115 = arith.constant 0 : index
    %c528 = arith.constant 528 : index
    %167 = vector.load %arg12[%c0_115, %c528] : memref<2x768xf32, #tpu.memory_space<vmem>>, vector<2x16xf32>
    tpu.vector_store %arg12[%c0_115, %c528], %166 {strides = array<i32>} : memref<2x768xf32, #tpu.memory_space<vmem>>, vector<2x16xf32>,
    %168 = vector.extract_strided_slice %157 {offsets = [2, 32], sizes = [2, 16], strides = [1, 1]} : vector<4x48xf32> to vector<2x16xf32>
    %c0_116 = arith.constant 0 : index
    %c528_117 = arith.constant 528 : index
    %169 = vector.load %arg13[%c0_116, %c528_117] : memref<2x768xf32, #tpu.memory_space<vmem>>, vector<2x16xf32>
    tpu.vector_store %arg13[%c0_116, %c528_117], %168 {strides = array<i32>} : memref<2x768xf32, #tpu.memory_space<vmem>>, vector<2x16xf32>,
    %170 = vector.extract_strided_slice %125 {offsets = [0, 0], sizes = [4, 256], strides = [1, 1]} : vector<4x2048xf32> to vector<4x256xf32>
    %c0_118 = arith.constant 0 : index
    %c0_119 = arith.constant 0 : index
    %c0_120 = arith.constant 0 : index
    %171 = vector.load %arg10[%c0_118, %c0_119, %c0_120] : memref<4x256x48xf32, #tpu.memory_space<vmem>>, vector<1x256x48xf32>
    %172 = vector.shape_cast %171 : vector<1x256x48xf32> to vector<256x48xf32>
    %cst_121 = arith.constant dense<0.000000e+00> : vector<4x48xf32>
    %173 = tpu.matmul %170, %172, %cst_121 {dimension_numbers = #tpu.dot_dimension_numbers<[1], [0], [0], [1], [0, 0, 1, 1], [], []>} : vector<4x256xf32>, vector<256x48xf32>, vector<4x48xf32> -> vector<4x48xf32>
    %174 = vector.extract_strided_slice %125 {offsets = [0, 256], sizes = [4, 256], strides = [1, 1]} : vector<4x2048xf32> to vector<4x256xf32>
    %c2_122 = arith.constant 2 : index
    %c0_123 = arith.constant 0 : index
    %c0_124 = arith.constant 0 : index
    %175 = vector.load %arg10[%c2_122, %c0_123, %c0_124] : memref<4x256x48xf32, #tpu.memory_space<vmem>>, vector<1x256x48xf32>
    %176 = vector.shape_cast %175 : vector<1x256x48xf32> to vector<256x48xf32>
    %cst_125 = arith.constant dense<0.000000e+00> : vector<4x48xf32>
    %177 = tpu.matmul %174, %176, %cst_125 {dimension_numbers = #tpu.dot_dimension_numbers<[1], [0], [0], [1], [0, 0, 1, 1], [], []>} : vector<4x256xf32>, vector<256x48xf32>, vector<4x48xf32> -> vector<4x48xf32>
    %178 = arith.addf %173, %177 : vector<4x48xf32>
    %179 = vector.broadcast %126 : vector<1x48xf32> to vector<4x48xf32>
    %180 = arith.addf %178, %179 : vector<4x48xf32>
    %181 = math.tanh %180 : vector<4x48xf32>
    %182 = vector.extract_strided_slice %181 {offsets = [0, 0], sizes = [2, 16], strides = [1, 1]} : vector<4x48xf32> to vector<2x16xf32>
    %c0_126 = arith.constant 0 : index
    %c32 = arith.constant 32 : index
    %183 = vector.load %arg12[%c0_126, %c32] : memref<2x768xf32, #tpu.memory_space<vmem>>, vector<2x16xf32>
    tpu.vector_store %arg12[%c0_126, %c32], %182 {strides = array<i32>} : memref<2x768xf32, #tpu.memory_space<vmem>>, vector<2x16xf32>,
    %184 = vector.extract_strided_slice %181 {offsets = [2, 0], sizes = [2, 16], strides = [1, 1]} : vector<4x48xf32> to vector<2x16xf32>
    %c0_127 = arith.constant 0 : index
    %c32_128 = arith.constant 32 : index
    %185 = vector.load %arg13[%c0_127, %c32_128] : memref<2x768xf32, #tpu.memory_space<vmem>>, vector<2x16xf32>
    tpu.vector_store %arg13[%c0_127, %c32_128], %184 {strides = array<i32>} : memref<2x768xf32, #tpu.memory_space<vmem>>, vector<2x16xf32>,
    %186 = vector.extract_strided_slice %181 {offsets = [0, 16], sizes = [2, 16], strides = [1, 1]} : vector<4x48xf32> to vector<2x16xf32>
    %c0_129 = arith.constant 0 : index
    %c288 = arith.constant 288 : index
    %187 = vector.load %arg12[%c0_129, %c288] : memref<2x768xf32, #tpu.memory_space<vmem>>, vector<2x16xf32>
    tpu.vector_store %arg12[%c0_129, %c288], %186 {strides = array<i32>} : memref<2x768xf32, #tpu.memory_space<vmem>>, vector<2x16xf32>,
    %188 = vector.extract_strided_slice %181 {offsets = [2, 16], sizes = [2, 16], strides = [1, 1]} : vector<4x48xf32> to vector<2x16xf32>
    %c0_130 = arith.constant 0 : index
    %c288_131 = arith.constant 288 : index
    %189 = vector.load %arg13[%c0_130, %c288_131] : memref<2x768xf32, #tpu.memory_space<vmem>>, vector<2x16xf32>
    tpu.vector_store %arg13[%c0_130, %c288_131], %188 {strides = array<i32>} : memref<2x768xf32, #tpu.memory_space<vmem>>, vector<2x16xf32>,
    %190 = vector.extract_strided_slice %181 {offsets = [0, 32], sizes = [2, 16], strides = [1, 1]} : vector<4x48xf32> to vector<2x16xf32>
    %c0_132 = arith.constant 0 : index
    %c544 = arith.constant 544 : index
    %191 = vector.load %arg12[%c0_132, %c544] : memref<2x768xf32, #tpu.memory_space<vmem>>, vector<2x16xf32>
    tpu.vector_store %arg12[%c0_132, %c544], %190 {strides = array<i32>} : memref<2x768xf32, #tpu.memory_space<vmem>>, vector<2x16xf32>,
    %192 = vector.extract_strided_slice %181 {offsets = [2, 32], sizes = [2, 16], strides = [1, 1]} : vector<4x48xf32> to vector<2x16xf32>
    %c0_133 = arith.constant 0 : index
    %c544_134 = arith.constant 544 : index
    %193 = vector.load %arg13[%c0_133, %c544_134] : memref<2x768xf32, #tpu.memory_space<vmem>>, vector<2x16xf32>
    tpu.vector_store %arg13[%c0_133, %c544_134], %192 {strides = array<i32>} : memref<2x768xf32, #tpu.memory_space<vmem>>, vector<2x16xf32>,
    %194 = vector.extract_strided_slice %125 {offsets = [0, 256], sizes = [4, 256], strides = [1, 1]} : vector<4x2048xf32> to vector<4x256xf32>
    %c1_135 = arith.constant 1 : index
    %c0_136 = arith.constant 0 : index
    %c0_137 = arith.constant 0 : index
    %195 = vector.load %arg10[%c1_135, %c0_136, %c0_137] : memref<4x256x48xf32, #tpu.memory_space<vmem>>, vector<1x256x48xf32>
    %196 = vector.shape_cast %195 : vector<1x256x48xf32> to vector<256x48xf32>
    %cst_138 = arith.constant dense<0.000000e+00> : vector<4x48xf32>
    %197 = tpu.matmul %194, %196, %cst_138 {dimension_numbers = #tpu.dot_dimension_numbers<[1], [0], [0], [1], [0, 0, 1, 1], [], []>} : vector<4x256xf32>, vector<256x48xf32>, vector<4x48xf32> -> vector<4x48xf32>
    %198 = vector.extract_strided_slice %125 {offsets = [0, 512], sizes = [4, 256], strides = [1, 1]} : vector<4x2048xf32> to vector<4x256xf32>
    %c3_139 = arith.constant 3 : index
    %c0_140 = arith.constant 0 : index
    %c0_141 = arith.constant 0 : index
    %199 = vector.load %arg10[%c3_139, %c0_140, %c0_141] : memref<4x256x48xf32, #tpu.memory_space<vmem>>, vector<1x256x48xf32>
    %200 = vector.shape_cast %199 : vector<1x256x48xf32> to vector<256x48xf32>
    %cst_142 = arith.constant dense<0.000000e+00> : vector<4x48xf32>
    %201 = tpu.matmul %198, %200, %cst_142 {dimension_numbers = #tpu.dot_dimension_numbers<[1], [0], [0], [1], [0, 0, 1, 1], [], []>} : vector<4x256xf32>, vector<256x48xf32>, vector<4x48xf32> -> vector<4x48xf32>
    %202 = arith.addf %197, %201 : vector<4x48xf32>
    %203 = vector.broadcast %126 : vector<1x48xf32> to vector<4x48xf32>
    %204 = arith.addf %202, %203 : vector<4x48xf32>
    %205 = math.tanh %204 : vector<4x48xf32>
    %206 = vector.extract_strided_slice %205 {offsets = [0, 0], sizes = [2, 16], strides = [1, 1]} : vector<4x48xf32> to vector<2x16xf32>
    %c0_143 = arith.constant 0 : index
    %c48 = arith.constant 48 : index
    %207 = vector.load %arg12[%c0_143, %c48] : memref<2x768xf32, #tpu.memory_space<vmem>>, vector<2x16xf32>
    tpu.vector_store %arg12[%c0_143, %c48], %206 {strides = array<i32>} : memref<2x768xf32, #tpu.memory_space<vmem>>, vector<2x16xf32>,
    %208 = vector.extract_strided_slice %205 {offsets = [2, 0], sizes = [2, 16], strides = [1, 1]} : vector<4x48xf32> to vector<2x16xf32>
    %c0_144 = arith.constant 0 : index
    %c48_145 = arith.constant 48 : index
    %209 = vector.load %arg13[%c0_144, %c48_145] : memref<2x768xf32, #tpu.memory_space<vmem>>, vector<2x16xf32>
    tpu.vector_store %arg13[%c0_144, %c48_145], %208 {strides = array<i32>} : memref<2x768xf32, #tpu.memory_space<vmem>>, vector<2x16xf32>,
    %210 = vector.extract_strided_slice %205 {offsets = [0, 16], sizes = [2, 16], strides = [1, 1]} : vector<4x48xf32> to vector<2x16xf32>
    %c0_146 = arith.constant 0 : index
    %c304 = arith.constant 304 : index
    %211 = vector.load %arg12[%c0_146, %c304] : memref<2x768xf32, #tpu.memory_space<vmem>>, vector<2x16xf32>
    tpu.vector_store %arg12[%c0_146, %c304], %210 {strides = array<i32>} : memref<2x768xf32, #tpu.memory_space<vmem>>, vector<2x16xf32>,
    %212 = vector.extract_strided_slice %205 {offsets = [2, 16], sizes = [2, 16], strides = [1, 1]} : vector<4x48xf32> to vector<2x16xf32>
    %c0_147 = arith.constant 0 : index
    %c304_148 = arith.constant 304 : index
    %213 = vector.load %arg13[%c0_147, %c304_148] : memref<2x768xf32, #tpu.memory_space<vmem>>, vector<2x16xf32>
    tpu.vector_store %arg13[%c0_147, %c304_148], %212 {strides = array<i32>} : memref<2x768xf32, #tpu.memory_space<vmem>>, vector<2x16xf32>,
    %214 = vector.extract_strided_slice %205 {offsets = [0, 32], sizes = [2, 16], strides = [1, 1]} : vector<4x48xf32> to vector<2x16xf32>
    %c0_149 = arith.constant 0 : index
    %c560 = arith.constant 560 : index
    %215 = vector.load %arg12[%c0_149, %c560] : memref<2x768xf32, #tpu.memory_space<vmem>>, vector<2x16xf32>
    tpu.vector_store %arg12[%c0_149, %c560], %214 {strides = array<i32>} : memref<2x768xf32, #tpu.memory_space<vmem>>, vector<2x16xf32>,
    %216 = vector.extract_strided_slice %205 {offsets = [2, 32], sizes = [2, 16], strides = [1, 1]} : vector<4x48xf32> to vector<2x16xf32>
    %c0_150 = arith.constant 0 : index
    %c560_151 = arith.constant 560 : index
    %217 = vector.load %arg13[%c0_150, %c560_151] : memref<2x768xf32, #tpu.memory_space<vmem>>, vector<2x16xf32>
    tpu.vector_store %arg13[%c0_150, %c560_151], %216 {strides = array<i32>} : memref<2x768xf32, #tpu.memory_space<vmem>>, vector<2x16xf32>,
    %218 = vector.extract_strided_slice %125 {offsets = [0, 256], sizes = [4, 256], strides = [1, 1]} : vector<4x2048xf32> to vector<4x256xf32>
    %c0_152 = arith.constant 0 : index
    %c0_153 = arith.constant 0 : index
    %c0_154 = arith.constant 0 : index
    %219 = vector.load %arg10[%c0_152, %c0_153, %c0_154] : memref<4x256x48xf32, #tpu.memory_space<vmem>>, vector<1x256x48xf32>
    %220 = vector.shape_cast %219 : vector<1x256x48xf32> to vector<256x48xf32>
    %cst_155 = arith.constant dense<0.000000e+00> : vector<4x48xf32>
    %221 = tpu.matmul %218, %220, %cst_155 {dimension_numbers = #tpu.dot_dimension_numbers<[1], [0], [0], [1], [0, 0, 1, 1], [], []>} : vector<4x256xf32>, vector<256x48xf32>, vector<4x48xf32> -> vector<4x48xf32>
    %222 = vector.extract_strided_slice %125 {offsets = [0, 512], sizes = [4, 256], strides = [1, 1]} : vector<4x2048xf32> to vector<4x256xf32>
    %c2_156 = arith.constant 2 : index
    %c0_157 = arith.constant 0 : index
    %c0_158 = arith.constant 0 : index
    %223 = vector.load %arg10[%c2_156, %c0_157, %c0_158] : memref<4x256x48xf32, #tpu.memory_space<vmem>>, vector<1x256x48xf32>
    %224 = vector.shape_cast %223 : vector<1x256x48xf32> to vector<256x48xf32>
    %cst_159 = arith.constant dense<0.000000e+00> : vector<4x48xf32>
    %225 = tpu.matmul %222, %224, %cst_159 {dimension_numbers = #tpu.dot_dimension_numbers<[1], [0], [0], [1], [0, 0, 1, 1], [], []>} : vector<4x256xf32>, vector<256x48xf32>, vector<4x48xf32> -> vector<4x48xf32>
    %226 = arith.addf %221, %225 : vector<4x48xf32>
    %227 = vector.broadcast %126 : vector<1x48xf32> to vector<4x48xf32>
    %228 = arith.addf %226, %227 : vector<4x48xf32>
    %229 = math.tanh %228 : vector<4x48xf32>
    %230 = vector.extract_strided_slice %229 {offsets = [0, 0], sizes = [2, 16], strides = [1, 1]} : vector<4x48xf32> to vector<2x16xf32>
    %c0_160 = arith.constant 0 : index
    %c64 = arith.constant 64 : index
    %231 = vector.load %arg12[%c0_160, %c64] : memref<2x768xf32, #tpu.memory_space<vmem>>, vector<2x16xf32>
    tpu.vector_store %arg12[%c0_160, %c64], %230 {strides = array<i32>} : memref<2x768xf32, #tpu.memory_space<vmem>>, vector<2x16xf32>,
    %232 = vector.extract_strided_slice %229 {offsets = [2, 0], sizes = [2, 16], strides = [1, 1]} : vector<4x48xf32> to vector<2x16xf32>
    %c0_161 = arith.constant 0 : index
    %c64_162 = arith.constant 64 : index
    %233 = vector.load %arg13[%c0_161, %c64_162] : memref<2x768xf32, #tpu.memory_space<vmem>>, vector<2x16xf32>
    tpu.vector_store %arg13[%c0_161, %c64_162], %232 {strides = array<i32>} : memref<2x768xf32, #tpu.memory_space<vmem>>, vector<2x16xf32>,
    %234 = vector.extract_strided_slice %229 {offsets = [0, 16], sizes = [2, 16], strides = [1, 1]} : vector<4x48xf32> to vector<2x16xf32>
    %c0_163 = arith.constant 0 : index
    %c320 = arith.constant 320 : index
    %235 = vector.load %arg12[%c0_163, %c320] : memref<2x768xf32, #tpu.memory_space<vmem>>, vector<2x16xf32>
    tpu.vector_store %arg12[%c0_163, %c320], %234 {strides = array<i32>} : memref<2x768xf32, #tpu.memory_space<vmem>>, vector<2x16xf32>,
    %236 = vector.extract_strided_slice %229 {offsets = [2, 16], sizes = [2, 16], strides = [1, 1]} : vector<4x48xf32> to vector<2x16xf32>
    %c0_164 = arith.constant 0 : index
    %c320_165 = arith.constant 320 : index
    %237 = vector.load %arg13[%c0_164, %c320_165] : memref<2x768xf32, #tpu.memory_space<vmem>>, vector<2x16xf32>
    tpu.vector_store %arg13[%c0_164, %c320_165], %236 {strides = array<i32>} : memref<2x768xf32, #tpu.memory_space<vmem>>, vector<2x16xf32>,
    %238 = vector.extract_strided_slice %229 {offsets = [0, 32], sizes = [2, 16], strides = [1, 1]} : vector<4x48xf32> to vector<2x16xf32>
    %c0_166 = arith.constant 0 : index
    %c576 = arith.constant 576 : index
    %239 = vector.load %arg12[%c0_166, %c576] : memref<2x768xf32, #tpu.memory_space<vmem>>, vector<2x16xf32>
    tpu.vector_store %arg12[%c0_166, %c576], %238 {strides = array<i32>} : memref<2x768xf32, #tpu.memory_space<vmem>>, vector<2x16xf32>,
    %240 = vector.extract_strided_slice %229 {offsets = [2, 32], sizes = [2, 16], strides = [1, 1]} : vector<4x48xf32> to vector<2x16xf32>
    %c0_167 = arith.constant 0 : index
    %c576_168 = arith.constant 576 : index
    %241 = vector.load %arg13[%c0_167, %c576_168] : memref<2x768xf32, #tpu.memory_space<vmem>>, vector<2x16xf32>
    tpu.vector_store %arg13[%c0_167, %c576_168], %240 {strides = array<i32>} : memref<2x768xf32, #tpu.memory_space<vmem>>, vector<2x16xf32>,
    %242 = vector.extract_strided_slice %125 {offsets = [0, 512], sizes = [4, 256], strides = [1, 1]} : vector<4x2048xf32> to vector<4x256xf32>
    %c1_169 = arith.constant 1 : index
    %c0_170 = arith.constant 0 : index
    %c0_171 = arith.constant 0 : index
    %243 = vector.load %arg10[%c1_169, %c0_170, %c0_171] : memref<4x256x48xf32, #tpu.memory_space<vmem>>, vector<1x256x48xf32>
    %244 = vector.shape_cast %243 : vector<1x256x48xf32> to vector<256x48xf32>
    %cst_172 = arith.constant dense<0.000000e+00> : vector<4x48xf32>
    %245 = tpu.matmul %242, %244, %cst_172 {dimension_numbers = #tpu.dot_dimension_numbers<[1], [0], [0], [1], [0, 0, 1, 1], [], []>} : vector<4x256xf32>, vector<256x48xf32>, vector<4x48xf32> -> vector<4x48xf32>
    %246 = vector.extract_strided_slice %125 {offsets = [0, 768], sizes = [4, 256], strides = [1, 1]} : vector<4x2048xf32> to vector<4x256xf32>
    %c3_173 = arith.constant 3 : index
    %c0_174 = arith.constant 0 : index
    %c0_175 = arith.constant 0 : index
    %247 = vector.load %arg10[%c3_173, %c0_174, %c0_175] : memref<4x256x48xf32, #tpu.memory_space<vmem>>, vector<1x256x48xf32>
    %248 = vector.shape_cast %247 : vector<1x256x48xf32> to vector<256x48xf32>
    %cst_176 = arith.constant dense<0.000000e+00> : vector<4x48xf32>
    %249 = tpu.matmul %246, %248, %cst_176 {dimension_numbers = #tpu.dot_dimension_numbers<[1], [0], [0], [1], [0, 0, 1, 1], [], []>} : vector<4x256xf32>, vector<256x48xf32>, vector<4x48xf32> -> vector<4x48xf32>
    %250 = arith.addf %245, %249 : vector<4x48xf32>
    %251 = vector.broadcast %126 : vector<1x48xf32> to vector<4x48xf32>
    %252 = arith.addf %250, %251 : vector<4x48xf32>
    %253 = math.tanh %252 : vector<4x48xf32>
    %254 = vector.extract_strided_slice %253 {offsets = [0, 0], sizes = [2, 16], strides = [1, 1]} : vector<4x48xf32> to vector<2x16xf32>
    %c0_177 = arith.constant 0 : index
    %c80 = arith.constant 80 : index
    %255 = vector.load %arg12[%c0_177, %c80] : memref<2x768xf32, #tpu.memory_space<vmem>>, vector<2x16xf32>
    tpu.vector_store %arg12[%c0_177, %c80], %254 {strides = array<i32>} : memref<2x768xf32, #tpu.memory_space<vmem>>, vector<2x16xf32>,
    %256 = vector.extract_strided_slice %253 {offsets = [2, 0], sizes = [2, 16], strides = [1, 1]} : vector<4x48xf32> to vector<2x16xf32>
    %c0_178 = arith.constant 0 : index
    %c80_179 = arith.constant 80 : index
    %257 = vector.load %arg13[%c0_178, %c80_179] : memref<2x768xf32, #tpu.memory_space<vmem>>, vector<2x16xf32>
    tpu.vector_store %arg13[%c0_178, %c80_179], %256 {strides = array<i32>} : memref<2x768xf32, #tpu.memory_space<vmem>>, vector<2x16xf32>,
    %258 = vector.extract_strided_slice %253 {offsets = [0, 16], sizes = [2, 16], strides = [1, 1]} : vector<4x48xf32> to vector<2x16xf32>
    %c0_180 = arith.constant 0 : index
    %c336 = arith.constant 336 : index
    %259 = vector.load %arg12[%c0_180, %c336] : memref<2x768xf32, #tpu.memory_space<vmem>>, vector<2x16xf32>
    tpu.vector_store %arg12[%c0_180, %c336], %258 {strides = array<i32>} : memref<2x768xf32, #tpu.memory_space<vmem>>, vector<2x16xf32>,
    %260 = vector.extract_strided_slice %253 {offsets = [2, 16], sizes = [2, 16], strides = [1, 1]} : vector<4x48xf32> to vector<2x16xf32>
    %c0_181 = arith.constant 0 : index
    %c336_182 = arith.constant 336 : index
    %261 = vector.load %arg13[%c0_181, %c336_182] : memref<2x768xf32, #tpu.memory_space<vmem>>, vector<2x16xf32>
    tpu.vector_store %arg13[%c0_181, %c336_182], %260 {strides = array<i32>} : memref<2x768xf32, #tpu.memory_space<vmem>>, vector<2x16xf32>,
    %262 = vector.extract_strided_slice %253 {offsets = [0, 32], sizes = [2, 16], strides = [1, 1]} : vector<4x48xf32> to vector<2x16xf32>
    %c0_183 = arith.constant 0 : index
    %c592 = arith.constant 592 : index
    %263 = vector.load %arg12[%c0_183, %c592] : memref<2x768xf32, #tpu.memory_space<vmem>>, vector<2x16xf32>
    tpu.vector_store %arg12[%c0_183, %c592], %262 {strides = array<i32>} : memref<2x768xf32, #tpu.memory_space<vmem>>, vector<2x16xf32>,
    %264 = vector.extract_strided_slice %253 {offsets = [2, 32], sizes = [2, 16], strides = [1, 1]} : vector<4x48xf32> to vector<2x16xf32>
    %c0_184 = arith.constant 0 : index
    %c592_185 = arith.constant 592 : index
    %265 = vector.load %arg13[%c0_184, %c592_185] : memref<2x768xf32, #tpu.memory_space<vmem>>, vector<2x16xf32>
    tpu.vector_store %arg13[%c0_184, %c592_185], %264 {strides = array<i32>} : memref<2x768xf32, #tpu.memory_space<vmem>>, vector<2x16xf32>,
    %266 = vector.extract_strided_slice %125 {offsets = [0, 512], sizes = [4, 256], strides = [1, 1]} : vector<4x2048xf32> to vector<4x256xf32>
    %c0_186 = arith.constant 0 : index
    %c0_187 = arith.constant 0 : index
    %c0_188 = arith.constant 0 : index
    %267 = vector.load %arg10[%c0_186, %c0_187, %c0_188] : memref<4x256x48xf32, #tpu.memory_space<vmem>>, vector<1x256x48xf32>
    %268 = vector.shape_cast %267 : vector<1x256x48xf32> to vector<256x48xf32>
    %cst_189 = arith.constant dense<0.000000e+00> : vector<4x48xf32>
    %269 = tpu.matmul %266, %268, %cst_189 {dimension_numbers = #tpu.dot_dimension_numbers<[1], [0], [0], [1], [0, 0, 1, 1], [], []>} : vector<4x256xf32>, vector<256x48xf32>, vector<4x48xf32> -> vector<4x48xf32>
    %270 = vector.extract_strided_slice %125 {offsets = [0, 768], sizes = [4, 256], strides = [1, 1]} : vector<4x2048xf32> to vector<4x256xf32>
    %c2_190 = arith.constant 2 : index
    %c0_191 = arith.constant 0 : index
    %c0_192 = arith.constant 0 : index
    %271 = vector.load %arg10[%c2_190, %c0_191, %c0_192] : memref<4x256x48xf32, #tpu.memory_space<vmem>>, vector<1x256x48xf32>
    %272 = vector.shape_cast %271 : vector<1x256x48xf32> to vector<256x48xf32>
    %cst_193 = arith.constant dense<0.000000e+00> : vector<4x48xf32>
    %273 = tpu.matmul %270, %272, %cst_193 {dimension_numbers = #tpu.dot_dimension_numbers<[1], [0], [0], [1], [0, 0, 1, 1], [], []>} : vector<4x256xf32>, vector<256x48xf32>, vector<4x48xf32> -> vector<4x48xf32>
    %274 = arith.addf %269, %273 : vector<4x48xf32>
    %275 = vector.broadcast %126 : vector<1x48xf32> to vector<4x48xf32>
    %276 = arith.addf %274, %275 : vector<4x48xf32>
    %277 = math.tanh %276 : vector<4x48xf32>
    %278 = vector.extract_strided_slice %277 {offsets = [0, 0], sizes = [2, 16], strides = [1, 1]} : vector<4x48xf32> to vector<2x16xf32>
    %c0_194 = arith.constant 0 : index
    %c96 = arith.constant 96 : index
    %279 = vector.load %arg12[%c0_194, %c96] : memref<2x768xf32, #tpu.memory_space<vmem>>, vector<2x16xf32>
    tpu.vector_store %arg12[%c0_194, %c96], %278 {strides = array<i32>} : memref<2x768xf32, #tpu.memory_space<vmem>>, vector<2x16xf32>,
    %280 = vector.extract_strided_slice %277 {offsets = [2, 0], sizes = [2, 16], strides = [1, 1]} : vector<4x48xf32> to vector<2x16xf32>
    %c0_195 = arith.constant 0 : index
    %c96_196 = arith.constant 96 : index
    %281 = vector.load %arg13[%c0_195, %c96_196] : memref<2x768xf32, #tpu.memory_space<vmem>>, vector<2x16xf32>
    tpu.vector_store %arg13[%c0_195, %c96_196], %280 {strides = array<i32>} : memref<2x768xf32, #tpu.memory_space<vmem>>, vector<2x16xf32>,
    %282 = vector.extract_strided_slice %277 {offsets = [0, 16], sizes = [2, 16], strides = [1, 1]} : vector<4x48xf32> to vector<2x16xf32>
    %c0_197 = arith.constant 0 : index
    %c352 = arith.constant 352 : index
    %283 = vector.load %arg12[%c0_197, %c352] : memref<2x768xf32, #tpu.memory_space<vmem>>, vector<2x16xf32>
    tpu.vector_store %arg12[%c0_197, %c352], %282 {strides = array<i32>} : memref<2x768xf32, #tpu.memory_space<vmem>>, vector<2x16xf32>,
    %284 = vector.extract_strided_slice %277 {offsets = [2, 16], sizes = [2, 16], strides = [1, 1]} : vector<4x48xf32> to vector<2x16xf32>
    %c0_198 = arith.constant 0 : index
    %c352_199 = arith.constant 352 : index
    %285 = vector.load %arg13[%c0_198, %c352_199] : memref<2x768xf32, #tpu.memory_space<vmem>>, vector<2x16xf32>
    tpu.vector_store %arg13[%c0_198, %c352_199], %284 {strides = array<i32>} : memref<2x768xf32, #tpu.memory_space<vmem>>, vector<2x16xf32>,
    %286 = vector.extract_strided_slice %277 {offsets = [0, 32], sizes = [2, 16], strides = [1, 1]} : vector<4x48xf32> to vector<2x16xf32>
    %c0_200 = arith.constant 0 : index
    %c608 = arith.constant 608 : index
    %287 = vector.load %arg12[%c0_200, %c608] : memref<2x768xf32, #tpu.memory_space<vmem>>, vector<2x16xf32>
    tpu.vector_store %arg12[%c0_200, %c608], %286 {strides = array<i32>} : memref<2x768xf32, #tpu.memory_space<vmem>>, vector<2x16xf32>,
    %288 = vector.extract_strided_slice %277 {offsets = [2, 32], sizes = [2, 16], strides = [1, 1]} : vector<4x48xf32> to vector<2x16xf32>
    %c0_201 = arith.constant 0 : index
    %c608_202 = arith.constant 608 : index
    %289 = vector.load %arg13[%c0_201, %c608_202] : memref<2x768xf32, #tpu.memory_space<vmem>>, vector<2x16xf32>
    tpu.vector_store %arg13[%c0_201, %c608_202], %288 {strides = array<i32>} : memref<2x768xf32, #tpu.memory_space<vmem>>, vector<2x16xf32>,
    %290 = vector.extract_strided_slice %125 {offsets = [0, 768], sizes = [4, 256], strides = [1, 1]} : vector<4x2048xf32> to vector<4x256xf32>
    %c1_203 = arith.constant 1 : index
    %c0_204 = arith.constant 0 : index
    %c0_205 = arith.constant 0 : index
    %291 = vector.load %arg10[%c1_203, %c0_204, %c0_205] : memref<4x256x48xf32, #tpu.memory_space<vmem>>, vector<1x256x48xf32>
    %292 = vector.shape_cast %291 : vector<1x256x48xf32> to vector<256x48xf32>
    %cst_206 = arith.constant dense<0.000000e+00> : vector<4x48xf32>
    %293 = tpu.matmul %290, %292, %cst_206 {dimension_numbers = #tpu.dot_dimension_numbers<[1], [0], [0], [1], [0, 0, 1, 1], [], []>} : vector<4x256xf32>, vector<256x48xf32>, vector<4x48xf32> -> vector<4x48xf32>
    %294 = vector.extract_strided_slice %125 {offsets = [0, 1024], sizes = [4, 256], strides = [1, 1]} : vector<4x2048xf32> to vector<4x256xf32>
    %c3_207 = arith.constant 3 : index
    %c0_208 = arith.constant 0 : index
    %c0_209 = arith.constant 0 : index
    %295 = vector.load %arg10[%c3_207, %c0_208, %c0_209] : memref<4x256x48xf32, #tpu.memory_space<vmem>>, vector<1x256x48xf32>
    %296 = vector.shape_cast %295 : vector<1x256x48xf32> to vector<256x48xf32>
    %cst_210 = arith.constant dense<0.000000e+00> : vector<4x48xf32>
    %297 = tpu.matmul %294, %296, %cst_210 {dimension_numbers = #tpu.dot_dimension_numbers<[1], [0], [0], [1], [0, 0, 1, 1], [], []>} : vector<4x256xf32>, vector<256x48xf32>, vector<4x48xf32> -> vector<4x48xf32>
    %298 = arith.addf %293, %297 : vector<4x48xf32>
    %299 = vector.broadcast %126 : vector<1x48xf32> to vector<4x48xf32>
    %300 = arith.addf %298, %299 : vector<4x48xf32>
    %301 = math.tanh %300 : vector<4x48xf32>
    %302 = vector.extract_strided_slice %301 {offsets = [0, 0], sizes = [2, 16], strides = [1, 1]} : vector<4x48xf32> to vector<2x16xf32>
    %c0_211 = arith.constant 0 : index
    %c112 = arith.constant 112 : index
    %303 = vector.load %arg12[%c0_211, %c112] : memref<2x768xf32, #tpu.memory_space<vmem>>, vector<2x16xf32>
    tpu.vector_store %arg12[%c0_211, %c112], %302 {strides = array<i32>} : memref<2x768xf32, #tpu.memory_space<vmem>>, vector<2x16xf32>,
    %304 = vector.extract_strided_slice %301 {offsets = [2, 0], sizes = [2, 16], strides = [1, 1]} : vector<4x48xf32> to vector<2x16xf32>
    %c0_212 = arith.constant 0 : index
    %c112_213 = arith.constant 112 : index
    %305 = vector.load %arg13[%c0_212, %c112_213] : memref<2x768xf32, #tpu.memory_space<vmem>>, vector<2x16xf32>
    tpu.vector_store %arg13[%c0_212, %c112_213], %304 {strides = array<i32>} : memref<2x768xf32, #tpu.memory_space<vmem>>, vector<2x16xf32>,
    %306 = vector.extract_strided_slice %301 {offsets = [0, 16], sizes = [2, 16], strides = [1, 1]} : vector<4x48xf32> to vector<2x16xf32>
    %c0_214 = arith.constant 0 : index
    %c368 = arith.constant 368 : index
    %307 = vector.load %arg12[%c0_214, %c368] : memref<2x768xf32, #tpu.memory_space<vmem>>, vector<2x16xf32>
    tpu.vector_store %arg12[%c0_214, %c368], %306 {strides = array<i32>} : memref<2x768xf32, #tpu.memory_space<vmem>>, vector<2x16xf32>,
    %308 = vector.extract_strided_slice %301 {offsets = [2, 16], sizes = [2, 16], strides = [1, 1]} : vector<4x48xf32> to vector<2x16xf32>
    %c0_215 = arith.constant 0 : index
    %c368_216 = arith.constant 368 : index
    %309 = vector.load %arg13[%c0_215, %c368_216] : memref<2x768xf32, #tpu.memory_space<vmem>>, vector<2x16xf32>
    tpu.vector_store %arg13[%c0_215, %c368_216], %308 {strides = array<i32>} : memref<2x768xf32, #tpu.memory_space<vmem>>, vector<2x16xf32>,
    %310 = vector.extract_strided_slice %301 {offsets = [0, 32], sizes = [2, 16], strides = [1, 1]} : vector<4x48xf32> to vector<2x16xf32>
    %c0_217 = arith.constant 0 : index
    %c624 = arith.constant 624 : index
    %311 = vector.load %arg12[%c0_217, %c624] : memref<2x768xf32, #tpu.memory_space<vmem>>, vector<2x16xf32>
    tpu.vector_store %arg12[%c0_217, %c624], %310 {strides = array<i32>} : memref<2x768xf32, #tpu.memory_space<vmem>>, vector<2x16xf32>,
    %312 = vector.extract_strided_slice %301 {offsets = [2, 32], sizes = [2, 16], strides = [1, 1]} : vector<4x48xf32> to vector<2x16xf32>
    %c0_218 = arith.constant 0 : index
    %c624_219 = arith.constant 624 : index
    %313 = vector.load %arg13[%c0_218, %c624_219] : memref<2x768xf32, #tpu.memory_space<vmem>>, vector<2x16xf32>
    tpu.vector_store %arg13[%c0_218, %c624_219], %312 {strides = array<i32>} : memref<2x768xf32, #tpu.memory_space<vmem>>, vector<2x16xf32>,
    %314 = vector.extract_strided_slice %125 {offsets = [0, 768], sizes = [4, 256], strides = [1, 1]} : vector<4x2048xf32> to vector<4x256xf32>
    %c0_220 = arith.constant 0 : index
    %c0_221 = arith.constant 0 : index
    %c0_222 = arith.constant 0 : index
    %315 = vector.load %arg10[%c0_220, %c0_221, %c0_222] : memref<4x256x48xf32, #tpu.memory_space<vmem>>, vector<1x256x48xf32>
    %316 = vector.shape_cast %315 : vector<1x256x48xf32> to vector<256x48xf32>
    %cst_223 = arith.constant dense<0.000000e+00> : vector<4x48xf32>
    %317 = tpu.matmul %314, %316, %cst_223 {dimension_numbers = #tpu.dot_dimension_numbers<[1], [0], [0], [1], [0, 0, 1, 1], [], []>} : vector<4x256xf32>, vector<256x48xf32>, vector<4x48xf32> -> vector<4x48xf32>
    %318 = vector.extract_strided_slice %125 {offsets = [0, 1024], sizes = [4, 256], strides = [1, 1]} : vector<4x2048xf32> to vector<4x256xf32>
    %c2_224 = arith.constant 2 : index
    %c0_225 = arith.constant 0 : index
    %c0_226 = arith.constant 0 : index
    %319 = vector.load %arg10[%c2_224, %c0_225, %c0_226] : memref<4x256x48xf32, #tpu.memory_space<vmem>>, vector<1x256x48xf32>
    %320 = vector.shape_cast %319 : vector<1x256x48xf32> to vector<256x48xf32>
    %cst_227 = arith.constant dense<0.000000e+00> : vector<4x48xf32>
    %321 = tpu.matmul %318, %320, %cst_227 {dimension_numbers = #tpu.dot_dimension_numbers<[1], [0], [0], [1], [0, 0, 1, 1], [], []>} : vector<4x256xf32>, vector<256x48xf32>, vector<4x48xf32> -> vector<4x48xf32>
    %322 = arith.addf %317, %321 : vector<4x48xf32>
    %323 = vector.broadcast %126 : vector<1x48xf32> to vector<4x48xf32>
    %324 = arith.addf %322, %323 : vector<4x48xf32>
    %325 = math.tanh %324 : vector<4x48xf32>
    %326 = vector.extract_strided_slice %325 {offsets = [0, 0], sizes = [2, 16], strides = [1, 1]} : vector<4x48xf32> to vector<2x16xf32>
    %c0_228 = arith.constant 0 : index
    %c128 = arith.constant 128 : index
    %327 = vector.load %arg12[%c0_228, %c128] : memref<2x768xf32, #tpu.memory_space<vmem>>, vector<2x16xf32>
    tpu.vector_store %arg12[%c0_228, %c128], %326 {strides = array<i32>} : memref<2x768xf32, #tpu.memory_space<vmem>>, vector<2x16xf32>,
    %328 = vector.extract_strided_slice %325 {offsets = [2, 0], sizes = [2, 16], strides = [1, 1]} : vector<4x48xf32> to vector<2x16xf32>
    %c0_229 = arith.constant 0 : index
    %c128_230 = arith.constant 128 : index
    %329 = vector.load %arg13[%c0_229, %c128_230] : memref<2x768xf32, #tpu.memory_space<vmem>>, vector<2x16xf32>
    tpu.vector_store %arg13[%c0_229, %c128_230], %328 {strides = array<i32>} : memref<2x768xf32, #tpu.memory_space<vmem>>, vector<2x16xf32>,
    %330 = vector.extract_strided_slice %325 {offsets = [0, 16], sizes = [2, 16], strides = [1, 1]} : vector<4x48xf32> to vector<2x16xf32>
    %c0_231 = arith.constant 0 : index
    %c384 = arith.constant 384 : index
    %331 = vector.load %arg12[%c0_231, %c384] : memref<2x768xf32, #tpu.memory_space<vmem>>, vector<2x16xf32>
    tpu.vector_store %arg12[%c0_231, %c384], %330 {strides = array<i32>} : memref<2x768xf32, #tpu.memory_space<vmem>>, vector<2x16xf32>,
    %332 = vector.extract_strided_slice %325 {offsets = [2, 16], sizes = [2, 16], strides = [1, 1]} : vector<4x48xf32> to vector<2x16xf32>
    %c0_232 = arith.constant 0 : index
    %c384_233 = arith.constant 384 : index
    %333 = vector.load %arg13[%c0_232, %c384_233] : memref<2x768xf32, #tpu.memory_space<vmem>>, vector<2x16xf32>
    tpu.vector_store %arg13[%c0_232, %c384_233], %332 {strides = array<i32>} : memref<2x768xf32, #tpu.memory_space<vmem>>, vector<2x16xf32>,
    %334 = vector.extract_strided_slice %325 {offsets = [0, 32], sizes = [2, 16], strides = [1, 1]} : vector<4x48xf32> to vector<2x16xf32>
    %c0_234 = arith.constant 0 : index
    %c640 = arith.constant 640 : index
    %335 = vector.load %arg12[%c0_234, %c640] : memref<2x768xf32, #tpu.memory_space<vmem>>, vector<2x16xf32>
    tpu.vector_store %arg12[%c0_234, %c640], %334 {strides = array<i32>} : memref<2x768xf32, #tpu.memory_space<vmem>>, vector<2x16xf32>,
    %336 = vector.extract_strided_slice %325 {offsets = [2, 32], sizes = [2, 16], strides = [1, 1]} : vector<4x48xf32> to vector<2x16xf32>
    %c0_235 = arith.constant 0 : index
    %c640_236 = arith.constant 640 : index
    %337 = vector.load %arg13[%c0_235, %c640_236] : memref<2x768xf32, #tpu.memory_space<vmem>>, vector<2x16xf32>
    tpu.vector_store %arg13[%c0_235, %c640_236], %336 {strides = array<i32>} : memref<2x768xf32, #tpu.memory_space<vmem>>, vector<2x16xf32>,
    %338 = vector.extract_strided_slice %125 {offsets = [0, 1024], sizes = [4, 256], strides = [1, 1]} : vector<4x2048xf32> to vector<4x256xf32>
    %c1_237 = arith.constant 1 : index
    %c0_238 = arith.constant 0 : index
    %c0_239 = arith.constant 0 : index
    %339 = vector.load %arg10[%c1_237, %c0_238, %c0_239] : memref<4x256x48xf32, #tpu.memory_space<vmem>>, vector<1x256x48xf32>
    %340 = vector.shape_cast %339 : vector<1x256x48xf32> to vector<256x48xf32>
    %cst_240 = arith.constant dense<0.000000e+00> : vector<4x48xf32>
    %341 = tpu.matmul %338, %340, %cst_240 {dimension_numbers = #tpu.dot_dimension_numbers<[1], [0], [0], [1], [0, 0, 1, 1], [], []>} : vector<4x256xf32>, vector<256x48xf32>, vector<4x48xf32> -> vector<4x48xf32>
    %342 = vector.extract_strided_slice %125 {offsets = [0, 1280], sizes = [4, 256], strides = [1, 1]} : vector<4x2048xf32> to vector<4x256xf32>
    %c3_241 = arith.constant 3 : index
    %c0_242 = arith.constant 0 : index
    %c0_243 = arith.constant 0 : index
    %343 = vector.load %arg10[%c3_241, %c0_242, %c0_243] : memref<4x256x48xf32, #tpu.memory_space<vmem>>, vector<1x256x48xf32>
    %344 = vector.shape_cast %343 : vector<1x256x48xf32> to vector<256x48xf32>
    %cst_244 = arith.constant dense<0.000000e+00> : vector<4x48xf32>
    %345 = tpu.matmul %342, %344, %cst_244 {dimension_numbers = #tpu.dot_dimension_numbers<[1], [0], [0], [1], [0, 0, 1, 1], [], []>} : vector<4x256xf32>, vector<256x48xf32>, vector<4x48xf32> -> vector<4x48xf32>
    %346 = arith.addf %341, %345 : vector<4x48xf32>
    %347 = vector.broadcast %126 : vector<1x48xf32> to vector<4x48xf32>
    %348 = arith.addf %346, %347 : vector<4x48xf32>
    %349 = math.tanh %348 : vector<4x48xf32>
    %350 = vector.extract_strided_slice %349 {offsets = [0, 0], sizes = [2, 16], strides = [1, 1]} : vector<4x48xf32> to vector<2x16xf32>
    %c0_245 = arith.constant 0 : index
    %c144 = arith.constant 144 : index
    %351 = vector.load %arg12[%c0_245, %c144] : memref<2x768xf32, #tpu.memory_space<vmem>>, vector<2x16xf32>
    tpu.vector_store %arg12[%c0_245, %c144], %350 {strides = array<i32>} : memref<2x768xf32, #tpu.memory_space<vmem>>, vector<2x16xf32>,
    %352 = vector.extract_strided_slice %349 {offsets = [2, 0], sizes = [2, 16], strides = [1, 1]} : vector<4x48xf32> to vector<2x16xf32>
    %c0_246 = arith.constant 0 : index
    %c144_247 = arith.constant 144 : index
    %353 = vector.load %arg13[%c0_246, %c144_247] : memref<2x768xf32, #tpu.memory_space<vmem>>, vector<2x16xf32>
    tpu.vector_store %arg13[%c0_246, %c144_247], %352 {strides = array<i32>} : memref<2x768xf32, #tpu.memory_space<vmem>>, vector<2x16xf32>,
    %354 = vector.extract_strided_slice %349 {offsets = [0, 16], sizes = [2, 16], strides = [1, 1]} : vector<4x48xf32> to vector<2x16xf32>
    %c0_248 = arith.constant 0 : index
    %c400 = arith.constant 400 : index
    %355 = vector.load %arg12[%c0_248, %c400] : memref<2x768xf32, #tpu.memory_space<vmem>>, vector<2x16xf32>
    tpu.vector_store %arg12[%c0_248, %c400], %354 {strides = array<i32>} : memref<2x768xf32, #tpu.memory_space<vmem>>, vector<2x16xf32>,
    %356 = vector.extract_strided_slice %349 {offsets = [2, 16], sizes = [2, 16], strides = [1, 1]} : vector<4x48xf32> to vector<2x16xf32>
    %c0_249 = arith.constant 0 : index
    %c400_250 = arith.constant 400 : index
    %357 = vector.load %arg13[%c0_249, %c400_250] : memref<2x768xf32, #tpu.memory_space<vmem>>, vector<2x16xf32>
    tpu.vector_store %arg13[%c0_249, %c400_250], %356 {strides = array<i32>} : memref<2x768xf32, #tpu.memory_space<vmem>>, vector<2x16xf32>,
    %358 = vector.extract_strided_slice %349 {offsets = [0, 32], sizes = [2, 16], strides = [1, 1]} : vector<4x48xf32> to vector<2x16xf32>
    %c0_251 = arith.constant 0 : index
    %c656 = arith.constant 656 : index
    %359 = vector.load %arg12[%c0_251, %c656] : memref<2x768xf32, #tpu.memory_space<vmem>>, vector<2x16xf32>
    tpu.vector_store %arg12[%c0_251, %c656], %358 {strides = array<i32>} : memref<2x768xf32, #tpu.memory_space<vmem>>, vector<2x16xf32>,
    %360 = vector.extract_strided_slice %349 {offsets = [2, 32], sizes = [2, 16], strides = [1, 1]} : vector<4x48xf32> to vector<2x16xf32>
    %c0_252 = arith.constant 0 : index
    %c656_253 = arith.constant 656 : index
    %361 = vector.load %arg13[%c0_252, %c656_253] : memref<2x768xf32, #tpu.memory_space<vmem>>, vector<2x16xf32>
    tpu.vector_store %arg13[%c0_252, %c656_253], %360 {strides = array<i32>} : memref<2x768xf32, #tpu.memory_space<vmem>>, vector<2x16xf32>,
    %362 = vector.extract_strided_slice %125 {offsets = [0, 1024], sizes = [4, 256], strides = [1, 1]} : vector<4x2048xf32> to vector<4x256xf32>
    %c0_254 = arith.constant 0 : index
    %c0_255 = arith.constant 0 : index
    %c0_256 = arith.constant 0 : index
    %363 = vector.load %arg10[%c0_254, %c0_255, %c0_256] : memref<4x256x48xf32, #tpu.memory_space<vmem>>, vector<1x256x48xf32>
    %364 = vector.shape_cast %363 : vector<1x256x48xf32> to vector<256x48xf32>
    %cst_257 = arith.constant dense<0.000000e+00> : vector<4x48xf32>
    %365 = tpu.matmul %362, %364, %cst_257 {dimension_numbers = #tpu.dot_dimension_numbers<[1], [0], [0], [1], [0, 0, 1, 1], [], []>} : vector<4x256xf32>, vector<256x48xf32>, vector<4x48xf32> -> vector<4x48xf32>
    %366 = vector.extract_strided_slice %125 {offsets = [0, 1280], sizes = [4, 256], strides = [1, 1]} : vector<4x2048xf32> to vector<4x256xf32>
    %c2_258 = arith.constant 2 : index
    %c0_259 = arith.constant 0 : index
    %c0_260 = arith.constant 0 : index
    %367 = vector.load %arg10[%c2_258, %c0_259, %c0_260] : memref<4x256x48xf32, #tpu.memory_space<vmem>>, vector<1x256x48xf32>
    %368 = vector.shape_cast %367 : vector<1x256x48xf32> to vector<256x48xf32>
    %cst_261 = arith.constant dense<0.000000e+00> : vector<4x48xf32>
    %369 = tpu.matmul %366, %368, %cst_261 {dimension_numbers = #tpu.dot_dimension_numbers<[1], [0], [0], [1], [0, 0, 1, 1], [], []>} : vector<4x256xf32>, vector<256x48xf32>, vector<4x48xf32> -> vector<4x48xf32>
    %370 = arith.addf %365, %369 : vector<4x48xf32>
    %371 = vector.broadcast %126 : vector<1x48xf32> to vector<4x48xf32>
    %372 = arith.addf %370, %371 : vector<4x48xf32>
    %373 = math.tanh %372 : vector<4x48xf32>
    %374 = vector.extract_strided_slice %373 {offsets = [0, 0], sizes = [2, 16], strides = [1, 1]} : vector<4x48xf32> to vector<2x16xf32>
    %c0_262 = arith.constant 0 : index
    %c160 = arith.constant 160 : index
    %375 = vector.load %arg12[%c0_262, %c160] : memref<2x768xf32, #tpu.memory_space<vmem>>, vector<2x16xf32>
    tpu.vector_store %arg12[%c0_262, %c160], %374 {strides = array<i32>} : memref<2x768xf32, #tpu.memory_space<vmem>>, vector<2x16xf32>,
    %376 = vector.extract_strided_slice %373 {offsets = [2, 0], sizes = [2, 16], strides = [1, 1]} : vector<4x48xf32> to vector<2x16xf32>
    %c0_263 = arith.constant 0 : index
    %c160_264 = arith.constant 160 : index
    %377 = vector.load %arg13[%c0_263, %c160_264] : memref<2x768xf32, #tpu.memory_space<vmem>>, vector<2x16xf32>
    tpu.vector_store %arg13[%c0_263, %c160_264], %376 {strides = array<i32>} : memref<2x768xf32, #tpu.memory_space<vmem>>, vector<2x16xf32>,
    %378 = vector.extract_strided_slice %373 {offsets = [0, 16], sizes = [2, 16], strides = [1, 1]} : vector<4x48xf32> to vector<2x16xf32>
    %c0_265 = arith.constant 0 : index
    %c416 = arith.constant 416 : index
    %379 = vector.load %arg12[%c0_265, %c416] : memref<2x768xf32, #tpu.memory_space<vmem>>, vector<2x16xf32>
    tpu.vector_store %arg12[%c0_265, %c416], %378 {strides = array<i32>} : memref<2x768xf32, #tpu.memory_space<vmem>>, vector<2x16xf32>,
    %380 = vector.extract_strided_slice %373 {offsets = [2, 16], sizes = [2, 16], strides = [1, 1]} : vector<4x48xf32> to vector<2x16xf32>
    %c0_266 = arith.constant 0 : index
    %c416_267 = arith.constant 416 : index
    %381 = vector.load %arg13[%c0_266, %c416_267] : memref<2x768xf32, #tpu.memory_space<vmem>>, vector<2x16xf32>
    tpu.vector_store %arg13[%c0_266, %c416_267], %380 {strides = array<i32>} : memref<2x768xf32, #tpu.memory_space<vmem>>, vector<2x16xf32>,
    %382 = vector.extract_strided_slice %373 {offsets = [0, 32], sizes = [2, 16], strides = [1, 1]} : vector<4x48xf32> to vector<2x16xf32>
    %c0_268 = arith.constant 0 : index
    %c672 = arith.constant 672 : index
    %383 = vector.load %arg12[%c0_268, %c672] : memref<2x768xf32, #tpu.memory_space<vmem>>, vector<2x16xf32>
    tpu.vector_store %arg12[%c0_268, %c672], %382 {strides = array<i32>} : memref<2x768xf32, #tpu.memory_space<vmem>>, vector<2x16xf32>,
    %384 = vector.extract_strided_slice %373 {offsets = [2, 32], sizes = [2, 16], strides = [1, 1]} : vector<4x48xf32> to vector<2x16xf32>
    %c0_269 = arith.constant 0 : index
    %c672_270 = arith.constant 672 : index
    %385 = vector.load %arg13[%c0_269, %c672_270] : memref<2x768xf32, #tpu.memory_space<vmem>>, vector<2x16xf32>
    tpu.vector_store %arg13[%c0_269, %c672_270], %384 {strides = array<i32>} : memref<2x768xf32, #tpu.memory_space<vmem>>, vector<2x16xf32>,
    %386 = vector.extract_strided_slice %125 {offsets = [0, 1280], sizes = [4, 256], strides = [1, 1]} : vector<4x2048xf32> to vector<4x256xf32>
    %c1_271 = arith.constant 1 : index
    %c0_272 = arith.constant 0 : index
    %c0_273 = arith.constant 0 : index
    %387 = vector.load %arg10[%c1_271, %c0_272, %c0_273] : memref<4x256x48xf32, #tpu.memory_space<vmem>>, vector<1x256x48xf32>
    %388 = vector.shape_cast %387 : vector<1x256x48xf32> to vector<256x48xf32>
    %cst_274 = arith.constant dense<0.000000e+00> : vector<4x48xf32>
    %389 = tpu.matmul %386, %388, %cst_274 {dimension_numbers = #tpu.dot_dimension_numbers<[1], [0], [0], [1], [0, 0, 1, 1], [], []>} : vector<4x256xf32>, vector<256x48xf32>, vector<4x48xf32> -> vector<4x48xf32>
    %390 = vector.extract_strided_slice %125 {offsets = [0, 1536], sizes = [4, 256], strides = [1, 1]} : vector<4x2048xf32> to vector<4x256xf32>
    %c3_275 = arith.constant 3 : index
    %c0_276 = arith.constant 0 : index
    %c0_277 = arith.constant 0 : index
    %391 = vector.load %arg10[%c3_275, %c0_276, %c0_277] : memref<4x256x48xf32, #tpu.memory_space<vmem>>, vector<1x256x48xf32>
    %392 = vector.shape_cast %391 : vector<1x256x48xf32> to vector<256x48xf32>
    %cst_278 = arith.constant dense<0.000000e+00> : vector<4x48xf32>
    %393 = tpu.matmul %390, %392, %cst_278 {dimension_numbers = #tpu.dot_dimension_numbers<[1], [0], [0], [1], [0, 0, 1, 1], [], []>} : vector<4x256xf32>, vector<256x48xf32>, vector<4x48xf32> -> vector<4x48xf32>
    %394 = arith.addf %389, %393 : vector<4x48xf32>
    %395 = vector.broadcast %126 : vector<1x48xf32> to vector<4x48xf32>
    %396 = arith.addf %394, %395 : vector<4x48xf32>
    %397 = math.tanh %396 : vector<4x48xf32>
    %398 = vector.extract_strided_slice %397 {offsets = [0, 0], sizes = [2, 16], strides = [1, 1]} : vector<4x48xf32> to vector<2x16xf32>
    %c0_279 = arith.constant 0 : index
    %c176 = arith.constant 176 : index
    %399 = vector.load %arg12[%c0_279, %c176] : memref<2x768xf32, #tpu.memory_space<vmem>>, vector<2x16xf32>
    tpu.vector_store %arg12[%c0_279, %c176], %398 {strides = array<i32>} : memref<2x768xf32, #tpu.memory_space<vmem>>, vector<2x16xf32>,
    %400 = vector.extract_strided_slice %397 {offsets = [2, 0], sizes = [2, 16], strides = [1, 1]} : vector<4x48xf32> to vector<2x16xf32>
    %c0_280 = arith.constant 0 : index
    %c176_281 = arith.constant 176 : index
    %401 = vector.load %arg13[%c0_280, %c176_281] : memref<2x768xf32, #tpu.memory_space<vmem>>, vector<2x16xf32>
    tpu.vector_store %arg13[%c0_280, %c176_281], %400 {strides = array<i32>} : memref<2x768xf32, #tpu.memory_space<vmem>>, vector<2x16xf32>,
    %402 = vector.extract_strided_slice %397 {offsets = [0, 16], sizes = [2, 16], strides = [1, 1]} : vector<4x48xf32> to vector<2x16xf32>
    %c0_282 = arith.constant 0 : index
    %c432 = arith.constant 432 : index
    %403 = vector.load %arg12[%c0_282, %c432] : memref<2x768xf32, #tpu.memory_space<vmem>>, vector<2x16xf32>
    tpu.vector_store %arg12[%c0_282, %c432], %402 {strides = array<i32>} : memref<2x768xf32, #tpu.memory_space<vmem>>, vector<2x16xf32>,
    %404 = vector.extract_strided_slice %397 {offsets = [2, 16], sizes = [2, 16], strides = [1, 1]} : vector<4x48xf32> to vector<2x16xf32>
    %c0_283 = arith.constant 0 : index
    %c432_284 = arith.constant 432 : index
    %405 = vector.load %arg13[%c0_283, %c432_284] : memref<2x768xf32, #tpu.memory_space<vmem>>, vector<2x16xf32>
    tpu.vector_store %arg13[%c0_283, %c432_284], %404 {strides = array<i32>} : memref<2x768xf32, #tpu.memory_space<vmem>>, vector<2x16xf32>,
    %406 = vector.extract_strided_slice %397 {offsets = [0, 32], sizes = [2, 16], strides = [1, 1]} : vector<4x48xf32> to vector<2x16xf32>
    %c0_285 = arith.constant 0 : index
    %c688 = arith.constant 688 : index
    %407 = vector.load %arg12[%c0_285, %c688] : memref<2x768xf32, #tpu.memory_space<vmem>>, vector<2x16xf32>
    tpu.vector_store %arg12[%c0_285, %c688], %406 {strides = array<i32>} : memref<2x768xf32, #tpu.memory_space<vmem>>, vector<2x16xf32>,
    %408 = vector.extract_strided_slice %397 {offsets = [2, 32], sizes = [2, 16], strides = [1, 1]} : vector<4x48xf32> to vector<2x16xf32>
    %c0_286 = arith.constant 0 : index
    %c688_287 = arith.constant 688 : index
    %409 = vector.load %arg13[%c0_286, %c688_287] : memref<2x768xf32, #tpu.memory_space<vmem>>, vector<2x16xf32>
    tpu.vector_store %arg13[%c0_286, %c688_287], %408 {strides = array<i32>} : memref<2x768xf32, #tpu.memory_space<vmem>>, vector<2x16xf32>,
    %410 = vector.extract_strided_slice %125 {offsets = [0, 1280], sizes = [4, 256], strides = [1, 1]} : vector<4x2048xf32> to vector<4x256xf32>
    %c0_288 = arith.constant 0 : index
    %c0_289 = arith.constant 0 : index
    %c0_290 = arith.constant 0 : index
    %411 = vector.load %arg10[%c0_288, %c0_289, %c0_290] : memref<4x256x48xf32, #tpu.memory_space<vmem>>, vector<1x256x48xf32>
    %412 = vector.shape_cast %411 : vector<1x256x48xf32> to vector<256x48xf32>
    %cst_291 = arith.constant dense<0.000000e+00> : vector<4x48xf32>
    %413 = tpu.matmul %410, %412, %cst_291 {dimension_numbers = #tpu.dot_dimension_numbers<[1], [0], [0], [1], [0, 0, 1, 1], [], []>} : vector<4x256xf32>, vector<256x48xf32>, vector<4x48xf32> -> vector<4x48xf32>
    %414 = vector.extract_strided_slice %125 {offsets = [0, 1536], sizes = [4, 256], strides = [1, 1]} : vector<4x2048xf32> to vector<4x256xf32>
    %c2_292 = arith.constant 2 : index
    %c0_293 = arith.constant 0 : index
    %c0_294 = arith.constant 0 : index
    %415 = vector.load %arg10[%c2_292, %c0_293, %c0_294] : memref<4x256x48xf32, #tpu.memory_space<vmem>>, vector<1x256x48xf32>
    %416 = vector.shape_cast %415 : vector<1x256x48xf32> to vector<256x48xf32>
    %cst_295 = arith.constant dense<0.000000e+00> : vector<4x48xf32>
    %417 = tpu.matmul %414, %416, %cst_295 {dimension_numbers = #tpu.dot_dimension_numbers<[1], [0], [0], [1], [0, 0, 1, 1], [], []>} : vector<4x256xf32>, vector<256x48xf32>, vector<4x48xf32> -> vector<4x48xf32>
    %418 = arith.addf %413, %417 : vector<4x48xf32>
    %419 = vector.broadcast %126 : vector<1x48xf32> to vector<4x48xf32>
    %420 = arith.addf %418, %419 : vector<4x48xf32>
    %421 = math.tanh %420 : vector<4x48xf32>
    %422 = vector.extract_strided_slice %421 {offsets = [0, 0], sizes = [2, 16], strides = [1, 1]} : vector<4x48xf32> to vector<2x16xf32>
    %c0_296 = arith.constant 0 : index
    %c192 = arith.constant 192 : index
    %423 = vector.load %arg12[%c0_296, %c192] : memref<2x768xf32, #tpu.memory_space<vmem>>, vector<2x16xf32>
    tpu.vector_store %arg12[%c0_296, %c192], %422 {strides = array<i32>} : memref<2x768xf32, #tpu.memory_space<vmem>>, vector<2x16xf32>,
    %424 = vector.extract_strided_slice %421 {offsets = [2, 0], sizes = [2, 16], strides = [1, 1]} : vector<4x48xf32> to vector<2x16xf32>
    %c0_297 = arith.constant 0 : index
    %c192_298 = arith.constant 192 : index
    %425 = vector.load %arg13[%c0_297, %c192_298] : memref<2x768xf32, #tpu.memory_space<vmem>>, vector<2x16xf32>
    tpu.vector_store %arg13[%c0_297, %c192_298], %424 {strides = array<i32>} : memref<2x768xf32, #tpu.memory_space<vmem>>, vector<2x16xf32>,
    %426 = vector.extract_strided_slice %421 {offsets = [0, 16], sizes = [2, 16], strides = [1, 1]} : vector<4x48xf32> to vector<2x16xf32>
    %c0_299 = arith.constant 0 : index
    %c448 = arith.constant 448 : index
    %427 = vector.load %arg12[%c0_299, %c448] : memref<2x768xf32, #tpu.memory_space<vmem>>, vector<2x16xf32>
    tpu.vector_store %arg12[%c0_299, %c448], %426 {strides = array<i32>} : memref<2x768xf32, #tpu.memory_space<vmem>>, vector<2x16xf32>,
    %428 = vector.extract_strided_slice %421 {offsets = [2, 16], sizes = [2, 16], strides = [1, 1]} : vector<4x48xf32> to vector<2x16xf32>
    %c0_300 = arith.constant 0 : index
    %c448_301 = arith.constant 448 : index
    %429 = vector.load %arg13[%c0_300, %c448_301] : memref<2x768xf32, #tpu.memory_space<vmem>>, vector<2x16xf32>
    tpu.vector_store %arg13[%c0_300, %c448_301], %428 {strides = array<i32>} : memref<2x768xf32, #tpu.memory_space<vmem>>, vector<2x16xf32>,
    %430 = vector.extract_strided_slice %421 {offsets = [0, 32], sizes = [2, 16], strides = [1, 1]} : vector<4x48xf32> to vector<2x16xf32>
    %c0_302 = arith.constant 0 : index
    %c704 = arith.constant 704 : index
    %431 = vector.load %arg12[%c0_302, %c704] : memref<2x768xf32, #tpu.memory_space<vmem>>, vector<2x16xf32>
    tpu.vector_store %arg12[%c0_302, %c704], %430 {strides = array<i32>} : memref<2x768xf32, #tpu.memory_space<vmem>>, vector<2x16xf32>,
    %432 = vector.extract_strided_slice %421 {offsets = [2, 32], sizes = [2, 16], strides = [1, 1]} : vector<4x48xf32> to vector<2x16xf32>
    %c0_303 = arith.constant 0 : index
    %c704_304 = arith.constant 704 : index
    %433 = vector.load %arg13[%c0_303, %c704_304] : memref<2x768xf32, #tpu.memory_space<vmem>>, vector<2x16xf32>
    tpu.vector_store %arg13[%c0_303, %c704_304], %432 {strides = array<i32>} : memref<2x768xf32, #tpu.memory_space<vmem>>, vector<2x16xf32>,
    %434 = vector.extract_strided_slice %125 {offsets = [0, 1536], sizes = [4, 256], strides = [1, 1]} : vector<4x2048xf32> to vector<4x256xf32>
    %c1_305 = arith.constant 1 : index
    %c0_306 = arith.constant 0 : index
    %c0_307 = arith.constant 0 : index
    %435 = vector.load %arg10[%c1_305, %c0_306, %c0_307] : memref<4x256x48xf32, #tpu.memory_space<vmem>>, vector<1x256x48xf32>
    %436 = vector.shape_cast %435 : vector<1x256x48xf32> to vector<256x48xf32>
    %cst_308 = arith.constant dense<0.000000e+00> : vector<4x48xf32>
    %437 = tpu.matmul %434, %436, %cst_308 {dimension_numbers = #tpu.dot_dimension_numbers<[1], [0], [0], [1], [0, 0, 1, 1], [], []>} : vector<4x256xf32>, vector<256x48xf32>, vector<4x48xf32> -> vector<4x48xf32>
    %438 = vector.extract_strided_slice %125 {offsets = [0, 1792], sizes = [4, 256], strides = [1, 1]} : vector<4x2048xf32> to vector<4x256xf32>
    %c3_309 = arith.constant 3 : index
    %c0_310 = arith.constant 0 : index
    %c0_311 = arith.constant 0 : index
    %439 = vector.load %arg10[%c3_309, %c0_310, %c0_311] : memref<4x256x48xf32, #tpu.memory_space<vmem>>, vector<1x256x48xf32>
    %440 = vector.shape_cast %439 : vector<1x256x48xf32> to vector<256x48xf32>
    %cst_312 = arith.constant dense<0.000000e+00> : vector<4x48xf32>
    %441 = tpu.matmul %438, %440, %cst_312 {dimension_numbers = #tpu.dot_dimension_numbers<[1], [0], [0], [1], [0, 0, 1, 1], [], []>} : vector<4x256xf32>, vector<256x48xf32>, vector<4x48xf32> -> vector<4x48xf32>
    %442 = arith.addf %437, %441 : vector<4x48xf32>
    %443 = vector.broadcast %126 : vector<1x48xf32> to vector<4x48xf32>
    %444 = arith.addf %442, %443 : vector<4x48xf32>
    %445 = math.tanh %444 : vector<4x48xf32>
    %446 = vector.extract_strided_slice %445 {offsets = [0, 0], sizes = [2, 16], strides = [1, 1]} : vector<4x48xf32> to vector<2x16xf32>
    %c0_313 = arith.constant 0 : index
    %c208 = arith.constant 208 : index
    %447 = vector.load %arg12[%c0_313, %c208] : memref<2x768xf32, #tpu.memory_space<vmem>>, vector<2x16xf32>
    tpu.vector_store %arg12[%c0_313, %c208], %446 {strides = array<i32>} : memref<2x768xf32, #tpu.memory_space<vmem>>, vector<2x16xf32>,
    %448 = vector.extract_strided_slice %445 {offsets = [2, 0], sizes = [2, 16], strides = [1, 1]} : vector<4x48xf32> to vector<2x16xf32>
    %c0_314 = arith.constant 0 : index
    %c208_315 = arith.constant 208 : index
    %449 = vector.load %arg13[%c0_314, %c208_315] : memref<2x768xf32, #tpu.memory_space<vmem>>, vector<2x16xf32>
    tpu.vector_store %arg13[%c0_314, %c208_315], %448 {strides = array<i32>} : memref<2x768xf32, #tpu.memory_space<vmem>>, vector<2x16xf32>,
    %450 = vector.extract_strided_slice %445 {offsets = [0, 16], sizes = [2, 16], strides = [1, 1]} : vector<4x48xf32> to vector<2x16xf32>
    %c0_316 = arith.constant 0 : index
    %c464 = arith.constant 464 : index
    %451 = vector.load %arg12[%c0_316, %c464] : memref<2x768xf32, #tpu.memory_space<vmem>>, vector<2x16xf32>
    tpu.vector_store %arg12[%c0_316, %c464], %450 {strides = array<i32>} : memref<2x768xf32, #tpu.memory_space<vmem>>, vector<2x16xf32>,
    %452 = vector.extract_strided_slice %445 {offsets = [2, 16], sizes = [2, 16], strides = [1, 1]} : vector<4x48xf32> to vector<2x16xf32>
    %c0_317 = arith.constant 0 : index
    %c464_318 = arith.constant 464 : index
    %453 = vector.load %arg13[%c0_317, %c464_318] : memref<2x768xf32, #tpu.memory_space<vmem>>, vector<2x16xf32>
    tpu.vector_store %arg13[%c0_317, %c464_318], %452 {strides = array<i32>} : memref<2x768xf32, #tpu.memory_space<vmem>>, vector<2x16xf32>,
    %454 = vector.extract_strided_slice %445 {offsets = [0, 32], sizes = [2, 16], strides = [1, 1]} : vector<4x48xf32> to vector<2x16xf32>
    %c0_319 = arith.constant 0 : index
    %c720 = arith.constant 720 : index
    %455 = vector.load %arg12[%c0_319, %c720] : memref<2x768xf32, #tpu.memory_space<vmem>>, vector<2x16xf32>
    tpu.vector_store %arg12[%c0_319, %c720], %454 {strides = array<i32>} : memref<2x768xf32, #tpu.memory_space<vmem>>, vector<2x16xf32>,
    %456 = vector.extract_strided_slice %445 {offsets = [2, 32], sizes = [2, 16], strides = [1, 1]} : vector<4x48xf32> to vector<2x16xf32>
    %c0_320 = arith.constant 0 : index
    %c720_321 = arith.constant 720 : index
    %457 = vector.load %arg13[%c0_320, %c720_321] : memref<2x768xf32, #tpu.memory_space<vmem>>, vector<2x16xf32>
    tpu.vector_store %arg13[%c0_320, %c720_321], %456 {strides = array<i32>} : memref<2x768xf32, #tpu.memory_space<vmem>>, vector<2x16xf32>,
    %458 = vector.extract_strided_slice %125 {offsets = [0, 1536], sizes = [4, 256], strides = [1, 1]} : vector<4x2048xf32> to vector<4x256xf32>
    %c0_322 = arith.constant 0 : index
    %c0_323 = arith.constant 0 : index
    %c0_324 = arith.constant 0 : index
    %459 = vector.load %arg10[%c0_322, %c0_323, %c0_324] : memref<4x256x48xf32, #tpu.memory_space<vmem>>, vector<1x256x48xf32>
    %460 = vector.shape_cast %459 : vector<1x256x48xf32> to vector<256x48xf32>
    %cst_325 = arith.constant dense<0.000000e+00> : vector<4x48xf32>
    %461 = tpu.matmul %458, %460, %cst_325 {dimension_numbers = #tpu.dot_dimension_numbers<[1], [0], [0], [1], [0, 0, 1, 1], [], []>} : vector<4x256xf32>, vector<256x48xf32>, vector<4x48xf32> -> vector<4x48xf32>
    %462 = vector.extract_strided_slice %125 {offsets = [0, 1792], sizes = [4, 256], strides = [1, 1]} : vector<4x2048xf32> to vector<4x256xf32>
    %c2_326 = arith.constant 2 : index
    %c0_327 = arith.constant 0 : index
    %c0_328 = arith.constant 0 : index
    %463 = vector.load %arg10[%c2_326, %c0_327, %c0_328] : memref<4x256x48xf32, #tpu.memory_space<vmem>>, vector<1x256x48xf32>
    %464 = vector.shape_cast %463 : vector<1x256x48xf32> to vector<256x48xf32>
    %cst_329 = arith.constant dense<0.000000e+00> : vector<4x48xf32>
    %465 = tpu.matmul %462, %464, %cst_329 {dimension_numbers = #tpu.dot_dimension_numbers<[1], [0], [0], [1], [0, 0, 1, 1], [], []>} : vector<4x256xf32>, vector<256x48xf32>, vector<4x48xf32> -> vector<4x48xf32>
    %466 = arith.addf %461, %465 : vector<4x48xf32>
    %467 = vector.broadcast %126 : vector<1x48xf32> to vector<4x48xf32>
    %468 = arith.addf %466, %467 : vector<4x48xf32>
    %469 = math.tanh %468 : vector<4x48xf32>
    %470 = vector.extract_strided_slice %469 {offsets = [0, 0], sizes = [2, 16], strides = [1, 1]} : vector<4x48xf32> to vector<2x16xf32>
    %c0_330 = arith.constant 0 : index
    %c224 = arith.constant 224 : index
    %471 = vector.load %arg12[%c0_330, %c224] : memref<2x768xf32, #tpu.memory_space<vmem>>, vector<2x16xf32>
    tpu.vector_store %arg12[%c0_330, %c224], %470 {strides = array<i32>} : memref<2x768xf32, #tpu.memory_space<vmem>>, vector<2x16xf32>,
    %472 = vector.extract_strided_slice %469 {offsets = [2, 0], sizes = [2, 16], strides = [1, 1]} : vector<4x48xf32> to vector<2x16xf32>
    %c0_331 = arith.constant 0 : index
    %c224_332 = arith.constant 224 : index
    %473 = vector.load %arg13[%c0_331, %c224_332] : memref<2x768xf32, #tpu.memory_space<vmem>>, vector<2x16xf32>
    tpu.vector_store %arg13[%c0_331, %c224_332], %472 {strides = array<i32>} : memref<2x768xf32, #tpu.memory_space<vmem>>, vector<2x16xf32>,
    %474 = vector.extract_strided_slice %469 {offsets = [0, 16], sizes = [2, 16], strides = [1, 1]} : vector<4x48xf32> to vector<2x16xf32>
    %c0_333 = arith.constant 0 : index
    %c480 = arith.constant 480 : index
    %475 = vector.load %arg12[%c0_333, %c480] : memref<2x768xf32, #tpu.memory_space<vmem>>, vector<2x16xf32>
    tpu.vector_store %arg12[%c0_333, %c480], %474 {strides = array<i32>} : memref<2x768xf32, #tpu.memory_space<vmem>>, vector<2x16xf32>,
    %476 = vector.extract_strided_slice %469 {offsets = [2, 16], sizes = [2, 16], strides = [1, 1]} : vector<4x48xf32> to vector<2x16xf32>
    %c0_334 = arith.constant 0 : index
    %c480_335 = arith.constant 480 : index
    %477 = vector.load %arg13[%c0_334, %c480_335] : memref<2x768xf32, #tpu.memory_space<vmem>>, vector<2x16xf32>
    tpu.vector_store %arg13[%c0_334, %c480_335], %476 {strides = array<i32>} : memref<2x768xf32, #tpu.memory_space<vmem>>, vector<2x16xf32>,
    %478 = vector.extract_strided_slice %469 {offsets = [0, 32], sizes = [2, 16], strides = [1, 1]} : vector<4x48xf32> to vector<2x16xf32>
    %c0_336 = arith.constant 0 : index
    %c736 = arith.constant 736 : index
    %479 = vector.load %arg12[%c0_336, %c736] : memref<2x768xf32, #tpu.memory_space<vmem>>, vector<2x16xf32>
    tpu.vector_store %arg12[%c0_336, %c736], %478 {strides = array<i32>} : memref<2x768xf32, #tpu.memory_space<vmem>>, vector<2x16xf32>,
    %480 = vector.extract_strided_slice %469 {offsets = [2, 32], sizes = [2, 16], strides = [1, 1]} : vector<4x48xf32> to vector<2x16xf32>
    %c0_337 = arith.constant 0 : index
    %c736_338 = arith.constant 736 : index
    %481 = vector.load %arg13[%c0_337, %c736_338] : memref<2x768xf32, #tpu.memory_space<vmem>>, vector<2x16xf32>
    tpu.vector_store %arg13[%c0_337, %c736_338], %480 {strides = array<i32>} : memref<2x768xf32, #tpu.memory_space<vmem>>, vector<2x16xf32>,
    %482 = vector.extract_strided_slice %125 {offsets = [0, 1792], sizes = [4, 256], strides = [1, 1]} : vector<4x2048xf32> to vector<4x256xf32>
    %c1_339 = arith.constant 1 : index
    %c0_340 = arith.constant 0 : index
    %c0_341 = arith.constant 0 : index
    %483 = vector.load %arg10[%c1_339, %c0_340, %c0_341] : memref<4x256x48xf32, #tpu.memory_space<vmem>>, vector<1x256x48xf32>
    %484 = vector.shape_cast %483 : vector<1x256x48xf32> to vector<256x48xf32>
    %cst_342 = arith.constant dense<0.000000e+00> : vector<4x48xf32>
    %485 = tpu.matmul %482, %484, %cst_342 {dimension_numbers = #tpu.dot_dimension_numbers<[1], [0], [0], [1], [0, 0, 1, 1], [], []>} : vector<4x256xf32>, vector<256x48xf32>, vector<4x48xf32> -> vector<4x48xf32>
    %486 = vector.broadcast %126 : vector<1x48xf32> to vector<4x48xf32>
    %487 = arith.addf %485, %486 : vector<4x48xf32>
    %488 = math.tanh %487 : vector<4x48xf32>
    %489 = vector.extract_strided_slice %488 {offsets = [0, 0], sizes = [2, 16], strides = [1, 1]} : vector<4x48xf32> to vector<2x16xf32>
    %c0_343 = arith.constant 0 : index
    %c240 = arith.constant 240 : index
    %490 = vector.load %arg12[%c0_343, %c240] : memref<2x768xf32, #tpu.memory_space<vmem>>, vector<2x16xf32>
    tpu.vector_store %arg12[%c0_343, %c240], %489 {strides = array<i32>} : memref<2x768xf32, #tpu.memory_space<vmem>>, vector<2x16xf32>,
    %491 = vector.extract_strided_slice %488 {offsets = [2, 0], sizes = [2, 16], strides = [1, 1]} : vector<4x48xf32> to vector<2x16xf32>
    %c0_344 = arith.constant 0 : index
    %c240_345 = arith.constant 240 : index
    %492 = vector.load %arg13[%c0_344, %c240_345] : memref<2x768xf32, #tpu.memory_space<vmem>>, vector<2x16xf32>
    tpu.vector_store %arg13[%c0_344, %c240_345], %491 {strides = array<i32>} : memref<2x768xf32, #tpu.memory_space<vmem>>, vector<2x16xf32>,
    %493 = vector.extract_strided_slice %488 {offsets = [0, 16], sizes = [2, 16], strides = [1, 1]} : vector<4x48xf32> to vector<2x16xf32>
    %c0_346 = arith.constant 0 : index
    %c496 = arith.constant 496 : index
    %494 = vector.load %arg12[%c0_346, %c496] : memref<2x768xf32, #tpu.memory_space<vmem>>, vector<2x16xf32>
    tpu.vector_store %arg12[%c0_346, %c496], %493 {strides = array<i32>} : memref<2x768xf32, #tpu.memory_space<vmem>>, vector<2x16xf32>,
    %495 = vector.extract_strided_slice %488 {offsets = [2, 16], sizes = [2, 16], strides = [1, 1]} : vector<4x48xf32> to vector<2x16xf32>
    %c0_347 = arith.constant 0 : index
    %c496_348 = arith.constant 496 : index
    %496 = vector.load %arg13[%c0_347, %c496_348] : memref<2x768xf32, #tpu.memory_space<vmem>>, vector<2x16xf32>
    tpu.vector_store %arg13[%c0_347, %c496_348], %495 {strides = array<i32>} : memref<2x768xf32, #tpu.memory_space<vmem>>, vector<2x16xf32>,
    %497 = vector.extract_strided_slice %488 {offsets = [0, 32], sizes = [2, 16], strides = [1, 1]} : vector<4x48xf32> to vector<2x16xf32>
    %c0_349 = arith.constant 0 : index
    %c752 = arith.constant 752 : index
    %498 = vector.load %arg12[%c0_349, %c752] : memref<2x768xf32, #tpu.memory_space<vmem>>, vector<2x16xf32>
    tpu.vector_store %arg12[%c0_349, %c752], %497 {strides = array<i32>} : memref<2x768xf32, #tpu.memory_space<vmem>>, vector<2x16xf32>,
    %499 = vector.extract_strided_slice %488 {offsets = [2, 32], sizes = [2, 16], strides = [1, 1]} : vector<4x48xf32> to vector<2x16xf32>
    %c0_350 = arith.constant 0 : index
    %c752_351 = arith.constant 752 : index
    %500 = vector.load %arg13[%c0_350, %c752_351] : memref<2x768xf32, #tpu.memory_space<vmem>>, vector<2x16xf32>
    tpu.vector_store %arg13[%c0_350, %c752_351], %499 {strides = array<i32>} : memref<2x768xf32, #tpu.memory_space<vmem>>, vector<2x16xf32>,
    return
  }
}

</mosaic_0001>

<llo_original>
// kernel: model_forward.1
$region0: #{model_forward.1}
  #allocation0 [shape = 'u32[]', space=smem, size = 0x4, offset = 0x4, fixed_abs, tag = 'smem constant byte address 0x4 - core index']
  #allocation1 [shape = 'u32[144,128]{1,0:T(1,128)}', space=vmem, size = 0x12000, scoped, tag = 'internal scratch']
  #allocation2 [shape = 'f32[4,8]{1,0:T(4,128)}', space=vmem, size = 0x800, scoped, tag = 'scratch operand']
  %s0 = inlined_call_operand.vmem [shape: f32[2,768], index: 0, kind: input, shape index: {}]
  %s1 = inlined_call_operand.vmem [shape: f32[2,8], index: 1, kind: input, shape index: {}]
  %s2 = inlined_call_operand.vmem [shape: f32[144,256], index: 2, kind: input, shape index: {}]
  %s3 = inlined_call_operand.vmem [shape: f32[1,256], index: 3, kind: input, shape index: {}]
  %s4 = inlined_call_operand.vmem [shape: f32[2048,8], index: 4, kind: input, shape index: {}]
  %s5 = inlined_call_operand.vmem [shape: f32[1,8], index: 5, kind: input, shape index: {}]
  %s6 = inlined_call_operand.vmem [shape: f32[2048,8], index: 6, kind: input, shape index: {}]
  %s7 = inlined_call_operand.vmem [shape: f32[1,8], index: 7, kind: input, shape index: {}]
  %s8 = inlined_call_operand.vmem [shape: f32[8,2048], index: 8, kind: input, shape index: {}]
  %s9 = inlined_call_operand.vmem [shape: f32[1,2048], index: 9, kind: input, shape index: {}]
  %s10 = inlined_call_operand.vmem [shape: f32[4,256,48], index: 10, kind: input, shape index: {}]
  %s11 = inlined_call_operand.vmem [shape: f32[1,48], index: 11, kind: input, shape index: {}]
  %s12 = inlined_call_operand.vmem [shape: f32[2,768], index: 12, kind: output, shape index: {0}]
  %s13 = inlined_call_operand.vmem [shape: f32[2,768], index: 13, kind: output, shape index: {1}]
  %s14 = inlined_call_operand.hbm [shape: f32[2,8], index: 14, kind: output, shape index: {2}]
  %s15 = inlined_call_operand.hbm [shape: f32[2,8], index: 15, kind: output, shape index: {3}]
  %16 = xla_tuple %s12, %s13, %s14, %s15
  %s17 = sld [smem:[#allocation0]]
  $region82: #{model_forward.1} parent=0
    _
  %s19 = ssub.s32 1, %s17
  %s20 = scalar_select 0, %s19, %s17
  $region1: #{model_forward.1} parent=0
    #allocation3 [shape = 'u8[1024]{0}', space=vmem, size = 0x400, scoped, tag = 'output window, operand 2, single buffered']
    #allocation4 [shape = 's32[1]{0}', space=sflag, size = 0x4, scoped, tag = 'scoped memory for model_forward.1']
    #allocation5 [shape = 'u8[1024]{0}', space=vmem, size = 0x400, scoped, tag = 'output window, operand 3, single buffered']
    #allocation6 [shape = 's32[1]{0}', space=sflag, size = 0x4, scoped, tag = 'scoped memory for model_forward.1']
    %21 = vsyncpa [#allocation4], 0
    %22 = vsyncpa [#allocation6], 0
    // Predicated region
    $region2: #{model_forward.1} parent=1 // pred_check
      _
    $region3: #{model_forward.1} parent=1 // pred_check_branch
      %24 = sbr.rel (0) target = $region5
    $region4: #{model_forward.1} parent=1 // pred_region
      _
    $region5: #{model_forward.1} parent=1 // pred_fallthru
      _
    // Predicated region
    $region6: #{model_forward.1} parent=1 // pred_check
      _
    $region7: #{model_forward.1} parent=1 // pred_check_branch
      %26 = sbr.rel (0) target = $region9
    $region8: #{model_forward.1} parent=1 // pred_region
      _
    $region9: #{model_forward.1} parent=1 // pred_fallthru
      _
    // Predicated region
    $region10: #{model_forward.1} parent=1 // pred_check
      _
    $region11: #{model_forward.1} parent=1 // pred_check_branch
      %28 = sbr.rel (0) target = $region13
    $region12: #{model_forward.1} parent=1 // pred_region
      _
    $region13: #{model_forward.1} parent=1 // pred_fallthru
      _
    // Predicated region
    $region14: #{model_forward.1} parent=1 // pred_check
      _
    $region15: #{model_forward.1} parent=1 // pred_check_branch
      %30 = sbr.rel (0) target = $region17
    $region16: #{model_forward.1} parent=1 // pred_region
      _
    $region17: #{model_forward.1} parent=1 // pred_fallthru
      _
    // Predicated region
    $region18: #{model_forward.1} parent=1 // pred_check
      _
    $region19: #{model_forward.1} parent=1 // pred_check_branch
      %32 = sbr.rel (0) target = $region21
    $region20: #{model_forward.1} parent=1 // pred_region
      _
    $region21: #{model_forward.1} parent=1 // pred_fallthru
      _
    // Predicated region
    $region22: #{model_forward.1} parent=1 // pred_check
      _
    $region23: #{model_forward.1} parent=1 // pred_check_branch
      %34 = sbr.rel (0) target = $region25
    $region24: #{model_forward.1} parent=1 // pred_region
      _
    $region25: #{model_forward.1} parent=1 // pred_fallthru
      _
    // Predicated region
    $region26: #{model_forward.1} parent=1 // pred_check
      _
    $region27: #{model_forward.1} parent=1 // pred_check_branch
      %36 = sbr.rel (0) target = $region29
    $region28: #{model_forward.1} parent=1 // pred_region
      _
    $region29: #{model_forward.1} parent=1 // pred_fallthru
      _
    // Predicated region
    $region30: #{model_forward.1} parent=1 // pred_check
      _
    $region31: #{model_forward.1} parent=1 // pred_check_branch
      %38 = sbr.rel (0) target = $region33
    $region32: #{model_forward.1} parent=1 // pred_region
      _
    $region33: #{model_forward.1} parent=1 // pred_fallthru
      _
    // Predicated region
    $region34: #{model_forward.1} parent=1 // pred_check
      _
    $region35: #{model_forward.1} parent=1 // pred_check_branch
      %40 = sbr.rel (0) target = $region37
    $region36: #{model_forward.1} parent=1 // pred_region
      _
    $region37: #{model_forward.1} parent=1 // pred_fallthru
      _
    // Predicated region
    $region38: #{model_forward.1} parent=1 // pred_check
      _
    $region39: #{model_forward.1} parent=1 // pred_check_branch
      %42 = sbr.rel (0) target = $region41
    $region40: #{model_forward.1} parent=1 // pred_region
      _
    $region41: #{model_forward.1} parent=1 // pred_fallthru
      _
    // Predicated region
    $region42: #{model_forward.1} parent=1 // pred_check
      _
    $region43: #{model_forward.1} parent=1 // pred_check_branch
      %44 = sbr.rel (0) target = $region45
    $region44: #{model_forward.1} parent=1 // pred_region
      _
    $region45: #{model_forward.1} parent=1 // pred_fallthru
      _
    // Predicated region
    $region46: #{model_forward.1} parent=1 // pred_check
      _
    $region47: #{model_forward.1} parent=1 // pred_check_branch
      %46 = sbr.rel (0) target = $region49
    $region48: #{model_forward.1} parent=1 // pred_region
      _
    $region49: #{model_forward.1} parent=1 // pred_fallthru
      _
    %v47 = vld [vmem:[%s0] sm:$0xff]
    %v48 = vld [vmem:[%s0 + $0x8] sm:$0xf]
    %v49 = vld [vmem:[%s1] sm:$0x3]
    %v50 = vld [vmem:[%s2] sm:$0xff]
    %v51 = vld [vmem:[%s2 + $0x8] sm:$0xff]
    %v52 = vld [vmem:[%s2 + $0x10] sm:$0xff]
    %v53 = vld [vmem:[%s2 + $0x18] sm:$0xff]
    %v54 = vld [vmem:[%s2 + $0x20] sm:$0xff]
    %v55 = vld [vmem:[%s2 + $0x28] sm:$0xff]
    %v56 = vld [vmem:[%s2 + $0x30] sm:$0xff]
    %v57 = vld [vmem:[%s2 + $0x38] sm:$0xff]
    %v58 = vld [vmem:[%s2 + $0x40] sm:$0xff]
    %v59 = vld [vmem:[%s2 + $0x48] sm:$0xff]
    %v60 = vld [vmem:[%s2 + $0x50] sm:$0xff]
    %v61 = vld [vmem:[%s2 + $0x58] sm:$0xff]
    %v62 = vld [vmem:[%s2 + $0x60] sm:$0xff]
    %v63 = vld [vmem:[%s2 + $0x68] sm:$0xff]
    %v64 = vld [vmem:[%s2 + $0x70] sm:$0xff]
    %v65 = vld [vmem:[%s2 + $0x78] sm:$0xff]
    %v66 = vld [vmem:[%s2 + $0x80] sm:$0xff]
    %v67 = vld [vmem:[%s2 + $0x88] sm:$0xff]
    %v68 = vld [vmem:[%s2 + $0x90] sm:$0xff]
    %v69 = vld [vmem:[%s2 + $0x98] sm:$0xff]
    %v70 = vld [vmem:[%s2 + $0xa0] sm:$0xff]
    %v71 = vld [vmem:[%s2 + $0xa8] sm:$0xff]
    %v72 = vld [vmem:[%s2 + $0xb0] sm:$0xff]
    %v73 = vld [vmem:[%s2 + $0xb8] sm:$0xff]
    %v74 = vld [vmem:[%s2 + $0xc0] sm:$0xff]
    %v75 = vld [vmem:[%s2 + $0xc8] sm:$0xff]
    %v76 = vld [vmem:[%s2 + $0xd0] sm:$0xff]
    %v77 = vld [vmem:[%s2 + $0xd8] sm:$0xff]
    %v78 = vld [vmem:[%s2 + $0xe0] sm:$0xff]
    %v79 = vld [vmem:[%s2 + $0xe8] sm:$0xff]
    %v80 = vld [vmem:[%s2 + $0xf0] sm:$0xff]
    %v81 = vld [vmem:[%s2 + $0xf8] sm:$0xff]
    %v82 = vld [vmem:[%s2 + $0x100] sm:$0xff]
    %v83 = vld [vmem:[%s2 + $0x108] sm:$0xff]
    %v84 = vld [vmem:[%s2 + $0x110] sm:$0xff]
    %v85 = vld [vmem:[%s2 + $0x118] sm:$0xff]
    %v86 = vld [vmem:[%s3] sm:$0x3]
    %v88 = vlaneseq
    %v89 = vshrl.u32 %v88, 7
    %v90 = vsub.s32 0, %v89
    %v91 = vrot.slane %v86, %v90
    %v92 = vlaneseq
    %v93 = vshrl.u32 %v92, 7
    %v94 = vsub.s32 1, %v93
    %v95 = vrot.slane %v86, %v94
    %vm98 = vcmask 785408
    %v100 = vsel %vm98, %v47, 0
    %102 = vmatprep.subr.mxu0 %v63
    %103 = vmatpush1.msra.mxu0 %v62
    %104 = vmatprep.subr.mxu0 %v65
    %105 = vmatpush1.msra.mxu0 %v64
    %106 = vmatprep.subr.mxu0 %v67
    %107 = vmatpush1.msra.mxu0 %v66
    %108 = vmatprep.subr.mxu0 %v69
    %109 = vmatpush1.msra.mxu0 %v68
    %110 = vmatprep.subr.mxu0 %v71
    %111 = vmatpush1.msra.mxu0 %v70
    %112 = vmatprep.subr.mxu0 %v73
    %113 = vmatpush1.msra.mxu0 %v72
    %114 = vmatprep.subr.mxu0 %v75
    %115 = vmatpush1.msra.mxu0 %v74
    %116 = vmatprep.subr.mxu0 %v77
    %117 = vmatpush1.msra.mxu0 %v76
    %118 = vmatprep.subr.mxu0 %v79
    %119 = vmatpush1.msra.mxu0 %v78
    %120 = vmatprep.subr.mxu0 %v81
    %121 = vmatpush1.msra.mxu0 %v80
    %122 = vmatprep.subr.mxu0 %v83
    %123 = vmatpush1.msra.mxu0 %v82
    %124 = vmatprep.subr.mxu0 %v85
    %125 = vmatpush1.msra.mxu0 %v84
    %126 = vmatprep.subr.mxu0 0.0
    %127 = vmatpush1.msra.mxu0 0.0
    %128 = vmatprep.subr.mxu0 0.0
    %129 = vmatpush1.msra.mxu0 0.0
    %130 = vmatprep.subr.mxu0 0.0
    %131 = vmatpush1.msra.mxu0 0.0
    %132 = vmatprep.subr.mxu0 0.0
    %133 = vmatpush1.msra.mxu0 0.0
    %134 = vmatprep.subr.mxu0 0.0
    %135 = vmatpush1.msra.mxu0 0.0
    %136 = vmatprep.subr.mxu0 0.0
    %137 = vmatpush1.msra.mxu0 0.0
    %138 = vmatprep.subr.mxu0 0.0
    %139 = vmatpush1.msra.mxu0 0.0
    %140 = vmatprep.subr.mxu0 0.0
    %141 = vmatpush1.msra.mxu0 0.0
    %142 = vmatprep.subr.mxu0 0.0
    %143 = vmatpush1.msra.mxu0 0.0
    %144 = vmatprep.subr.mxu0 0.0
    %145 = vmatpush1.msra.mxu0 0.0
    %146 = vmatprep.subr.mxu0 0.0
    %147 = vmatpush1.msra.mxu0 0.0
    %148 = vmatprep.subr.mxu0 0.0
    %149 = vmatpush1.msra.mxu0 0.0
    %150 = vmatprep.subr.mxu0 0.0
    %151 = vmatpush1.msra.mxu0 0.0
    %152 = vmatprep.subr.mxu0 0.0
    %153 = vmatpush1.msra.mxu0 0.0
    %154 = vmatprep.subr.mxu0 0.0
    %155 = vmatpush1.msra.mxu0 0.0
    %156 = vmatprep.subr.mxu0 0.0
    %157 = vmatpush1.msra.mxu0 0.0
    %158 = vmatprep.subr.mxu0 0.0
    %159 = vmatpush1.msra.mxu0 0.0
    %160 = vmatprep.subr.mxu0 0.0
    %161 = vmatpush1.msra.mxu0 0.0
    %162 = vmatprep.subr.mxu0 0.0
    %163 = vmatpush1.msra.mxu0 0.0
    %164 = vmatprep.subr.mxu0 0.0
    %165 = vmatpush1.msra.mxu0 0.0
    %166 = vmatprep.mubr.f32.mxu0 0.0
    %167 = vmatmul.mubr.f32.gmra.mrb[0].mxu0 %v100
    %v168 = vpop.f32.mrb[0].mxu0
    %v169 = vadd.f32 %v91, %v168
    %v170 = vpop.f32.mrb[0].mxu0
    %v171 = vadd.f32 %v95, %v170
    %172 = vdwg.mxu0
    %v173 = vmax.f32 %v169, 0.0
    %v174 = vmax.f32 %v171, 0.0
    %v175 = vld [vmem:[%s4] sm:$0xff]
    %v176 = vld [vmem:[%s4 + $0x8] sm:$0xff]
    %v177 = vld [vmem:[%s4 + $0x10] sm:$0xff]
    %v178 = vld [vmem:[%s4 + $0x18] sm:$0xff]
    %v179 = vld [vmem:[%s4 + $0x20] sm:$0xff]
    %v180 = vld [vmem:[%s4 + $0x28] sm:$0xff]
    %v181 = vld [vmem:[%s4 + $0x30] sm:$0xff]
    %v182 = vld [vmem:[%s4 + $0x38] sm:$0xff]
    %v183 = vld [vmem:[%s4 + $0x40] sm:$0xff]
    %v184 = vld [vmem:[%s4 + $0x48] sm:$0xff]
    %v185 = vld [vmem:[%s4 + $0x50] sm:$0xff]
    %v186 = vld [vmem:[%s4 + $0x58] sm:$0xff]
    %v187 = vld [vmem:[%s4 + $0x60] sm:$0xff]
    %v188 = vld [vmem:[%s4 + $0x68] sm:$0xff]
    %v189 = vld [vmem:[%s4 + $0x70] sm:$0xff]
    %v190 = vld [vmem:[%s4 + $0x78] sm:$0xff]
    %v191 = vld [vmem:[%s4 + $0x80] sm:$0xff]
    %v192 = vld [vmem:[%s4 + $0x88] sm:$0xff]
    %v193 = vld [vmem:[%s4 + $0x90] sm:$0xff]
    %v194 = vld [vmem:[%s4 + $0x98] sm:$0xff]
    %v195 = vld [vmem:[%s4 + $0xa0] sm:$0xff]
    %v196 = vld [vmem:[%s4 + $0xa8] sm:$0xff]
    %v197 = vld [vmem:[%s4 + $0xb0] sm:$0xff]
    %v198 = vld [vmem:[%s4 + $0xb8] sm:$0xff]
    %v199 = vld [vmem:[%s4 + $0xc0] sm:$0xff]
    %v200 = vld [vmem:[%s4 + $0xc8] sm:$0xff]
    %v201 = vld [vmem:[%s4 + $0xd0] sm:$0xff]
    %v202 = vld [vmem:[%s4 + $0xd8] sm:$0xff]
    %v203 = vld [vmem:[%s4 + $0xe0] sm:$0xff]
    %v204 = vld [vmem:[%s4 + $0xe8] sm:$0xff]
    %v205 = vld [vmem:[%s4 + $0xf0] sm:$0xff]
    %v206 = vld [vmem:[%s4 + $0xf8] sm:$0xff]
    %v207 = vld [vmem:[%s6] sm:$0xff]
    %v208 = vld [vmem:[%s6 + $0x8] sm:$0xff]
    %v209 = vld [vmem:[%s6 + $0x10] sm:$0xff]
    %v210 = vld [vmem:[%s6 + $0x18] sm:$0xff]
    %v211 = vld [vmem:[%s6 + $0x20] sm:$0xff]
    %v212 = vld [vmem:[%s6 + $0x28] sm:$0xff]
    %v213 = vld [vmem:[%s6 + $0x30] sm:$0xff]
    %v214 = vld [vmem:[%s6 + $0x38] sm:$0xff]
    %v215 = vld [vmem:[%s6 + $0x40] sm:$0xff]
    %v216 = vld [vmem:[%s6 + $0x48] sm:$0xff]
    %v217 = vld [vmem:[%s6 + $0x50] sm:$0xff]
    %v218 = vld [vmem:[%s6 + $0x58] sm:$0xff]
    %v219 = vld [vmem:[%s6 + $0x60] sm:$0xff]
    %v220 = vld [vmem:[%s6 + $0x68] sm:$0xff]
    %v221 = vld [vmem:[%s6 + $0x70] sm:$0xff]
    %v222 = vld [vmem:[%s6 + $0x78] sm:$0xff]
    %v223 = vld [vmem:[%s6 + $0x80] sm:$0xff]
    %v224 = vld [vmem:[%s6 + $0x88] sm:$0xff]
    %v225 = vld [vmem:[%s6 + $0x90] sm:$0xff]
    %v226 = vld [vmem:[%s6 + $0x98] sm:$0xff]
    %v227 = vld [vmem:[%s6 + $0xa0] sm:$0xff]
    %v228 = vld [vmem:[%s6 + $0xa8] sm:$0xff]
    %v229 = vld [vmem:[%s6 + $0xb0] sm:$0xff]
    %v230 = vld [vmem:[%s6 + $0xb8] sm:$0xff]
    %v231 = vld [vmem:[%s6 + $0xc0] sm:$0xff]
    %v232 = vld [vmem:[%s6 + $0xc8] sm:$0xff]
    %v233 = vld [vmem:[%s6 + $0xd0] sm:$0xff]
    %v234 = vld [vmem:[%s6 + $0xd8] sm:$0xff]
    %v235 = vld [vmem:[%s6 + $0xe0] sm:$0xff]
    %v236 = vld [vmem:[%s6 + $0xe8] sm:$0xff]
    %v237 = vld [vmem:[%s6 + $0xf0] sm:$0xff]
    %v238 = vld [vmem:[%s6 + $0xf8] sm:$0xff]
    %v240 = vunpack.c.l.s4 1983009808
    %v241 = vunpack.c.0.s8 %v240
    %v242 = vlaneseq
    %v243 = vshrl.u32 %v242, 7
    %v244 = vsub.s32 %v241, %v243
    %v245 = vrot.slane %v47, %v244
    %v246 = vcombine.high %v245, %v245
    %247 = vrot.lane.b32.xlu0 %v245, 80
    %v248 = vpop.permute.xlu0 %247
    %249 = vrot.lane.b32.xlu0 %v246, 80
    %v250 = vpop.permute.xlu0 %249
    %vm251 = vcmask 654336
    %v252 = vsel %vm251, %v248, %v250
    %vm254 = vcmask 130048
    %v255 = vsel %vm254, %v250, 0
    %257 = vmatprep.subr.mxu0 %v51
    %258 = vmatpush1.msra.mxu0 %v50
    %259 = vmatprep.subr.mxu0 %v53
    %260 = vmatpush1.msra.mxu0 %v52
    %261 = vmatprep.subr.mxu0 %v55
    %262 = vmatpush1.msra.mxu0 %v54
    %263 = vmatprep.subr.mxu0 %v57
    %264 = vmatpush1.msra.mxu0 %v56
    %265 = vmatprep.subr.mxu0 %v59
    %266 = vmatpush1.msra.mxu0 %v58
    %267 = vmatprep.subr.mxu0 %v61
    %268 = vmatpush1.msra.mxu0 %v60
    %269 = vmatprep.subr.mxu0 %v63
    %270 = vmatpush1.msra.mxu0 %v62
    %271 = vmatprep.subr.mxu0 %v65
    %272 = vmatpush1.msra.mxu0 %v64
    %273 = vmatprep.subr.mxu0 %v67
    %274 = vmatpush1.msra.mxu0 %v66
    %275 = vmatprep.subr.mxu0 %v69
    %276 = vmatpush1.msra.mxu0 %v68
    %277 = vmatprep.subr.mxu0 %v71
    %278 = vmatpush1.msra.mxu0 %v70
    %279 = vmatprep.subr.mxu0 %v73
    %280 = vmatpush1.msra.mxu0 %v72
    %281 = vmatprep.subr.mxu0 %v75
    %282 = vmatpush1.msra.mxu0 %v74
    %283 = vmatprep.subr.mxu0 %v77
    %284 = vmatpush1.msra.mxu0 %v76
    %285 = vmatprep.subr.mxu0 %v79
    %286 = vmatpush1.msra.mxu0 %v78
    %287 = vmatprep.subr.mxu0 %v81
    %288 = vmatpush1.msra.mxu0 %v80
    %289 = vmatprep.subr.mxu0 %v83
    %290 = vmatpush1.msra.mxu0 %v82
    %291 = vmatprep.subr.mxu0 %v85
    %292 = vmatpush1.msra.mxu0 %v84
    %293 = vmatprep.subr.mxu0 0.0
    %294 = vmatpush1.msra.mxu0 0.0
    %295 = vmatprep.subr.mxu0 0.0
    %296 = vmatpush1.msra.mxu0 0.0
    %297 = vmatprep.subr.mxu0 0.0
    %298 = vmatpush1.msra.mxu0 0.0
    %299 = vmatprep.subr.mxu0 0.0
    %300 = vmatpush1.msra.mxu0 0.0
    %301 = vmatprep.subr.mxu0 0.0
    %302 = vmatpush1.msra.mxu0 0.0
    %303 = vmatprep.subr.mxu0 0.0
    %304 = vmatpush1.msra.mxu0 0.0
    %305 = vmatprep.subr.mxu0 0.0
    %306 = vmatpush1.msra.mxu0 0.0
    %307 = vmatprep.subr.mxu0 0.0
    %308 = vmatpush1.msra.mxu0 0.0
    %309 = vmatprep.subr.mxu0 0.0
    %310 = vmatpush1.msra.mxu0 0.0
    %311 = vmatprep.subr.mxu0 0.0
    %312 = vmatpush1.msra.mxu0 0.0
    %313 = vmatprep.subr.mxu0 0.0
    %314 = vmatpush1.msra.mxu0 0.0
    %315 = vmatprep.subr.mxu0 0.0
    %316 = vmatpush1.msra.mxu0 0.0
    %317 = vmatprep.subr.mxu0 0.0
    %318 = vmatpush1.msra.mxu0 0.0
    %319 = vmatprep.subr.mxu0 0.0
    %320 = vmatpush1.msra.mxu0 0.0
    %321 = vmatprep.mubr.f32.mxu0 %v255
    %322 = vmatmul.mubr.f32.gmra.mrb[0].mxu0 %v252
    %v323 = vpop.f32.mrb[0].mxu0
    %v324 = vadd.f32 %v91, %v323
    %v325 = vpop.f32.mrb[0].mxu0
    %v326 = vadd.f32 %v95, %v325
    %327 = vdwg.mxu0
    %v328 = vmax.f32 %v324, 0.0
    %v329 = vmax.f32 %v326, 0.0
    %v330 = vld [vmem:[%s4 + $0x100] sm:$0xff]
    %v331 = vld [vmem:[%s4 + $0x108] sm:$0xff]
    %v332 = vld [vmem:[%s4 + $0x110] sm:$0xff]
    %v333 = vld [vmem:[%s4 + $0x118] sm:$0xff]
    %v334 = vld [vmem:[%s4 + $0x120] sm:$0xff]
    %v335 = vld [vmem:[%s4 + $0x128] sm:$0xff]
    %v336 = vld [vmem:[%s4 + $0x130] sm:$0xff]
    %v337 = vld [vmem:[%s4 + $0x138] sm:$0xff]
    %v338 = vld [vmem:[%s4 + $0x140] sm:$0xff]
    %v339 = vld [vmem:[%s4 + $0x148] sm:$0xff]
    %v340 = vld [vmem:[%s4 + $0x150] sm:$0xff]
    %v341 = vld [vmem:[%s4 + $0x158] sm:$0xff]
    %v342 = vld [vmem:[%s4 + $0x160] sm:$0xff]
    %v343 = vld [vmem:[%s4 + $0x168] sm:$0xff]
    %v344 = vld [vmem:[%s4 + $0x170] sm:$0xff]
    %v345 = vld [vmem:[%s4 + $0x178] sm:$0xff]
    %v346 = vld [vmem:[%s4 + $0x180] sm:$0xff]
    %v347 = vld [vmem:[%s4 + $0x188] sm:$0xff]
    %v348 = vld [vmem:[%s4 + $0x190] sm:$0xff]
    %v349 = vld [vmem:[%s4 + $0x198] sm:$0xff]
    %v350 = vld [vmem:[%s4 + $0x1a0] sm:$0xff]
    %v351 = vld [vmem:[%s4 + $0x1a8] sm:$0xff]
    %v352 = vld [vmem:[%s4 + $0x1b0] sm:$0xff]
    %v353 = vld [vmem:[%s4 + $0x1b8] sm:$0xff]
    %v354 = vld [vmem:[%s4 + $0x1c0] sm:$0xff]
    %v355 = vld [vmem:[%s4 + $0x1c8] sm:$0xff]
    %v356 = vld [vmem:[%s4 + $0x1d0] sm:$0xff]
    %v357 = vld [vmem:[%s4 + $0x1d8] sm:$0xff]
    %v358 = vld [vmem:[%s4 + $0x1e0] sm:$0xff]
    %v359 = vld [vmem:[%s4 + $0x1e8] sm:$0xff]
    %v360 = vld [vmem:[%s4 + $0x1f0] sm:$0xff]
    %v361 = vld [vmem:[%s4 + $0x1f8] sm:$0xff]
    %362 = vmatprep.subr.mxu0 0.0
    %363 = vmatpush1.msra.mxu0 %v330
    %364 = vmatprep.subr.mxu0 0.0
    %365 = vmatpush1.msra.mxu0 %v331
    %366 = vmatprep.subr.mxu0 0.0
    %367 = vmatpush1.msra.mxu0 %v332
    %368 = vmatprep.subr.mxu0 0.0
    %369 = vmatpush1.msra.mxu0 %v333
    %370 = vmatprep.subr.mxu0 0.0
    %371 = vmatpush1.msra.mxu0 %v334
    %372 = vmatprep.subr.mxu0 0.0
    %373 = vmatpush1.msra.mxu0 %v335
    %374 = vmatprep.subr.mxu0 0.0
    %375 = vmatpush1.msra.mxu0 %v336
    %376 = vmatprep.subr.mxu0 0.0
    %377 = vmatpush1.msra.mxu0 %v337
    %378 = vmatprep.subr.mxu0 0.0
    %379 = vmatpush1.msra.mxu0 %v338
    %380 = vmatprep.subr.mxu0 0.0
    %381 = vmatpush1.msra.mxu0 %v339
    %382 = vmatprep.subr.mxu0 0.0
    %383 = vmatpush1.msra.mxu0 %v340
    %384 = vmatprep.subr.mxu0 0.0
    %385 = vmatpush1.msra.mxu0 %v341
    %386 = vmatprep.subr.mxu0 0.0
    %387 = vmatpush1.msra.mxu0 %v342
    %388 = vmatprep.subr.mxu0 0.0
    %389 = vmatpush1.msra.mxu0 %v343
    %390 = vmatprep.subr.mxu0 0.0
    %391 = vmatpush1.msra.mxu0 %v344
    %392 = vmatprep.subr.mxu0 0.0
    %393 = vmatpush1.msra.mxu0 %v345
    %394 = vmatprep.subr.mxu0 0.0
    %395 = vmatpush1.msra.mxu0 %v346
    %396 = vmatprep.subr.mxu0 0.0
    %397 = vmatpush1.msra.mxu0 %v347
    %398 = vmatprep.subr.mxu0 0.0
    %399 = vmatpush1.msra.mxu0 %v348
    %400 = vmatprep.subr.mxu0 0.0
    %401 = vmatpush1.msra.mxu0 %v349
    %402 = vmatprep.subr.mxu0 0.0
    %403 = vmatpush1.msra.mxu0 %v350
    %404 = vmatprep.subr.mxu0 0.0
    %405 = vmatpush1.msra.mxu0 %v351
    %406 = vmatprep.subr.mxu0 0.0
    %407 = vmatpush1.msra.mxu0 %v352
    %408 = vmatprep.subr.mxu0 0.0
    %409 = vmatpush1.msra.mxu0 %v353
    %410 = vmatprep.subr.mxu0 0.0
    %411 = vmatpush1.msra.mxu0 %v354
    %412 = vmatprep.subr.mxu0 0.0
    %413 = vmatpush1.msra.mxu0 %v355
    %414 = vmatprep.subr.mxu0 0.0
    %415 = vmatpush1.msra.mxu0 %v356
    %416 = vmatprep.subr.mxu0 0.0
    %417 = vmatpush1.msra.mxu0 %v357
    %418 = vmatprep.subr.mxu0 0.0
    %419 = vmatpush1.msra.mxu0 %v358
    %420 = vmatprep.subr.mxu0 0.0
    %421 = vmatpush1.msra.mxu0 %v359
    %422 = vmatprep.subr.mxu0 0.0
    %423 = vmatpush1.msra.mxu0 %v360
    %424 = vmatprep.subr.mxu0 0.0
    %425 = vmatpush1.msra.mxu0 %v361
    %426 = vmatprep.mubr.f32.mxu0 %v329
    %427 = vmatmul.mubr.f32.gmra.mrb[0].mxu0 %v328
    %v428 = vpop.f32.mrb[0].mxu0
    %v429 = vadd.f32 0.0, %v428
    %v430 = vpop.f32.mrb[0].mxu0
    %431 = vdwg.mxu0
    %432 = vmatprep.subr.mxu0 0.0
    %433 = vmatpush1.msra.mxu0 %v175
    %434 = vmatprep.subr.mxu0 0.0
    %435 = vmatpush1.msra.mxu0 %v176
    %436 = vmatprep.subr.mxu0 0.0
    %437 = vmatpush1.msra.mxu0 %v177
    %438 = vmatprep.subr.mxu0 0.0
    %439 = vmatpush1.msra.mxu0 %v178
    %440 = vmatprep.subr.mxu0 0.0
    %441 = vmatpush1.msra.mxu0 %v179
    %442 = vmatprep.subr.mxu0 0.0
    %443 = vmatpush1.msra.mxu0 %v180
    %444 = vmatprep.subr.mxu0 0.0
    %445 = vmatpush1.msra.mxu0 %v181
    %446 = vmatprep.subr.mxu0 0.0
    %447 = vmatpush1.msra.mxu0 %v182
    %448 = vmatprep.subr.mxu0 0.0
    %449 = vmatpush1.msra.mxu0 %v183
    %450 = vmatprep.subr.mxu0 0.0
    %451 = vmatpush1.msra.mxu0 %v184
    %452 = vmatprep.subr.mxu0 0.0
    %453 = vmatpush1.msra.mxu0 %v185
    %454 = vmatprep.subr.mxu0 0.0
    %455 = vmatpush1.msra.mxu0 %v186
    %456 = vmatprep.subr.mxu0 0.0
    %457 = vmatpush1.msra.mxu0 %v187
    %458 = vmatprep.subr.mxu0 0.0
    %459 = vmatpush1.msra.mxu0 %v188
    %460 = vmatprep.subr.mxu0 0.0
    %461 = vmatpush1.msra.mxu0 %v189
    %462 = vmatprep.subr.mxu0 0.0
    %463 = vmatpush1.msra.mxu0 %v190
    %464 = vmatprep.subr.mxu0 0.0
    %465 = vmatpush1.msra.mxu0 %v191
    %466 = vmatprep.subr.mxu0 0.0
    %467 = vmatpush1.msra.mxu0 %v192
    %468 = vmatprep.subr.mxu0 0.0
    %469 = vmatpush1.msra.mxu0 %v193
    %470 = vmatprep.subr.mxu0 0.0
    %471 = vmatpush1.msra.mxu0 %v194
    %472 = vmatprep.subr.mxu0 0.0
    %473 = vmatpush1.msra.mxu0 %v195
    %474 = vmatprep.subr.mxu0 0.0
    %475 = vmatpush1.msra.mxu0 %v196
    %476 = vmatprep.subr.mxu0 0.0
    %477 = vmatpush1.msra.mxu0 %v197
    %478 = vmatprep.subr.mxu0 0.0
    %479 = vmatpush1.msra.mxu0 %v198
    %480 = vmatprep.subr.mxu0 0.0
    %481 = vmatpush1.msra.mxu0 %v199
    %482 = vmatprep.subr.mxu0 0.0
    %483 = vmatpush1.msra.mxu0 %v200
    %484 = vmatprep.subr.mxu0 0.0
    %485 = vmatpush1.msra.mxu0 %v201
    %486 = vmatprep.subr.mxu0 0.0
    %487 = vmatpush1.msra.mxu0 %v202
    %488 = vmatprep.subr.mxu0 0.0
    %489 = vmatpush1.msra.mxu0 %v203
    %490 = vmatprep.subr.mxu0 0.0
    %491 = vmatpush1.msra.mxu0 %v204
    %492 = vmatprep.subr.mxu0 0.0
    %493 = vmatpush1.msra.mxu0 %v205
    %494 = vmatprep.subr.mxu0 0.0
    %495 = vmatpush1.msra.mxu0 %v206
    %496 = vmatprep.mubr.f32.mxu0 %v174
    %497 = vmatmul.mubr.f32.gmra.mrb[0].mxu0 %v173
    %v498 = vpop.f32.mrb[0].mxu0
    %v499 = vadd.f32 %v429, %v498
    %v500 = vpop.f32.mrb[0].mxu0
    %501 = vdwg.mxu0
    %v502 = vld [vmem:[%s6 + $0x100] sm:$0xff]
    %v503 = vld [vmem:[%s6 + $0x108] sm:$0xff]
    %v504 = vld [vmem:[%s6 + $0x110] sm:$0xff]
    %v505 = vld [vmem:[%s6 + $0x118] sm:$0xff]
    %v506 = vld [vmem:[%s6 + $0x120] sm:$0xff]
    %v507 = vld [vmem:[%s6 + $0x128] sm:$0xff]
    %v508 = vld [vmem:[%s6 + $0x130] sm:$0xff]
    %v509 = vld [vmem:[%s6 + $0x138] sm:$0xff]
    %v510 = vld [vmem:[%s6 + $0x140] sm:$0xff]
    %v511 = vld [vmem:[%s6 + $0x148] sm:$0xff]
    %v512 = vld [vmem:[%s6 + $0x150] sm:$0xff]
    %v513 = vld [vmem:[%s6 + $0x158] sm:$0xff]
    %v514 = vld [vmem:[%s6 + $0x160] sm:$0xff]
    %v515 = vld [vmem:[%s6 + $0x168] sm:$0xff]
    %v516 = vld [vmem:[%s6 + $0x170] sm:$0xff]
    %v517 = vld [vmem:[%s6 + $0x178] sm:$0xff]
    %v518 = vld [vmem:[%s6 + $0x180] sm:$0xff]
    %v519 = vld [vmem:[%s6 + $0x188] sm:$0xff]
    %v520 = vld [vmem:[%s6 + $0x190] sm:$0xff]
    %v521 = vld [vmem:[%s6 + $0x198] sm:$0xff]
    %v522 = vld [vmem:[%s6 + $0x1a0] sm:$0xff]
    %v523 = vld [vmem:[%s6 + $0x1a8] sm:$0xff]
    %v524 = vld [vmem:[%s6 + $0x1b0] sm:$0xff]
    %v525 = vld [vmem:[%s6 + $0x1b8] sm:$0xff]
    %v526 = vld [vmem:[%s6 + $0x1c0] sm:$0xff]
    %v527 = vld [vmem:[%s6 + $0x1c8] sm:$0xff]
    %v528 = vld [vmem:[%s6 + $0x1d0] sm:$0xff]
    %v529 = vld [vmem:[%s6 + $0x1d8] sm:$0xff]
    %v530 = vld [vmem:[%s6 + $0x1e0] sm:$0xff]
    %v531 = vld [vmem:[%s6 + $0x1e8] sm:$0xff]
    %v532 = vld [vmem:[%s6 + $0x1f0] sm:$0xff]
    %v533 = vld [vmem:[%s6 + $0x1f8] sm:$0xff]
    %534 = vmatprep.subr.mxu0 0.0
    %535 = vmatpush1.msra.mxu0 %v502
    %536 = vmatprep.subr.mxu0 0.0
    %537 = vmatpush1.msra.mxu0 %v503
    %538 = vmatprep.subr.mxu0 0.0
    %539 = vmatpush1.msra.mxu0 %v504
    %540 = vmatprep.subr.mxu0 0.0
    %541 = vmatpush1.msra.mxu0 %v505
    %542 = vmatprep.subr.mxu0 0.0
    %543 = vmatpush1.msra.mxu0 %v506
    %544 = vmatprep.subr.mxu0 0.0
    %545 = vmatpush1.msra.mxu0 %v507
    %546 = vmatprep.subr.mxu0 0.0
    %547 = vmatpush1.msra.mxu0 %v508
    %548 = vmatprep.subr.mxu0 0.0
    %549 = vmatpush1.msra.mxu0 %v509
    %550 = vmatprep.subr.mxu0 0.0
    %551 = vmatpush1.msra.mxu0 %v510
    %552 = vmatprep.subr.mxu0 0.0
    %553 = vmatpush1.msra.mxu0 %v511
    %554 = vmatprep.subr.mxu0 0.0
    %555 = vmatpush1.msra.mxu0 %v512
    %556 = vmatprep.subr.mxu0 0.0
    %557 = vmatpush1.msra.mxu0 %v513
    %558 = vmatprep.subr.mxu0 0.0
    %559 = vmatpush1.msra.mxu0 %v514
    %560 = vmatprep.subr.mxu0 0.0
    %561 = vmatpush1.msra.mxu0 %v515
    %562 = vmatprep.subr.mxu0 0.0
    %563 = vmatpush1.msra.mxu0 %v516
    %564 = vmatprep.subr.mxu0 0.0
    %565 = vmatpush1.msra.mxu0 %v517
    %566 = vmatprep.subr.mxu0 0.0
    %567 = vmatpush1.msra.mxu0 %v518
    %568 = vmatprep.subr.mxu0 0.0
    %569 = vmatpush1.msra.mxu0 %v519
    %570 = vmatprep.subr.mxu0 0.0
    %571 = vmatpush1.msra.mxu0 %v520
    %572 = vmatprep.subr.mxu0 0.0
    %573 = vmatpush1.msra.mxu0 %v521
    %574 = vmatprep.subr.mxu0 0.0
    %575 = vmatpush1.msra.mxu0 %v522
    %576 = vmatprep.subr.mxu0 0.0
    %577 = vmatpush1.msra.mxu0 %v523
    %578 = vmatprep.subr.mxu0 0.0
    %579 = vmatpush1.msra.mxu0 %v524
    %580 = vmatprep.subr.mxu0 0.0
    %581 = vmatpush1.msra.mxu0 %v525
    %582 = vmatprep.subr.mxu0 0.0
    %583 = vmatpush1.msra.mxu0 %v526
    %584 = vmatprep.subr.mxu0 0.0
    %585 = vmatpush1.msra.mxu0 %v527
    %586 = vmatprep.subr.mxu0 0.0
    %587 = vmatpush1.msra.mxu0 %v528
    %588 = vmatprep.subr.mxu0 0.0
    %589 = vmatpush1.msra.mxu0 %v529
    %590 = vmatprep.subr.mxu0 0.0
    %591 = vmatpush1.msra.mxu0 %v530
    %592 = vmatprep.subr.mxu0 0.0
    %593 = vmatpush1.msra.mxu0 %v531
    %594 = vmatprep.subr.mxu0 0.0
    %595 = vmatpush1.msra.mxu0 %v532
    %596 = vmatprep.subr.mxu0 0.0
    %597 = vmatpush1.msra.mxu0 %v533
    %598 = vmatprep.mubr.f32.mxu0 %v329
    %599 = vmatmul.mubr.f32.gmra.mrb[0].mxu0 %v328
    %v600 = vpop.f32.mrb[0].mxu0
    %v601 = vadd.f32 0.0, %v600
    %v602 = vpop.f32.mrb[0].mxu0
    %603 = vdwg.mxu0
    %604 = vmatprep.subr.mxu0 0.0
    %605 = vmatpush1.msra.mxu0 %v207
    %606 = vmatprep.subr.mxu0 0.0
    %607 = vmatpush1.msra.mxu0 %v208
    %608 = vmatprep.subr.mxu0 0.0
    %609 = vmatpush1.msra.mxu0 %v209
    %610 = vmatprep.subr.mxu0 0.0
    %611 = vmatpush1.msra.mxu0 %v210
    %612 = vmatprep.subr.mxu0 0.0
    %613 = vmatpush1.msra.mxu0 %v211
    %614 = vmatprep.subr.mxu0 0.0
    %615 = vmatpush1.msra.mxu0 %v212
    %616 = vmatprep.subr.mxu0 0.0
    %617 = vmatpush1.msra.mxu0 %v213
    %618 = vmatprep.subr.mxu0 0.0
    %619 = vmatpush1.msra.mxu0 %v214
    %620 = vmatprep.subr.mxu0 0.0
    %621 = vmatpush1.msra.mxu0 %v215
    %622 = vmatprep.subr.mxu0 0.0
    %623 = vmatpush1.msra.mxu0 %v216
    %624 = vmatprep.subr.mxu0 0.0
    %625 = vmatpush1.msra.mxu0 %v217
    %626 = vmatprep.subr.mxu0 0.0
    %627 = vmatpush1.msra.mxu0 %v218
    %628 = vmatprep.subr.mxu0 0.0
    %629 = vmatpush1.msra.mxu0 %v219
    %630 = vmatprep.subr.mxu0 0.0
    %631 = vmatpush1.msra.mxu0 %v220
    %632 = vmatprep.subr.mxu0 0.0
    %633 = vmatpush1.msra.mxu0 %v221
    %634 = vmatprep.subr.mxu0 0.0
    %635 = vmatpush1.msra.mxu0 %v222
    %636 = vmatprep.subr.mxu0 0.0
    %637 = vmatpush1.msra.mxu0 %v223
    %638 = vmatprep.subr.mxu0 0.0
    %639 = vmatpush1.msra.mxu0 %v224
    %640 = vmatprep.subr.mxu0 0.0
    %641 = vmatpush1.msra.mxu0 %v225
    %642 = vmatprep.subr.mxu0 0.0
    %643 = vmatpush1.msra.mxu0 %v226
    %644 = vmatprep.subr.mxu0 0.0
    %645 = vmatpush1.msra.mxu0 %v227
    %646 = vmatprep.subr.mxu0 0.0
    %647 = vmatpush1.msra.mxu0 %v228
    %648 = vmatprep.subr.mxu0 0.0
    %649 = vmatpush1.msra.mxu0 %v229
    %650 = vmatprep.subr.mxu0 0.0
    %651 = vmatpush1.msra.mxu0 %v230
    %652 = vmatprep.subr.mxu0 0.0
    %653 = vmatpush1.msra.mxu0 %v231
    %654 = vmatprep.subr.mxu0 0.0
    %655 = vmatpush1.msra.mxu0 %v232
    %656 = vmatprep.subr.mxu0 0.0
    %657 = vmatpush1.msra.mxu0 %v233
    %658 = vmatprep.subr.mxu0 0.0
    %659 = vmatpush1.msra.mxu0 %v234
    %660 = vmatprep.subr.mxu0 0.0
    %661 = vmatpush1.msra.mxu0 %v235
    %662 = vmatprep.subr.mxu0 0.0
    %663 = vmatpush1.msra.mxu0 %v236
    %664 = vmatprep.subr.mxu0 0.0
    %665 = vmatpush1.msra.mxu0 %v237
    %666 = vmatprep.subr.mxu0 0.0
    %667 = vmatpush1.msra.mxu0 %v238
    %668 = vmatprep.mubr.f32.mxu0 %v174
    %669 = vmatmul.mubr.f32.gmra.mrb[0].mxu0 %v173
    %v670 = vpop.f32.mrb[0].mxu0
    %v671 = vadd.f32 %v601, %v670
    %v672 = vpop.f32.mrb[0].mxu0
    %673 = vdwg.mxu0
    %v674 = vcombine.high %v47, %v47
    %v676 = vunpack.c.l.s4 1983009808
    %v677 = vunpack.c.0.s8 %v676
    %v678 = vlaneseq
    %v679 = vshrl.u32 %v678, 7
    %v680 = vsub.s32 %v677, %v679
    %v681 = vrot.slane %v674, %v680
    %682 = vrot.lane.b32.xlu0 %v246, 112
    %v683 = vpop.permute.xlu0 %682
    %684 = vrot.lane.b32.xlu0 %v681, 112
    %v685 = vpop.permute.xlu0 %684
    %vm686 = vcmask 916480
    %v687 = vsel %vm686, %v683, %v685
    %v689 = vsel %vm254, %v685, 0
    %691 = vmatprep.subr.mxu0 %v51
    %692 = vmatpush1.msra.mxu0 %v50
    %693 = vmatprep.subr.mxu0 %v53
    %694 = vmatpush1.msra.mxu0 %v52
    %695 = vmatprep.subr.mxu0 %v55
    %696 = vmatpush1.msra.mxu0 %v54
    %697 = vmatprep.subr.mxu0 %v57
    %698 = vmatpush1.msra.mxu0 %v56
    %699 = vmatprep.subr.mxu0 %v59
    %700 = vmatpush1.msra.mxu0 %v58
    %701 = vmatprep.subr.mxu0 %v61
    %702 = vmatpush1.msra.mxu0 %v60
    %703 = vmatprep.subr.mxu0 %v63
    %704 = vmatpush1.msra.mxu0 %v62
    %705 = vmatprep.subr.mxu0 %v65
    %706 = vmatpush1.msra.mxu0 %v64
    %707 = vmatprep.subr.mxu0 %v67
    %708 = vmatpush1.msra.mxu0 %v66
    %709 = vmatprep.subr.mxu0 %v69
    %710 = vmatpush1.msra.mxu0 %v68
    %711 = vmatprep.subr.mxu0 %v71
    %712 = vmatpush1.msra.mxu0 %v70
    %713 = vmatprep.subr.mxu0 %v73
    %714 = vmatpush1.msra.mxu0 %v72
    %715 = vmatprep.subr.mxu0 %v75
    %716 = vmatpush1.msra.mxu0 %v74
    %717 = vmatprep.subr.mxu0 %v77
    %718 = vmatpush1.msra.mxu0 %v76
    %719 = vmatprep.subr.mxu0 %v79
    %720 = vmatpush1.msra.mxu0 %v78
    %721 = vmatprep.subr.mxu0 %v81
    %722 = vmatpush1.msra.mxu0 %v80
    %723 = vmatprep.subr.mxu0 %v83
    %724 = vmatpush1.msra.mxu0 %v82
    %725 = vmatprep.subr.mxu0 %v85
    %726 = vmatpush1.msra.mxu0 %v84
    %727 = vmatprep.subr.mxu0 0.0
    %728 = vmatpush1.msra.mxu0 0.0
    %729 = vmatprep.subr.mxu0 0.0
    %730 = vmatpush1.msra.mxu0 0.0
    %731 = vmatprep.subr.mxu0 0.0
    %732 = vmatpush1.msra.mxu0 0.0
    %733 = vmatprep.subr.mxu0 0.0
    %734 = vmatpush1.msra.mxu0 0.0
    %735 = vmatprep.subr.mxu0 0.0
    %736 = vmatpush1.msra.mxu0 0.0
    %737 = vmatprep.subr.mxu0 0.0
    %738 = vmatpush1.msra.mxu0 0.0
    %739 = vmatprep.subr.mxu0 0.0
    %740 = vmatpush1.msra.mxu0 0.0
    %741 = vmatprep.subr.mxu0 0.0
    %742 = vmatpush1.msra.mxu0 0.0
    %743 = vmatprep.subr.mxu0 0.0
    %744 = vmatpush1.msra.mxu0 0.0
    %745 = vmatprep.subr.mxu0 0.0
    %746 = vmatpush1.msra.mxu0 0.0
    %747 = vmatprep.subr.mxu0 0.0
    %748 = vmatpush1.msra.mxu0 0.0
    %749 = vmatprep.subr.mxu0 0.0
    %750 = vmatpush1.msra.mxu0 0.0
    %751 = vmatprep.subr.mxu0 0.0
    %752 = vmatpush1.msra.mxu0 0.0
    %753 = vmatprep.subr.mxu0 0.0
    %754 = vmatpush1.msra.mxu0 0.0
    %755 = vmatprep.mubr.f32.mxu0 %v689
    %756 = vmatmul.mubr.f32.gmra.mrb[0].mxu0 %v687
    %v757 = vpop.f32.mrb[0].mxu0
    %v758 = vadd.f32 %v91, %v757
    %v759 = vpop.f32.mrb[0].mxu0
    %v760 = vadd.f32 %v95, %v759
    %761 = vdwg.mxu0
    %v762 = vmax.f32 %v758, 0.0
    %v763 = vmax.f32 %v760, 0.0
    %v764 = vld [vmem:[%s4 + $0x200] sm:$0xff]
    %v765 = vld [vmem:[%s4 + $0x208] sm:$0xff]
    %v766 = vld [vmem:[%s4 + $0x210] sm:$0xff]
    %v767 = vld [vmem:[%s4 + $0x218] sm:$0xff]
    %v768 = vld [vmem:[%s4 + $0x220] sm:$0xff]
    %v769 = vld [vmem:[%s4 + $0x228] sm:$0xff]
    %v770 = vld [vmem:[%s4 + $0x230] sm:$0xff]
    %v771 = vld [vmem:[%s4 + $0x238] sm:$0xff]
    %v772 = vld [vmem:[%s4 + $0x240] sm:$0xff]
    %v773 = vld [vmem:[%s4 + $0x248] sm:$0xff]
    %v774 = vld [vmem:[%s4 + $0x250] sm:$0xff]
    %v775 = vld [vmem:[%s4 + $0x258] sm:$0xff]
    %v776 = vld [vmem:[%s4 + $0x260] sm:$0xff]
    %v777 = vld [vmem:[%s4 + $0x268] sm:$0xff]
    %v778 = vld [vmem:[%s4 + $0x270] sm:$0xff]
    %v779 = vld [vmem:[%s4 + $0x278] sm:$0xff]
    %v780 = vld [vmem:[%s4 + $0x280] sm:$0xff]
    %v781 = vld [vmem:[%s4 + $0x288] sm:$0xff]
    %v782 = vld [vmem:[%s4 + $0x290] sm:$0xff]
    %v783 = vld [vmem:[%s4 + $0x298] sm:$0xff]
    %v784 = vld [vmem:[%s4 + $0x2a0] sm:$0xff]
    %v785 = vld [vmem:[%s4 + $0x2a8] sm:$0xff]
    %v786 = vld [vmem:[%s4 + $0x2b0] sm:$0xff]
    %v787 = vld [vmem:[%s4 + $0x2b8] sm:$0xff]
    %v788 = vld [vmem:[%s4 + $0x2c0] sm:$0xff]
    %v789 = vld [vmem:[%s4 + $0x2c8] sm:$0xff]
    %v790 = vld [vmem:[%s4 + $0x2d0] sm:$0xff]
    %v791 = vld [vmem:[%s4 + $0x2d8] sm:$0xff]
    %v792 = vld [vmem:[%s4 + $0x2e0] sm:$0xff]
    %v793 = vld [vmem:[%s4 + $0x2e8] sm:$0xff]
    %v794 = vld [vmem:[%s4 + $0x2f0] sm:$0xff]
    %v795 = vld [vmem:[%s4 + $0x2f8] sm:$0xff]
    %796 = vmatprep.subr.mxu0 0.0
    %797 = vmatpush1.msra.mxu0 %v764
    %798 = vmatprep.subr.mxu0 0.0
    %799 = vmatpush1.msra.mxu0 %v765
    %800 = vmatprep.subr.mxu0 0.0
    %801 = vmatpush1.msra.mxu0 %v766
    %802 = vmatprep.subr.mxu0 0.0
    %803 = vmatpush1.msra.mxu0 %v767
    %804 = vmatprep.subr.mxu0 0.0
    %805 = vmatpush1.msra.mxu0 %v768
    %806 = vmatprep.subr.mxu0 0.0
    %807 = vmatpush1.msra.mxu0 %v769
    %808 = vmatprep.subr.mxu0 0.0
    %809 = vmatpush1.msra.mxu0 %v770
    %810 = vmatprep.subr.mxu0 0.0
    %811 = vmatpush1.msra.mxu0 %v771
    %812 = vmatprep.subr.mxu0 0.0
    %813 = vmatpush1.msra.mxu0 %v772
    %814 = vmatprep.subr.mxu0 0.0
    %815 = vmatpush1.msra.mxu0 %v773
    %816 = vmatprep.subr.mxu0 0.0
    %817 = vmatpush1.msra.mxu0 %v774
    %818 = vmatprep.subr.mxu0 0.0
    %819 = vmatpush1.msra.mxu0 %v775
    %820 = vmatprep.subr.mxu0 0.0
    %821 = vmatpush1.msra.mxu0 %v776
    %822 = vmatprep.subr.mxu0 0.0
    %823 = vmatpush1.msra.mxu0 %v777
    %824 = vmatprep.subr.mxu0 0.0
    %825 = vmatpush1.msra.mxu0 %v778
    %826 = vmatprep.subr.mxu0 0.0
    %827 = vmatpush1.msra.mxu0 %v779
    %828 = vmatprep.subr.mxu0 0.0
    %829 = vmatpush1.msra.mxu0 %v780
    %830 = vmatprep.subr.mxu0 0.0
    %831 = vmatpush1.msra.mxu0 %v781
    %832 = vmatprep.subr.mxu0 0.0
    %833 = vmatpush1.msra.mxu0 %v782
    %834 = vmatprep.subr.mxu0 0.0
    %835 = vmatpush1.msra.mxu0 %v783
    %836 = vmatprep.subr.mxu0 0.0
    %837 = vmatpush1.msra.mxu0 %v784
    %838 = vmatprep.subr.mxu0 0.0
    %839 = vmatpush1.msra.mxu0 %v785
    %840 = vmatprep.subr.mxu0 0.0
    %841 = vmatpush1.msra.mxu0 %v786
    %842 = vmatprep.subr.mxu0 0.0
    %843 = vmatpush1.msra.mxu0 %v787
    %844 = vmatprep.subr.mxu0 0.0
    %845 = vmatpush1.msra.mxu0 %v788
    %846 = vmatprep.subr.mxu0 0.0
    %847 = vmatpush1.msra.mxu0 %v789
    %848 = vmatprep.subr.mxu0 0.0
    %849 = vmatpush1.msra.mxu0 %v790
    %850 = vmatprep.subr.mxu0 0.0
    %851 = vmatpush1.msra.mxu0 %v791
    %852 = vmatprep.subr.mxu0 0.0
    %853 = vmatpush1.msra.mxu0 %v792
    %854 = vmatprep.subr.mxu0 0.0
    %855 = vmatpush1.msra.mxu0 %v793
    %856 = vmatprep.subr.mxu0 0.0
    %857 = vmatpush1.msra.mxu0 %v794
    %858 = vmatprep.subr.mxu0 0.0
    %859 = vmatpush1.msra.mxu0 %v795
    %860 = vmatprep.mubr.f32.mxu0 %v763
    %861 = vmatmul.mubr.f32.gmra.mrb[0].mxu0 %v762
    %v862 = vpop.f32.mrb[0].mxu0
    %v863 = vadd.f32 0.0, %v862
    %v864 = vpop.f32.mrb[0].mxu0
    %865 = vdwg.mxu0
    %v866 = vadd.f32 %v499, %v863
    %v867 = vld [vmem:[%s6 + $0x200] sm:$0xff]
    %v868 = vld [vmem:[%s6 + $0x208] sm:$0xff]
    %v869 = vld [vmem:[%s6 + $0x210] sm:$0xff]
    %v870 = vld [vmem:[%s6 + $0x218] sm:$0xff]
    %v871 = vld [vmem:[%s6 + $0x220] sm:$0xff]
    %v872 = vld [vmem:[%s6 + $0x228] sm:$0xff]
    %v873 = vld [vmem:[%s6 + $0x230] sm:$0xff]
    %v874 = vld [vmem:[%s6 + $0x238] sm:$0xff]
    %v875 = vld [vmem:[%s6 + $0x240] sm:$0xff]
    %v876 = vld [vmem:[%s6 + $0x248] sm:$0xff]
    %v877 = vld [vmem:[%s6 + $0x250] sm:$0xff]
    %v878 = vld [vmem:[%s6 + $0x258] sm:$0xff]
    %v879 = vld [vmem:[%s6 + $0x260] sm:$0xff]
    %v880 = vld [vmem:[%s6 + $0x268] sm:$0xff]
    %v881 = vld [vmem:[%s6 + $0x270] sm:$0xff]
    %v882 = vld [vmem:[%s6 + $0x278] sm:$0xff]
    %v883 = vld [vmem:[%s6 + $0x280] sm:$0xff]
    %v884 = vld [vmem:[%s6 + $0x288] sm:$0xff]
    %v885 = vld [vmem:[%s6 + $0x290] sm:$0xff]
    %v886 = vld [vmem:[%s6 + $0x298] sm:$0xff]
    %v887 = vld [vmem:[%s6 + $0x2a0] sm:$0xff]
    %v888 = vld [vmem:[%s6 + $0x2a8] sm:$0xff]
    %v889 = vld [vmem:[%s6 + $0x2b0] sm:$0xff]
    %v890 = vld [vmem:[%s6 + $0x2b8] sm:$0xff]
    %v891 = vld [vmem:[%s6 + $0x2c0] sm:$0xff]
    %v892 = vld [vmem:[%s6 + $0x2c8] sm:$0xff]
    %v893 = vld [vmem:[%s6 + $0x2d0] sm:$0xff]
    %v894 = vld [vmem:[%s6 + $0x2d8] sm:$0xff]
    %v895 = vld [vmem:[%s6 + $0x2e0] sm:$0xff]
    %v896 = vld [vmem:[%s6 + $0x2e8] sm:$0xff]
    %v897 = vld [vmem:[%s6 + $0x2f0] sm:$0xff]
    %v898 = vld [vmem:[%s6 + $0x2f8] sm:$0xff]
    %899 = vmatprep.subr.mxu0 0.0
    %900 = vmatpush1.msra.mxu0 %v867
    %901 = vmatprep.subr.mxu0 0.0
    %902 = vmatpush1.msra.mxu0 %v868
    %903 = vmatprep.subr.mxu0 0.0
    %904 = vmatpush1.msra.mxu0 %v869
    %905 = vmatprep.subr.mxu0 0.0
    %906 = vmatpush1.msra.mxu0 %v870
    %907 = vmatprep.subr.mxu0 0.0
    %908 = vmatpush1.msra.mxu0 %v871
    %909 = vmatprep.subr.mxu0 0.0
    %910 = vmatpush1.msra.mxu0 %v872
    %911 = vmatprep.subr.mxu0 0.0
    %912 = vmatpush1.msra.mxu0 %v873
    %913 = vmatprep.subr.mxu0 0.0
    %914 = vmatpush1.msra.mxu0 %v874
    %915 = vmatprep.subr.mxu0 0.0
    %916 = vmatpush1.msra.mxu0 %v875
    %917 = vmatprep.subr.mxu0 0.0
    %918 = vmatpush1.msra.mxu0 %v876
    %919 = vmatprep.subr.mxu0 0.0
    %920 = vmatpush1.msra.mxu0 %v877
    %921 = vmatprep.subr.mxu0 0.0
    %922 = vmatpush1.msra.mxu0 %v878
    %923 = vmatprep.subr.mxu0 0.0
    %924 = vmatpush1.msra.mxu0 %v879
    %925 = vmatprep.subr.mxu0 0.0
    %926 = vmatpush1.msra.mxu0 %v880
    %927 = vmatprep.subr.mxu0 0.0
    %928 = vmatpush1.msra.mxu0 %v881
    %929 = vmatprep.subr.mxu0 0.0
    %930 = vmatpush1.msra.mxu0 %v882
    %931 = vmatprep.subr.mxu0 0.0
    %932 = vmatpush1.msra.mxu0 %v883
    %933 = vmatprep.subr.mxu0 0.0
    %934 = vmatpush1.msra.mxu0 %v884
    %935 = vmatprep.subr.mxu0 0.0
    %936 = vmatpush1.msra.mxu0 %v885
    %937 = vmatprep.subr.mxu0 0.0
    %938 = vmatpush1.msra.mxu0 %v886
    %939 = vmatprep.subr.mxu0 0.0
    %940 = vmatpush1.msra.mxu0 %v887
    %941 = vmatprep.subr.mxu0 0.0
    %942 = vmatpush1.msra.mxu0 %v888
    %943 = vmatprep.subr.mxu0 0.0
    %944 = vmatpush1.msra.mxu0 %v889
    %945 = vmatprep.subr.mxu0 0.0
    %946 = vmatpush1.msra.mxu0 %v890
    %947 = vmatprep.subr.mxu0 0.0
    %948 = vmatpush1.msra.mxu0 %v891
    %949 = vmatprep.subr.mxu0 0.0
    %950 = vmatpush1.msra.mxu0 %v892
    %951 = vmatprep.subr.mxu0 0.0
    %952 = vmatpush1.msra.mxu0 %v893
    %953 = vmatprep.subr.mxu0 0.0
    %954 = vmatpush1.msra.mxu0 %v894
    %955 = vmatprep.subr.mxu0 0.0
    %956 = vmatpush1.msra.mxu0 %v895
    %957 = vmatprep.subr.mxu0 0.0
    %958 = vmatpush1.msra.mxu0 %v896
    %959 = vmatprep.subr.mxu0 0.0
    %960 = vmatpush1.msra.mxu0 %v897
    %961 = vmatprep.subr.mxu0 0.0
    %962 = vmatpush1.msra.mxu0 %v898
    %963 = vmatprep.mubr.f32.mxu0 %v763
    %964 = vmatmul.mubr.f32.gmra.mrb[0].mxu0 %v762
    %v965 = vpop.f32.mrb[0].mxu0
    %v966 = vadd.f32 0.0, %v965
    %v967 = vpop.f32.mrb[0].mxu0
    %968 = vdwg.mxu0
    %v969 = vadd.f32 %v671, %v966
    %970 = vrot.lane.b32.xlu0 %v246, 16
    %v971 = vpop.permute.xlu0 %970
    %972 = vrot.lane.b32.xlu0 %v681, 16
    %v973 = vpop.permute.xlu0 %972
    %v974 = vsel %vm254, %v971, %v973
    %v976 = vsel %vm254, %v973, 0
    %978 = vmatprep.subr.mxu0 %v51
    %979 = vmatpush1.msra.mxu0 %v50
    %980 = vmatprep.subr.mxu0 %v53
    %981 = vmatpush1.msra.mxu0 %v52
    %982 = vmatprep.subr.mxu0 %v55
    %983 = vmatpush1.msra.mxu0 %v54
    %984 = vmatprep.subr.mxu0 %v57
    %985 = vmatpush1.msra.mxu0 %v56
    %986 = vmatprep.subr.mxu0 %v59
    %987 = vmatpush1.msra.mxu0 %v58
    %988 = vmatprep.subr.mxu0 %v61
    %989 = vmatpush1.msra.mxu0 %v60
    %990 = vmatprep.subr.mxu0 %v63
    %991 = vmatpush1.msra.mxu0 %v62
    %992 = vmatprep.subr.mxu0 %v65
    %993 = vmatpush1.msra.mxu0 %v64
    %994 = vmatprep.subr.mxu0 %v67
    %995 = vmatpush1.msra.mxu0 %v66
    %996 = vmatprep.subr.mxu0 %v69
    %997 = vmatpush1.msra.mxu0 %v68
    %998 = vmatprep.subr.mxu0 %v71
    %999 = vmatpush1.msra.mxu0 %v70
    %1000 = vmatprep.subr.mxu0 %v73
    %1001 = vmatpush1.msra.mxu0 %v72
    %1002 = vmatprep.subr.mxu0 %v75
    %1003 = vmatpush1.msra.mxu0 %v74
    %1004 = vmatprep.subr.mxu0 %v77
    %1005 = vmatpush1.msra.mxu0 %v76
    %1006 = vmatprep.subr.mxu0 %v79
    %1007 = vmatpush1.msra.mxu0 %v78
    %1008 = vmatprep.subr.mxu0 %v81
    %1009 = vmatpush1.msra.mxu0 %v80
    %1010 = vmatprep.subr.mxu0 %v83
    %1011 = vmatpush1.msra.mxu0 %v82
    %1012 = vmatprep.subr.mxu0 %v85
    %1013 = vmatpush1.msra.mxu0 %v84
    %1014 = vmatprep.subr.mxu0 0.0
    %1015 = vmatpush1.msra.mxu0 0.0
    %1016 = vmatprep.subr.mxu0 0.0
    %1017 = vmatpush1.msra.mxu0 0.0
    %1018 = vmatprep.subr.mxu0 0.0
    %1019 = vmatpush1.msra.mxu0 0.0
    %1020 = vmatprep.subr.mxu0 0.0
    %1021 = vmatpush1.msra.mxu0 0.0
    %1022 = vmatprep.subr.mxu0 0.0
    %1023 = vmatpush1.msra.mxu0 0.0
    %1024 = vmatprep.subr.mxu0 0.0
    %1025 = vmatpush1.msra.mxu0 0.0
    %1026 = vmatprep.subr.mxu0 0.0
    %1027 = vmatpush1.msra.mxu0 0.0
    %1028 = vmatprep.subr.mxu0 0.0
    %1029 = vmatpush1.msra.mxu0 0.0
    %1030 = vmatprep.subr.mxu0 0.0
    %1031 = vmatpush1.msra.mxu0 0.0
    %1032 = vmatprep.subr.mxu0 0.0
    %1033 = vmatpush1.msra.mxu0 0.0
    %1034 = vmatprep.subr.mxu0 0.0
    %1035 = vmatpush1.msra.mxu0 0.0
    %1036 = vmatprep.subr.mxu0 0.0
    %1037 = vmatpush1.msra.mxu0 0.0
    %1038 = vmatprep.subr.mxu0 0.0
    %1039 = vmatpush1.msra.mxu0 0.0
    %1040 = vmatprep.subr.mxu0 0.0
    %1041 = vmatpush1.msra.mxu0 0.0
    %1042 = vmatprep.mubr.f32.mxu0 %v976
    %1043 = vmatmul.mubr.f32.gmra.mrb[0].mxu0 %v974
    %v1044 = vpop.f32.mrb[0].mxu0
    %v1045 = vadd.f32 %v91, %v1044
    %v1046 = vpop.f32.mrb[0].mxu0
    %v1047 = vadd.f32 %v95, %v1046
    %1048 = vdwg.mxu0
    %v1049 = vmax.f32 %v1045, 0.0
    %v1050 = vmax.f32 %v1047, 0.0
    %v1051 = vld [vmem:[%s4 + $0x300] sm:$0xff]
    %v1052 = vld [vmem:[%s4 + $0x308] sm:$0xff]
    %v1053 = vld [vmem:[%s4 + $0x310] sm:$0xff]
    %v1054 = vld [vmem:[%s4 + $0x318] sm:$0xff]
    %v1055 = vld [vmem:[%s4 + $0x320] sm:$0xff]
    %v1056 = vld [vmem:[%s4 + $0x328] sm:$0xff]
    %v1057 = vld [vmem:[%s4 + $0x330] sm:$0xff]
    %v1058 = vld [vmem:[%s4 + $0x338] sm:$0xff]
    %v1059 = vld [vmem:[%s4 + $0x340] sm:$0xff]
    %v1060 = vld [vmem:[%s4 + $0x348] sm:$0xff]
    %v1061 = vld [vmem:[%s4 + $0x350] sm:$0xff]
    %v1062 = vld [vmem:[%s4 + $0x358] sm:$0xff]
    %v1063 = vld [vmem:[%s4 + $0x360] sm:$0xff]
    %v1064 = vld [vmem:[%s4 + $0x368] sm:$0xff]
    %v1065 = vld [vmem:[%s4 + $0x370] sm:$0xff]
    %v1066 = vld [vmem:[%s4 + $0x378] sm:$0xff]
    %v1067 = vld [vmem:[%s4 + $0x380] sm:$0xff]
    %v1068 = vld [vmem:[%s4 + $0x388] sm:$0xff]
    %v1069 = vld [vmem:[%s4 + $0x390] sm:$0xff]
    %v1070 = vld [vmem:[%s4 + $0x398] sm:$0xff]
    %v1071 = vld [vmem:[%s4 + $0x3a0] sm:$0xff]
    %v1072 = vld [vmem:[%s4 + $0x3a8] sm:$0xff]
    %v1073 = vld [vmem:[%s4 + $0x3b0] sm:$0xff]
    %v1074 = vld [vmem:[%s4 + $0x3b8] sm:$0xff]
    %v1075 = vld [vmem:[%s4 + $0x3c0] sm:$0xff]
    %v1076 = vld [vmem:[%s4 + $0x3c8] sm:$0xff]
    %v1077 = vld [vmem:[%s4 + $0x3d0] sm:$0xff]
    %v1078 = vld [vmem:[%s4 + $0x3d8] sm:$0xff]
    %v1079 = vld [vmem:[%s4 + $0x3e0] sm:$0xff]
    %v1080 = vld [vmem:[%s4 + $0x3e8] sm:$0xff]
    %v1081 = vld [vmem:[%s4 + $0x3f0] sm:$0xff]
    %v1082 = vld [vmem:[%s4 + $0x3f8] sm:$0xff]
    %1083 = vmatprep.subr.mxu0 0.0
    %1084 = vmatpush1.msra.mxu0 %v1051
    %1085 = vmatprep.subr.mxu0 0.0
    %1086 = vmatpush1.msra.mxu0 %v1052
    %1087 = vmatprep.subr.mxu0 0.0
    %1088 = vmatpush1.msra.mxu0 %v1053
    %1089 = vmatprep.subr.mxu0 0.0
    %1090 = vmatpush1.msra.mxu0 %v1054
    %1091 = vmatprep.subr.mxu0 0.0
    %1092 = vmatpush1.msra.mxu0 %v1055
    %1093 = vmatprep.subr.mxu0 0.0
    %1094 = vmatpush1.msra.mxu0 %v1056
    %1095 = vmatprep.subr.mxu0 0.0
    %1096 = vmatpush1.msra.mxu0 %v1057
    %1097 = vmatprep.subr.mxu0 0.0
    %1098 = vmatpush1.msra.mxu0 %v1058
    %1099 = vmatprep.subr.mxu0 0.0
    %1100 = vmatpush1.msra.mxu0 %v1059
    %1101 = vmatprep.subr.mxu0 0.0
    %1102 = vmatpush1.msra.mxu0 %v1060
    %1103 = vmatprep.subr.mxu0 0.0
    %1104 = vmatpush1.msra.mxu0 %v1061
    %1105 = vmatprep.subr.mxu0 0.0
    %1106 = vmatpush1.msra.mxu0 %v1062
    %1107 = vmatprep.subr.mxu0 0.0
    %1108 = vmatpush1.msra.mxu0 %v1063
    %1109 = vmatprep.subr.mxu0 0.0
    %1110 = vmatpush1.msra.mxu0 %v1064
    %1111 = vmatprep.subr.mxu0 0.0
    %1112 = vmatpush1.msra.mxu0 %v1065
    %1113 = vmatprep.subr.mxu0 0.0
    %1114 = vmatpush1.msra.mxu0 %v1066
    %1115 = vmatprep.subr.mxu0 0.0
    %1116 = vmatpush1.msra.mxu0 %v1067
    %1117 = vmatprep.subr.mxu0 0.0
    %1118 = vmatpush1.msra.mxu0 %v1068
    %1119 = vmatprep.subr.mxu0 0.0
    %1120 = vmatpush1.msra.mxu0 %v1069
    %1121 = vmatprep.subr.mxu0 0.0
    %1122 = vmatpush1.msra.mxu0 %v1070
    %1123 = vmatprep.subr.mxu0 0.0
    %1124 = vmatpush1.msra.mxu0 %v1071
    %1125 = vmatprep.subr.mxu0 0.0
    %1126 = vmatpush1.msra.mxu0 %v1072
    %1127 = vmatprep.subr.mxu0 0.0
    %1128 = vmatpush1.msra.mxu0 %v1073
    %1129 = vmatprep.subr.mxu0 0.0
    %1130 = vmatpush1.msra.mxu0 %v1074
    %1131 = vmatprep.subr.mxu0 0.0
    %1132 = vmatpush1.msra.mxu0 %v1075
    %1133 = vmatprep.subr.mxu0 0.0
    %1134 = vmatpush1.msra.mxu0 %v1076
    %1135 = vmatprep.subr.mxu0 0.0
    %1136 = vmatpush1.msra.mxu0 %v1077
    %1137 = vmatprep.subr.mxu0 0.0
    %1138 = vmatpush1.msra.mxu0 %v1078
    %1139 = vmatprep.subr.mxu0 0.0
    %1140 = vmatpush1.msra.mxu0 %v1079
    %1141 = vmatprep.subr.mxu0 0.0
    %1142 = vmatpush1.msra.mxu0 %v1080
    %1143 = vmatprep.subr.mxu0 0.0
    %1144 = vmatpush1.msra.mxu0 %v1081
    %1145 = vmatprep.subr.mxu0 0.0
    %1146 = vmatpush1.msra.mxu0 %v1082
    %1147 = vmatprep.mubr.f32.mxu0 %v1050
    %1148 = vmatmul.mubr.f32.gmra.mrb[0].mxu0 %v1049
    %v1149 = vpop.f32.mrb[0].mxu0
    %v1150 = vadd.f32 0.0, %v1149
    %v1151 = vpop.f32.mrb[0].mxu0
    %1152 = vdwg.mxu0
    %v1153 = vadd.f32 %v866, %v1150
    %v1154 = vld [vmem:[%s6 + $0x300] sm:$0xff]
    %v1155 = vld [vmem:[%s6 + $0x308] sm:$0xff]
    %v1156 = vld [vmem:[%s6 + $0x310] sm:$0xff]
    %v1157 = vld [vmem:[%s6 + $0x318] sm:$0xff]
    %v1158 = vld [vmem:[%s6 + $0x320] sm:$0xff]
    %v1159 = vld [vmem:[%s6 + $0x328] sm:$0xff]
    %v1160 = vld [vmem:[%s6 + $0x330] sm:$0xff]
    %v1161 = vld [vmem:[%s6 + $0x338] sm:$0xff]
    %v1162 = vld [vmem:[%s6 + $0x340] sm:$0xff]
    %v1163 = vld [vmem:[%s6 + $0x348] sm:$0xff]
    %v1164 = vld [vmem:[%s6 + $0x350] sm:$0xff]
    %v1165 = vld [vmem:[%s6 + $0x358] sm:$0xff]
    %v1166 = vld [vmem:[%s6 + $0x360] sm:$0xff]
    %v1167 = vld [vmem:[%s6 + $0x368] sm:$0xff]
    %v1168 = vld [vmem:[%s6 + $0x370] sm:$0xff]
    %v1169 = vld [vmem:[%s6 + $0x378] sm:$0xff]
    %v1170 = vld [vmem:[%s6 + $0x380] sm:$0xff]
    %v1171 = vld [vmem:[%s6 + $0x388] sm:$0xff]
    %v1172 = vld [vmem:[%s6 + $0x390] sm:$0xff]
    %v1173 = vld [vmem:[%s6 + $0x398] sm:$0xff]
    %v1174 = vld [vmem:[%s6 + $0x3a0] sm:$0xff]
    %v1175 = vld [vmem:[%s6 + $0x3a8] sm:$0xff]
    %v1176 = vld [vmem:[%s6 + $0x3b0] sm:$0xff]
    %v1177 = vld [vmem:[%s6 + $0x3b8] sm:$0xff]
    %v1178 = vld [vmem:[%s6 + $0x3c0] sm:$0xff]
    %v1179 = vld [vmem:[%s6 + $0x3c8] sm:$0xff]
    %v1180 = vld [vmem:[%s6 + $0x3d0] sm:$0xff]
    %v1181 = vld [vmem:[%s6 + $0x3d8] sm:$0xff]
    %v1182 = vld [vmem:[%s6 + $0x3e0] sm:$0xff]
    %v1183 = vld [vmem:[%s6 + $0x3e8] sm:$0xff]
    %v1184 = vld [vmem:[%s6 + $0x3f0] sm:$0xff]
    %v1185 = vld [vmem:[%s6 + $0x3f8] sm:$0xff]
    %1186 = vmatprep.subr.mxu0 0.0
    %1187 = vmatpush1.msra.mxu0 %v1154
    %1188 = vmatprep.subr.mxu0 0.0
    %1189 = vmatpush1.msra.mxu0 %v1155
    %1190 = vmatprep.subr.mxu0 0.0
    %1191 = vmatpush1.msra.mxu0 %v1156
    %1192 = vmatprep.subr.mxu0 0.0
    %1193 = vmatpush1.msra.mxu0 %v1157
    %1194 = vmatprep.subr.mxu0 0.0
    %1195 = vmatpush1.msra.mxu0 %v1158
    %1196 = vmatprep.subr.mxu0 0.0
    %1197 = vmatpush1.msra.mxu0 %v1159
    %1198 = vmatprep.subr.mxu0 0.0
    %1199 = vmatpush1.msra.mxu0 %v1160
    %1200 = vmatprep.subr.mxu0 0.0
    %1201 = vmatpush1.msra.mxu0 %v1161
    %1202 = vmatprep.subr.mxu0 0.0
    %1203 = vmatpush1.msra.mxu0 %v1162
    %1204 = vmatprep.subr.mxu0 0.0
    %1205 = vmatpush1.msra.mxu0 %v1163
    %1206 = vmatprep.subr.mxu0 0.0
    %1207 = vmatpush1.msra.mxu0 %v1164
    %1208 = vmatprep.subr.mxu0 0.0
    %1209 = vmatpush1.msra.mxu0 %v1165
    %1210 = vmatprep.subr.mxu0 0.0
    %1211 = vmatpush1.msra.mxu0 %v1166
    %1212 = vmatprep.subr.mxu0 0.0
    %1213 = vmatpush1.msra.mxu0 %v1167
    %1214 = vmatprep.subr.mxu0 0.0
    %1215 = vmatpush1.msra.mxu0 %v1168
    %1216 = vmatprep.subr.mxu0 0.0
    %1217 = vmatpush1.msra.mxu0 %v1169
    %1218 = vmatprep.subr.mxu0 0.0
    %1219 = vmatpush1.msra.mxu0 %v1170
    %1220 = vmatprep.subr.mxu0 0.0
    %1221 = vmatpush1.msra.mxu0 %v1171
    %1222 = vmatprep.subr.mxu0 0.0
    %1223 = vmatpush1.msra.mxu0 %v1172
    %1224 = vmatprep.subr.mxu0 0.0
    %1225 = vmatpush1.msra.mxu0 %v1173
    %1226 = vmatprep.subr.mxu0 0.0
    %1227 = vmatpush1.msra.mxu0 %v1174
    %1228 = vmatprep.subr.mxu0 0.0
    %1229 = vmatpush1.msra.mxu0 %v1175
    %1230 = vmatprep.subr.mxu0 0.0
    %1231 = vmatpush1.msra.mxu0 %v1176
    %1232 = vmatprep.subr.mxu0 0.0
    %1233 = vmatpush1.msra.mxu0 %v1177
    %1234 = vmatprep.subr.mxu0 0.0
    %1235 = vmatpush1.msra.mxu0 %v1178
    %1236 = vmatprep.subr.mxu0 0.0
    %1237 = vmatpush1.msra.mxu0 %v1179
    %1238 = vmatprep.subr.mxu0 0.0
    %1239 = vmatpush1.msra.mxu0 %v1180
    %1240 = vmatprep.subr.mxu0 0.0
    %1241 = vmatpush1.msra.mxu0 %v1181
    %1242 = vmatprep.subr.mxu0 0.0
    %1243 = vmatpush1.msra.mxu0 %v1182
    %1244 = vmatprep.subr.mxu0 0.0
    %1245 = vmatpush1.msra.mxu0 %v1183
    %1246 = vmatprep.subr.mxu0 0.0
    %1247 = vmatpush1.msra.mxu0 %v1184
    %1248 = vmatprep.subr.mxu0 0.0
    %1249 = vmatpush1.msra.mxu0 %v1185
    %1250 = vmatprep.mubr.f32.mxu0 %v1050
    %1251 = vmatmul.mubr.f32.gmra.mrb[0].mxu0 %v1049
    %v1252 = vpop.f32.mrb[0].mxu0
    %v1253 = vadd.f32 0.0, %v1252
    %v1254 = vpop.f32.mrb[0].mxu0
    %1255 = vdwg.mxu0
    %v1256 = vadd.f32 %v969, %v1253
    %v1257 = vcombine.high %v681, %v681
    %1258 = vrot.lane.b32.xlu0 %v681, 48
    %v1259 = vpop.permute.xlu0 %1258
    %1260 = vrot.lane.b32.xlu0 %v1257, 48
    %v1261 = vpop.permute.xlu0 %1260
    %vm1262 = vcmask 392192
    %v1263 = vsel %vm1262, %v1259, %v1261
    %v1265 = vsel %vm254, %v1261, 0
    %1267 = vmatprep.subr.mxu0 %v51
    %1268 = vmatpush1.msra.mxu0 %v50
    %1269 = vmatprep.subr.mxu0 %v53
    %1270 = vmatpush1.msra.mxu0 %v52
    %1271 = vmatprep.subr.mxu0 %v55
    %1272 = vmatpush1.msra.mxu0 %v54
    %1273 = vmatprep.subr.mxu0 %v57
    %1274 = vmatpush1.msra.mxu0 %v56
    %1275 = vmatprep.subr.mxu0 %v59
    %1276 = vmatpush1.msra.mxu0 %v58
    %1277 = vmatprep.subr.mxu0 %v61
    %1278 = vmatpush1.msra.mxu0 %v60
    %1279 = vmatprep.subr.mxu0 %v63
    %1280 = vmatpush1.msra.mxu0 %v62
    %1281 = vmatprep.subr.mxu0 %v65
    %1282 = vmatpush1.msra.mxu0 %v64
    %1283 = vmatprep.subr.mxu0 %v67
    %1284 = vmatpush1.msra.mxu0 %v66
    %1285 = vmatprep.subr.mxu0 %v69
    %1286 = vmatpush1.msra.mxu0 %v68
    %1287 = vmatprep.subr.mxu0 %v71
    %1288 = vmatpush1.msra.mxu0 %v70
    %1289 = vmatprep.subr.mxu0 %v73
    %1290 = vmatpush1.msra.mxu0 %v72
    %1291 = vmatprep.subr.mxu0 %v75
    %1292 = vmatpush1.msra.mxu0 %v74
    %1293 = vmatprep.subr.mxu0 %v77
    %1294 = vmatpush1.msra.mxu0 %v76
    %1295 = vmatprep.subr.mxu0 %v79
    %1296 = vmatpush1.msra.mxu0 %v78
    %1297 = vmatprep.subr.mxu0 %v81
    %1298 = vmatpush1.msra.mxu0 %v80
    %1299 = vmatprep.subr.mxu0 %v83
    %1300 = vmatpush1.msra.mxu0 %v82
    %1301 = vmatprep.subr.mxu0 %v85
    %1302 = vmatpush1.msra.mxu0 %v84
    %1303 = vmatprep.subr.mxu0 0.0
    %1304 = vmatpush1.msra.mxu0 0.0
    %1305 = vmatprep.subr.mxu0 0.0
    %1306 = vmatpush1.msra.mxu0 0.0
    %1307 = vmatprep.subr.mxu0 0.0
    %1308 = vmatpush1.msra.mxu0 0.0
    %1309 = vmatprep.subr.mxu0 0.0
    %1310 = vmatpush1.msra.mxu0 0.0
    %1311 = vmatprep.subr.mxu0 0.0
    %1312 = vmatpush1.msra.mxu0 0.0
    %1313 = vmatprep.subr.mxu0 0.0
    %1314 = vmatpush1.msra.mxu0 0.0
    %1315 = vmatprep.subr.mxu0 0.0
    %1316 = vmatpush1.msra.mxu0 0.0
    %1317 = vmatprep.subr.mxu0 0.0
    %1318 = vmatpush1.msra.mxu0 0.0
    %1319 = vmatprep.subr.mxu0 0.0
    %1320 = vmatpush1.msra.mxu0 0.0
    %1321 = vmatprep.subr.mxu0 0.0
    %1322 = vmatpush1.msra.mxu0 0.0
    %1323 = vmatprep.subr.mxu0 0.0
    %1324 = vmatpush1.msra.mxu0 0.0
    %1325 = vmatprep.subr.mxu0 0.0
    %1326 = vmatpush1.msra.mxu0 0.0
    %1327 = vmatprep.subr.mxu0 0.0
    %1328 = vmatpush1.msra.mxu0 0.0
    %1329 = vmatprep.subr.mxu0 0.0
    %1330 = vmatpush1.msra.mxu0 0.0
    %1331 = vmatprep.mubr.f32.mxu0 %v1265
    %1332 = vmatmul.mubr.f32.gmra.mrb[0].mxu0 %v1263
    %v1333 = vpop.f32.mrb[0].mxu0
    %v1334 = vadd.f32 %v91, %v1333
    %v1335 = vpop.f32.mrb[0].mxu0
    %v1336 = vadd.f32 %v95, %v1335
    %1337 = vdwg.mxu0
    %v1338 = vmax.f32 %v1334, 0.0
    %v1339 = vmax.f32 %v1336, 0.0
    %v1340 = vld [vmem:[%s4 + $0x400] sm:$0xff]
    %v1341 = vld [vmem:[%s4 + $0x408] sm:$0xff]
    %v1342 = vld [vmem:[%s4 + $0x410] sm:$0xff]
    %v1343 = vld [vmem:[%s4 + $0x418] sm:$0xff]
    %v1344 = vld [vmem:[%s4 + $0x420] sm:$0xff]
    %v1345 = vld [vmem:[%s4 + $0x428] sm:$0xff]
    %v1346 = vld [vmem:[%s4 + $0x430] sm:$0xff]
    %v1347 = vld [vmem:[%s4 + $0x438] sm:$0xff]
    %v1348 = vld [vmem:[%s4 + $0x440] sm:$0xff]
    %v1349 = vld [vmem:[%s4 + $0x448] sm:$0xff]
    %v1350 = vld [vmem:[%s4 + $0x450] sm:$0xff]
    %v1351 = vld [vmem:[%s4 + $0x458] sm:$0xff]
    %v1352 = vld [vmem:[%s4 + $0x460] sm:$0xff]
    %v1353 = vld [vmem:[%s4 + $0x468] sm:$0xff]
    %v1354 = vld [vmem:[%s4 + $0x470] sm:$0xff]
    %v1355 = vld [vmem:[%s4 + $0x478] sm:$0xff]
    %v1356 = vld [vmem:[%s4 + $0x480] sm:$0xff]
    %v1357 = vld [vmem:[%s4 + $0x488] sm:$0xff]
    %v1358 = vld [vmem:[%s4 + $0x490] sm:$0xff]
    %v1359 = vld [vmem:[%s4 + $0x498] sm:$0xff]
    %v1360 = vld [vmem:[%s4 + $0x4a0] sm:$0xff]
    %v1361 = vld [vmem:[%s4 + $0x4a8] sm:$0xff]
    %v1362 = vld [vmem:[%s4 + $0x4b0] sm:$0xff]
    %v1363 = vld [vmem:[%s4 + $0x4b8] sm:$0xff]
    %v1364 = vld [vmem:[%s4 + $0x4c0] sm:$0xff]
    %v1365 = vld [vmem:[%s4 + $0x4c8] sm:$0xff]
    %v1366 = vld [vmem:[%s4 + $0x4d0] sm:$0xff]
    %v1367 = vld [vmem:[%s4 + $0x4d8] sm:$0xff]
    %v1368 = vld [vmem:[%s4 + $0x4e0] sm:$0xff]
    %v1369 = vld [vmem:[%s4 + $0x4e8] sm:$0xff]
    %v1370 = vld [vmem:[%s4 + $0x4f0] sm:$0xff]
    %v1371 = vld [vmem:[%s4 + $0x4f8] sm:$0xff]
    %1372 = vmatprep.subr.mxu0 0.0
    %1373 = vmatpush1.msra.mxu0 %v1340
    %1374 = vmatprep.subr.mxu0 0.0
    %1375 = vmatpush1.msra.mxu0 %v1341
    %1376 = vmatprep.subr.mxu0 0.0
    %1377 = vmatpush1.msra.mxu0 %v1342
    %1378 = vmatprep.subr.mxu0 0.0
    %1379 = vmatpush1.msra.mxu0 %v1343
    %1380 = vmatprep.subr.mxu0 0.0
    %1381 = vmatpush1.msra.mxu0 %v1344
    %1382 = vmatprep.subr.mxu0 0.0
    %1383 = vmatpush1.msra.mxu0 %v1345
    %1384 = vmatprep.subr.mxu0 0.0
    %1385 = vmatpush1.msra.mxu0 %v1346
    %1386 = vmatprep.subr.mxu0 0.0
    %1387 = vmatpush1.msra.mxu0 %v1347
    %1388 = vmatprep.subr.mxu0 0.0
    %1389 = vmatpush1.msra.mxu0 %v1348
    %1390 = vmatprep.subr.mxu0 0.0
    %1391 = vmatpush1.msra.mxu0 %v1349
    %1392 = vmatprep.subr.mxu0 0.0
    %1393 = vmatpush1.msra.mxu0 %v1350
    %1394 = vmatprep.subr.mxu0 0.0
    %1395 = vmatpush1.msra.mxu0 %v1351
    %1396 = vmatprep.subr.mxu0 0.0
    %1397 = vmatpush1.msra.mxu0 %v1352
    %1398 = vmatprep.subr.mxu0 0.0
    %1399 = vmatpush1.msra.mxu0 %v1353
    %1400 = vmatprep.subr.mxu0 0.0
    %1401 = vmatpush1.msra.mxu0 %v1354
    %1402 = vmatprep.subr.mxu0 0.0
    %1403 = vmatpush1.msra.mxu0 %v1355
    %1404 = vmatprep.subr.mxu0 0.0
    %1405 = vmatpush1.msra.mxu0 %v1356
    %1406 = vmatprep.subr.mxu0 0.0
    %1407 = vmatpush1.msra.mxu0 %v1357
    %1408 = vmatprep.subr.mxu0 0.0
    %1409 = vmatpush1.msra.mxu0 %v1358
    %1410 = vmatprep.subr.mxu0 0.0
    %1411 = vmatpush1.msra.mxu0 %v1359
    %1412 = vmatprep.subr.mxu0 0.0
    %1413 = vmatpush1.msra.mxu0 %v1360
    %1414 = vmatprep.subr.mxu0 0.0
    %1415 = vmatpush1.msra.mxu0 %v1361
    %1416 = vmatprep.subr.mxu0 0.0
    %1417 = vmatpush1.msra.mxu0 %v1362
    %1418 = vmatprep.subr.mxu0 0.0
    %1419 = vmatpush1.msra.mxu0 %v1363
    %1420 = vmatprep.subr.mxu0 0.0
    %1421 = vmatpush1.msra.mxu0 %v1364
    %1422 = vmatprep.subr.mxu0 0.0
    %1423 = vmatpush1.msra.mxu0 %v1365
    %1424 = vmatprep.subr.mxu0 0.0
    %1425 = vmatpush1.msra.mxu0 %v1366
    %1426 = vmatprep.subr.mxu0 0.0
    %1427 = vmatpush1.msra.mxu0 %v1367
    %1428 = vmatprep.subr.mxu0 0.0
    %1429 = vmatpush1.msra.mxu0 %v1368
    %1430 = vmatprep.subr.mxu0 0.0
    %1431 = vmatpush1.msra.mxu0 %v1369
    %1432 = vmatprep.subr.mxu0 0.0
    %1433 = vmatpush1.msra.mxu0 %v1370
    %1434 = vmatprep.subr.mxu0 0.0
    %1435 = vmatpush1.msra.mxu0 %v1371
    %1436 = vmatprep.mubr.f32.mxu0 %v1339
    %1437 = vmatmul.mubr.f32.gmra.mrb[0].mxu0 %v1338
    %v1438 = vpop.f32.mrb[0].mxu0
    %v1439 = vadd.f32 0.0, %v1438
    %v1440 = vpop.f32.mrb[0].mxu0
    %1441 = vdwg.mxu0
    %v1442 = vadd.f32 %v1153, %v1439
    %v1443 = vld [vmem:[%s6 + $0x400] sm:$0xff]
    %v1444 = vld [vmem:[%s6 + $0x408] sm:$0xff]
    %v1445 = vld [vmem:[%s6 + $0x410] sm:$0xff]
    %v1446 = vld [vmem:[%s6 + $0x418] sm:$0xff]
    %v1447 = vld [vmem:[%s6 + $0x420] sm:$0xff]
    %v1448 = vld [vmem:[%s6 + $0x428] sm:$0xff]
    %v1449 = vld [vmem:[%s6 + $0x430] sm:$0xff]
    %v1450 = vld [vmem:[%s6 + $0x438] sm:$0xff]
    %v1451 = vld [vmem:[%s6 + $0x440] sm:$0xff]
    %v1452 = vld [vmem:[%s6 + $0x448] sm:$0xff]
    %v1453 = vld [vmem:[%s6 + $0x450] sm:$0xff]
    %v1454 = vld [vmem:[%s6 + $0x458] sm:$0xff]
    %v1455 = vld [vmem:[%s6 + $0x460] sm:$0xff]
    %v1456 = vld [vmem:[%s6 + $0x468] sm:$0xff]
    %v1457 = vld [vmem:[%s6 + $0x470] sm:$0xff]
    %v1458 = vld [vmem:[%s6 + $0x478] sm:$0xff]
    %v1459 = vld [vmem:[%s6 + $0x480] sm:$0xff]
    %v1460 = vld [vmem:[%s6 + $0x488] sm:$0xff]
    %v1461 = vld [vmem:[%s6 + $0x490] sm:$0xff]
    %v1462 = vld [vmem:[%s6 + $0x498] sm:$0xff]
    %v1463 = vld [vmem:[%s6 + $0x4a0] sm:$0xff]
    %v1464 = vld [vmem:[%s6 + $0x4a8] sm:$0xff]
    %v1465 = vld [vmem:[%s6 + $0x4b0] sm:$0xff]
    %v1466 = vld [vmem:[%s6 + $0x4b8] sm:$0xff]
    %v1467 = vld [vmem:[%s6 + $0x4c0] sm:$0xff]
    %v1468 = vld [vmem:[%s6 + $0x4c8] sm:$0xff]
    %v1469 = vld [vmem:[%s6 + $0x4d0] sm:$0xff]
    %v1470 = vld [vmem:[%s6 + $0x4d8] sm:$0xff]
    %v1471 = vld [vmem:[%s6 + $0x4e0] sm:$0xff]
    %v1472 = vld [vmem:[%s6 + $0x4e8] sm:$0xff]
    %v1473 = vld [vmem:[%s6 + $0x4f0] sm:$0xff]
    %v1474 = vld [vmem:[%s6 + $0x4f8] sm:$0xff]
    %1475 = vmatprep.subr.mxu0 0.0
    %1476 = vmatpush1.msra.mxu0 %v1443
    %1477 = vmatprep.subr.mxu0 0.0
    %1478 = vmatpush1.msra.mxu0 %v1444
    %1479 = vmatprep.subr.mxu0 0.0
    %1480 = vmatpush1.msra.mxu0 %v1445
    %1481 = vmatprep.subr.mxu0 0.0
    %1482 = vmatpush1.msra.mxu0 %v1446
    %1483 = vmatprep.subr.mxu0 0.0
    %1484 = vmatpush1.msra.mxu0 %v1447
    %1485 = vmatprep.subr.mxu0 0.0
    %1486 = vmatpush1.msra.mxu0 %v1448
    %1487 = vmatprep.subr.mxu0 0.0
    %1488 = vmatpush1.msra.mxu0 %v1449
    %1489 = vmatprep.subr.mxu0 0.0
    %1490 = vmatpush1.msra.mxu0 %v1450
    %1491 = vmatprep.subr.mxu0 0.0
    %1492 = vmatpush1.msra.mxu0 %v1451
    %1493 = vmatprep.subr.mxu0 0.0
    %1494 = vmatpush1.msra.mxu0 %v1452
    %1495 = vmatprep.subr.mxu0 0.0
    %1496 = vmatpush1.msra.mxu0 %v1453
    %1497 = vmatprep.subr.mxu0 0.0
    %1498 = vmatpush1.msra.mxu0 %v1454
    %1499 = vmatprep.subr.mxu0 0.0
    %1500 = vmatpush1.msra.mxu0 %v1455
    %1501 = vmatprep.subr.mxu0 0.0
    %1502 = vmatpush1.msra.mxu0 %v1456
    %1503 = vmatprep.subr.mxu0 0.0
    %1504 = vmatpush1.msra.mxu0 %v1457
    %1505 = vmatprep.subr.mxu0 0.0
    %1506 = vmatpush1.msra.mxu0 %v1458
    %1507 = vmatprep.subr.mxu0 0.0
    %1508 = vmatpush1.msra.mxu0 %v1459
    %1509 = vmatprep.subr.mxu0 0.0
    %1510 = vmatpush1.msra.mxu0 %v1460
    %1511 = vmatprep.subr.mxu0 0.0
    %1512 = vmatpush1.msra.mxu0 %v1461
    %1513 = vmatprep.subr.mxu0 0.0
    %1514 = vmatpush1.msra.mxu0 %v1462
    %1515 = vmatprep.subr.mxu0 0.0
    %1516 = vmatpush1.msra.mxu0 %v1463
    %1517 = vmatprep.subr.mxu0 0.0
    %1518 = vmatpush1.msra.mxu0 %v1464
    %1519 = vmatprep.subr.mxu0 0.0
    %1520 = vmatpush1.msra.mxu0 %v1465
    %1521 = vmatprep.subr.mxu0 0.0
    %1522 = vmatpush1.msra.mxu0 %v1466
    %1523 = vmatprep.subr.mxu0 0.0
    %1524 = vmatpush1.msra.mxu0 %v1467
    %1525 = vmatprep.subr.mxu0 0.0
    %1526 = vmatpush1.msra.mxu0 %v1468
    %1527 = vmatprep.subr.mxu0 0.0
    %1528 = vmatpush1.msra.mxu0 %v1469
    %1529 = vmatprep.subr.mxu0 0.0
    %1530 = vmatpush1.msra.mxu0 %v1470
    %1531 = vmatprep.subr.mxu0 0.0
    %1532 = vmatpush1.msra.mxu0 %v1471
    %1533 = vmatprep.subr.mxu0 0.0
    %1534 = vmatpush1.msra.mxu0 %v1472
    %1535 = vmatprep.subr.mxu0 0.0
    %1536 = vmatpush1.msra.mxu0 %v1473
    %1537 = vmatprep.subr.mxu0 0.0
    %1538 = vmatpush1.msra.mxu0 %v1474
    %1539 = vmatprep.mubr.f32.mxu0 %v1339
    %1540 = vmatmul.mubr.f32.gmra.mrb[0].mxu0 %v1338
    %v1541 = vpop.f32.mrb[0].mxu0
    %v1542 = vadd.f32 0.0, %v1541
    %v1543 = vpop.f32.mrb[0].mxu0
    %1544 = vdwg.mxu0
    %v1545 = vadd.f32 %v1256, %v1542
    %v1548 = vunpack.c.l.s4 1983009808
    %v1549 = vunpack.c.0.s8 %v1548
    %v1550 = vlaneseq
    %v1551 = vshrl.u32 %v1550, 7
    %v1552 = vsub.s32 %v1549, %v1551
    %v1553 = vrot.slane %v48, %v1552
    %1554 = vrot.lane.b32.xlu0 %v1257, 80
    %v1555 = vpop.permute.xlu0 %1554
    %1556 = vrot.lane.b32.xlu0 %v1553, 80
    %v1557 = vpop.permute.xlu0 %1556
    %v1558 = vsel %vm251, %v1555, %v1557
    %v1560 = vsel %vm254, %v1557, 0
    %1562 = vmatprep.subr.mxu0 %v51
    %1563 = vmatpush1.msra.mxu0 %v50
    %1564 = vmatprep.subr.mxu0 %v53
    %1565 = vmatpush1.msra.mxu0 %v52
    %1566 = vmatprep.subr.mxu0 %v55
    %1567 = vmatpush1.msra.mxu0 %v54
    %1568 = vmatprep.subr.mxu0 %v57
    %1569 = vmatpush1.msra.mxu0 %v56
    %1570 = vmatprep.subr.mxu0 %v59
    %1571 = vmatpush1.msra.mxu0 %v58
    %1572 = vmatprep.subr.mxu0 %v61
    %1573 = vmatpush1.msra.mxu0 %v60
    %1574 = vmatprep.subr.mxu0 %v63
    %1575 = vmatpush1.msra.mxu0 %v62
    %1576 = vmatprep.subr.mxu0 %v65
    %1577 = vmatpush1.msra.mxu0 %v64
    %1578 = vmatprep.subr.mxu0 %v67
    %1579 = vmatpush1.msra.mxu0 %v66
    %1580 = vmatprep.subr.mxu0 %v69
    %1581 = vmatpush1.msra.mxu0 %v68
    %1582 = vmatprep.subr.mxu0 %v71
    %1583 = vmatpush1.msra.mxu0 %v70
    %1584 = vmatprep.subr.mxu0 %v73
    %1585 = vmatpush1.msra.mxu0 %v72
    %1586 = vmatprep.subr.mxu0 %v75
    %1587 = vmatpush1.msra.mxu0 %v74
    %1588 = vmatprep.subr.mxu0 %v77
    %1589 = vmatpush1.msra.mxu0 %v76
    %1590 = vmatprep.subr.mxu0 %v79
    %1591 = vmatpush1.msra.mxu0 %v78
    %1592 = vmatprep.subr.mxu0 %v81
    %1593 = vmatpush1.msra.mxu0 %v80
    %1594 = vmatprep.subr.mxu0 %v83
    %1595 = vmatpush1.msra.mxu0 %v82
    %1596 = vmatprep.subr.mxu0 %v85
    %1597 = vmatpush1.msra.mxu0 %v84
    %1598 = vmatprep.subr.mxu0 0.0
    %1599 = vmatpush1.msra.mxu0 0.0
    %1600 = vmatprep.subr.mxu0 0.0
    %1601 = vmatpush1.msra.mxu0 0.0
    %1602 = vmatprep.subr.mxu0 0.0
    %1603 = vmatpush1.msra.mxu0 0.0
    %1604 = vmatprep.subr.mxu0 0.0
    %1605 = vmatpush1.msra.mxu0 0.0
    %1606 = vmatprep.subr.mxu0 0.0
    %1607 = vmatpush1.msra.mxu0 0.0
    %1608 = vmatprep.subr.mxu0 0.0
    %1609 = vmatpush1.msra.mxu0 0.0
    %1610 = vmatprep.subr.mxu0 0.0
    %1611 = vmatpush1.msra.mxu0 0.0
    %1612 = vmatprep.subr.mxu0 0.0
    %1613 = vmatpush1.msra.mxu0 0.0
    %1614 = vmatprep.subr.mxu0 0.0
    %1615 = vmatpush1.msra.mxu0 0.0
    %1616 = vmatprep.subr.mxu0 0.0
    %1617 = vmatpush1.msra.mxu0 0.0
    %1618 = vmatprep.subr.mxu0 0.0
    %1619 = vmatpush1.msra.mxu0 0.0
    %1620 = vmatprep.subr.mxu0 0.0
    %1621 = vmatpush1.msra.mxu0 0.0
    %1622 = vmatprep.subr.mxu0 0.0
    %1623 = vmatpush1.msra.mxu0 0.0
    %1624 = vmatprep.subr.mxu0 0.0
    %1625 = vmatpush1.msra.mxu0 0.0
    %1626 = vmatprep.mubr.f32.mxu0 %v1560
    %1627 = vmatmul.mubr.f32.gmra.mrb[0].mxu0 %v1558
    %v1628 = vpop.f32.mrb[0].mxu0
    %v1629 = vadd.f32 %v91, %v1628
    %v1630 = vpop.f32.mrb[0].mxu0
    %v1631 = vadd.f32 %v95, %v1630
    %1632 = vdwg.mxu0
    %v1633 = vmax.f32 %v1629, 0.0
    %v1634 = vmax.f32 %v1631, 0.0
    %v1635 = vld [vmem:[%s4 + $0x500] sm:$0xff]
    %v1636 = vld [vmem:[%s4 + $0x508] sm:$0xff]
    %v1637 = vld [vmem:[%s4 + $0x510] sm:$0xff]
    %v1638 = vld [vmem:[%s4 + $0x518] sm:$0xff]
    %v1639 = vld [vmem:[%s4 + $0x520] sm:$0xff]
    %v1640 = vld [vmem:[%s4 + $0x528] sm:$0xff]
    %v1641 = vld [vmem:[%s4 + $0x530] sm:$0xff]
    %v1642 = vld [vmem:[%s4 + $0x538] sm:$0xff]
    %v1643 = vld [vmem:[%s4 + $0x540] sm:$0xff]
    %v1644 = vld [vmem:[%s4 + $0x548] sm:$0xff]
    %v1645 = vld [vmem:[%s4 + $0x550] sm:$0xff]
    %v1646 = vld [vmem:[%s4 + $0x558] sm:$0xff]
    %v1647 = vld [vmem:[%s4 + $0x560] sm:$0xff]
    %v1648 = vld [vmem:[%s4 + $0x568] sm:$0xff]
    %v1649 = vld [vmem:[%s4 + $0x570] sm:$0xff]
    %v1650 = vld [vmem:[%s4 + $0x578] sm:$0xff]
    %v1651 = vld [vmem:[%s4 + $0x580] sm:$0xff]
    %v1652 = vld [vmem:[%s4 + $0x588] sm:$0xff]
    %v1653 = vld [vmem:[%s4 + $0x590] sm:$0xff]
    %v1654 = vld [vmem:[%s4 + $0x598] sm:$0xff]
    %v1655 = vld [vmem:[%s4 + $0x5a0] sm:$0xff]
    %v1656 = vld [vmem:[%s4 + $0x5a8] sm:$0xff]
    %v1657 = vld [vmem:[%s4 + $0x5b0] sm:$0xff]
    %v1658 = vld [vmem:[%s4 + $0x5b8] sm:$0xff]
    %v1659 = vld [vmem:[%s4 + $0x5c0] sm:$0xff]
    %v1660 = vld [vmem:[%s4 + $0x5c8] sm:$0xff]
    %v1661 = vld [vmem:[%s4 + $0x5d0] sm:$0xff]
    %v1662 = vld [vmem:[%s4 + $0x5d8] sm:$0xff]
    %v1663 = vld [vmem:[%s4 + $0x5e0] sm:$0xff]
    %v1664 = vld [vmem:[%s4 + $0x5e8] sm:$0xff]
    %v1665 = vld [vmem:[%s4 + $0x5f0] sm:$0xff]
    %v1666 = vld [vmem:[%s4 + $0x5f8] sm:$0xff]
    %1667 = vmatprep.subr.mxu0 0.0
    %1668 = vmatpush1.msra.mxu0 %v1635
    %1669 = vmatprep.subr.mxu0 0.0
    %1670 = vmatpush1.msra.mxu0 %v1636
    %1671 = vmatprep.subr.mxu0 0.0
    %1672 = vmatpush1.msra.mxu0 %v1637
    %1673 = vmatprep.subr.mxu0 0.0
    %1674 = vmatpush1.msra.mxu0 %v1638
    %1675 = vmatprep.subr.mxu0 0.0
    %1676 = vmatpush1.msra.mxu0 %v1639
    %1677 = vmatprep.subr.mxu0 0.0
    %1678 = vmatpush1.msra.mxu0 %v1640
    %1679 = vmatprep.subr.mxu0 0.0
    %1680 = vmatpush1.msra.mxu0 %v1641
    %1681 = vmatprep.subr.mxu0 0.0
    %1682 = vmatpush1.msra.mxu0 %v1642
    %1683 = vmatprep.subr.mxu0 0.0
    %1684 = vmatpush1.msra.mxu0 %v1643
    %1685 = vmatprep.subr.mxu0 0.0
    %1686 = vmatpush1.msra.mxu0 %v1644
    %1687 = vmatprep.subr.mxu0 0.0
    %1688 = vmatpush1.msra.mxu0 %v1645
    %1689 = vmatprep.subr.mxu0 0.0
    %1690 = vmatpush1.msra.mxu0 %v1646
    %1691 = vmatprep.subr.mxu0 0.0
    %1692 = vmatpush1.msra.mxu0 %v1647
    %1693 = vmatprep.subr.mxu0 0.0
    %1694 = vmatpush1.msra.mxu0 %v1648
    %1695 = vmatprep.subr.mxu0 0.0
    %1696 = vmatpush1.msra.mxu0 %v1649
    %1697 = vmatprep.subr.mxu0 0.0
    %1698 = vmatpush1.msra.mxu0 %v1650
    %1699 = vmatprep.subr.mxu0 0.0
    %1700 = vmatpush1.msra.mxu0 %v1651
    %1701 = vmatprep.subr.mxu0 0.0
    %1702 = vmatpush1.msra.mxu0 %v1652
    %1703 = vmatprep.subr.mxu0 0.0
    %1704 = vmatpush1.msra.mxu0 %v1653
    %1705 = vmatprep.subr.mxu0 0.0
    %1706 = vmatpush1.msra.mxu0 %v1654
    %1707 = vmatprep.subr.mxu0 0.0
    %1708 = vmatpush1.msra.mxu0 %v1655
    %1709 = vmatprep.subr.mxu0 0.0
    %1710 = vmatpush1.msra.mxu0 %v1656
    %1711 = vmatprep.subr.mxu0 0.0
    %1712 = vmatpush1.msra.mxu0 %v1657
    %1713 = vmatprep.subr.mxu0 0.0
    %1714 = vmatpush1.msra.mxu0 %v1658
    %1715 = vmatprep.subr.mxu0 0.0
    %1716 = vmatpush1.msra.mxu0 %v1659
    %1717 = vmatprep.subr.mxu0 0.0
    %1718 = vmatpush1.msra.mxu0 %v1660
    %1719 = vmatprep.subr.mxu0 0.0
    %1720 = vmatpush1.msra.mxu0 %v1661
    %1721 = vmatprep.subr.mxu0 0.0
    %1722 = vmatpush1.msra.mxu0 %v1662
    %1723 = vmatprep.subr.mxu0 0.0
    %1724 = vmatpush1.msra.mxu0 %v1663
    %1725 = vmatprep.subr.mxu0 0.0
    %1726 = vmatpush1.msra.mxu0 %v1664
    %1727 = vmatprep.subr.mxu0 0.0
    %1728 = vmatpush1.msra.mxu0 %v1665
    %1729 = vmatprep.subr.mxu0 0.0
    %1730 = vmatpush1.msra.mxu0 %v1666
    %1731 = vmatprep.mubr.f32.mxu0 %v1634
    %1732 = vmatmul.mubr.f32.gmra.mrb[0].mxu0 %v1633
    %v1733 = vpop.f32.mrb[0].mxu0
    %v1734 = vadd.f32 0.0, %v1733
    %v1735 = vpop.f32.mrb[0].mxu0
    %1736 = vdwg.mxu0
    %v1737 = vadd.f32 %v1442, %v1734
    %v1738 = vld [vmem:[%s6 + $0x500] sm:$0xff]
    %v1739 = vld [vmem:[%s6 + $0x508] sm:$0xff]
    %v1740 = vld [vmem:[%s6 + $0x510] sm:$0xff]
    %v1741 = vld [vmem:[%s6 + $0x518] sm:$0xff]
    %v1742 = vld [vmem:[%s6 + $0x520] sm:$0xff]
    %v1743 = vld [vmem:[%s6 + $0x528] sm:$0xff]
    %v1744 = vld [vmem:[%s6 + $0x530] sm:$0xff]
    %v1745 = vld [vmem:[%s6 + $0x538] sm:$0xff]
    %v1746 = vld [vmem:[%s6 + $0x540] sm:$0xff]
    %v1747 = vld [vmem:[%s6 + $0x548] sm:$0xff]
    %v1748 = vld [vmem:[%s6 + $0x550] sm:$0xff]
    %v1749 = vld [vmem:[%s6 + $0x558] sm:$0xff]
    %v1750 = vld [vmem:[%s6 + $0x560] sm:$0xff]
    %v1751 = vld [vmem:[%s6 + $0x568] sm:$0xff]
    %v1752 = vld [vmem:[%s6 + $0x570] sm:$0xff]
    %v1753 = vld [vmem:[%s6 + $0x578] sm:$0xff]
    %v1754 = vld [vmem:[%s6 + $0x580] sm:$0xff]
    %v1755 = vld [vmem:[%s6 + $0x588] sm:$0xff]
    %v1756 = vld [vmem:[%s6 + $0x590] sm:$0xff]
    %v1757 = vld [vmem:[%s6 + $0x598] sm:$0xff]
    %v1758 = vld [vmem:[%s6 + $0x5a0] sm:$0xff]
    %v1759 = vld [vmem:[%s6 + $0x5a8] sm:$0xff]
    %v1760 = vld [vmem:[%s6 + $0x5b0] sm:$0xff]
    %v1761 = vld [vmem:[%s6 + $0x5b8] sm:$0xff]
    %v1762 = vld [vmem:[%s6 + $0x5c0] sm:$0xff]
    %v1763 = vld [vmem:[%s6 + $0x5c8] sm:$0xff]
    %v1764 = vld [vmem:[%s6 + $0x5d0] sm:$0xff]
    %v1765 = vld [vmem:[%s6 + $0x5d8] sm:$0xff]
    %v1766 = vld [vmem:[%s6 + $0x5e0] sm:$0xff]
    %v1767 = vld [vmem:[%s6 + $0x5e8] sm:$0xff]
    %v1768 = vld [vmem:[%s6 + $0x5f0] sm:$0xff]
    %v1769 = vld [vmem:[%s6 + $0x5f8] sm:$0xff]
    %1770 = vmatprep.subr.mxu0 0.0
    %1771 = vmatpush1.msra.mxu0 %v1738
    %1772 = vmatprep.subr.mxu0 0.0
    %1773 = vmatpush1.msra.mxu0 %v1739
    %1774 = vmatprep.subr.mxu0 0.0
    %1775 = vmatpush1.msra.mxu0 %v1740
    %1776 = vmatprep.subr.mxu0 0.0
    %1777 = vmatpush1.msra.mxu0 %v1741
    %1778 = vmatprep.subr.mxu0 0.0
    %1779 = vmatpush1.msra.mxu0 %v1742
    %1780 = vmatprep.subr.mxu0 0.0
    %1781 = vmatpush1.msra.mxu0 %v1743
    %1782 = vmatprep.subr.mxu0 0.0
    %1783 = vmatpush1.msra.mxu0 %v1744
    %1784 = vmatprep.subr.mxu0 0.0
    %1785 = vmatpush1.msra.mxu0 %v1745
    %1786 = vmatprep.subr.mxu0 0.0
    %1787 = vmatpush1.msra.mxu0 %v1746
    %1788 = vmatprep.subr.mxu0 0.0
    %1789 = vmatpush1.msra.mxu0 %v1747
    %1790 = vmatprep.subr.mxu0 0.0
    %1791 = vmatpush1.msra.mxu0 %v1748
    %1792 = vmatprep.subr.mxu0 0.0
    %1793 = vmatpush1.msra.mxu0 %v1749
    %1794 = vmatprep.subr.mxu0 0.0
    %1795 = vmatpush1.msra.mxu0 %v1750
    %1796 = vmatprep.subr.mxu0 0.0
    %1797 = vmatpush1.msra.mxu0 %v1751
    %1798 = vmatprep.subr.mxu0 0.0
    %1799 = vmatpush1.msra.mxu0 %v1752
    %1800 = vmatprep.subr.mxu0 0.0
    %1801 = vmatpush1.msra.mxu0 %v1753
    %1802 = vmatprep.subr.mxu0 0.0
    %1803 = vmatpush1.msra.mxu0 %v1754
    %1804 = vmatprep.subr.mxu0 0.0
    %1805 = vmatpush1.msra.mxu0 %v1755
    %1806 = vmatprep.subr.mxu0 0.0
    %1807 = vmatpush1.msra.mxu0 %v1756
    %1808 = vmatprep.subr.mxu0 0.0
    %1809 = vmatpush1.msra.mxu0 %v1757
    %1810 = vmatprep.subr.mxu0 0.0
    %1811 = vmatpush1.msra.mxu0 %v1758
    %1812 = vmatprep.subr.mxu0 0.0
    %1813 = vmatpush1.msra.mxu0 %v1759
    %1814 = vmatprep.subr.mxu0 0.0
    %1815 = vmatpush1.msra.mxu0 %v1760
    %1816 = vmatprep.subr.mxu0 0.0
    %1817 = vmatpush1.msra.mxu0 %v1761
    %1818 = vmatprep.subr.mxu0 0.0
    %1819 = vmatpush1.msra.mxu0 %v1762
    %1820 = vmatprep.subr.mxu0 0.0
    %1821 = vmatpush1.msra.mxu0 %v1763
    %1822 = vmatprep.subr.mxu0 0.0
    %1823 = vmatpush1.msra.mxu0 %v1764
    %1824 = vmatprep.subr.mxu0 0.0
    %1825 = vmatpush1.msra.mxu0 %v1765
    %1826 = vmatprep.subr.mxu0 0.0
    %1827 = vmatpush1.msra.mxu0 %v1766
    %1828 = vmatprep.subr.mxu0 0.0
    %1829 = vmatpush1.msra.mxu0 %v1767
    %1830 = vmatprep.subr.mxu0 0.0
    %1831 = vmatpush1.msra.mxu0 %v1768
    %1832 = vmatprep.subr.mxu0 0.0
    %1833 = vmatpush1.msra.mxu0 %v1769
    %1834 = vmatprep.mubr.f32.mxu0 %v1634
    %1835 = vmatmul.mubr.f32.gmra.mrb[0].mxu0 %v1633
    %v1836 = vpop.f32.mrb[0].mxu0
    %v1837 = vadd.f32 0.0, %v1836
    %v1838 = vpop.f32.mrb[0].mxu0
    %1839 = vdwg.mxu0
    %v1840 = vadd.f32 %v1545, %v1837
    %v1841 = vcombine.high %v1553, %v1553
    %1842 = vrot.lane.b32.xlu0 %v1553, 112
    %v1843 = vpop.permute.xlu0 %1842
    %1844 = vrot.lane.b32.xlu0 %v1841, 112
    %v1845 = vpop.permute.xlu0 %1844
    %v1846 = vsel %vm686, %v1843, %v1845
    %v1848 = vsel %vm254, %v1845, 0
    %1850 = vmatprep.subr.mxu0 %v51
    %1851 = vmatpush1.msra.mxu0 %v50
    %1852 = vmatprep.subr.mxu0 %v53
    %1853 = vmatpush1.msra.mxu0 %v52
    %1854 = vmatprep.subr.mxu0 %v55
    %1855 = vmatpush1.msra.mxu0 %v54
    %1856 = vmatprep.subr.mxu0 %v57
    %1857 = vmatpush1.msra.mxu0 %v56
    %1858 = vmatprep.subr.mxu0 %v59
    %1859 = vmatpush1.msra.mxu0 %v58
    %1860 = vmatprep.subr.mxu0 %v61
    %1861 = vmatpush1.msra.mxu0 %v60
    %1862 = vmatprep.subr.mxu0 %v63
    %1863 = vmatpush1.msra.mxu0 %v62
    %1864 = vmatprep.subr.mxu0 %v65
    %1865 = vmatpush1.msra.mxu0 %v64
    %1866 = vmatprep.subr.mxu0 %v67
    %1867 = vmatpush1.msra.mxu0 %v66
    %1868 = vmatprep.subr.mxu0 %v69
    %1869 = vmatpush1.msra.mxu0 %v68
    %1870 = vmatprep.subr.mxu0 %v71
    %1871 = vmatpush1.msra.mxu0 %v70
    %1872 = vmatprep.subr.mxu0 %v73
    %1873 = vmatpush1.msra.mxu0 %v72
    %1874 = vmatprep.subr.mxu0 %v75
    %1875 = vmatpush1.msra.mxu0 %v74
    %1876 = vmatprep.subr.mxu0 %v77
    %1877 = vmatpush1.msra.mxu0 %v76
    %1878 = vmatprep.subr.mxu0 %v79
    %1879 = vmatpush1.msra.mxu0 %v78
    %1880 = vmatprep.subr.mxu0 %v81
    %1881 = vmatpush1.msra.mxu0 %v80
    %1882 = vmatprep.subr.mxu0 %v83
    %1883 = vmatpush1.msra.mxu0 %v82
    %1884 = vmatprep.subr.mxu0 %v85
    %1885 = vmatpush1.msra.mxu0 %v84
    %1886 = vmatprep.subr.mxu0 0.0
    %1887 = vmatpush1.msra.mxu0 0.0
    %1888 = vmatprep.subr.mxu0 0.0
    %1889 = vmatpush1.msra.mxu0 0.0
    %1890 = vmatprep.subr.mxu0 0.0
    %1891 = vmatpush1.msra.mxu0 0.0
    %1892 = vmatprep.subr.mxu0 0.0
    %1893 = vmatpush1.msra.mxu0 0.0
    %1894 = vmatprep.subr.mxu0 0.0
    %1895 = vmatpush1.msra.mxu0 0.0
    %1896 = vmatprep.subr.mxu0 0.0
    %1897 = vmatpush1.msra.mxu0 0.0
    %1898 = vmatprep.subr.mxu0 0.0
    %1899 = vmatpush1.msra.mxu0 0.0
    %1900 = vmatprep.subr.mxu0 0.0
    %1901 = vmatpush1.msra.mxu0 0.0
    %1902 = vmatprep.subr.mxu0 0.0
    %1903 = vmatpush1.msra.mxu0 0.0
    %1904 = vmatprep.subr.mxu0 0.0
    %1905 = vmatpush1.msra.mxu0 0.0
    %1906 = vmatprep.subr.mxu0 0.0
    %1907 = vmatpush1.msra.mxu0 0.0
    %1908 = vmatprep.subr.mxu0 0.0
    %1909 = vmatpush1.msra.mxu0 0.0
    %1910 = vmatprep.subr.mxu0 0.0
    %1911 = vmatpush1.msra.mxu0 0.0
    %1912 = vmatprep.subr.mxu0 0.0
    %1913 = vmatpush1.msra.mxu0 0.0
    %1914 = vmatprep.mubr.f32.mxu0 %v1848
    %1915 = vmatmul.mubr.f32.gmra.mrb[0].mxu0 %v1846
    %v1916 = vpop.f32.mrb[0].mxu0
    %v1917 = vadd.f32 %v91, %v1916
    %v1918 = vpop.f32.mrb[0].mxu0
    %v1919 = vadd.f32 %v95, %v1918
    %1920 = vdwg.mxu0
    %v1921 = vmax.f32 %v1917, 0.0
    %v1922 = vmax.f32 %v1919, 0.0
    %v1923 = vld [vmem:[%s4 + $0x600] sm:$0xff]
    %v1924 = vld [vmem:[%s4 + $0x608] sm:$0xff]
    %v1925 = vld [vmem:[%s4 + $0x610] sm:$0xff]
    %v1926 = vld [vmem:[%s4 + $0x618] sm:$0xff]
    %v1927 = vld [vmem:[%s4 + $0x620] sm:$0xff]
    %v1928 = vld [vmem:[%s4 + $0x628] sm:$0xff]
    %v1929 = vld [vmem:[%s4 + $0x630] sm:$0xff]
    %v1930 = vld [vmem:[%s4 + $0x638] sm:$0xff]
    %v1931 = vld [vmem:[%s4 + $0x640] sm:$0xff]
    %v1932 = vld [vmem:[%s4 + $0x648] sm:$0xff]
    %v1933 = vld [vmem:[%s4 + $0x650] sm:$0xff]
    %v1934 = vld [vmem:[%s4 + $0x658] sm:$0xff]
    %v1935 = vld [vmem:[%s4 + $0x660] sm:$0xff]
    %v1936 = vld [vmem:[%s4 + $0x668] sm:$0xff]
    %v1937 = vld [vmem:[%s4 + $0x670] sm:$0xff]
    %v1938 = vld [vmem:[%s4 + $0x678] sm:$0xff]
    %v1939 = vld [vmem:[%s4 + $0x680] sm:$0xff]
    %v1940 = vld [vmem:[%s4 + $0x688] sm:$0xff]
    %v1941 = vld [vmem:[%s4 + $0x690] sm:$0xff]
    %v1942 = vld [vmem:[%s4 + $0x698] sm:$0xff]
    %v1943 = vld [vmem:[%s4 + $0x6a0] sm:$0xff]
    %v1944 = vld [vmem:[%s4 + $0x6a8] sm:$0xff]
    %v1945 = vld [vmem:[%s4 + $0x6b0] sm:$0xff]
    %v1946 = vld [vmem:[%s4 + $0x6b8] sm:$0xff]
    %v1947 = vld [vmem:[%s4 + $0x6c0] sm:$0xff]
    %v1948 = vld [vmem:[%s4 + $0x6c8] sm:$0xff]
    %v1949 = vld [vmem:[%s4 + $0x6d0] sm:$0xff]
    %v1950 = vld [vmem:[%s4 + $0x6d8] sm:$0xff]
    %v1951 = vld [vmem:[%s4 + $0x6e0] sm:$0xff]
    %v1952 = vld [vmem:[%s4 + $0x6e8] sm:$0xff]
    %v1953 = vld [vmem:[%s4 + $0x6f0] sm:$0xff]
    %v1954 = vld [vmem:[%s4 + $0x6f8] sm:$0xff]
    %1955 = vmatprep.subr.mxu0 0.0
    %1956 = vmatpush1.msra.mxu0 %v1923
    %1957 = vmatprep.subr.mxu0 0.0
    %1958 = vmatpush1.msra.mxu0 %v1924
    %1959 = vmatprep.subr.mxu0 0.0
    %1960 = vmatpush1.msra.mxu0 %v1925
    %1961 = vmatprep.subr.mxu0 0.0
    %1962 = vmatpush1.msra.mxu0 %v1926
    %1963 = vmatprep.subr.mxu0 0.0
    %1964 = vmatpush1.msra.mxu0 %v1927
    %1965 = vmatprep.subr.mxu0 0.0
    %1966 = vmatpush1.msra.mxu0 %v1928
    %1967 = vmatprep.subr.mxu0 0.0
    %1968 = vmatpush1.msra.mxu0 %v1929
    %1969 = vmatprep.subr.mxu0 0.0
    %1970 = vmatpush1.msra.mxu0 %v1930
    %1971 = vmatprep.subr.mxu0 0.0
    %1972 = vmatpush1.msra.mxu0 %v1931
    %1973 = vmatprep.subr.mxu0 0.0
    %1974 = vmatpush1.msra.mxu0 %v1932
    %1975 = vmatprep.subr.mxu0 0.0
    %1976 = vmatpush1.msra.mxu0 %v1933
    %1977 = vmatprep.subr.mxu0 0.0
    %1978 = vmatpush1.msra.mxu0 %v1934
    %1979 = vmatprep.subr.mxu0 0.0
    %1980 = vmatpush1.msra.mxu0 %v1935
    %1981 = vmatprep.subr.mxu0 0.0
    %1982 = vmatpush1.msra.mxu0 %v1936
    %1983 = vmatprep.subr.mxu0 0.0
    %1984 = vmatpush1.msra.mxu0 %v1937
    %1985 = vmatprep.subr.mxu0 0.0
    %1986 = vmatpush1.msra.mxu0 %v1938
    %1987 = vmatprep.subr.mxu0 0.0
    %1988 = vmatpush1.msra.mxu0 %v1939
    %1989 = vmatprep.subr.mxu0 0.0
    %1990 = vmatpush1.msra.mxu0 %v1940
    %1991 = vmatprep.subr.mxu0 0.0
    %1992 = vmatpush1.msra.mxu0 %v1941
    %1993 = vmatprep.subr.mxu0 0.0
    %1994 = vmatpush1.msra.mxu0 %v1942
    %1995 = vmatprep.subr.mxu0 0.0
    %1996 = vmatpush1.msra.mxu0 %v1943
    %1997 = vmatprep.subr.mxu0 0.0
    %1998 = vmatpush1.msra.mxu0 %v1944
    %1999 = vmatprep.subr.mxu0 0.0
    %2000 = vmatpush1.msra.mxu0 %v1945
    %2001 = vmatprep.subr.mxu0 0.0
    %2002 = vmatpush1.msra.mxu0 %v1946
    %2003 = vmatprep.subr.mxu0 0.0
    %2004 = vmatpush1.msra.mxu0 %v1947
    %2005 = vmatprep.subr.mxu0 0.0
    %2006 = vmatpush1.msra.mxu0 %v1948
    %2007 = vmatprep.subr.mxu0 0.0
    %2008 = vmatpush1.msra.mxu0 %v1949
    %2009 = vmatprep.subr.mxu0 0.0
    %2010 = vmatpush1.msra.mxu0 %v1950
    %2011 = vmatprep.subr.mxu0 0.0
    %2012 = vmatpush1.msra.mxu0 %v1951
    %2013 = vmatprep.subr.mxu0 0.0
    %2014 = vmatpush1.msra.mxu0 %v1952
    %2015 = vmatprep.subr.mxu0 0.0
    %2016 = vmatpush1.msra.mxu0 %v1953
    %2017 = vmatprep.subr.mxu0 0.0
    %2018 = vmatpush1.msra.mxu0 %v1954
    %2019 = vmatprep.mubr.f32.mxu0 %v1922
    %2020 = vmatmul.mubr.f32.gmra.mrb[0].mxu0 %v1921
    %v2021 = vpop.f32.mrb[0].mxu0
    %v2022 = vadd.f32 0.0, %v2021
    %v2023 = vpop.f32.mrb[0].mxu0
    %2024 = vdwg.mxu0
    %v2025 = vadd.f32 %v1737, %v2022
    %v2026 = vld [vmem:[%s6 + $0x600] sm:$0xff]
    %v2027 = vld [vmem:[%s6 + $0x608] sm:$0xff]
    %v2028 = vld [vmem:[%s6 + $0x610] sm:$0xff]
    %v2029 = vld [vmem:[%s6 + $0x618] sm:$0xff]
    %v2030 = vld [vmem:[%s6 + $0x620] sm:$0xff]
    %v2031 = vld [vmem:[%s6 + $0x628] sm:$0xff]
    %v2032 = vld [vmem:[%s6 + $0x630] sm:$0xff]
    %v2033 = vld [vmem:[%s6 + $0x638] sm:$0xff]
    %v2034 = vld [vmem:[%s6 + $0x640] sm:$0xff]
    %v2035 = vld [vmem:[%s6 + $0x648] sm:$0xff]
    %v2036 = vld [vmem:[%s6 + $0x650] sm:$0xff]
    %v2037 = vld [vmem:[%s6 + $0x658] sm:$0xff]
    %v2038 = vld [vmem:[%s6 + $0x660] sm:$0xff]
    %v2039 = vld [vmem:[%s6 + $0x668] sm:$0xff]
    %v2040 = vld [vmem:[%s6 + $0x670] sm:$0xff]
    %v2041 = vld [vmem:[%s6 + $0x678] sm:$0xff]
    %v2042 = vld [vmem:[%s6 + $0x680] sm:$0xff]
    %v2043 = vld [vmem:[%s6 + $0x688] sm:$0xff]
    %v2044 = vld [vmem:[%s6 + $0x690] sm:$0xff]
    %v2045 = vld [vmem:[%s6 + $0x698] sm:$0xff]
    %v2046 = vld [vmem:[%s6 + $0x6a0] sm:$0xff]
    %v2047 = vld [vmem:[%s6 + $0x6a8] sm:$0xff]
    %v2048 = vld [vmem:[%s6 + $0x6b0] sm:$0xff]
    %v2049 = vld [vmem:[%s6 + $0x6b8] sm:$0xff]
    %v2050 = vld [vmem:[%s6 + $0x6c0] sm:$0xff]
    %v2051 = vld [vmem:[%s6 + $0x6c8] sm:$0xff]
    %v2052 = vld [vmem:[%s6 + $0x6d0] sm:$0xff]
    %v2053 = vld [vmem:[%s6 + $0x6d8] sm:$0xff]
    %v2054 = vld [vmem:[%s6 + $0x6e0] sm:$0xff]
    %v2055 = vld [vmem:[%s6 + $0x6e8] sm:$0xff]
    %v2056 = vld [vmem:[%s6 + $0x6f0] sm:$0xff]
    %v2057 = vld [vmem:[%s6 + $0x6f8] sm:$0xff]
    %2058 = vmatprep.subr.mxu0 0.0
    %2059 = vmatpush1.msra.mxu0 %v2026
    %2060 = vmatprep.subr.mxu0 0.0
    %2061 = vmatpush1.msra.mxu0 %v2027
    %2062 = vmatprep.subr.mxu0 0.0
    %2063 = vmatpush1.msra.mxu0 %v2028
    %2064 = vmatprep.subr.mxu0 0.0
    %2065 = vmatpush1.msra.mxu0 %v2029
    %2066 = vmatprep.subr.mxu0 0.0
    %2067 = vmatpush1.msra.mxu0 %v2030
    %2068 = vmatprep.subr.mxu0 0.0
    %2069 = vmatpush1.msra.mxu0 %v2031
    %2070 = vmatprep.subr.mxu0 0.0
    %2071 = vmatpush1.msra.mxu0 %v2032
    %2072 = vmatprep.subr.mxu0 0.0
    %2073 = vmatpush1.msra.mxu0 %v2033
    %2074 = vmatprep.subr.mxu0 0.0
    %2075 = vmatpush1.msra.mxu0 %v2034
    %2076 = vmatprep.subr.mxu0 0.0
    %2077 = vmatpush1.msra.mxu0 %v2035
    %2078 = vmatprep.subr.mxu0 0.0
    %2079 = vmatpush1.msra.mxu0 %v2036
    %2080 = vmatprep.subr.mxu0 0.0
    %2081 = vmatpush1.msra.mxu0 %v2037
    %2082 = vmatprep.subr.mxu0 0.0
    %2083 = vmatpush1.msra.mxu0 %v2038
    %2084 = vmatprep.subr.mxu0 0.0
    %2085 = vmatpush1.msra.mxu0 %v2039
    %2086 = vmatprep.subr.mxu0 0.0
    %2087 = vmatpush1.msra.mxu0 %v2040
    %2088 = vmatprep.subr.mxu0 0.0
    %2089 = vmatpush1.msra.mxu0 %v2041
    %2090 = vmatprep.subr.mxu0 0.0
    %2091 = vmatpush1.msra.mxu0 %v2042
    %2092 = vmatprep.subr.mxu0 0.0
    %2093 = vmatpush1.msra.mxu0 %v2043
    %2094 = vmatprep.subr.mxu0 0.0
    %2095 = vmatpush1.msra.mxu0 %v2044
    %2096 = vmatprep.subr.mxu0 0.0
    %2097 = vmatpush1.msra.mxu0 %v2045
    %2098 = vmatprep.subr.mxu0 0.0
    %2099 = vmatpush1.msra.mxu0 %v2046
    %2100 = vmatprep.subr.mxu0 0.0
    %2101 = vmatpush1.msra.mxu0 %v2047
    %2102 = vmatprep.subr.mxu0 0.0
    %2103 = vmatpush1.msra.mxu0 %v2048
    %2104 = vmatprep.subr.mxu0 0.0
    %2105 = vmatpush1.msra.mxu0 %v2049
    %2106 = vmatprep.subr.mxu0 0.0
    %2107 = vmatpush1.msra.mxu0 %v2050
    %2108 = vmatprep.subr.mxu0 0.0
    %2109 = vmatpush1.msra.mxu0 %v2051
    %2110 = vmatprep.subr.mxu0 0.0
    %2111 = vmatpush1.msra.mxu0 %v2052
    %2112 = vmatprep.subr.mxu0 0.0
    %2113 = vmatpush1.msra.mxu0 %v2053
    %2114 = vmatprep.subr.mxu0 0.0
    %2115 = vmatpush1.msra.mxu0 %v2054
    %2116 = vmatprep.subr.mxu0 0.0
    %2117 = vmatpush1.msra.mxu0 %v2055
    %2118 = vmatprep.subr.mxu0 0.0
    %2119 = vmatpush1.msra.mxu0 %v2056
    %2120 = vmatprep.subr.mxu0 0.0
    %2121 = vmatpush1.msra.mxu0 %v2057
    %2122 = vmatprep.mubr.f32.mxu0 %v1922
    %2123 = vmatmul.mubr.f32.gmra.mrb[0].mxu0 %v1921
    %v2124 = vpop.f32.mrb[0].mxu0
    %v2125 = vadd.f32 0.0, %v2124
    %v2126 = vpop.f32.mrb[0].mxu0
    %2127 = vdwg.mxu0
    %v2128 = vadd.f32 %v1840, %v2125
    %2129 = vrot.lane.b32.xlu0 %v1553, 16
    %v2130 = vpop.permute.xlu0 %2129
    %2131 = vrot.lane.b32.xlu0 %v1841, 16
    %v2132 = vpop.permute.xlu0 %2131
    %v2133 = vsel %vm254, %v2130, %v2132
    %v2135 = vsel %vm254, %v2132, 0
    %2137 = vmatprep.subr.mxu0 %v51
    %2138 = vmatpush1.msra.mxu0 %v50
    %2139 = vmatprep.subr.mxu0 %v53
    %2140 = vmatpush1.msra.mxu0 %v52
    %2141 = vmatprep.subr.mxu0 %v55
    %2142 = vmatpush1.msra.mxu0 %v54
    %2143 = vmatprep.subr.mxu0 %v57
    %2144 = vmatpush1.msra.mxu0 %v56
    %2145 = vmatprep.subr.mxu0 %v59
    %2146 = vmatpush1.msra.mxu0 %v58
    %2147 = vmatprep.subr.mxu0 %v61
    %2148 = vmatpush1.msra.mxu0 %v60
    %2149 = vmatprep.subr.mxu0 %v63
    %2150 = vmatpush1.msra.mxu0 %v62
    %2151 = vmatprep.subr.mxu0 %v65
    %2152 = vmatpush1.msra.mxu0 %v64
    %2153 = vmatprep.subr.mxu0 %v67
    %2154 = vmatpush1.msra.mxu0 %v66
    %2155 = vmatprep.subr.mxu0 %v69
    %2156 = vmatpush1.msra.mxu0 %v68
    %2157 = vmatprep.subr.mxu0 %v71
    %2158 = vmatpush1.msra.mxu0 %v70
    %2159 = vmatprep.subr.mxu0 %v73
    %2160 = vmatpush1.msra.mxu0 %v72
    %2161 = vmatprep.subr.mxu0 %v75
    %2162 = vmatpush1.msra.mxu0 %v74
    %2163 = vmatprep.subr.mxu0 %v77
    %2164 = vmatpush1.msra.mxu0 %v76
    %2165 = vmatprep.subr.mxu0 %v79
    %2166 = vmatpush1.msra.mxu0 %v78
    %2167 = vmatprep.subr.mxu0 %v81
    %2168 = vmatpush1.msra.mxu0 %v80
    %2169 = vmatprep.subr.mxu0 %v83
    %2170 = vmatpush1.msra.mxu0 %v82
    %2171 = vmatprep.subr.mxu0 %v85
    %2172 = vmatpush1.msra.mxu0 %v84
    %2173 = vmatprep.subr.mxu0 0.0
    %2174 = vmatpush1.msra.mxu0 0.0
    %2175 = vmatprep.subr.mxu0 0.0
    %2176 = vmatpush1.msra.mxu0 0.0
    %2177 = vmatprep.subr.mxu0 0.0
    %2178 = vmatpush1.msra.mxu0 0.0
    %2179 = vmatprep.subr.mxu0 0.0
    %2180 = vmatpush1.msra.mxu0 0.0
    %2181 = vmatprep.subr.mxu0 0.0
    %2182 = vmatpush1.msra.mxu0 0.0
    %2183 = vmatprep.subr.mxu0 0.0
    %2184 = vmatpush1.msra.mxu0 0.0
    %2185 = vmatprep.subr.mxu0 0.0
    %2186 = vmatpush1.msra.mxu0 0.0
    %2187 = vmatprep.subr.mxu0 0.0
    %2188 = vmatpush1.msra.mxu0 0.0
    %2189 = vmatprep.subr.mxu0 0.0
    %2190 = vmatpush1.msra.mxu0 0.0
    %2191 = vmatprep.subr.mxu0 0.0
    %2192 = vmatpush1.msra.mxu0 0.0
    %2193 = vmatprep.subr.mxu0 0.0
    %2194 = vmatpush1.msra.mxu0 0.0
    %2195 = vmatprep.subr.mxu0 0.0
    %2196 = vmatpush1.msra.mxu0 0.0
    %2197 = vmatprep.subr.mxu0 0.0
    %2198 = vmatpush1.msra.mxu0 0.0
    %2199 = vmatprep.subr.mxu0 0.0
    %2200 = vmatpush1.msra.mxu0 0.0
    %2201 = vmatprep.mubr.f32.mxu0 %v2135
    %2202 = vmatmul.mubr.f32.gmra.mrb[0].mxu0 %v2133
    %v2203 = vpop.f32.mrb[0].mxu0
    %v2204 = vadd.f32 %v91, %v2203
    %v2205 = vpop.f32.mrb[0].mxu0
    %v2206 = vadd.f32 %v95, %v2205
    %2207 = vdwg.mxu0
    %v2208 = vmax.f32 %v2204, 0.0
    %v2209 = vmax.f32 %v2206, 0.0
    %v2210 = vld [vmem:[%s4 + $0x700] sm:$0xff]
    %v2211 = vld [vmem:[%s4 + $0x708] sm:$0xff]
    %v2212 = vld [vmem:[%s4 + $0x710] sm:$0xff]
    %v2213 = vld [vmem:[%s4 + $0x718] sm:$0xff]
    %v2214 = vld [vmem:[%s4 + $0x720] sm:$0xff]
    %v2215 = vld [vmem:[%s4 + $0x728] sm:$0xff]
    %v2216 = vld [vmem:[%s4 + $0x730] sm:$0xff]
    %v2217 = vld [vmem:[%s4 + $0x738] sm:$0xff]
    %v2218 = vld [vmem:[%s4 + $0x740] sm:$0xff]
    %v2219 = vld [vmem:[%s4 + $0x748] sm:$0xff]
    %v2220 = vld [vmem:[%s4 + $0x750] sm:$0xff]
    %v2221 = vld [vmem:[%s4 + $0x758] sm:$0xff]
    %v2222 = vld [vmem:[%s4 + $0x760] sm:$0xff]
    %v2223 = vld [vmem:[%s4 + $0x768] sm:$0xff]
    %v2224 = vld [vmem:[%s4 + $0x770] sm:$0xff]
    %v2225 = vld [vmem:[%s4 + $0x778] sm:$0xff]
    %v2226 = vld [vmem:[%s4 + $0x780] sm:$0xff]
    %v2227 = vld [vmem:[%s4 + $0x788] sm:$0xff]
    %v2228 = vld [vmem:[%s4 + $0x790] sm:$0xff]
    %v2229 = vld [vmem:[%s4 + $0x798] sm:$0xff]
    %v2230 = vld [vmem:[%s4 + $0x7a0] sm:$0xff]
    %v2231 = vld [vmem:[%s4 + $0x7a8] sm:$0xff]
    %v2232 = vld [vmem:[%s4 + $0x7b0] sm:$0xff]
    %v2233 = vld [vmem:[%s4 + $0x7b8] sm:$0xff]
    %v2234 = vld [vmem:[%s4 + $0x7c0] sm:$0xff]
    %v2235 = vld [vmem:[%s4 + $0x7c8] sm:$0xff]
    %v2236 = vld [vmem:[%s4 + $0x7d0] sm:$0xff]
    %v2237 = vld [vmem:[%s4 + $0x7d8] sm:$0xff]
    %v2238 = vld [vmem:[%s4 + $0x7e0] sm:$0xff]
    %v2239 = vld [vmem:[%s4 + $0x7e8] sm:$0xff]
    %v2240 = vld [vmem:[%s4 + $0x7f0] sm:$0xff]
    %v2241 = vld [vmem:[%s4 + $0x7f8] sm:$0xff]
    %2242 = vmatprep.subr.mxu0 0.0
    %2243 = vmatpush1.msra.mxu0 %v2210
    %2244 = vmatprep.subr.mxu0 0.0
    %2245 = vmatpush1.msra.mxu0 %v2211
    %2246 = vmatprep.subr.mxu0 0.0
    %2247 = vmatpush1.msra.mxu0 %v2212
    %2248 = vmatprep.subr.mxu0 0.0
    %2249 = vmatpush1.msra.mxu0 %v2213
    %2250 = vmatprep.subr.mxu0 0.0
    %2251 = vmatpush1.msra.mxu0 %v2214
    %2252 = vmatprep.subr.mxu0 0.0
    %2253 = vmatpush1.msra.mxu0 %v2215
    %2254 = vmatprep.subr.mxu0 0.0
    %2255 = vmatpush1.msra.mxu0 %v2216
    %2256 = vmatprep.subr.mxu0 0.0
    %2257 = vmatpush1.msra.mxu0 %v2217
    %2258 = vmatprep.subr.mxu0 0.0
    %2259 = vmatpush1.msra.mxu0 %v2218
    %2260 = vmatprep.subr.mxu0 0.0
    %2261 = vmatpush1.msra.mxu0 %v2219
    %2262 = vmatprep.subr.mxu0 0.0
    %2263 = vmatpush1.msra.mxu0 %v2220
    %2264 = vmatprep.subr.mxu0 0.0
    %2265 = vmatpush1.msra.mxu0 %v2221
    %2266 = vmatprep.subr.mxu0 0.0
    %2267 = vmatpush1.msra.mxu0 %v2222
    %2268 = vmatprep.subr.mxu0 0.0
    %2269 = vmatpush1.msra.mxu0 %v2223
    %2270 = vmatprep.subr.mxu0 0.0
    %2271 = vmatpush1.msra.mxu0 %v2224
    %2272 = vmatprep.subr.mxu0 0.0
    %2273 = vmatpush1.msra.mxu0 %v2225
    %2274 = vmatprep.subr.mxu0 0.0
    %2275 = vmatpush1.msra.mxu0 %v2226
    %2276 = vmatprep.subr.mxu0 0.0
    %2277 = vmatpush1.msra.mxu0 %v2227
    %2278 = vmatprep.subr.mxu0 0.0
    %2279 = vmatpush1.msra.mxu0 %v2228
    %2280 = vmatprep.subr.mxu0 0.0
    %2281 = vmatpush1.msra.mxu0 %v2229
    %2282 = vmatprep.subr.mxu0 0.0
    %2283 = vmatpush1.msra.mxu0 %v2230
    %2284 = vmatprep.subr.mxu0 0.0
    %2285 = vmatpush1.msra.mxu0 %v2231
    %2286 = vmatprep.subr.mxu0 0.0
    %2287 = vmatpush1.msra.mxu0 %v2232
    %2288 = vmatprep.subr.mxu0 0.0
    %2289 = vmatpush1.msra.mxu0 %v2233
    %2290 = vmatprep.subr.mxu0 0.0
    %2291 = vmatpush1.msra.mxu0 %v2234
    %2292 = vmatprep.subr.mxu0 0.0
    %2293 = vmatpush1.msra.mxu0 %v2235
    %2294 = vmatprep.subr.mxu0 0.0
    %2295 = vmatpush1.msra.mxu0 %v2236
    %2296 = vmatprep.subr.mxu0 0.0
    %2297 = vmatpush1.msra.mxu0 %v2237
    %2298 = vmatprep.subr.mxu0 0.0
    %2299 = vmatpush1.msra.mxu0 %v2238
    %2300 = vmatprep.subr.mxu0 0.0
    %2301 = vmatpush1.msra.mxu0 %v2239
    %2302 = vmatprep.subr.mxu0 0.0
    %2303 = vmatpush1.msra.mxu0 %v2240
    %2304 = vmatprep.subr.mxu0 0.0
    %2305 = vmatpush1.msra.mxu0 %v2241
    %2306 = vmatprep.mubr.f32.mxu0 %v2209
    %2307 = vmatmul.mubr.f32.gmra.mrb[0].mxu0 %v2208
    %v2308 = vpop.f32.mrb[0].mxu0
    %v2309 = vadd.f32 0.0, %v2308
    %v2310 = vpop.f32.mrb[0].mxu0
    %2311 = vdwg.mxu0
    %v2312 = vadd.f32 %v2025, %v2309
    %v2313 = vld [vmem:[%s6 + $0x700] sm:$0xff]
    %v2314 = vld [vmem:[%s6 + $0x708] sm:$0xff]
    %v2315 = vld [vmem:[%s6 + $0x710] sm:$0xff]
    %v2316 = vld [vmem:[%s6 + $0x718] sm:$0xff]
    %v2317 = vld [vmem:[%s6 + $0x720] sm:$0xff]
    %v2318 = vld [vmem:[%s6 + $0x728] sm:$0xff]
    %v2319 = vld [vmem:[%s6 + $0x730] sm:$0xff]
    %v2320 = vld [vmem:[%s6 + $0x738] sm:$0xff]
    %v2321 = vld [vmem:[%s6 + $0x740] sm:$0xff]
    %v2322 = vld [vmem:[%s6 + $0x748] sm:$0xff]
    %v2323 = vld [vmem:[%s6 + $0x750] sm:$0xff]
    %v2324 = vld [vmem:[%s6 + $0x758] sm:$0xff]
    %v2325 = vld [vmem:[%s6 + $0x760] sm:$0xff]
    %v2326 = vld [vmem:[%s6 + $0x768] sm:$0xff]
    %v2327 = vld [vmem:[%s6 + $0x770] sm:$0xff]
    %v2328 = vld [vmem:[%s6 + $0x778] sm:$0xff]
    %v2329 = vld [vmem:[%s6 + $0x780] sm:$0xff]
    %v2330 = vld [vmem:[%s6 + $0x788] sm:$0xff]
    %v2331 = vld [vmem:[%s6 + $0x790] sm:$0xff]
    %v2332 = vld [vmem:[%s6 + $0x798] sm:$0xff]
    %v2333 = vld [vmem:[%s6 + $0x7a0] sm:$0xff]
    %v2334 = vld [vmem:[%s6 + $0x7a8] sm:$0xff]
    %v2335 = vld [vmem:[%s6 + $0x7b0] sm:$0xff]
    %v2336 = vld [vmem:[%s6 + $0x7b8] sm:$0xff]
    %v2337 = vld [vmem:[%s6 + $0x7c0] sm:$0xff]
    %v2338 = vld [vmem:[%s6 + $0x7c8] sm:$0xff]
    %v2339 = vld [vmem:[%s6 + $0x7d0] sm:$0xff]
    %v2340 = vld [vmem:[%s6 + $0x7d8] sm:$0xff]
    %v2341 = vld [vmem:[%s6 + $0x7e0] sm:$0xff]
    %v2342 = vld [vmem:[%s6 + $0x7e8] sm:$0xff]
    %v2343 = vld [vmem:[%s6 + $0x7f0] sm:$0xff]
    %v2344 = vld [vmem:[%s6 + $0x7f8] sm:$0xff]
    %2345 = vmatprep.subr.mxu0 0.0
    %2346 = vmatpush1.msra.mxu0 %v2313
    %2347 = vmatprep.subr.mxu0 0.0
    %2348 = vmatpush1.msra.mxu0 %v2314
    %2349 = vmatprep.subr.mxu0 0.0
    %2350 = vmatpush1.msra.mxu0 %v2315
    %2351 = vmatprep.subr.mxu0 0.0
    %2352 = vmatpush1.msra.mxu0 %v2316
    %2353 = vmatprep.subr.mxu0 0.0
    %2354 = vmatpush1.msra.mxu0 %v2317
    %2355 = vmatprep.subr.mxu0 0.0
    %2356 = vmatpush1.msra.mxu0 %v2318
    %2357 = vmatprep.subr.mxu0 0.0
    %2358 = vmatpush1.msra.mxu0 %v2319
    %2359 = vmatprep.subr.mxu0 0.0
    %2360 = vmatpush1.msra.mxu0 %v2320
    %2361 = vmatprep.subr.mxu0 0.0
    %2362 = vmatpush1.msra.mxu0 %v2321
    %2363 = vmatprep.subr.mxu0 0.0
    %2364 = vmatpush1.msra.mxu0 %v2322
    %2365 = vmatprep.subr.mxu0 0.0
    %2366 = vmatpush1.msra.mxu0 %v2323
    %2367 = vmatprep.subr.mxu0 0.0
    %2368 = vmatpush1.msra.mxu0 %v2324
    %2369 = vmatprep.subr.mxu0 0.0
    %2370 = vmatpush1.msra.mxu0 %v2325
    %2371 = vmatprep.subr.mxu0 0.0
    %2372 = vmatpush1.msra.mxu0 %v2326
    %2373 = vmatprep.subr.mxu0 0.0
    %2374 = vmatpush1.msra.mxu0 %v2327
    %2375 = vmatprep.subr.mxu0 0.0
    %2376 = vmatpush1.msra.mxu0 %v2328
    %2377 = vmatprep.subr.mxu0 0.0
    %2378 = vmatpush1.msra.mxu0 %v2329
    %2379 = vmatprep.subr.mxu0 0.0
    %2380 = vmatpush1.msra.mxu0 %v2330
    %2381 = vmatprep.subr.mxu0 0.0
    %2382 = vmatpush1.msra.mxu0 %v2331
    %2383 = vmatprep.subr.mxu0 0.0
    %2384 = vmatpush1.msra.mxu0 %v2332
    %2385 = vmatprep.subr.mxu0 0.0
    %2386 = vmatpush1.msra.mxu0 %v2333
    %2387 = vmatprep.subr.mxu0 0.0
    %2388 = vmatpush1.msra.mxu0 %v2334
    %2389 = vmatprep.subr.mxu0 0.0
    %2390 = vmatpush1.msra.mxu0 %v2335
    %2391 = vmatprep.subr.mxu0 0.0
    %2392 = vmatpush1.msra.mxu0 %v2336
    %2393 = vmatprep.subr.mxu0 0.0
    %2394 = vmatpush1.msra.mxu0 %v2337
    %2395 = vmatprep.subr.mxu0 0.0
    %2396 = vmatpush1.msra.mxu0 %v2338
    %2397 = vmatprep.subr.mxu0 0.0
    %2398 = vmatpush1.msra.mxu0 %v2339
    %2399 = vmatprep.subr.mxu0 0.0
    %2400 = vmatpush1.msra.mxu0 %v2340
    %2401 = vmatprep.subr.mxu0 0.0
    %2402 = vmatpush1.msra.mxu0 %v2341
    %2403 = vmatprep.subr.mxu0 0.0
    %2404 = vmatpush1.msra.mxu0 %v2342
    %2405 = vmatprep.subr.mxu0 0.0
    %2406 = vmatpush1.msra.mxu0 %v2343
    %2407 = vmatprep.subr.mxu0 0.0
    %2408 = vmatpush1.msra.mxu0 %v2344
    %2409 = vmatprep.mubr.f32.mxu0 %v2209
    %2410 = vmatmul.mubr.f32.gmra.mrb[0].mxu0 %v2208
    %v2411 = vpop.f32.mrb[0].mxu0
    %v2412 = vadd.f32 0.0, %v2411
    %v2413 = vpop.f32.mrb[0].mxu0
    %2414 = vdwg.mxu0
    %v2415 = vadd.f32 %v2128, %v2412
    %v2416 = vld [vmem:[%s5] sm:$0x1]
    %v2418 = vlaneseq
    %v2419 = vshrl.u32 %v2418, 7
    %v2420 = vsub.s32 0, %v2419
    %v2421 = vrot.slane %v2416, %v2420
    %v2423 = vadd.f32 %v2312, %v2421
    %v2424 = vld [vmem:[%s7] sm:$0x1]
    %v2426 = vlaneseq
    %v2427 = vshrl.u32 %v2426, 7
    %v2428 = vsub.s32 0, %v2427
    %v2429 = vrot.slane %v2424, %v2428
    %v2431 = vadd.f32 %v2415, %v2429
    %vm2432 = vcmask 58368
    %2433 = vst.msk [vmem:[#allocation3] sm:$0x3] %vm2432, %v2423
    %2434 = vst.msk [vmem:[#allocation5] sm:$0x3] %vm2432, %v2431
    %v2435 = vmul.f32 %v2431, 0.5
    %v2436 = vmul.f32 %v2435, 1.442695
    %v2437 = vpow.pop %v2436
    %v2438 = vmul.f32 %v2437, %v49
    %v2439 = vadd.f32 %v2423, %v2438
    %2440 = vst.msk [vmem:[#allocation2] sm:$0x3] %vm2432, %v2439
    %2441 = vst.msk [vmem:[#allocation2 + $0x2] sm:$0x3] %vm2432, %v49
    %v2442 = vld [vmem:[#allocation2] sm:$0xf]
    %v2443 = vld [vmem:[%s8] sm:$0xff]
    %v2444 = vld [vmem:[%s8 + $0x8] sm:$0xff]
    %v2445 = vld [vmem:[%s8 + $0x10] sm:$0xff]
    %v2446 = vld [vmem:[%s8 + $0x18] sm:$0xff]
    %v2447 = vld [vmem:[%s8 + $0x20] sm:$0xff]
    %v2448 = vld [vmem:[%s8 + $0x28] sm:$0xff]
    %v2449 = vld [vmem:[%s8 + $0x30] sm:$0xff]
    %v2450 = vld [vmem:[%s8 + $0x38] sm:$0xff]
    %v2451 = vld [vmem:[%s8 + $0x40] sm:$0xff]
    %v2452 = vld [vmem:[%s8 + $0x48] sm:$0xff]
    %v2453 = vld [vmem:[%s8 + $0x50] sm:$0xff]
    %v2454 = vld [vmem:[%s8 + $0x58] sm:$0xff]
    %v2455 = vld [vmem:[%s8 + $0x60] sm:$0xff]
    %v2456 = vld [vmem:[%s8 + $0x68] sm:$0xff]
    %v2457 = vld [vmem:[%s8 + $0x70] sm:$0xff]
    %v2458 = vld [vmem:[%s8 + $0x78] sm:$0xff]
    %v2459 = vld [vmem:[%s9] sm:$0xff]
    %v2460 = vld [vmem:[%s9 + $0x8] sm:$0xff]
    %v2463 = vlaneseq
    %v2464 = vshrl.u32 %v2463, 7
    %v2465 = vsub.s32 0, %v2464
    %v2466 = vrot.slane %v2459, %v2465
    %v2467 = vlaneseq
    %v2468 = vshrl.u32 %v2467, 7
    %v2469 = vsub.s32 1, %v2468
    %v2470 = vrot.slane %v2459, %v2469
    %v2471 = vlaneseq
    %v2472 = vshrl.u32 %v2471, 7
    %v2473 = vsub.s32 2, %v2472
    %v2474 = vrot.slane %v2459, %v2473
    %v2475 = vlaneseq
    %v2476 = vshrl.u32 %v2475, 7
    %v2477 = vsub.s32 3, %v2476
    %v2478 = vrot.slane %v2459, %v2477
    %v2479 = vlaneseq
    %v2480 = vshrl.u32 %v2479, 7
    %v2481 = vsub.s32 4, %v2480
    %v2482 = vrot.slane %v2459, %v2481
    %v2483 = vlaneseq
    %v2484 = vshrl.u32 %v2483, 7
    %v2485 = vsub.s32 5, %v2484
    %v2486 = vrot.slane %v2459, %v2485
    %v2487 = vlaneseq
    %v2488 = vshrl.u32 %v2487, 7
    %v2489 = vsub.s32 6, %v2488
    %v2490 = vrot.slane %v2459, %v2489
    %v2491 = vlaneseq
    %v2492 = vshrl.u32 %v2491, 7
    %v2493 = vsub.s32 7, %v2492
    %v2494 = vrot.slane %v2459, %v2493
    %v2495 = vlaneseq
    %v2496 = vshrl.u32 %v2495, 7
    %v2497 = vsub.s32 0, %v2496
    %v2498 = vrot.slane %v2460, %v2497
    %v2499 = vlaneseq
    %v2500 = vshrl.u32 %v2499, 7
    %v2501 = vsub.s32 1, %v2500
    %v2502 = vrot.slane %v2460, %v2501
    %v2503 = vlaneseq
    %v2504 = vshrl.u32 %v2503, 7
    %v2505 = vsub.s32 2, %v2504
    %v2506 = vrot.slane %v2460, %v2505
    %v2507 = vlaneseq
    %v2508 = vshrl.u32 %v2507, 7
    %v2509 = vsub.s32 3, %v2508
    %v2510 = vrot.slane %v2460, %v2509
    %v2511 = vlaneseq
    %v2512 = vshrl.u32 %v2511, 7
    %v2513 = vsub.s32 4, %v2512
    %v2514 = vrot.slane %v2460, %v2513
    %v2515 = vlaneseq
    %v2516 = vshrl.u32 %v2515, 7
    %v2517 = vsub.s32 5, %v2516
    %v2518 = vrot.slane %v2460, %v2517
    %v2519 = vlaneseq
    %v2520 = vshrl.u32 %v2519, 7
    %v2521 = vsub.s32 6, %v2520
    %v2522 = vrot.slane %v2460, %v2521
    %v2523 = vlaneseq
    %v2524 = vshrl.u32 %v2523, 7
    %v2525 = vsub.s32 7, %v2524
    %v2526 = vrot.slane %v2460, %v2525
    %vm2543 = vcmask 64512
    %v2545 = vsel %vm2543, %v2442, 0
    %2547 = vmatprep.subr.mxu0 %v2444
    %2548 = vmatpush1.msra.mxu0 %v2443
    %2549 = vmatprep.subr.mxu0 0.0
    %2550 = vmatpush1.msra.mxu0 0.0
    %2551 = vmatprep.subr.mxu0 0.0
    %2552 = vmatpush1.msra.mxu0 0.0
    %2553 = vmatprep.subr.mxu0 0.0
    %2554 = vmatpush1.msra.mxu0 0.0
    %2555 = vmatprep.subr.mxu0 0.0
    %2556 = vmatpush1.msra.mxu0 0.0
    %2557 = vmatprep.subr.mxu0 0.0
    %2558 = vmatpush1.msra.mxu0 0.0
    %2559 = vmatprep.subr.mxu0 0.0
    %2560 = vmatpush1.msra.mxu0 0.0
    %2561 = vmatprep.subr.mxu0 0.0
    %2562 = vmatpush1.msra.mxu0 0.0
    %2563 = vmatprep.subr.mxu0 0.0
    %2564 = vmatpush1.msra.mxu0 0.0
    %2565 = vmatprep.subr.mxu0 0.0
    %2566 = vmatpush1.msra.mxu0 0.0
    %2567 = vmatprep.subr.mxu0 0.0
    %2568 = vmatpush1.msra.mxu0 0.0
    %2569 = vmatprep.subr.mxu0 0.0
    %2570 = vmatpush1.msra.mxu0 0.0
    %2571 = vmatprep.subr.mxu0 0.0
    %2572 = vmatpush1.msra.mxu0 0.0
    %2573 = vmatprep.subr.mxu0 0.0
    %2574 = vmatpush1.msra.mxu0 0.0
    %2575 = vmatprep.subr.mxu0 0.0
    %2576 = vmatpush1.msra.mxu0 0.0
    %2577 = vmatprep.subr.mxu0 0.0
    %2578 = vmatpush1.msra.mxu0 0.0
    %2579 = vmatprep.subr.mxu0 0.0
    %2580 = vmatpush1.msra.mxu0 0.0
    %2581 = vmatprep.subr.mxu0 0.0
    %2582 = vmatpush1.msra.mxu0 0.0
    %2583 = vmatprep.subr.mxu0 0.0
    %2584 = vmatpush1.msra.mxu0 0.0
    %2585 = vmatprep.subr.mxu0 0.0
    %2586 = vmatpush1.msra.mxu0 0.0
    %2587 = vmatprep.subr.mxu0 0.0
    %2588 = vmatpush1.msra.mxu0 0.0
    %2589 = vmatprep.subr.mxu0 0.0
    %2590 = vmatpush1.msra.mxu0 0.0
    %2591 = vmatprep.subr.mxu0 0.0
    %2592 = vmatpush1.msra.mxu0 0.0
    %2593 = vmatprep.subr.mxu0 0.0
    %2594 = vmatpush1.msra.mxu0 0.0
    %2595 = vmatprep.subr.mxu0 0.0
    %2596 = vmatpush1.msra.mxu0 0.0
    %2597 = vmatprep.subr.mxu0 0.0
    %2598 = vmatpush1.msra.mxu0 0.0
    %2599 = vmatprep.subr.mxu0 0.0
    %2600 = vmatpush1.msra.mxu0 0.0
    %2601 = vmatprep.subr.mxu0 0.0
    %2602 = vmatpush1.msra.mxu0 0.0
    %2603 = vmatprep.subr.mxu0 0.0
    %2604 = vmatpush1.msra.mxu0 0.0
    %2605 = vmatprep.subr.mxu0 0.0
    %2606 = vmatpush1.msra.mxu0 0.0
    %2607 = vmatprep.subr.mxu0 0.0
    %2608 = vmatpush1.msra.mxu0 0.0
    %2609 = vmatprep.subr.mxu0 0.0
    %2610 = vmatpush1.msra.mxu0 0.0
    %2611 = vmatprep.mubr.f32.mxu0 0.0
    %2612 = vmatmul.mubr.f32.gmra.mrb[0].mxu0 %v2545
    %v2613 = vpop.f32.mrb[0].mxu0
    %v2614 = vadd.f32 %v2466, %v2613
    %v2615 = vpop.f32.mrb[0].mxu0
    %v2616 = vadd.f32 %v2470, %v2615
    %2617 = vdwg.mxu0
    %2618 = vmatprep.subr.mxu0 %v2446
    %2619 = vmatpush1.msra.mxu0 %v2445
    %2620 = vmatprep.subr.mxu0 0.0
    %2621 = vmatpush1.msra.mxu0 0.0
    %2622 = vmatprep.subr.mxu0 0.0
    %2623 = vmatpush1.msra.mxu0 0.0
    %2624 = vmatprep.subr.mxu0 0.0
    %2625 = vmatpush1.msra.mxu0 0.0
    %2626 = vmatprep.subr.mxu0 0.0
    %2627 = vmatpush1.msra.mxu0 0.0
    %2628 = vmatprep.subr.mxu0 0.0
    %2629 = vmatpush1.msra.mxu0 0.0
    %2630 = vmatprep.subr.mxu0 0.0
    %2631 = vmatpush1.msra.mxu0 0.0
    %2632 = vmatprep.subr.mxu0 0.0
    %2633 = vmatpush1.msra.mxu0 0.0
    %2634 = vmatprep.subr.mxu0 0.0
    %2635 = vmatpush1.msra.mxu0 0.0
    %2636 = vmatprep.subr.mxu0 0.0
    %2637 = vmatpush1.msra.mxu0 0.0
    %2638 = vmatprep.subr.mxu0 0.0
    %2639 = vmatpush1.msra.mxu0 0.0
    %2640 = vmatprep.subr.mxu0 0.0
    %2641 = vmatpush1.msra.mxu0 0.0
    %2642 = vmatprep.subr.mxu0 0.0
    %2643 = vmatpush1.msra.mxu0 0.0
    %2644 = vmatprep.subr.mxu0 0.0
    %2645 = vmatpush1.msra.mxu0 0.0
    %2646 = vmatprep.subr.mxu0 0.0
    %2647 = vmatpush1.msra.mxu0 0.0
    %2648 = vmatprep.subr.mxu0 0.0
    %2649 = vmatpush1.msra.mxu0 0.0
    %2650 = vmatprep.subr.mxu0 0.0
    %2651 = vmatpush1.msra.mxu0 0.0
    %2652 = vmatprep.subr.mxu0 0.0
    %2653 = vmatpush1.msra.mxu0 0.0
    %2654 = vmatprep.subr.mxu0 0.0
    %2655 = vmatpush1.msra.mxu0 0.0
    %2656 = vmatprep.subr.mxu0 0.0
    %2657 = vmatpush1.msra.mxu0 0.0
    %2658 = vmatprep.subr.mxu0 0.0
    %2659 = vmatpush1.msra.mxu0 0.0
    %2660 = vmatprep.subr.mxu0 0.0
    %2661 = vmatpush1.msra.mxu0 0.0
    %2662 = vmatprep.subr.mxu0 0.0
    %2663 = vmatpush1.msra.mxu0 0.0
    %2664 = vmatprep.subr.mxu0 0.0
    %2665 = vmatpush1.msra.mxu0 0.0
    %2666 = vmatprep.subr.mxu0 0.0
    %2667 = vmatpush1.msra.mxu0 0.0
    %2668 = vmatprep.subr.mxu0 0.0
    %2669 = vmatpush1.msra.mxu0 0.0
    %2670 = vmatprep.subr.mxu0 0.0
    %2671 = vmatpush1.msra.mxu0 0.0
    %2672 = vmatprep.subr.mxu0 0.0
    %2673 = vmatpush1.msra.mxu0 0.0
    %2674 = vmatprep.subr.mxu0 0.0
    %2675 = vmatpush1.msra.mxu0 0.0
    %2676 = vmatprep.subr.mxu0 0.0
    %2677 = vmatpush1.msra.mxu0 0.0
    %2678 = vmatprep.subr.mxu0 0.0
    %2679 = vmatpush1.msra.mxu0 0.0
    %2680 = vmatprep.subr.mxu0 0.0
    %2681 = vmatpush1.msra.mxu0 0.0
    %2682 = vmatprep.mubr.f32.mxu0 0.0
    %2683 = vmatmul.mubr.f32.gmra.mrb[0].mxu0 %v2545
    %v2684 = vpop.f32.mrb[0].mxu0
    %v2685 = vadd.f32 %v2474, %v2684
    %v2686 = vpop.f32.mrb[0].mxu0
    %v2687 = vadd.f32 %v2478, %v2686
    %2688 = vdwg.mxu0
    %2689 = vmatprep.subr.mxu0 %v2448
    %2690 = vmatpush1.msra.mxu0 %v2447
    %2691 = vmatprep.subr.mxu0 0.0
    %2692 = vmatpush1.msra.mxu0 0.0
    %2693 = vmatprep.subr.mxu0 0.0
    %2694 = vmatpush1.msra.mxu0 0.0
    %2695 = vmatprep.subr.mxu0 0.0
    %2696 = vmatpush1.msra.mxu0 0.0
    %2697 = vmatprep.subr.mxu0 0.0
    %2698 = vmatpush1.msra.mxu0 0.0
    %2699 = vmatprep.subr.mxu0 0.0
    %2700 = vmatpush1.msra.mxu0 0.0
    %2701 = vmatprep.subr.mxu0 0.0
    %2702 = vmatpush1.msra.mxu0 0.0
    %2703 = vmatprep.subr.mxu0 0.0
    %2704 = vmatpush1.msra.mxu0 0.0
    %2705 = vmatprep.subr.mxu0 0.0
    %2706 = vmatpush1.msra.mxu0 0.0
    %2707 = vmatprep.subr.mxu0 0.0
    %2708 = vmatpush1.msra.mxu0 0.0
    %2709 = vmatprep.subr.mxu0 0.0
    %2710 = vmatpush1.msra.mxu0 0.0
    %2711 = vmatprep.subr.mxu0 0.0
    %2712 = vmatpush1.msra.mxu0 0.0
    %2713 = vmatprep.subr.mxu0 0.0
    %2714 = vmatpush1.msra.mxu0 0.0
    %2715 = vmatprep.subr.mxu0 0.0
    %2716 = vmatpush1.msra.mxu0 0.0
    %2717 = vmatprep.subr.mxu0 0.0
    %2718 = vmatpush1.msra.mxu0 0.0
    %2719 = vmatprep.subr.mxu0 0.0
    %2720 = vmatpush1.msra.mxu0 0.0
    %2721 = vmatprep.subr.mxu0 0.0
    %2722 = vmatpush1.msra.mxu0 0.0
    %2723 = vmatprep.subr.mxu0 0.0
    %2724 = vmatpush1.msra.mxu0 0.0
    %2725 = vmatprep.subr.mxu0 0.0
    %2726 = vmatpush1.msra.mxu0 0.0
    %2727 = vmatprep.subr.mxu0 0.0
    %2728 = vmatpush1.msra.mxu0 0.0
    %2729 = vmatprep.subr.mxu0 0.0
    %2730 = vmatpush1.msra.mxu0 0.0
    %2731 = vmatprep.subr.mxu0 0.0
    %2732 = vmatpush1.msra.mxu0 0.0
    %2733 = vmatprep.subr.mxu0 0.0
    %2734 = vmatpush1.msra.mxu0 0.0
    %2735 = vmatprep.subr.mxu0 0.0
    %2736 = vmatpush1.msra.mxu0 0.0
    %2737 = vmatprep.subr.mxu0 0.0
    %2738 = vmatpush1.msra.mxu0 0.0
    %2739 = vmatprep.subr.mxu0 0.0
    %2740 = vmatpush1.msra.mxu0 0.0
    %2741 = vmatprep.subr.mxu0 0.0
    %2742 = vmatpush1.msra.mxu0 0.0
    %2743 = vmatprep.subr.mxu0 0.0
    %2744 = vmatpush1.msra.mxu0 0.0
    %2745 = vmatprep.subr.mxu0 0.0
    %2746 = vmatpush1.msra.mxu0 0.0
    %2747 = vmatprep.subr.mxu0 0.0
    %2748 = vmatpush1.msra.mxu0 0.0
    %2749 = vmatprep.subr.mxu0 0.0
    %2750 = vmatpush1.msra.mxu0 0.0
    %2751 = vmatprep.subr.mxu0 0.0
    %2752 = vmatpush1.msra.mxu0 0.0
    %2753 = vmatprep.mubr.f32.mxu0 0.0
    %2754 = vmatmul.mubr.f32.gmra.mrb[0].mxu0 %v2545
    %v2755 = vpop.f32.mrb[0].mxu0
    %v2756 = vadd.f32 %v2482, %v2755
    %v2757 = vpop.f32.mrb[0].mxu0
    %v2758 = vadd.f32 %v2486, %v2757
    %2759 = vdwg.mxu0
    %2760 = vmatprep.subr.mxu0 %v2450
    %2761 = vmatpush1.msra.mxu0 %v2449
    %2762 = vmatprep.subr.mxu0 0.0
    %2763 = vmatpush1.msra.mxu0 0.0
    %2764 = vmatprep.subr.mxu0 0.0
    %2765 = vmatpush1.msra.mxu0 0.0
    %2766 = vmatprep.subr.mxu0 0.0
    %2767 = vmatpush1.msra.mxu0 0.0
    %2768 = vmatprep.subr.mxu0 0.0
    %2769 = vmatpush1.msra.mxu0 0.0
    %2770 = vmatprep.subr.mxu0 0.0
    %2771 = vmatpush1.msra.mxu0 0.0
    %2772 = vmatprep.subr.mxu0 0.0
    %2773 = vmatpush1.msra.mxu0 0.0
    %2774 = vmatprep.subr.mxu0 0.0
    %2775 = vmatpush1.msra.mxu0 0.0
    %2776 = vmatprep.subr.mxu0 0.0
    %2777 = vmatpush1.msra.mxu0 0.0
    %2778 = vmatprep.subr.mxu0 0.0
    %2779 = vmatpush1.msra.mxu0 0.0
    %2780 = vmatprep.subr.mxu0 0.0
    %2781 = vmatpush1.msra.mxu0 0.0
    %2782 = vmatprep.subr.mxu0 0.0
    %2783 = vmatpush1.msra.mxu0 0.0
    %2784 = vmatprep.subr.mxu0 0.0
    %2785 = vmatpush1.msra.mxu0 0.0
    %2786 = vmatprep.subr.mxu0 0.0
    %2787 = vmatpush1.msra.mxu0 0.0
    %2788 = vmatprep.subr.mxu0 0.0
    %2789 = vmatpush1.msra.mxu0 0.0
    %2790 = vmatprep.subr.mxu0 0.0
    %2791 = vmatpush1.msra.mxu0 0.0
    %2792 = vmatprep.subr.mxu0 0.0
    %2793 = vmatpush1.msra.mxu0 0.0
    %2794 = vmatprep.subr.mxu0 0.0
    %2795 = vmatpush1.msra.mxu0 0.0
    %2796 = vmatprep.subr.mxu0 0.0
    %2797 = vmatpush1.msra.mxu0 0.0
    %2798 = vmatprep.subr.mxu0 0.0
    %2799 = vmatpush1.msra.mxu0 0.0
    %2800 = vmatprep.subr.mxu0 0.0
    %2801 = vmatpush1.msra.mxu0 0.0
    %2802 = vmatprep.subr.mxu0 0.0
    %2803 = vmatpush1.msra.mxu0 0.0
    %2804 = vmatprep.subr.mxu0 0.0
    %2805 = vmatpush1.msra.mxu0 0.0
    %2806 = vmatprep.subr.mxu0 0.0
    %2807 = vmatpush1.msra.mxu0 0.0
    %2808 = vmatprep.subr.mxu0 0.0
    %2809 = vmatpush1.msra.mxu0 0.0
    %2810 = vmatprep.subr.mxu0 0.0
    %2811 = vmatpush1.msra.mxu0 0.0
    %2812 = vmatprep.subr.mxu0 0.0
    %2813 = vmatpush1.msra.mxu0 0.0
    %2814 = vmatprep.subr.mxu0 0.0
    %2815 = vmatpush1.msra.mxu0 0.0
    %2816 = vmatprep.subr.mxu0 0.0
    %2817 = vmatpush1.msra.mxu0 0.0
    %2818 = vmatprep.subr.mxu0 0.0
    %2819 = vmatpush1.msra.mxu0 0.0
    %2820 = vmatprep.subr.mxu0 0.0
    %2821 = vmatpush1.msra.mxu0 0.0
    %2822 = vmatprep.subr.mxu0 0.0
    %2823 = vmatpush1.msra.mxu0 0.0
    %2824 = vmatprep.mubr.f32.mxu0 0.0
    %2825 = vmatmul.mubr.f32.gmra.mrb[0].mxu0 %v2545
    %v2826 = vpop.f32.mrb[0].mxu0
    %v2827 = vadd.f32 %v2490, %v2826
    %v2828 = vpop.f32.mrb[0].mxu0
    %v2829 = vadd.f32 %v2494, %v2828
    %2830 = vdwg.mxu0
    %2831 = vmatprep.subr.mxu0 %v2452
    %2832 = vmatpush1.msra.mxu0 %v2451
    %2833 = vmatprep.subr.mxu0 0.0
    %2834 = vmatpush1.msra.mxu0 0.0
    %2835 = vmatprep.subr.mxu0 0.0
    %2836 = vmatpush1.msra.mxu0 0.0
    %2837 = vmatprep.subr.mxu0 0.0
    %2838 = vmatpush1.msra.mxu0 0.0
    %2839 = vmatprep.subr.mxu0 0.0
    %2840 = vmatpush1.msra.mxu0 0.0
    %2841 = vmatprep.subr.mxu0 0.0
    %2842 = vmatpush1.msra.mxu0 0.0
    %2843 = vmatprep.subr.mxu0 0.0
    %2844 = vmatpush1.msra.mxu0 0.0
    %2845 = vmatprep.subr.mxu0 0.0
    %2846 = vmatpush1.msra.mxu0 0.0
    %2847 = vmatprep.subr.mxu0 0.0
    %2848 = vmatpush1.msra.mxu0 0.0
    %2849 = vmatprep.subr.mxu0 0.0
    %2850 = vmatpush1.msra.mxu0 0.0
    %2851 = vmatprep.subr.mxu0 0.0
    %2852 = vmatpush1.msra.mxu0 0.0
    %2853 = vmatprep.subr.mxu0 0.0
    %2854 = vmatpush1.msra.mxu0 0.0
    %2855 = vmatprep.subr.mxu0 0.0
    %2856 = vmatpush1.msra.mxu0 0.0
    %2857 = vmatprep.subr.mxu0 0.0
    %2858 = vmatpush1.msra.mxu0 0.0
    %2859 = vmatprep.subr.mxu0 0.0
    %2860 = vmatpush1.msra.mxu0 0.0
    %2861 = vmatprep.subr.mxu0 0.0
    %2862 = vmatpush1.msra.mxu0 0.0
    %2863 = vmatprep.subr.mxu0 0.0
    %2864 = vmatpush1.msra.mxu0 0.0
    %2865 = vmatprep.subr.mxu0 0.0
    %2866 = vmatpush1.msra.mxu0 0.0
    %2867 = vmatprep.subr.mxu0 0.0
    %2868 = vmatpush1.msra.mxu0 0.0
    %2869 = vmatprep.subr.mxu0 0.0
    %2870 = vmatpush1.msra.mxu0 0.0
    %2871 = vmatprep.subr.mxu0 0.0
    %2872 = vmatpush1.msra.mxu0 0.0
    %2873 = vmatprep.subr.mxu0 0.0
    %2874 = vmatpush1.msra.mxu0 0.0
    %2875 = vmatprep.subr.mxu0 0.0
    %2876 = vmatpush1.msra.mxu0 0.0
    %2877 = vmatprep.subr.mxu0 0.0
    %2878 = vmatpush1.msra.mxu0 0.0
    %2879 = vmatprep.subr.mxu0 0.0
    %2880 = vmatpush1.msra.mxu0 0.0
    %2881 = vmatprep.subr.mxu0 0.0
    %2882 = vmatpush1.msra.mxu0 0.0
    %2883 = vmatprep.subr.mxu0 0.0
    %2884 = vmatpush1.msra.mxu0 0.0
    %2885 = vmatprep.subr.mxu0 0.0
    %2886 = vmatpush1.msra.mxu0 0.0
    %2887 = vmatprep.subr.mxu0 0.0
    %2888 = vmatpush1.msra.mxu0 0.0
    %2889 = vmatprep.subr.mxu0 0.0
    %2890 = vmatpush1.msra.mxu0 0.0
    %2891 = vmatprep.subr.mxu0 0.0
    %2892 = vmatpush1.msra.mxu0 0.0
    %2893 = vmatprep.subr.mxu0 0.0
    %2894 = vmatpush1.msra.mxu0 0.0
    %2895 = vmatprep.mubr.f32.mxu0 0.0
    %2896 = vmatmul.mubr.f32.gmra.mrb[0].mxu0 %v2545
    %v2897 = vpop.f32.mrb[0].mxu0
    %v2898 = vadd.f32 %v2498, %v2897
    %v2899 = vpop.f32.mrb[0].mxu0
    %v2900 = vadd.f32 %v2502, %v2899
    %2901 = vdwg.mxu0
    %2902 = vmatprep.subr.mxu0 %v2454
    %2903 = vmatpush1.msra.mxu0 %v2453
    %2904 = vmatprep.subr.mxu0 0.0
    %2905 = vmatpush1.msra.mxu0 0.0
    %2906 = vmatprep.subr.mxu0 0.0
    %2907 = vmatpush1.msra.mxu0 0.0
    %2908 = vmatprep.subr.mxu0 0.0
    %2909 = vmatpush1.msra.mxu0 0.0
    %2910 = vmatprep.subr.mxu0 0.0
    %2911 = vmatpush1.msra.mxu0 0.0
    %2912 = vmatprep.subr.mxu0 0.0
    %2913 = vmatpush1.msra.mxu0 0.0
    %2914 = vmatprep.subr.mxu0 0.0
    %2915 = vmatpush1.msra.mxu0 0.0
    %2916 = vmatprep.subr.mxu0 0.0
    %2917 = vmatpush1.msra.mxu0 0.0
    %2918 = vmatprep.subr.mxu0 0.0
    %2919 = vmatpush1.msra.mxu0 0.0
    %2920 = vmatprep.subr.mxu0 0.0
    %2921 = vmatpush1.msra.mxu0 0.0
    %2922 = vmatprep.subr.mxu0 0.0
    %2923 = vmatpush1.msra.mxu0 0.0
    %2924 = vmatprep.subr.mxu0 0.0
    %2925 = vmatpush1.msra.mxu0 0.0
    %2926 = vmatprep.subr.mxu0 0.0
    %2927 = vmatpush1.msra.mxu0 0.0
    %2928 = vmatprep.subr.mxu0 0.0
    %2929 = vmatpush1.msra.mxu0 0.0
    %2930 = vmatprep.subr.mxu0 0.0
    %2931 = vmatpush1.msra.mxu0 0.0
    %2932 = vmatprep.subr.mxu0 0.0
    %2933 = vmatpush1.msra.mxu0 0.0
    %2934 = vmatprep.subr.mxu0 0.0
    %2935 = vmatpush1.msra.mxu0 0.0
    %2936 = vmatprep.subr.mxu0 0.0
    %2937 = vmatpush1.msra.mxu0 0.0
    %2938 = vmatprep.subr.mxu0 0.0
    %2939 = vmatpush1.msra.mxu0 0.0
    %2940 = vmatprep.subr.mxu0 0.0
    %2941 = vmatpush1.msra.mxu0 0.0
    %2942 = vmatprep.subr.mxu0 0.0
    %2943 = vmatpush1.msra.mxu0 0.0
    %2944 = vmatprep.subr.mxu0 0.0
    %2945 = vmatpush1.msra.mxu0 0.0
    %2946 = vmatprep.subr.mxu0 0.0
    %2947 = vmatpush1.msra.mxu0 0.0
    %2948 = vmatprep.subr.mxu0 0.0
    %2949 = vmatpush1.msra.mxu0 0.0
    %2950 = vmatprep.subr.mxu0 0.0
    %2951 = vmatpush1.msra.mxu0 0.0
    %2952 = vmatprep.subr.mxu0 0.0
    %2953 = vmatpush1.msra.mxu0 0.0
    %2954 = vmatprep.subr.mxu0 0.0
    %2955 = vmatpush1.msra.mxu0 0.0
    %2956 = vmatprep.subr.mxu0 0.0
    %2957 = vmatpush1.msra.mxu0 0.0
    %2958 = vmatprep.subr.mxu0 0.0
    %2959 = vmatpush1.msra.mxu0 0.0
    %2960 = vmatprep.subr.mxu0 0.0
    %2961 = vmatpush1.msra.mxu0 0.0
    %2962 = vmatprep.subr.mxu0 0.0
    %2963 = vmatpush1.msra.mxu0 0.0
    %2964 = vmatprep.subr.mxu0 0.0
    %2965 = vmatpush1.msra.mxu0 0.0
    %2966 = vmatprep.mubr.f32.mxu0 0.0
    %2967 = vmatmul.mubr.f32.gmra.mrb[0].mxu0 %v2545
    %v2968 = vpop.f32.mrb[0].mxu0
    %v2969 = vadd.f32 %v2506, %v2968
    %v2970 = vpop.f32.mrb[0].mxu0
    %v2971 = vadd.f32 %v2510, %v2970
    %2972 = vdwg.mxu0
    %2973 = vmatprep.subr.mxu0 %v2456
    %2974 = vmatpush1.msra.mxu0 %v2455
    %2975 = vmatprep.subr.mxu0 0.0
    %2976 = vmatpush1.msra.mxu0 0.0
    %2977 = vmatprep.subr.mxu0 0.0
    %2978 = vmatpush1.msra.mxu0 0.0
    %2979 = vmatprep.subr.mxu0 0.0
    %2980 = vmatpush1.msra.mxu0 0.0
    %2981 = vmatprep.subr.mxu0 0.0
    %2982 = vmatpush1.msra.mxu0 0.0
    %2983 = vmatprep.subr.mxu0 0.0
    %2984 = vmatpush1.msra.mxu0 0.0
    %2985 = vmatprep.subr.mxu0 0.0
    %2986 = vmatpush1.msra.mxu0 0.0
    %2987 = vmatprep.subr.mxu0 0.0
    %2988 = vmatpush1.msra.mxu0 0.0
    %2989 = vmatprep.subr.mxu0 0.0
    %2990 = vmatpush1.msra.mxu0 0.0
    %2991 = vmatprep.subr.mxu0 0.0
    %2992 = vmatpush1.msra.mxu0 0.0
    %2993 = vmatprep.subr.mxu0 0.0
    %2994 = vmatpush1.msra.mxu0 0.0
    %2995 = vmatprep.subr.mxu0 0.0
    %2996 = vmatpush1.msra.mxu0 0.0
    %2997 = vmatprep.subr.mxu0 0.0
    %2998 = vmatpush1.msra.mxu0 0.0
    %2999 = vmatprep.subr.mxu0 0.0
    %3000 = vmatpush1.msra.mxu0 0.0
    %3001 = vmatprep.subr.mxu0 0.0
    %3002 = vmatpush1.msra.mxu0 0.0
    %3003 = vmatprep.subr.mxu0 0.0
    %3004 = vmatpush1.msra.mxu0 0.0
    %3005 = vmatprep.subr.mxu0 0.0
    %3006 = vmatpush1.msra.mxu0 0.0
    %3007 = vmatprep.subr.mxu0 0.0
    %3008 = vmatpush1.msra.mxu0 0.0
    %3009 = vmatprep.subr.mxu0 0.0
    %3010 = vmatpush1.msra.mxu0 0.0
    %3011 = vmatprep.subr.mxu0 0.0
    %3012 = vmatpush1.msra.mxu0 0.0
    %3013 = vmatprep.subr.mxu0 0.0
    %3014 = vmatpush1.msra.mxu0 0.0
    %3015 = vmatprep.subr.mxu0 0.0
    %3016 = vmatpush1.msra.mxu0 0.0
    %3017 = vmatprep.subr.mxu0 0.0
    %3018 = vmatpush1.msra.mxu0 0.0
    %3019 = vmatprep.subr.mxu0 0.0
    %3020 = vmatpush1.msra.mxu0 0.0
    %3021 = vmatprep.subr.mxu0 0.0
    %3022 = vmatpush1.msra.mxu0 0.0
    %3023 = vmatprep.subr.mxu0 0.0
    %3024 = vmatpush1.msra.mxu0 0.0
    %3025 = vmatprep.subr.mxu0 0.0
    %3026 = vmatpush1.msra.mxu0 0.0
    %3027 = vmatprep.subr.mxu0 0.0
    %3028 = vmatpush1.msra.mxu0 0.0
    %3029 = vmatprep.subr.mxu0 0.0
    %3030 = vmatpush1.msra.mxu0 0.0
    %3031 = vmatprep.subr.mxu0 0.0
    %3032 = vmatpush1.msra.mxu0 0.0
    %3033 = vmatprep.subr.mxu0 0.0
    %3034 = vmatpush1.msra.mxu0 0.0
    %3035 = vmatprep.subr.mxu0 0.0
    %3036 = vmatpush1.msra.mxu0 0.0
    %3037 = vmatprep.mubr.f32.mxu0 0.0
    %3038 = vmatmul.mubr.f32.gmra.mrb[0].mxu0 %v2545
    %v3039 = vpop.f32.mrb[0].mxu0
    %v3040 = vadd.f32 %v2514, %v3039
    %v3041 = vpop.f32.mrb[0].mxu0
    %v3042 = vadd.f32 %v2518, %v3041
    %3043 = vdwg.mxu0
    %3044 = vmatprep.subr.mxu0 %v2458
    %3045 = vmatpush1.msra.mxu0 %v2457
    %3046 = vmatprep.subr.mxu0 0.0
    %3047 = vmatpush1.msra.mxu0 0.0
    %3048 = vmatprep.subr.mxu0 0.0
    %3049 = vmatpush1.msra.mxu0 0.0
    %3050 = vmatprep.subr.mxu0 0.0
    %3051 = vmatpush1.msra.mxu0 0.0
    %3052 = vmatprep.subr.mxu0 0.0
    %3053 = vmatpush1.msra.mxu0 0.0
    %3054 = vmatprep.subr.mxu0 0.0
    %3055 = vmatpush1.msra.mxu0 0.0
    %3056 = vmatprep.subr.mxu0 0.0
    %3057 = vmatpush1.msra.mxu0 0.0
    %3058 = vmatprep.subr.mxu0 0.0
    %3059 = vmatpush1.msra.mxu0 0.0
    %3060 = vmatprep.subr.mxu0 0.0
    %3061 = vmatpush1.msra.mxu0 0.0
    %3062 = vmatprep.subr.mxu0 0.0
    %3063 = vmatpush1.msra.mxu0 0.0
    %3064 = vmatprep.subr.mxu0 0.0
    %3065 = vmatpush1.msra.mxu0 0.0
    %3066 = vmatprep.subr.mxu0 0.0
    %3067 = vmatpush1.msra.mxu0 0.0
    %3068 = vmatprep.subr.mxu0 0.0
    %3069 = vmatpush1.msra.mxu0 0.0
    %3070 = vmatprep.subr.mxu0 0.0
    %3071 = vmatpush1.msra.mxu0 0.0
    %3072 = vmatprep.subr.mxu0 0.0
    %3073 = vmatpush1.msra.mxu0 0.0
    %3074 = vmatprep.subr.mxu0 0.0
    %3075 = vmatpush1.msra.mxu0 0.0
    %3076 = vmatprep.subr.mxu0 0.0
    %3077 = vmatpush1.msra.mxu0 0.0
    %3078 = vmatprep.subr.mxu0 0.0
    %3079 = vmatpush1.msra.mxu0 0.0
    %3080 = vmatprep.subr.mxu0 0.0
    %3081 = vmatpush1.msra.mxu0 0.0
    %3082 = vmatprep.subr.mxu0 0.0
    %3083 = vmatpush1.msra.mxu0 0.0
    %3084 = vmatprep.subr.mxu0 0.0
    %3085 = vmatpush1.msra.mxu0 0.0
    %3086 = vmatprep.subr.mxu0 0.0
    %3087 = vmatpush1.msra.mxu0 0.0
    %3088 = vmatprep.subr.mxu0 0.0
    %3089 = vmatpush1.msra.mxu0 0.0
    %3090 = vmatprep.subr.mxu0 0.0
    %3091 = vmatpush1.msra.mxu0 0.0
    %3092 = vmatprep.subr.mxu0 0.0
    %3093 = vmatpush1.msra.mxu0 0.0
    %3094 = vmatprep.subr.mxu0 0.0
    %3095 = vmatpush1.msra.mxu0 0.0
    %3096 = vmatprep.subr.mxu0 0.0
    %3097 = vmatpush1.msra.mxu0 0.0
    %3098 = vmatprep.subr.mxu0 0.0
    %3099 = vmatpush1.msra.mxu0 0.0
    %3100 = vmatprep.subr.mxu0 0.0
    %3101 = vmatpush1.msra.mxu0 0.0
    %3102 = vmatprep.subr.mxu0 0.0
    %3103 = vmatpush1.msra.mxu0 0.0
    %3104 = vmatprep.subr.mxu0 0.0
    %3105 = vmatpush1.msra.mxu0 0.0
    %3106 = vmatprep.subr.mxu0 0.0
    %3107 = vmatpush1.msra.mxu0 0.0
    %3108 = vmatprep.mubr.f32.mxu0 0.0
    %3109 = vmatmul.mubr.f32.gmra.mrb[0].mxu0 %v2545
    %v3110 = vpop.f32.mrb[0].mxu0
    %v3111 = vadd.f32 %v2522, %v3110
    %v3112 = vpop.f32.mrb[0].mxu0
    %v3113 = vadd.f32 %v2526, %v3112
    %3114 = vdwg.mxu0
    %v3115 = vmax.f32 %v2614, 0.0
    %v3116 = vmax.f32 %v2616, 0.0
    %v3117 = vmax.f32 %v2685, 0.0
    %v3118 = vmax.f32 %v2687, 0.0
    %v3119 = vmax.f32 %v2756, 0.0
    %v3120 = vmax.f32 %v2758, 0.0
    %v3121 = vmax.f32 %v2827, 0.0
    %v3122 = vmax.f32 %v2829, 0.0
    %v3123 = vmax.f32 %v2898, 0.0
    %v3124 = vmax.f32 %v2900, 0.0
    %v3125 = vmax.f32 %v2969, 0.0
    %v3126 = vmax.f32 %v2971, 0.0
    %v3127 = vmax.f32 %v3040, 0.0
    %v3128 = vmax.f32 %v3042, 0.0
    %v3129 = vmax.f32 %v3111, 0.0
    %v3130 = vmax.f32 %v3113, 0.0
    %v3131 = vld [vmem:[%s11] sm:$0x1]
    %s3132 = scalar_lea.vmem %s10, 512
    %v3133 = vld [vmem:[%s3132] sm:$0xff]
    %v3134 = vld [vmem:[%s3132 + $0x8] sm:$0xff]
    %v3135 = vld [vmem:[%s3132 + $0x10] sm:$0xff]
    %v3136 = vld [vmem:[%s3132 + $0x18] sm:$0xff]
    %v3137 = vld [vmem:[%s3132 + $0x20] sm:$0xff]
    %v3138 = vld [vmem:[%s3132 + $0x28] sm:$0xff]
    %v3139 = vld [vmem:[%s3132 + $0x30] sm:$0xff]
    %v3140 = vld [vmem:[%s3132 + $0x38] sm:$0xff]
    %v3141 = vld [vmem:[%s3132 + $0x40] sm:$0xff]
    %v3142 = vld [vmem:[%s3132 + $0x48] sm:$0xff]
    %v3143 = vld [vmem:[%s3132 + $0x50] sm:$0xff]
    %v3144 = vld [vmem:[%s3132 + $0x58] sm:$0xff]
    %v3145 = vld [vmem:[%s3132 + $0x60] sm:$0xff]
    %v3146 = vld [vmem:[%s3132 + $0x68] sm:$0xff]
    %v3147 = vld [vmem:[%s3132 + $0x70] sm:$0xff]
    %v3148 = vld [vmem:[%s3132 + $0x78] sm:$0xff]
    %v3149 = vld [vmem:[%s3132 + $0x80] sm:$0xff]
    %v3150 = vld [vmem:[%s3132 + $0x88] sm:$0xff]
    %v3151 = vld [vmem:[%s3132 + $0x90] sm:$0xff]
    %v3152 = vld [vmem:[%s3132 + $0x98] sm:$0xff]
    %v3153 = vld [vmem:[%s3132 + $0xa0] sm:$0xff]
    %v3154 = vld [vmem:[%s3132 + $0xa8] sm:$0xff]
    %v3155 = vld [vmem:[%s3132 + $0xb0] sm:$0xff]
    %v3156 = vld [vmem:[%s3132 + $0xb8] sm:$0xff]
    %v3157 = vld [vmem:[%s3132 + $0xc0] sm:$0xff]
    %v3158 = vld [vmem:[%s3132 + $0xc8] sm:$0xff]
    %v3159 = vld [vmem:[%s3132 + $0xd0] sm:$0xff]
    %v3160 = vld [vmem:[%s3132 + $0xd8] sm:$0xff]
    %v3161 = vld [vmem:[%s3132 + $0xe0] sm:$0xff]
    %v3162 = vld [vmem:[%s3132 + $0xe8] sm:$0xff]
    %v3163 = vld [vmem:[%s3132 + $0xf0] sm:$0xff]
    %v3164 = vld [vmem:[%s3132 + $0xf8] sm:$0xff]
    %v3166 = vlaneseq
    %v3167 = vshrl.u32 %v3166, 7
    %v3168 = vsub.s32 0, %v3167
    %v3169 = vrot.slane %v3131, %v3168
    %3171 = vmatprep.subr.mxu0 0.0
    %3172 = vmatpush1.msra.mxu0 %v3133
    %3173 = vmatprep.subr.mxu0 0.0
    %3174 = vmatpush1.msra.mxu0 %v3134
    %3175 = vmatprep.subr.mxu0 0.0
    %3176 = vmatpush1.msra.mxu0 %v3135
    %3177 = vmatprep.subr.mxu0 0.0
    %3178 = vmatpush1.msra.mxu0 %v3136
    %3179 = vmatprep.subr.mxu0 0.0
    %3180 = vmatpush1.msra.mxu0 %v3137
    %3181 = vmatprep.subr.mxu0 0.0
    %3182 = vmatpush1.msra.mxu0 %v3138
    %3183 = vmatprep.subr.mxu0 0.0
    %3184 = vmatpush1.msra.mxu0 %v3139
    %3185 = vmatprep.subr.mxu0 0.0
    %3186 = vmatpush1.msra.mxu0 %v3140
    %3187 = vmatprep.subr.mxu0 0.0
    %3188 = vmatpush1.msra.mxu0 %v3141
    %3189 = vmatprep.subr.mxu0 0.0
    %3190 = vmatpush1.msra.mxu0 %v3142
    %3191 = vmatprep.subr.mxu0 0.0
    %3192 = vmatpush1.msra.mxu0 %v3143
    %3193 = vmatprep.subr.mxu0 0.0
    %3194 = vmatpush1.msra.mxu0 %v3144
    %3195 = vmatprep.subr.mxu0 0.0
    %3196 = vmatpush1.msra.mxu0 %v3145
    %3197 = vmatprep.subr.mxu0 0.0
    %3198 = vmatpush1.msra.mxu0 %v3146
    %3199 = vmatprep.subr.mxu0 0.0
    %3200 = vmatpush1.msra.mxu0 %v3147
    %3201 = vmatprep.subr.mxu0 0.0
    %3202 = vmatpush1.msra.mxu0 %v3148
    %3203 = vmatprep.subr.mxu0 0.0
    %3204 = vmatpush1.msra.mxu0 %v3149
    %3205 = vmatprep.subr.mxu0 0.0
    %3206 = vmatpush1.msra.mxu0 %v3150
    %3207 = vmatprep.subr.mxu0 0.0
    %3208 = vmatpush1.msra.mxu0 %v3151
    %3209 = vmatprep.subr.mxu0 0.0
    %3210 = vmatpush1.msra.mxu0 %v3152
    %3211 = vmatprep.subr.mxu0 0.0
    %3212 = vmatpush1.msra.mxu0 %v3153
    %3213 = vmatprep.subr.mxu0 0.0
    %3214 = vmatpush1.msra.mxu0 %v3154
    %3215 = vmatprep.subr.mxu0 0.0
    %3216 = vmatpush1.msra.mxu0 %v3155
    %3217 = vmatprep.subr.mxu0 0.0
    %3218 = vmatpush1.msra.mxu0 %v3156
    %3219 = vmatprep.subr.mxu0 0.0
    %3220 = vmatpush1.msra.mxu0 %v3157
    %3221 = vmatprep.subr.mxu0 0.0
    %3222 = vmatpush1.msra.mxu0 %v3158
    %3223 = vmatprep.subr.mxu0 0.0
    %3224 = vmatpush1.msra.mxu0 %v3159
    %3225 = vmatprep.subr.mxu0 0.0
    %3226 = vmatpush1.msra.mxu0 %v3160
    %3227 = vmatprep.subr.mxu0 0.0
    %3228 = vmatpush1.msra.mxu0 %v3161
    %3229 = vmatprep.subr.mxu0 0.0
    %3230 = vmatpush1.msra.mxu0 %v3162
    %3231 = vmatprep.subr.mxu0 0.0
    %3232 = vmatpush1.msra.mxu0 %v3163
    %3233 = vmatprep.subr.mxu0 0.0
    %3234 = vmatpush1.msra.mxu0 %v3164
    %3235 = vmatprep.mubr.f32.mxu0 %v3116
    %3236 = vmatmul.mubr.f32.gmra.mrb[0].mxu0 %v3115
    %v3237 = vpop.f32.mrb[0].mxu0
    %v3238 = vadd.f32 %v3169, %v3237
    %v3239 = vpop.f32.mrb[0].mxu0
    %3240 = vdwg.mxu0
    %v3241 = vtanh.pop %v3238
    %vm3242 = vcmask 123904
    %3243 = vst.msk [vmem:[%s12] sm:$0x3] %vm3242, %v3241
    %v3246 = vunpack.c.l.s4 1983009808
    %v3247 = vunpack.c.0.s8 %v3246
    %v3248 = vlaneseq
    %v3249 = vshrl.u32 %v3248, 7
    %v3250 = vsub.s32 %v3247, %v3249
    %v3251 = vrot.slane %v3241, %v3250
    %v3252 = vcombine.high %v3251, %v3251
    %3254 = vst.msk [vmem:[%s13] sm:$0x3] %vm3242, %v3252
    %3255 = vrot.lane.b32.xlu0 %v3251, 112
    %v3256 = vpop.permute.xlu0 %3255
    %3258 = vst.msk [vmem:[%s12 + $0x4] sm:$0x3] %vm3242, %v3256
    %3259 = vrot.lane.b32.xlu0 %v3252, 112
    %v3260 = vpop.permute.xlu0 %3259
    %3262 = vst.msk [vmem:[%s13 + $0x4] sm:$0x3] %vm3242, %v3260
    %3263 = vrot.lane.b32.xlu0 %v3251, 96
    %v3264 = vpop.permute.xlu0 %3263
    %3266 = vst.msk [vmem:[%s12 + $0x8] sm:$0x3] %vm3242, %v3264
    %3267 = vrot.lane.b32.xlu0 %v3252, 96
    %v3268 = vpop.permute.xlu0 %3267
    %3270 = vst.msk [vmem:[%s13 + $0x8] sm:$0x3] %vm3242, %v3268
    %s3271 = scalar_lea.vmem %s10, 256
    %v3272 = vld [vmem:[%s3271] sm:$0xff]
    %v3273 = vld [vmem:[%s3271 + $0x8] sm:$0xff]
    %v3274 = vld [vmem:[%s3271 + $0x10] sm:$0xff]
    %v3275 = vld [vmem:[%s3271 + $0x18] sm:$0xff]
    %v3276 = vld [vmem:[%s3271 + $0x20] sm:$0xff]
    %v3277 = vld [vmem:[%s3271 + $0x28] sm:$0xff]
    %v3278 = vld [vmem:[%s3271 + $0x30] sm:$0xff]
    %v3279 = vld [vmem:[%s3271 + $0x38] sm:$0xff]
    %v3280 = vld [vmem:[%s3271 + $0x40] sm:$0xff]
    %v3281 = vld [vmem:[%s3271 + $0x48] sm:$0xff]
    %v3282 = vld [vmem:[%s3271 + $0x50] sm:$0xff]
    %v3283 = vld [vmem:[%s3271 + $0x58] sm:$0xff]
    %v3284 = vld [vmem:[%s3271 + $0x60] sm:$0xff]
    %v3285 = vld [vmem:[%s3271 + $0x68] sm:$0xff]
    %v3286 = vld [vmem:[%s3271 + $0x70] sm:$0xff]
    %v3287 = vld [vmem:[%s3271 + $0x78] sm:$0xff]
    %v3288 = vld [vmem:[%s3271 + $0x80] sm:$0xff]
    %v3289 = vld [vmem:[%s3271 + $0x88] sm:$0xff]
    %v3290 = vld [vmem:[%s3271 + $0x90] sm:$0xff]
    %v3291 = vld [vmem:[%s3271 + $0x98] sm:$0xff]
    %v3292 = vld [vmem:[%s3271 + $0xa0] sm:$0xff]
    %v3293 = vld [vmem:[%s3271 + $0xa8] sm:$0xff]
    %v3294 = vld [vmem:[%s3271 + $0xb0] sm:$0xff]
    %v3295 = vld [vmem:[%s3271 + $0xb8] sm:$0xff]
    %v3296 = vld [vmem:[%s3271 + $0xc0] sm:$0xff]
    %v3297 = vld [vmem:[%s3271 + $0xc8] sm:$0xff]
    %v3298 = vld [vmem:[%s3271 + $0xd0] sm:$0xff]
    %v3299 = vld [vmem:[%s3271 + $0xd8] sm:$0xff]
    %v3300 = vld [vmem:[%s3271 + $0xe0] sm:$0xff]
    %v3301 = vld [vmem:[%s3271 + $0xe8] sm:$0xff]
    %v3302 = vld [vmem:[%s3271 + $0xf0] sm:$0xff]
    %v3303 = vld [vmem:[%s3271 + $0xf8] sm:$0xff]
    %s3304 = scalar_lea.vmem %s10, 768
    %v3305 = vld [vmem:[%s3304] sm:$0xff]
    %v3306 = vld [vmem:[%s3304 + $0x8] sm:$0xff]
    %v3307 = vld [vmem:[%s3304 + $0x10] sm:$0xff]
    %v3308 = vld [vmem:[%s3304 + $0x18] sm:$0xff]
    %v3309 = vld [vmem:[%s3304 + $0x20] sm:$0xff]
    %v3310 = vld [vmem:[%s3304 + $0x28] sm:$0xff]
    %v3311 = vld [vmem:[%s3304 + $0x30] sm:$0xff]
    %v3312 = vld [vmem:[%s3304 + $0x38] sm:$0xff]
    %v3313 = vld [vmem:[%s3304 + $0x40] sm:$0xff]
    %v3314 = vld [vmem:[%s3304 + $0x48] sm:$0xff]
    %v3315 = vld [vmem:[%s3304 + $0x50] sm:$0xff]
    %v3316 = vld [vmem:[%s3304 + $0x58] sm:$0xff]
    %v3317 = vld [vmem:[%s3304 + $0x60] sm:$0xff]
    %v3318 = vld [vmem:[%s3304 + $0x68] sm:$0xff]
    %v3319 = vld [vmem:[%s3304 + $0x70] sm:$0xff]
    %v3320 = vld [vmem:[%s3304 + $0x78] sm:$0xff]
    %v3321 = vld [vmem:[%s3304 + $0x80] sm:$0xff]
    %v3322 = vld [vmem:[%s3304 + $0x88] sm:$0xff]
    %v3323 = vld [vmem:[%s3304 + $0x90] sm:$0xff]
    %v3324 = vld [vmem:[%s3304 + $0x98] sm:$0xff]
    %v3325 = vld [vmem:[%s3304 + $0xa0] sm:$0xff]
    %v3326 = vld [vmem:[%s3304 + $0xa8] sm:$0xff]
    %v3327 = vld [vmem:[%s3304 + $0xb0] sm:$0xff]
    %v3328 = vld [vmem:[%s3304 + $0xb8] sm:$0xff]
    %v3329 = vld [vmem:[%s3304 + $0xc0] sm:$0xff]
    %v3330 = vld [vmem:[%s3304 + $0xc8] sm:$0xff]
    %v3331 = vld [vmem:[%s3304 + $0xd0] sm:$0xff]
    %v3332 = vld [vmem:[%s3304 + $0xd8] sm:$0xff]
    %v3333 = vld [vmem:[%s3304 + $0xe0] sm:$0xff]
    %v3334 = vld [vmem:[%s3304 + $0xe8] sm:$0xff]
    %v3335 = vld [vmem:[%s3304 + $0xf0] sm:$0xff]
    %v3336 = vld [vmem:[%s3304 + $0xf8] sm:$0xff]
    %3337 = vmatprep.subr.mxu0 0.0
    %3338 = vmatpush1.msra.mxu0 %v3305
    %3339 = vmatprep.subr.mxu0 0.0
    %3340 = vmatpush1.msra.mxu0 %v3306
    %3341 = vmatprep.subr.mxu0 0.0
    %3342 = vmatpush1.msra.mxu0 %v3307
    %3343 = vmatprep.subr.mxu0 0.0
    %3344 = vmatpush1.msra.mxu0 %v3308
    %3345 = vmatprep.subr.mxu0 0.0
    %3346 = vmatpush1.msra.mxu0 %v3309
    %3347 = vmatprep.subr.mxu0 0.0
    %3348 = vmatpush1.msra.mxu0 %v3310
    %3349 = vmatprep.subr.mxu0 0.0
    %3350 = vmatpush1.msra.mxu0 %v3311
    %3351 = vmatprep.subr.mxu0 0.0
    %3352 = vmatpush1.msra.mxu0 %v3312
    %3353 = vmatprep.subr.mxu0 0.0
    %3354 = vmatpush1.msra.mxu0 %v3313
    %3355 = vmatprep.subr.mxu0 0.0
    %3356 = vmatpush1.msra.mxu0 %v3314
    %3357 = vmatprep.subr.mxu0 0.0
    %3358 = vmatpush1.msra.mxu0 %v3315
    %3359 = vmatprep.subr.mxu0 0.0
    %3360 = vmatpush1.msra.mxu0 %v3316
    %3361 = vmatprep.subr.mxu0 0.0
    %3362 = vmatpush1.msra.mxu0 %v3317
    %3363 = vmatprep.subr.mxu0 0.0
    %3364 = vmatpush1.msra.mxu0 %v3318
    %3365 = vmatprep.subr.mxu0 0.0
    %3366 = vmatpush1.msra.mxu0 %v3319
    %3367 = vmatprep.subr.mxu0 0.0
    %3368 = vmatpush1.msra.mxu0 %v3320
    %3369 = vmatprep.subr.mxu0 0.0
    %3370 = vmatpush1.msra.mxu0 %v3321
    %3371 = vmatprep.subr.mxu0 0.0
    %3372 = vmatpush1.msra.mxu0 %v3322
    %3373 = vmatprep.subr.mxu0 0.0
    %3374 = vmatpush1.msra.mxu0 %v3323
    %3375 = vmatprep.subr.mxu0 0.0
    %3376 = vmatpush1.msra.mxu0 %v3324
    %3377 = vmatprep.subr.mxu0 0.0
    %3378 = vmatpush1.msra.mxu0 %v3325
    %3379 = vmatprep.subr.mxu0 0.0
    %3380 = vmatpush1.msra.mxu0 %v3326
    %3381 = vmatprep.subr.mxu0 0.0
    %3382 = vmatpush1.msra.mxu0 %v3327
    %3383 = vmatprep.subr.mxu0 0.0
    %3384 = vmatpush1.msra.mxu0 %v3328
    %3385 = vmatprep.subr.mxu0 0.0
    %3386 = vmatpush1.msra.mxu0 %v3329
    %3387 = vmatprep.subr.mxu0 0.0
    %3388 = vmatpush1.msra.mxu0 %v3330
    %3389 = vmatprep.subr.mxu0 0.0
    %3390 = vmatpush1.msra.mxu0 %v3331
    %3391 = vmatprep.subr.mxu0 0.0
    %3392 = vmatpush1.msra.mxu0 %v3332
    %3393 = vmatprep.subr.mxu0 0.0
    %3394 = vmatpush1.msra.mxu0 %v3333
    %3395 = vmatprep.subr.mxu0 0.0
    %3396 = vmatpush1.msra.mxu0 %v3334
    %3397 = vmatprep.subr.mxu0 0.0
    %3398 = vmatpush1.msra.mxu0 %v3335
    %3399 = vmatprep.subr.mxu0 0.0
    %3400 = vmatpush1.msra.mxu0 %v3336
    %3401 = vmatprep.mubr.f32.mxu0 %v3118
    %3402 = vmatmul.mubr.f32.gmra.mrb[0].mxu0 %v3117
    %v3403 = vpop.f32.mrb[0].mxu0
    %v3404 = vadd.f32 0.0, %v3403
    %v3405 = vpop.f32.mrb[0].mxu0
    %3406 = vdwg.mxu0
    %3407 = vmatprep.subr.mxu0 0.0
    %3408 = vmatpush1.msra.mxu0 %v3272
    %3409 = vmatprep.subr.mxu0 0.0
    %3410 = vmatpush1.msra.mxu0 %v3273
    %3411 = vmatprep.subr.mxu0 0.0
    %3412 = vmatpush1.msra.mxu0 %v3274
    %3413 = vmatprep.subr.mxu0 0.0
    %3414 = vmatpush1.msra.mxu0 %v3275
    %3415 = vmatprep.subr.mxu0 0.0
    %3416 = vmatpush1.msra.mxu0 %v3276
    %3417 = vmatprep.subr.mxu0 0.0
    %3418 = vmatpush1.msra.mxu0 %v3277
    %3419 = vmatprep.subr.mxu0 0.0
    %3420 = vmatpush1.msra.mxu0 %v3278
    %3421 = vmatprep.subr.mxu0 0.0
    %3422 = vmatpush1.msra.mxu0 %v3279
    %3423 = vmatprep.subr.mxu0 0.0
    %3424 = vmatpush1.msra.mxu0 %v3280
    %3425 = vmatprep.subr.mxu0 0.0
    %3426 = vmatpush1.msra.mxu0 %v3281
    %3427 = vmatprep.subr.mxu0 0.0
    %3428 = vmatpush1.msra.mxu0 %v3282
    %3429 = vmatprep.subr.mxu0 0.0
    %3430 = vmatpush1.msra.mxu0 %v3283
    %3431 = vmatprep.subr.mxu0 0.0
    %3432 = vmatpush1.msra.mxu0 %v3284
    %3433 = vmatprep.subr.mxu0 0.0
    %3434 = vmatpush1.msra.mxu0 %v3285
    %3435 = vmatprep.subr.mxu0 0.0
    %3436 = vmatpush1.msra.mxu0 %v3286
    %3437 = vmatprep.subr.mxu0 0.0
    %3438 = vmatpush1.msra.mxu0 %v3287
    %3439 = vmatprep.subr.mxu0 0.0
    %3440 = vmatpush1.msra.mxu0 %v3288
    %3441 = vmatprep.subr.mxu0 0.0
    %3442 = vmatpush1.msra.mxu0 %v3289
    %3443 = vmatprep.subr.mxu0 0.0
    %3444 = vmatpush1.msra.mxu0 %v3290
    %3445 = vmatprep.subr.mxu0 0.0
    %3446 = vmatpush1.msra.mxu0 %v3291
    %3447 = vmatprep.subr.mxu0 0.0
    %3448 = vmatpush1.msra.mxu0 %v3292
    %3449 = vmatprep.subr.mxu0 0.0
    %3450 = vmatpush1.msra.mxu0 %v3293
    %3451 = vmatprep.subr.mxu0 0.0
    %3452 = vmatpush1.msra.mxu0 %v3294
    %3453 = vmatprep.subr.mxu0 0.0
    %3454 = vmatpush1.msra.mxu0 %v3295
    %3455 = vmatprep.subr.mxu0 0.0
    %3456 = vmatpush1.msra.mxu0 %v3296
    %3457 = vmatprep.subr.mxu0 0.0
    %3458 = vmatpush1.msra.mxu0 %v3297
    %3459 = vmatprep.subr.mxu0 0.0
    %3460 = vmatpush1.msra.mxu0 %v3298
    %3461 = vmatprep.subr.mxu0 0.0
    %3462 = vmatpush1.msra.mxu0 %v3299
    %3463 = vmatprep.subr.mxu0 0.0
    %3464 = vmatpush1.msra.mxu0 %v3300
    %3465 = vmatprep.subr.mxu0 0.0
    %3466 = vmatpush1.msra.mxu0 %v3301
    %3467 = vmatprep.subr.mxu0 0.0
    %3468 = vmatpush1.msra.mxu0 %v3302
    %3469 = vmatprep.subr.mxu0 0.0
    %3470 = vmatpush1.msra.mxu0 %v3303
    %3471 = vmatprep.mubr.f32.mxu0 %v3116
    %3472 = vmatmul.mubr.f32.gmra.mrb[0].mxu0 %v3115
    %v3473 = vpop.f32.mrb[0].mxu0
    %v3474 = vadd.f32 %v3404, %v3473
    %v3475 = vpop.f32.mrb[0].mxu0
    %3476 = vdwg.mxu0
    %v3477 = vadd.f32 %v3474, %v3169
    %v3478 = vtanh.pop %v3477
    %v3481 = vunpack.c.l.s4 1983009808
    %v3482 = vunpack.c.0.s8 %v3481
    %v3483 = vlaneseq
    %v3484 = vshrl.u32 %v3483, 7
    %v3485 = vsub.s32 %v3482, %v3484
    %v3486 = vrot.slane %v3478, %v3485
    %3487 = vrot.lane.b32.xlu0 %v3486, 16
    %v3488 = vpop.permute.xlu0 %3487
    %vm3490 = vcmask 255104
    %3491 = vst.msk [vmem:[%s12] sm:$0x3] %vm3490, %v3488
    %v3492 = vcombine.high %v3486, %v3486
    %3493 = vrot.lane.b32.xlu0 %v3492, 16
    %v3494 = vpop.permute.xlu0 %3493
    %3496 = vst.msk [vmem:[%s13] sm:$0x3] %vm3490, %v3494
    %3497 = vst.msk [vmem:[%s12 + $0x4] sm:$0x3] %vm3490, %v3478
    %3499 = vst.msk [vmem:[%s13 + $0x4] sm:$0x3] %vm3490, %v3492
    %3500 = vrot.lane.b32.xlu0 %v3486, 112
    %v3501 = vpop.permute.xlu0 %3500
    %3503 = vst.msk [vmem:[%s12 + $0x8] sm:$0x3] %vm3490, %v3501
    %3504 = vrot.lane.b32.xlu0 %v3492, 112
    %v3505 = vpop.permute.xlu0 %3504
    %3507 = vst.msk [vmem:[%s13 + $0x8] sm:$0x3] %vm3490, %v3505
    %v3508 = vld [vmem:[%s10] sm:$0xff]
    %v3509 = vld [vmem:[%s10 + $0x8] sm:$0xff]
    %v3510 = vld [vmem:[%s10 + $0x10] sm:$0xff]
    %v3511 = vld [vmem:[%s10 + $0x18] sm:$0xff]
    %v3512 = vld [vmem:[%s10 + $0x20] sm:$0xff]
    %v3513 = vld [vmem:[%s10 + $0x28] sm:$0xff]
    %v3514 = vld [vmem:[%s10 + $0x30] sm:$0xff]
    %v3515 = vld [vmem:[%s10 + $0x38] sm:$0xff]
    %v3516 = vld [vmem:[%s10 + $0x40] sm:$0xff]
    %v3517 = vld [vmem:[%s10 + $0x48] sm:$0xff]
    %v3518 = vld [vmem:[%s10 + $0x50] sm:$0xff]
    %v3519 = vld [vmem:[%s10 + $0x58] sm:$0xff]
    %v3520 = vld [vmem:[%s10 + $0x60] sm:$0xff]
    %v3521 = vld [vmem:[%s10 + $0x68] sm:$0xff]
    %v3522 = vld [vmem:[%s10 + $0x70] sm:$0xff]
    %v3523 = vld [vmem:[%s10 + $0x78] sm:$0xff]
    %v3524 = vld [vmem:[%s10 + $0x80] sm:$0xff]
    %v3525 = vld [vmem:[%s10 + $0x88] sm:$0xff]
    %v3526 = vld [vmem:[%s10 + $0x90] sm:$0xff]
    %v3527 = vld [vmem:[%s10 + $0x98] sm:$0xff]
    %v3528 = vld [vmem:[%s10 + $0xa0] sm:$0xff]
    %v3529 = vld [vmem:[%s10 + $0xa8] sm:$0xff]
    %v3530 = vld [vmem:[%s10 + $0xb0] sm:$0xff]
    %v3531 = vld [vmem:[%s10 + $0xb8] sm:$0xff]
    %v3532 = vld [vmem:[%s10 + $0xc0] sm:$0xff]
    %v3533 = vld [vmem:[%s10 + $0xc8] sm:$0xff]
    %v3534 = vld [vmem:[%s10 + $0xd0] sm:$0xff]
    %v3535 = vld [vmem:[%s10 + $0xd8] sm:$0xff]
    %v3536 = vld [vmem:[%s10 + $0xe0] sm:$0xff]
    %v3537 = vld [vmem:[%s10 + $0xe8] sm:$0xff]
    %v3538 = vld [vmem:[%s10 + $0xf0] sm:$0xff]
    %v3539 = vld [vmem:[%s10 + $0xf8] sm:$0xff]
    %v3540 = vld [vmem:[%s3132] sm:$0xff]
    %v3541 = vld [vmem:[%s3132 + $0x8] sm:$0xff]
    %v3542 = vld [vmem:[%s3132 + $0x10] sm:$0xff]
    %v3543 = vld [vmem:[%s3132 + $0x18] sm:$0xff]
    %v3544 = vld [vmem:[%s3132 + $0x20] sm:$0xff]
    %v3545 = vld [vmem:[%s3132 + $0x28] sm:$0xff]
    %v3546 = vld [vmem:[%s3132 + $0x30] sm:$0xff]
    %v3547 = vld [vmem:[%s3132 + $0x38] sm:$0xff]
    %v3548 = vld [vmem:[%s3132 + $0x40] sm:$0xff]
    %v3549 = vld [vmem:[%s3132 + $0x48] sm:$0xff]
    %v3550 = vld [vmem:[%s3132 + $0x50] sm:$0xff]
    %v3551 = vld [vmem:[%s3132 + $0x58] sm:$0xff]
    %v3552 = vld [vmem:[%s3132 + $0x60] sm:$0xff]
    %v3553 = vld [vmem:[%s3132 + $0x68] sm:$0xff]
    %v3554 = vld [vmem:[%s3132 + $0x70] sm:$0xff]
    %v3555 = vld [vmem:[%s3132 + $0x78] sm:$0xff]
    %v3556 = vld [vmem:[%s3132 + $0x80] sm:$0xff]
    %v3557 = vld [vmem:[%s3132 + $0x88] sm:$0xff]
    %v3558 = vld [vmem:[%s3132 + $0x90] sm:$0xff]
    %v3559 = vld [vmem:[%s3132 + $0x98] sm:$0xff]
    %v3560 = vld [vmem:[%s3132 + $0xa0] sm:$0xff]
    %v3561 = vld [vmem:[%s3132 + $0xa8] sm:$0xff]
    %v3562 = vld [vmem:[%s3132 + $0xb0] sm:$0xff]
    %v3563 = vld [vmem:[%s3132 + $0xb8] sm:$0xff]
    %v3564 = vld [vmem:[%s3132 + $0xc0] sm:$0xff]
    %v3565 = vld [vmem:[%s3132 + $0xc8] sm:$0xff]
    %v3566 = vld [vmem:[%s3132 + $0xd0] sm:$0xff]
    %v3567 = vld [vmem:[%s3132 + $0xd8] sm:$0xff]
    %v3568 = vld [vmem:[%s3132 + $0xe0] sm:$0xff]
    %v3569 = vld [vmem:[%s3132 + $0xe8] sm:$0xff]
    %v3570 = vld [vmem:[%s3132 + $0xf0] sm:$0xff]
    %v3571 = vld [vmem:[%s3132 + $0xf8] sm:$0xff]
    %3572 = vmatprep.subr.mxu0 0.0
    %3573 = vmatpush1.msra.mxu0 %v3540
    %3574 = vmatprep.subr.mxu0 0.0
    %3575 = vmatpush1.msra.mxu0 %v3541
    %3576 = vmatprep.subr.mxu0 0.0
    %3577 = vmatpush1.msra.mxu0 %v3542
    %3578 = vmatprep.subr.mxu0 0.0
    %3579 = vmatpush1.msra.mxu0 %v3543
    %3580 = vmatprep.subr.mxu0 0.0
    %3581 = vmatpush1.msra.mxu0 %v3544
    %3582 = vmatprep.subr.mxu0 0.0
    %3583 = vmatpush1.msra.mxu0 %v3545
    %3584 = vmatprep.subr.mxu0 0.0
    %3585 = vmatpush1.msra.mxu0 %v3546
    %3586 = vmatprep.subr.mxu0 0.0
    %3587 = vmatpush1.msra.mxu0 %v3547
    %3588 = vmatprep.subr.mxu0 0.0
    %3589 = vmatpush1.msra.mxu0 %v3548
    %3590 = vmatprep.subr.mxu0 0.0
    %3591 = vmatpush1.msra.mxu0 %v3549
    %3592 = vmatprep.subr.mxu0 0.0
    %3593 = vmatpush1.msra.mxu0 %v3550
    %3594 = vmatprep.subr.mxu0 0.0
    %3595 = vmatpush1.msra.mxu0 %v3551
    %3596 = vmatprep.subr.mxu0 0.0
    %3597 = vmatpush1.msra.mxu0 %v3552
    %3598 = vmatprep.subr.mxu0 0.0
    %3599 = vmatpush1.msra.mxu0 %v3553
    %3600 = vmatprep.subr.mxu0 0.0
    %3601 = vmatpush1.msra.mxu0 %v3554
    %3602 = vmatprep.subr.mxu0 0.0
    %3603 = vmatpush1.msra.mxu0 %v3555
    %3604 = vmatprep.subr.mxu0 0.0
    %3605 = vmatpush1.msra.mxu0 %v3556
    %3606 = vmatprep.subr.mxu0 0.0
    %3607 = vmatpush1.msra.mxu0 %v3557
    %3608 = vmatprep.subr.mxu0 0.0
    %3609 = vmatpush1.msra.mxu0 %v3558
    %3610 = vmatprep.subr.mxu0 0.0
    %3611 = vmatpush1.msra.mxu0 %v3559
    %3612 = vmatprep.subr.mxu0 0.0
    %3613 = vmatpush1.msra.mxu0 %v3560
    %3614 = vmatprep.subr.mxu0 0.0
    %3615 = vmatpush1.msra.mxu0 %v3561
    %3616 = vmatprep.subr.mxu0 0.0
    %3617 = vmatpush1.msra.mxu0 %v3562
    %3618 = vmatprep.subr.mxu0 0.0
    %3619 = vmatpush1.msra.mxu0 %v3563
    %3620 = vmatprep.subr.mxu0 0.0
    %3621 = vmatpush1.msra.mxu0 %v3564
    %3622 = vmatprep.subr.mxu0 0.0
    %3623 = vmatpush1.msra.mxu0 %v3565
    %3624 = vmatprep.subr.mxu0 0.0
    %3625 = vmatpush1.msra.mxu0 %v3566
    %3626 = vmatprep.subr.mxu0 0.0
    %3627 = vmatpush1.msra.mxu0 %v3567
    %3628 = vmatprep.subr.mxu0 0.0
    %3629 = vmatpush1.msra.mxu0 %v3568
    %3630 = vmatprep.subr.mxu0 0.0
    %3631 = vmatpush1.msra.mxu0 %v3569
    %3632 = vmatprep.subr.mxu0 0.0
    %3633 = vmatpush1.msra.mxu0 %v3570
    %3634 = vmatprep.subr.mxu0 0.0
    %3635 = vmatpush1.msra.mxu0 %v3571
    %3636 = vmatprep.mubr.f32.mxu0 %v3118
    %3637 = vmatmul.mubr.f32.gmra.mrb[0].mxu0 %v3117
    %v3638 = vpop.f32.mrb[0].mxu0
    %v3639 = vadd.f32 0.0, %v3638
    %v3640 = vpop.f32.mrb[0].mxu0
    %3641 = vdwg.mxu0
    %3642 = vmatprep.subr.mxu0 0.0
    %3643 = vmatpush1.msra.mxu0 %v3508
    %3644 = vmatprep.subr.mxu0 0.0
    %3645 = vmatpush1.msra.mxu0 %v3509
    %3646 = vmatprep.subr.mxu0 0.0
    %3647 = vmatpush1.msra.mxu0 %v3510
    %3648 = vmatprep.subr.mxu0 0.0
    %3649 = vmatpush1.msra.mxu0 %v3511
    %3650 = vmatprep.subr.mxu0 0.0
    %3651 = vmatpush1.msra.mxu0 %v3512
    %3652 = vmatprep.subr.mxu0 0.0
    %3653 = vmatpush1.msra.mxu0 %v3513
    %3654 = vmatprep.subr.mxu0 0.0
    %3655 = vmatpush1.msra.mxu0 %v3514
    %3656 = vmatprep.subr.mxu0 0.0
    %3657 = vmatpush1.msra.mxu0 %v3515
    %3658 = vmatprep.subr.mxu0 0.0
    %3659 = vmatpush1.msra.mxu0 %v3516
    %3660 = vmatprep.subr.mxu0 0.0
    %3661 = vmatpush1.msra.mxu0 %v3517
    %3662 = vmatprep.subr.mxu0 0.0
    %3663 = vmatpush1.msra.mxu0 %v3518
    %3664 = vmatprep.subr.mxu0 0.0
    %3665 = vmatpush1.msra.mxu0 %v3519
    %3666 = vmatprep.subr.mxu0 0.0
    %3667 = vmatpush1.msra.mxu0 %v3520
    %3668 = vmatprep.subr.mxu0 0.0
    %3669 = vmatpush1.msra.mxu0 %v3521
    %3670 = vmatprep.subr.mxu0 0.0
    %3671 = vmatpush1.msra.mxu0 %v3522
    %3672 = vmatprep.subr.mxu0 0.0
    %3673 = vmatpush1.msra.mxu0 %v3523
    %3674 = vmatprep.subr.mxu0 0.0
    %3675 = vmatpush1.msra.mxu0 %v3524
    %3676 = vmatprep.subr.mxu0 0.0
    %3677 = vmatpush1.msra.mxu0 %v3525
    %3678 = vmatprep.subr.mxu0 0.0
    %3679 = vmatpush1.msra.mxu0 %v3526
    %3680 = vmatprep.subr.mxu0 0.0
    %3681 = vmatpush1.msra.mxu0 %v3527
    %3682 = vmatprep.subr.mxu0 0.0
    %3683 = vmatpush1.msra.mxu0 %v3528
    %3684 = vmatprep.subr.mxu0 0.0
    %3685 = vmatpush1.msra.mxu0 %v3529
    %3686 = vmatprep.subr.mxu0 0.0
    %3687 = vmatpush1.msra.mxu0 %v3530
    %3688 = vmatprep.subr.mxu0 0.0
    %3689 = vmatpush1.msra.mxu0 %v3531
    %3690 = vmatprep.subr.mxu0 0.0
    %3691 = vmatpush1.msra.mxu0 %v3532
    %3692 = vmatprep.subr.mxu0 0.0
    %3693 = vmatpush1.msra.mxu0 %v3533
    %3694 = vmatprep.subr.mxu0 0.0
    %3695 = vmatpush1.msra.mxu0 %v3534
    %3696 = vmatprep.subr.mxu0 0.0
    %3697 = vmatpush1.msra.mxu0 %v3535
    %3698 = vmatprep.subr.mxu0 0.0
    %3699 = vmatpush1.msra.mxu0 %v3536
    %3700 = vmatprep.subr.mxu0 0.0
    %3701 = vmatpush1.msra.mxu0 %v3537
    %3702 = vmatprep.subr.mxu0 0.0
    %3703 = vmatpush1.msra.mxu0 %v3538
    %3704 = vmatprep.subr.mxu0 0.0
    %3705 = vmatpush1.msra.mxu0 %v3539
    %3706 = vmatprep.mubr.f32.mxu0 %v3116
    %3707 = vmatmul.mubr.f32.gmra.mrb[0].mxu0 %v3115
    %v3708 = vpop.f32.mrb[0].mxu0
    %v3709 = vadd.f32 %v3639, %v3708
    %v3710 = vpop.f32.mrb[0].mxu0
    %3711 = vdwg.mxu0
    %v3712 = vadd.f32 %v3709, %v3169
    %v3713 = vtanh.pop %v3712
    %v3716 = vunpack.c.l.s4 1983009808
    %v3717 = vunpack.c.0.s8 %v3716
    %v3718 = vlaneseq
    %v3719 = vshrl.u32 %v3718, 7
    %v3720 = vsub.s32 %v3717, %v3719
    %v3721 = vrot.slane %v3713, %v3720
    %3722 = vrot.lane.b32.xlu0 %v3721, 32
    %v3723 = vpop.permute.xlu0 %3722
    %vm3725 = vcmask 386304
    %3726 = vst.msk [vmem:[%s12] sm:$0x3] %vm3725, %v3723
    %v3727 = vcombine.high %v3721, %v3721
    %3728 = vrot.lane.b32.xlu0 %v3727, 32
    %v3729 = vpop.permute.xlu0 %3728
    %3731 = vst.msk [vmem:[%s13] sm:$0x3] %vm3725, %v3729
    %3732 = vrot.lane.b32.xlu0 %v3721, 16
    %v3733 = vpop.permute.xlu0 %3732
    %3735 = vst.msk [vmem:[%s12 + $0x4] sm:$0x3] %vm3725, %v3733
    %3736 = vrot.lane.b32.xlu0 %v3727, 16
    %v3737 = vpop.permute.xlu0 %3736
    %3739 = vst.msk [vmem:[%s13 + $0x4] sm:$0x3] %vm3725, %v3737
    %3740 = vst.msk [vmem:[%s12 + $0x8] sm:$0x3] %vm3725, %v3713
    %3742 = vst.msk [vmem:[%s13 + $0x8] sm:$0x3] %vm3725, %v3727
    %v3743 = vld [vmem:[%s3271] sm:$0xff]
    %v3744 = vld [vmem:[%s3271 + $0x8] sm:$0xff]
    %v3745 = vld [vmem:[%s3271 + $0x10] sm:$0xff]
    %v3746 = vld [vmem:[%s3271 + $0x18] sm:$0xff]
    %v3747 = vld [vmem:[%s3271 + $0x20] sm:$0xff]
    %v3748 = vld [vmem:[%s3271 + $0x28] sm:$0xff]
    %v3749 = vld [vmem:[%s3271 + $0x30] sm:$0xff]
    %v3750 = vld [vmem:[%s3271 + $0x38] sm:$0xff]
    %v3751 = vld [vmem:[%s3271 + $0x40] sm:$0xff]
    %v3752 = vld [vmem:[%s3271 + $0x48] sm:$0xff]
    %v3753 = vld [vmem:[%s3271 + $0x50] sm:$0xff]
    %v3754 = vld [vmem:[%s3271 + $0x58] sm:$0xff]
    %v3755 = vld [vmem:[%s3271 + $0x60] sm:$0xff]
    %v3756 = vld [vmem:[%s3271 + $0x68] sm:$0xff]
    %v3757 = vld [vmem:[%s3271 + $0x70] sm:$0xff]
    %v3758 = vld [vmem:[%s3271 + $0x78] sm:$0xff]
    %v3759 = vld [vmem:[%s3271 + $0x80] sm:$0xff]
    %v3760 = vld [vmem:[%s3271 + $0x88] sm:$0xff]
    %v3761 = vld [vmem:[%s3271 + $0x90] sm:$0xff]
    %v3762 = vld [vmem:[%s3271 + $0x98] sm:$0xff]
    %v3763 = vld [vmem:[%s3271 + $0xa0] sm:$0xff]
    %v3764 = vld [vmem:[%s3271 + $0xa8] sm:$0xff]
    %v3765 = vld [vmem:[%s3271 + $0xb0] sm:$0xff]
    %v3766 = vld [vmem:[%s3271 + $0xb8] sm:$0xff]
    %v3767 = vld [vmem:[%s3271 + $0xc0] sm:$0xff]
    %v3768 = vld [vmem:[%s3271 + $0xc8] sm:$0xff]
    %v3769 = vld [vmem:[%s3271 + $0xd0] sm:$0xff]
    %v3770 = vld [vmem:[%s3271 + $0xd8] sm:$0xff]
    %v3771 = vld [vmem:[%s3271 + $0xe0] sm:$0xff]
    %v3772 = vld [vmem:[%s3271 + $0xe8] sm:$0xff]
    %v3773 = vld [vmem:[%s3271 + $0xf0] sm:$0xff]
    %v3774 = vld [vmem:[%s3271 + $0xf8] sm:$0xff]
    %v3775 = vld [vmem:[%s3304] sm:$0xff]
    %v3776 = vld [vmem:[%s3304 + $0x8] sm:$0xff]
    %v3777 = vld [vmem:[%s3304 + $0x10] sm:$0xff]
    %v3778 = vld [vmem:[%s3304 + $0x18] sm:$0xff]
    %v3779 = vld [vmem:[%s3304 + $0x20] sm:$0xff]
    %v3780 = vld [vmem:[%s3304 + $0x28] sm:$0xff]
    %v3781 = vld [vmem:[%s3304 + $0x30] sm:$0xff]
    %v3782 = vld [vmem:[%s3304 + $0x38] sm:$0xff]
    %v3783 = vld [vmem:[%s3304 + $0x40] sm:$0xff]
    %v3784 = vld [vmem:[%s3304 + $0x48] sm:$0xff]
    %v3785 = vld [vmem:[%s3304 + $0x50] sm:$0xff]
    %v3786 = vld [vmem:[%s3304 + $0x58] sm:$0xff]
    %v3787 = vld [vmem:[%s3304 + $0x60] sm:$0xff]
    %v3788 = vld [vmem:[%s3304 + $0x68] sm:$0xff]
    %v3789 = vld [vmem:[%s3304 + $0x70] sm:$0xff]
    %v3790 = vld [vmem:[%s3304 + $0x78] sm:$0xff]
    %v3791 = vld [vmem:[%s3304 + $0x80] sm:$0xff]
    %v3792 = vld [vmem:[%s3304 + $0x88] sm:$0xff]
    %v3793 = vld [vmem:[%s3304 + $0x90] sm:$0xff]
    %v3794 = vld [vmem:[%s3304 + $0x98] sm:$0xff]
    %v3795 = vld [vmem:[%s3304 + $0xa0] sm:$0xff]
    %v3796 = vld [vmem:[%s3304 + $0xa8] sm:$0xff]
    %v3797 = vld [vmem:[%s3304 + $0xb0] sm:$0xff]
    %v3798 = vld [vmem:[%s3304 + $0xb8] sm:$0xff]
    %v3799 = vld [vmem:[%s3304 + $0xc0] sm:$0xff]
    %v3800 = vld [vmem:[%s3304 + $0xc8] sm:$0xff]
    %v3801 = vld [vmem:[%s3304 + $0xd0] sm:$0xff]
    %v3802 = vld [vmem:[%s3304 + $0xd8] sm:$0xff]
    %v3803 = vld [vmem:[%s3304 + $0xe0] sm:$0xff]
    %v3804 = vld [vmem:[%s3304 + $0xe8] sm:$0xff]
    %v3805 = vld [vmem:[%s3304 + $0xf0] sm:$0xff]
    %v3806 = vld [vmem:[%s3304 + $0xf8] sm:$0xff]
    %3807 = vmatprep.subr.mxu0 0.0
    %3808 = vmatpush1.msra.mxu0 %v3775
    %3809 = vmatprep.subr.mxu0 0.0
    %3810 = vmatpush1.msra.mxu0 %v3776
    %3811 = vmatprep.subr.mxu0 0.0
    %3812 = vmatpush1.msra.mxu0 %v3777
    %3813 = vmatprep.subr.mxu0 0.0
    %3814 = vmatpush1.msra.mxu0 %v3778
    %3815 = vmatprep.subr.mxu0 0.0
    %3816 = vmatpush1.msra.mxu0 %v3779
    %3817 = vmatprep.subr.mxu0 0.0
    %3818 = vmatpush1.msra.mxu0 %v3780
    %3819 = vmatprep.subr.mxu0 0.0
    %3820 = vmatpush1.msra.mxu0 %v3781
    %3821 = vmatprep.subr.mxu0 0.0
    %3822 = vmatpush1.msra.mxu0 %v3782
    %3823 = vmatprep.subr.mxu0 0.0
    %3824 = vmatpush1.msra.mxu0 %v3783
    %3825 = vmatprep.subr.mxu0 0.0
    %3826 = vmatpush1.msra.mxu0 %v3784
    %3827 = vmatprep.subr.mxu0 0.0
    %3828 = vmatpush1.msra.mxu0 %v3785
    %3829 = vmatprep.subr.mxu0 0.0
    %3830 = vmatpush1.msra.mxu0 %v3786
    %3831 = vmatprep.subr.mxu0 0.0
    %3832 = vmatpush1.msra.mxu0 %v3787
    %3833 = vmatprep.subr.mxu0 0.0
    %3834 = vmatpush1.msra.mxu0 %v3788
    %3835 = vmatprep.subr.mxu0 0.0
    %3836 = vmatpush1.msra.mxu0 %v3789
    %3837 = vmatprep.subr.mxu0 0.0
    %3838 = vmatpush1.msra.mxu0 %v3790
    %3839 = vmatprep.subr.mxu0 0.0
    %3840 = vmatpush1.msra.mxu0 %v3791
    %3841 = vmatprep.subr.mxu0 0.0
    %3842 = vmatpush1.msra.mxu0 %v3792
    %3843 = vmatprep.subr.mxu0 0.0
    %3844 = vmatpush1.msra.mxu0 %v3793
    %3845 = vmatprep.subr.mxu0 0.0
    %3846 = vmatpush1.msra.mxu0 %v3794
    %3847 = vmatprep.subr.mxu0 0.0
    %3848 = vmatpush1.msra.mxu0 %v3795
    %3849 = vmatprep.subr.mxu0 0.0
    %3850 = vmatpush1.msra.mxu0 %v3796
    %3851 = vmatprep.subr.mxu0 0.0
    %3852 = vmatpush1.msra.mxu0 %v3797
    %3853 = vmatprep.subr.mxu0 0.0
    %3854 = vmatpush1.msra.mxu0 %v3798
    %3855 = vmatprep.subr.mxu0 0.0
    %3856 = vmatpush1.msra.mxu0 %v3799
    %3857 = vmatprep.subr.mxu0 0.0
    %3858 = vmatpush1.msra.mxu0 %v3800
    %3859 = vmatprep.subr.mxu0 0.0
    %3860 = vmatpush1.msra.mxu0 %v3801
    %3861 = vmatprep.subr.mxu0 0.0
    %3862 = vmatpush1.msra.mxu0 %v3802
    %3863 = vmatprep.subr.mxu0 0.0
    %3864 = vmatpush1.msra.mxu0 %v3803
    %3865 = vmatprep.subr.mxu0 0.0
    %3866 = vmatpush1.msra.mxu0 %v3804
    %3867 = vmatprep.subr.mxu0 0.0
    %3868 = vmatpush1.msra.mxu0 %v3805
    %3869 = vmatprep.subr.mxu0 0.0
    %3870 = vmatpush1.msra.mxu0 %v3806
    %3871 = vmatprep.mubr.f32.mxu0 %v3120
    %3872 = vmatmul.mubr.f32.gmra.mrb[0].mxu0 %v3119
    %v3873 = vpop.f32.mrb[0].mxu0
    %v3874 = vadd.f32 0.0, %v3873
    %v3875 = vpop.f32.mrb[0].mxu0
    %3876 = vdwg.mxu0
    %3877 = vmatprep.subr.mxu0 0.0
    %3878 = vmatpush1.msra.mxu0 %v3743
    %3879 = vmatprep.subr.mxu0 0.0
    %3880 = vmatpush1.msra.mxu0 %v3744
    %3881 = vmatprep.subr.mxu0 0.0
    %3882 = vmatpush1.msra.mxu0 %v3745
    %3883 = vmatprep.subr.mxu0 0.0
    %3884 = vmatpush1.msra.mxu0 %v3746
    %3885 = vmatprep.subr.mxu0 0.0
    %3886 = vmatpush1.msra.mxu0 %v3747
    %3887 = vmatprep.subr.mxu0 0.0
    %3888 = vmatpush1.msra.mxu0 %v3748
    %3889 = vmatprep.subr.mxu0 0.0
    %3890 = vmatpush1.msra.mxu0 %v3749
    %3891 = vmatprep.subr.mxu0 0.0
    %3892 = vmatpush1.msra.mxu0 %v3750
    %3893 = vmatprep.subr.mxu0 0.0
    %3894 = vmatpush1.msra.mxu0 %v3751
    %3895 = vmatprep.subr.mxu0 0.0
    %3896 = vmatpush1.msra.mxu0 %v3752
    %3897 = vmatprep.subr.mxu0 0.0
    %3898 = vmatpush1.msra.mxu0 %v3753
    %3899 = vmatprep.subr.mxu0 0.0
    %3900 = vmatpush1.msra.mxu0 %v3754
    %3901 = vmatprep.subr.mxu0 0.0
    %3902 = vmatpush1.msra.mxu0 %v3755
    %3903 = vmatprep.subr.mxu0 0.0
    %3904 = vmatpush1.msra.mxu0 %v3756
    %3905 = vmatprep.subr.mxu0 0.0
    %3906 = vmatpush1.msra.mxu0 %v3757
    %3907 = vmatprep.subr.mxu0 0.0
    %3908 = vmatpush1.msra.mxu0 %v3758
    %3909 = vmatprep.subr.mxu0 0.0
    %3910 = vmatpush1.msra.mxu0 %v3759
    %3911 = vmatprep.subr.mxu0 0.0
    %3912 = vmatpush1.msra.mxu0 %v3760
    %3913 = vmatprep.subr.mxu0 0.0
    %3914 = vmatpush1.msra.mxu0 %v3761
    %3915 = vmatprep.subr.mxu0 0.0
    %3916 = vmatpush1.msra.mxu0 %v3762
    %3917 = vmatprep.subr.mxu0 0.0
    %3918 = vmatpush1.msra.mxu0 %v3763
    %3919 = vmatprep.subr.mxu0 0.0
    %3920 = vmatpush1.msra.mxu0 %v3764
    %3921 = vmatprep.subr.mxu0 0.0
    %3922 = vmatpush1.msra.mxu0 %v3765
    %3923 = vmatprep.subr.mxu0 0.0
    %3924 = vmatpush1.msra.mxu0 %v3766
    %3925 = vmatprep.subr.mxu0 0.0
    %3926 = vmatpush1.msra.mxu0 %v3767
    %3927 = vmatprep.subr.mxu0 0.0
    %3928 = vmatpush1.msra.mxu0 %v3768
    %3929 = vmatprep.subr.mxu0 0.0
    %3930 = vmatpush1.msra.mxu0 %v3769
    %3931 = vmatprep.subr.mxu0 0.0
    %3932 = vmatpush1.msra.mxu0 %v3770
    %3933 = vmatprep.subr.mxu0 0.0
    %3934 = vmatpush1.msra.mxu0 %v3771
    %3935 = vmatprep.subr.mxu0 0.0
    %3936 = vmatpush1.msra.mxu0 %v3772
    %3937 = vmatprep.subr.mxu0 0.0
    %3938 = vmatpush1.msra.mxu0 %v3773
    %3939 = vmatprep.subr.mxu0 0.0
    %3940 = vmatpush1.msra.mxu0 %v3774
    %3941 = vmatprep.mubr.f32.mxu0 %v3118
    %3942 = vmatmul.mubr.f32.gmra.mrb[0].mxu0 %v3117
    %v3943 = vpop.f32.mrb[0].mxu0
    %v3944 = vadd.f32 %v3874, %v3943
    %v3945 = vpop.f32.mrb[0].mxu0
    %3946 = vdwg.mxu0
    %v3947 = vadd.f32 %v3944, %v3169
    %v3948 = vtanh.pop %v3947
    %v3951 = vunpack.c.l.s4 1983009808
    %v3952 = vunpack.c.0.s8 %v3951
    %v3953 = vlaneseq
    %v3954 = vshrl.u32 %v3953, 7
    %v3955 = vsub.s32 %v3952, %v3954
    %v3956 = vrot.slane %v3948, %v3955
    %3957 = vrot.lane.b32.xlu0 %v3956, 48
    %v3958 = vpop.permute.xlu0 %3957
    %vm3960 = vcmask 517504
    %3961 = vst.msk [vmem:[%s12] sm:$0x3] %vm3960, %v3958
    %v3962 = vcombine.high %v3956, %v3956
    %3963 = vrot.lane.b32.xlu0 %v3962, 48
    %v3964 = vpop.permute.xlu0 %3963
    %3966 = vst.msk [vmem:[%s13] sm:$0x3] %vm3960, %v3964
    %3967 = vrot.lane.b32.xlu0 %v3956, 32
    %v3968 = vpop.permute.xlu0 %3967
    %3970 = vst.msk [vmem:[%s12 + $0x4] sm:$0x3] %vm3960, %v3968
    %3971 = vrot.lane.b32.xlu0 %v3962, 32
    %v3972 = vpop.permute.xlu0 %3971
    %3974 = vst.msk [vmem:[%s13 + $0x4] sm:$0x3] %vm3960, %v3972
    %3975 = vrot.lane.b32.xlu0 %v3956, 16
    %v3976 = vpop.permute.xlu0 %3975
    %3978 = vst.msk [vmem:[%s12 + $0x8] sm:$0x3] %vm3960, %v3976
    %3979 = vrot.lane.b32.xlu0 %v3962, 16
    %v3980 = vpop.permute.xlu0 %3979
    %3982 = vst.msk [vmem:[%s13 + $0x8] sm:$0x3] %vm3960, %v3980
    %v3983 = vld [vmem:[%s10] sm:$0xff]
    %v3984 = vld [vmem:[%s10 + $0x8] sm:$0xff]
    %v3985 = vld [vmem:[%s10 + $0x10] sm:$0xff]
    %v3986 = vld [vmem:[%s10 + $0x18] sm:$0xff]
    %v3987 = vld [vmem:[%s10 + $0x20] sm:$0xff]
    %v3988 = vld [vmem:[%s10 + $0x28] sm:$0xff]
    %v3989 = vld [vmem:[%s10 + $0x30] sm:$0xff]
    %v3990 = vld [vmem:[%s10 + $0x38] sm:$0xff]
    %v3991 = vld [vmem:[%s10 + $0x40] sm:$0xff]
    %v3992 = vld [vmem:[%s10 + $0x48] sm:$0xff]
    %v3993 = vld [vmem:[%s10 + $0x50] sm:$0xff]
    %v3994 = vld [vmem:[%s10 + $0x58] sm:$0xff]
    %v3995 = vld [vmem:[%s10 + $0x60] sm:$0xff]
    %v3996 = vld [vmem:[%s10 + $0x68] sm:$0xff]
    %v3997 = vld [vmem:[%s10 + $0x70] sm:$0xff]
    %v3998 = vld [vmem:[%s10 + $0x78] sm:$0xff]
    %v3999 = vld [vmem:[%s10 + $0x80] sm:$0xff]
    %v4000 = vld [vmem:[%s10 + $0x88] sm:$0xff]
    %v4001 = vld [vmem:[%s10 + $0x90] sm:$0xff]
    %v4002 = vld [vmem:[%s10 + $0x98] sm:$0xff]
    %v4003 = vld [vmem:[%s10 + $0xa0] sm:$0xff]
    %v4004 = vld [vmem:[%s10 + $0xa8] sm:$0xff]
    %v4005 = vld [vmem:[%s10 + $0xb0] sm:$0xff]
    %v4006 = vld [vmem:[%s10 + $0xb8] sm:$0xff]
    %v4007 = vld [vmem:[%s10 + $0xc0] sm:$0xff]
    %v4008 = vld [vmem:[%s10 + $0xc8] sm:$0xff]
    %v4009 = vld [vmem:[%s10 + $0xd0] sm:$0xff]
    %v4010 = vld [vmem:[%s10 + $0xd8] sm:$0xff]
    %v4011 = vld [vmem:[%s10 + $0xe0] sm:$0xff]
    %v4012 = vld [vmem:[%s10 + $0xe8] sm:$0xff]
    %v4013 = vld [vmem:[%s10 + $0xf0] sm:$0xff]
    %v4014 = vld [vmem:[%s10 + $0xf8] sm:$0xff]
    %v4015 = vld [vmem:[%s3132] sm:$0xff]
    %v4016 = vld [vmem:[%s3132 + $0x8] sm:$0xff]
    %v4017 = vld [vmem:[%s3132 + $0x10] sm:$0xff]
    %v4018 = vld [vmem:[%s3132 + $0x18] sm:$0xff]
    %v4019 = vld [vmem:[%s3132 + $0x20] sm:$0xff]
    %v4020 = vld [vmem:[%s3132 + $0x28] sm:$0xff]
    %v4021 = vld [vmem:[%s3132 + $0x30] sm:$0xff]
    %v4022 = vld [vmem:[%s3132 + $0x38] sm:$0xff]
    %v4023 = vld [vmem:[%s3132 + $0x40] sm:$0xff]
    %v4024 = vld [vmem:[%s3132 + $0x48] sm:$0xff]
    %v4025 = vld [vmem:[%s3132 + $0x50] sm:$0xff]
    %v4026 = vld [vmem:[%s3132 + $0x58] sm:$0xff]
    %v4027 = vld [vmem:[%s3132 + $0x60] sm:$0xff]
    %v4028 = vld [vmem:[%s3132 + $0x68] sm:$0xff]
    %v4029 = vld [vmem:[%s3132 + $0x70] sm:$0xff]
    %v4030 = vld [vmem:[%s3132 + $0x78] sm:$0xff]
    %v4031 = vld [vmem:[%s3132 + $0x80] sm:$0xff]
    %v4032 = vld [vmem:[%s3132 + $0x88] sm:$0xff]
    %v4033 = vld [vmem:[%s3132 + $0x90] sm:$0xff]
    %v4034 = vld [vmem:[%s3132 + $0x98] sm:$0xff]
    %v4035 = vld [vmem:[%s3132 + $0xa0] sm:$0xff]
    %v4036 = vld [vmem:[%s3132 + $0xa8] sm:$0xff]
    %v4037 = vld [vmem:[%s3132 + $0xb0] sm:$0xff]
    %v4038 = vld [vmem:[%s3132 + $0xb8] sm:$0xff]
    %v4039 = vld [vmem:[%s3132 + $0xc0] sm:$0xff]
    %v4040 = vld [vmem:[%s3132 + $0xc8] sm:$0xff]
    %v4041 = vld [vmem:[%s3132 + $0xd0] sm:$0xff]
    %v4042 = vld [vmem:[%s3132 + $0xd8] sm:$0xff]
    %v4043 = vld [vmem:[%s3132 + $0xe0] sm:$0xff]
    %v4044 = vld [vmem:[%s3132 + $0xe8] sm:$0xff]
    %v4045 = vld [vmem:[%s3132 + $0xf0] sm:$0xff]
    %v4046 = vld [vmem:[%s3132 + $0xf8] sm:$0xff]
    %4047 = vmatprep.subr.mxu0 0.0
    %4048 = vmatpush1.msra.mxu0 %v4015
    %4049 = vmatprep.subr.mxu0 0.0
    %4050 = vmatpush1.msra.mxu0 %v4016
    %4051 = vmatprep.subr.mxu0 0.0
    %4052 = vmatpush1.msra.mxu0 %v4017
    %4053 = vmatprep.subr.mxu0 0.0
    %4054 = vmatpush1.msra.mxu0 %v4018
    %4055 = vmatprep.subr.mxu0 0.0
    %4056 = vmatpush1.msra.mxu0 %v4019
    %4057 = vmatprep.subr.mxu0 0.0
    %4058 = vmatpush1.msra.mxu0 %v4020
    %4059 = vmatprep.subr.mxu0 0.0
    %4060 = vmatpush1.msra.mxu0 %v4021
    %4061 = vmatprep.subr.mxu0 0.0
    %4062 = vmatpush1.msra.mxu0 %v4022
    %4063 = vmatprep.subr.mxu0 0.0
    %4064 = vmatpush1.msra.mxu0 %v4023
    %4065 = vmatprep.subr.mxu0 0.0
    %4066 = vmatpush1.msra.mxu0 %v4024
    %4067 = vmatprep.subr.mxu0 0.0
    %4068 = vmatpush1.msra.mxu0 %v4025
    %4069 = vmatprep.subr.mxu0 0.0
    %4070 = vmatpush1.msra.mxu0 %v4026
    %4071 = vmatprep.subr.mxu0 0.0
    %4072 = vmatpush1.msra.mxu0 %v4027
    %4073 = vmatprep.subr.mxu0 0.0
    %4074 = vmatpush1.msra.mxu0 %v4028
    %4075 = vmatprep.subr.mxu0 0.0
    %4076 = vmatpush1.msra.mxu0 %v4029
    %4077 = vmatprep.subr.mxu0 0.0
    %4078 = vmatpush1.msra.mxu0 %v4030
    %4079 = vmatprep.subr.mxu0 0.0
    %4080 = vmatpush1.msra.mxu0 %v4031
    %4081 = vmatprep.subr.mxu0 0.0
    %4082 = vmatpush1.msra.mxu0 %v4032
    %4083 = vmatprep.subr.mxu0 0.0
    %4084 = vmatpush1.msra.mxu0 %v4033
    %4085 = vmatprep.subr.mxu0 0.0
    %4086 = vmatpush1.msra.mxu0 %v4034
    %4087 = vmatprep.subr.mxu0 0.0
    %4088 = vmatpush1.msra.mxu0 %v4035
    %4089 = vmatprep.subr.mxu0 0.0
    %4090 = vmatpush1.msra.mxu0 %v4036
    %4091 = vmatprep.subr.mxu0 0.0
    %4092 = vmatpush1.msra.mxu0 %v4037
    %4093 = vmatprep.subr.mxu0 0.0
    %4094 = vmatpush1.msra.mxu0 %v4038
    %4095 = vmatprep.subr.mxu0 0.0
    %4096 = vmatpush1.msra.mxu0 %v4039
    %4097 = vmatprep.subr.mxu0 0.0
    %4098 = vmatpush1.msra.mxu0 %v4040
    %4099 = vmatprep.subr.mxu0 0.0
    %4100 = vmatpush1.msra.mxu0 %v4041
    %4101 = vmatprep.subr.mxu0 0.0
    %4102 = vmatpush1.msra.mxu0 %v4042
    %4103 = vmatprep.subr.mxu0 0.0
    %4104 = vmatpush1.msra.mxu0 %v4043
    %4105 = vmatprep.subr.mxu0 0.0
    %4106 = vmatpush1.msra.mxu0 %v4044
    %4107 = vmatprep.subr.mxu0 0.0
    %4108 = vmatpush1.msra.mxu0 %v4045
    %4109 = vmatprep.subr.mxu0 0.0
    %4110 = vmatpush1.msra.mxu0 %v4046
    %4111 = vmatprep.mubr.f32.mxu0 %v3120
    %4112 = vmatmul.mubr.f32.gmra.mrb[0].mxu0 %v3119
    %v4113 = vpop.f32.mrb[0].mxu0
    %v4114 = vadd.f32 0.0, %v4113
    %v4115 = vpop.f32.mrb[0].mxu0
    %4116 = vdwg.mxu0
    %4117 = vmatprep.subr.mxu0 0.0
    %4118 = vmatpush1.msra.mxu0 %v3983
    %4119 = vmatprep.subr.mxu0 0.0
    %4120 = vmatpush1.msra.mxu0 %v3984
    %4121 = vmatprep.subr.mxu0 0.0
    %4122 = vmatpush1.msra.mxu0 %v3985
    %4123 = vmatprep.subr.mxu0 0.0
    %4124 = vmatpush1.msra.mxu0 %v3986
    %4125 = vmatprep.subr.mxu0 0.0
    %4126 = vmatpush1.msra.mxu0 %v3987
    %4127 = vmatprep.subr.mxu0 0.0
    %4128 = vmatpush1.msra.mxu0 %v3988
    %4129 = vmatprep.subr.mxu0 0.0
    %4130 = vmatpush1.msra.mxu0 %v3989
    %4131 = vmatprep.subr.mxu0 0.0
    %4132 = vmatpush1.msra.mxu0 %v3990
    %4133 = vmatprep.subr.mxu0 0.0
    %4134 = vmatpush1.msra.mxu0 %v3991
    %4135 = vmatprep.subr.mxu0 0.0
    %4136 = vmatpush1.msra.mxu0 %v3992
    %4137 = vmatprep.subr.mxu0 0.0
    %4138 = vmatpush1.msra.mxu0 %v3993
    %4139 = vmatprep.subr.mxu0 0.0
    %4140 = vmatpush1.msra.mxu0 %v3994
    %4141 = vmatprep.subr.mxu0 0.0
    %4142 = vmatpush1.msra.mxu0 %v3995
    %4143 = vmatprep.subr.mxu0 0.0
    %4144 = vmatpush1.msra.mxu0 %v3996
    %4145 = vmatprep.subr.mxu0 0.0
    %4146 = vmatpush1.msra.mxu0 %v3997
    %4147 = vmatprep.subr.mxu0 0.0
    %4148 = vmatpush1.msra.mxu0 %v3998
    %4149 = vmatprep.subr.mxu0 0.0
    %4150 = vmatpush1.msra.mxu0 %v3999
    %4151 = vmatprep.subr.mxu0 0.0
    %4152 = vmatpush1.msra.mxu0 %v4000
    %4153 = vmatprep.subr.mxu0 0.0
    %4154 = vmatpush1.msra.mxu0 %v4001
    %4155 = vmatprep.subr.mxu0 0.0
    %4156 = vmatpush1.msra.mxu0 %v4002
    %4157 = vmatprep.subr.mxu0 0.0
    %4158 = vmatpush1.msra.mxu0 %v4003
    %4159 = vmatprep.subr.mxu0 0.0
    %4160 = vmatpush1.msra.mxu0 %v4004
    %4161 = vmatprep.subr.mxu0 0.0
    %4162 = vmatpush1.msra.mxu0 %v4005
    %4163 = vmatprep.subr.mxu0 0.0
    %4164 = vmatpush1.msra.mxu0 %v4006
    %4165 = vmatprep.subr.mxu0 0.0
    %4166 = vmatpush1.msra.mxu0 %v4007
    %4167 = vmatprep.subr.mxu0 0.0
    %4168 = vmatpush1.msra.mxu0 %v4008
    %4169 = vmatprep.subr.mxu0 0.0
    %4170 = vmatpush1.msra.mxu0 %v4009
    %4171 = vmatprep.subr.mxu0 0.0
    %4172 = vmatpush1.msra.mxu0 %v4010
    %4173 = vmatprep.subr.mxu0 0.0
    %4174 = vmatpush1.msra.mxu0 %v4011
    %4175 = vmatprep.subr.mxu0 0.0
    %4176 = vmatpush1.msra.mxu0 %v4012
    %4177 = vmatprep.subr.mxu0 0.0
    %4178 = vmatpush1.msra.mxu0 %v4013
    %4179 = vmatprep.subr.mxu0 0.0
    %4180 = vmatpush1.msra.mxu0 %v4014
    %4181 = vmatprep.mubr.f32.mxu0 %v3118
    %4182 = vmatmul.mubr.f32.gmra.mrb[0].mxu0 %v3117
    %v4183 = vpop.f32.mrb[0].mxu0
    %v4184 = vadd.f32 %v4114, %v4183
    %v4185 = vpop.f32.mrb[0].mxu0
    %4186 = vdwg.mxu0
    %v4187 = vadd.f32 %v4184, %v3169
    %v4188 = vtanh.pop %v4187
    %v4191 = vunpack.c.l.s4 1983009808
    %v4192 = vunpack.c.0.s8 %v4191
    %v4193 = vlaneseq
    %v4194 = vshrl.u32 %v4193, 7
    %v4195 = vsub.s32 %v4192, %v4194
    %v4196 = vrot.slane %v4188, %v4195
    %4197 = vrot.lane.b32.xlu0 %v4196, 64
    %v4198 = vpop.permute.xlu0 %4197
    %vm4200 = vcmask 648704
    %4201 = vst.msk [vmem:[%s12] sm:$0x3] %vm4200, %v4198
    %v4202 = vcombine.high %v4196, %v4196
    %4203 = vrot.lane.b32.xlu0 %v4202, 64
    %v4204 = vpop.permute.xlu0 %4203
    %4206 = vst.msk [vmem:[%s13] sm:$0x3] %vm4200, %v4204
    %4207 = vrot.lane.b32.xlu0 %v4196, 48
    %v4208 = vpop.permute.xlu0 %4207
    %4210 = vst.msk [vmem:[%s12 + $0x4] sm:$0x3] %vm4200, %v4208
    %4211 = vrot.lane.b32.xlu0 %v4202, 48
    %v4212 = vpop.permute.xlu0 %4211
    %4214 = vst.msk [vmem:[%s13 + $0x4] sm:$0x3] %vm4200, %v4212
    %4215 = vrot.lane.b32.xlu0 %v4196, 32
    %v4216 = vpop.permute.xlu0 %4215
    %4218 = vst.msk [vmem:[%s12 + $0x8] sm:$0x3] %vm4200, %v4216
    %4219 = vrot.lane.b32.xlu0 %v4202, 32
    %v4220 = vpop.permute.xlu0 %4219
    %4222 = vst.msk [vmem:[%s13 + $0x8] sm:$0x3] %vm4200, %v4220
    %v4223 = vld [vmem:[%s3271] sm:$0xff]
    %v4224 = vld [vmem:[%s3271 + $0x8] sm:$0xff]
    %v4225 = vld [vmem:[%s3271 + $0x10] sm:$0xff]
    %v4226 = vld [vmem:[%s3271 + $0x18] sm:$0xff]
    %v4227 = vld [vmem:[%s3271 + $0x20] sm:$0xff]
    %v4228 = vld [vmem:[%s3271 + $0x28] sm:$0xff]
    %v4229 = vld [vmem:[%s3271 + $0x30] sm:$0xff]
    %v4230 = vld [vmem:[%s3271 + $0x38] sm:$0xff]
    %v4231 = vld [vmem:[%s3271 + $0x40] sm:$0xff]
    %v4232 = vld [vmem:[%s3271 + $0x48] sm:$0xff]
    %v4233 = vld [vmem:[%s3271 + $0x50] sm:$0xff]
    %v4234 = vld [vmem:[%s3271 + $0x58] sm:$0xff]
    %v4235 = vld [vmem:[%s3271 + $0x60] sm:$0xff]
    %v4236 = vld [vmem:[%s3271 + $0x68] sm:$0xff]
    %v4237 = vld [vmem:[%s3271 + $0x70] sm:$0xff]
    %v4238 = vld [vmem:[%s3271 + $0x78] sm:$0xff]
    %v4239 = vld [vmem:[%s3271 + $0x80] sm:$0xff]
    %v4240 = vld [vmem:[%s3271 + $0x88] sm:$0xff]
    %v4241 = vld [vmem:[%s3271 + $0x90] sm:$0xff]
    %v4242 = vld [vmem:[%s3271 + $0x98] sm:$0xff]
    %v4243 = vld [vmem:[%s3271 + $0xa0] sm:$0xff]
    %v4244 = vld [vmem:[%s3271 + $0xa8] sm:$0xff]
    %v4245 = vld [vmem:[%s3271 + $0xb0] sm:$0xff]
    %v4246 = vld [vmem:[%s3271 + $0xb8] sm:$0xff]
    %v4247 = vld [vmem:[%s3271 + $0xc0] sm:$0xff]
    %v4248 = vld [vmem:[%s3271 + $0xc8] sm:$0xff]
    %v4249 = vld [vmem:[%s3271 + $0xd0] sm:$0xff]
    %v4250 = vld [vmem:[%s3271 + $0xd8] sm:$0xff]
    %v4251 = vld [vmem:[%s3271 + $0xe0] sm:$0xff]
    %v4252 = vld [vmem:[%s3271 + $0xe8] sm:$0xff]
    %v4253 = vld [vmem:[%s3271 + $0xf0] sm:$0xff]
    %v4254 = vld [vmem:[%s3271 + $0xf8] sm:$0xff]
    %v4255 = vld [vmem:[%s3304] sm:$0xff]
    %v4256 = vld [vmem:[%s3304 + $0x8] sm:$0xff]
    %v4257 = vld [vmem:[%s3304 + $0x10] sm:$0xff]
    %v4258 = vld [vmem:[%s3304 + $0x18] sm:$0xff]
    %v4259 = vld [vmem:[%s3304 + $0x20] sm:$0xff]
    %v4260 = vld [vmem:[%s3304 + $0x28] sm:$0xff]
    %v4261 = vld [vmem:[%s3304 + $0x30] sm:$0xff]
    %v4262 = vld [vmem:[%s3304 + $0x38] sm:$0xff]
    %v4263 = vld [vmem:[%s3304 + $0x40] sm:$0xff]
    %v4264 = vld [vmem:[%s3304 + $0x48] sm:$0xff]
    %v4265 = vld [vmem:[%s3304 + $0x50] sm:$0xff]
    %v4266 = vld [vmem:[%s3304 + $0x58] sm:$0xff]
    %v4267 = vld [vmem:[%s3304 + $0x60] sm:$0xff]
    %v4268 = vld [vmem:[%s3304 + $0x68] sm:$0xff]
    %v4269 = vld [vmem:[%s3304 + $0x70] sm:$0xff]
    %v4270 = vld [vmem:[%s3304 + $0x78] sm:$0xff]
    %v4271 = vld [vmem:[%s3304 + $0x80] sm:$0xff]
    %v4272 = vld [vmem:[%s3304 + $0x88] sm:$0xff]
    %v4273 = vld [vmem:[%s3304 + $0x90] sm:$0xff]
    %v4274 = vld [vmem:[%s3304 + $0x98] sm:$0xff]
    %v4275 = vld [vmem:[%s3304 + $0xa0] sm:$0xff]
    %v4276 = vld [vmem:[%s3304 + $0xa8] sm:$0xff]
    %v4277 = vld [vmem:[%s3304 + $0xb0] sm:$0xff]
    %v4278 = vld [vmem:[%s3304 + $0xb8] sm:$0xff]
    %v4279 = vld [vmem:[%s3304 + $0xc0] sm:$0xff]
    %v4280 = vld [vmem:[%s3304 + $0xc8] sm:$0xff]
    %v4281 = vld [vmem:[%s3304 + $0xd0] sm:$0xff]
    %v4282 = vld [vmem:[%s3304 + $0xd8] sm:$0xff]
    %v4283 = vld [vmem:[%s3304 + $0xe0] sm:$0xff]
    %v4284 = vld [vmem:[%s3304 + $0xe8] sm:$0xff]
    %v4285 = vld [vmem:[%s3304 + $0xf0] sm:$0xff]
    %v4286 = vld [vmem:[%s3304 + $0xf8] sm:$0xff]
    %4287 = vmatprep.subr.mxu0 0.0
    %4288 = vmatpush1.msra.mxu0 %v4255
    %4289 = vmatprep.subr.mxu0 0.0
    %4290 = vmatpush1.msra.mxu0 %v4256
    %4291 = vmatprep.subr.mxu0 0.0
    %4292 = vmatpush1.msra.mxu0 %v4257
    %4293 = vmatprep.subr.mxu0 0.0
    %4294 = vmatpush1.msra.mxu0 %v4258
    %4295 = vmatprep.subr.mxu0 0.0
    %4296 = vmatpush1.msra.mxu0 %v4259
    %4297 = vmatprep.subr.mxu0 0.0
    %4298 = vmatpush1.msra.mxu0 %v4260
    %4299 = vmatprep.subr.mxu0 0.0
    %4300 = vmatpush1.msra.mxu0 %v4261
    %4301 = vmatprep.subr.mxu0 0.0
    %4302 = vmatpush1.msra.mxu0 %v4262
    %4303 = vmatprep.subr.mxu0 0.0
    %4304 = vmatpush1.msra.mxu0 %v4263
    %4305 = vmatprep.subr.mxu0 0.0
    %4306 = vmatpush1.msra.mxu0 %v4264
    %4307 = vmatprep.subr.mxu0 0.0
    %4308 = vmatpush1.msra.mxu0 %v4265
    %4309 = vmatprep.subr.mxu0 0.0
    %4310 = vmatpush1.msra.mxu0 %v4266
    %4311 = vmatprep.subr.mxu0 0.0
    %4312 = vmatpush1.msra.mxu0 %v4267
    %4313 = vmatprep.subr.mxu0 0.0
    %4314 = vmatpush1.msra.mxu0 %v4268
    %4315 = vmatprep.subr.mxu0 0.0
    %4316 = vmatpush1.msra.mxu0 %v4269
    %4317 = vmatprep.subr.mxu0 0.0
    %4318 = vmatpush1.msra.mxu0 %v4270
    %4319 = vmatprep.subr.mxu0 0.0
    %4320 = vmatpush1.msra.mxu0 %v4271
    %4321 = vmatprep.subr.mxu0 0.0
    %4322 = vmatpush1.msra.mxu0 %v4272
    %4323 = vmatprep.subr.mxu0 0.0
    %4324 = vmatpush1.msra.mxu0 %v4273
    %4325 = vmatprep.subr.mxu0 0.0
    %4326 = vmatpush1.msra.mxu0 %v4274
    %4327 = vmatprep.subr.mxu0 0.0
    %4328 = vmatpush1.msra.mxu0 %v4275
    %4329 = vmatprep.subr.mxu0 0.0
    %4330 = vmatpush1.msra.mxu0 %v4276
    %4331 = vmatprep.subr.mxu0 0.0
    %4332 = vmatpush1.msra.mxu0 %v4277
    %4333 = vmatprep.subr.mxu0 0.0
    %4334 = vmatpush1.msra.mxu0 %v4278
    %4335 = vmatprep.subr.mxu0 0.0
    %4336 = vmatpush1.msra.mxu0 %v4279
    %4337 = vmatprep.subr.mxu0 0.0
    %4338 = vmatpush1.msra.mxu0 %v4280
    %4339 = vmatprep.subr.mxu0 0.0
    %4340 = vmatpush1.msra.mxu0 %v4281
    %4341 = vmatprep.subr.mxu0 0.0
    %4342 = vmatpush1.msra.mxu0 %v4282
    %4343 = vmatprep.subr.mxu0 0.0
    %4344 = vmatpush1.msra.mxu0 %v4283
    %4345 = vmatprep.subr.mxu0 0.0
    %4346 = vmatpush1.msra.mxu0 %v4284
    %4347 = vmatprep.subr.mxu0 0.0
    %4348 = vmatpush1.msra.mxu0 %v4285
    %4349 = vmatprep.subr.mxu0 0.0
    %4350 = vmatpush1.msra.mxu0 %v4286
    %4351 = vmatprep.mubr.f32.mxu0 %v3122
    %4352 = vmatmul.mubr.f32.gmra.mrb[0].mxu0 %v3121
    %v4353 = vpop.f32.mrb[0].mxu0
    %v4354 = vadd.f32 0.0, %v4353
    %v4355 = vpop.f32.mrb[0].mxu0
    %4356 = vdwg.mxu0
    %4357 = vmatprep.subr.mxu0 0.0
    %4358 = vmatpush1.msra.mxu0 %v4223
    %4359 = vmatprep.subr.mxu0 0.0
    %4360 = vmatpush1.msra.mxu0 %v4224
    %4361 = vmatprep.subr.mxu0 0.0
    %4362 = vmatpush1.msra.mxu0 %v4225
    %4363 = vmatprep.subr.mxu0 0.0
    %4364 = vmatpush1.msra.mxu0 %v4226
    %4365 = vmatprep.subr.mxu0 0.0
    %4366 = vmatpush1.msra.mxu0 %v4227
    %4367 = vmatprep.subr.mxu0 0.0
    %4368 = vmatpush1.msra.mxu0 %v4228
    %4369 = vmatprep.subr.mxu0 0.0
    %4370 = vmatpush1.msra.mxu0 %v4229
    %4371 = vmatprep.subr.mxu0 0.0
    %4372 = vmatpush1.msra.mxu0 %v4230
    %4373 = vmatprep.subr.mxu0 0.0
    %4374 = vmatpush1.msra.mxu0 %v4231
    %4375 = vmatprep.subr.mxu0 0.0
    %4376 = vmatpush1.msra.mxu0 %v4232
    %4377 = vmatprep.subr.mxu0 0.0
    %4378 = vmatpush1.msra.mxu0 %v4233
    %4379 = vmatprep.subr.mxu0 0.0
    %4380 = vmatpush1.msra.mxu0 %v4234
    %4381 = vmatprep.subr.mxu0 0.0
    %4382 = vmatpush1.msra.mxu0 %v4235
    %4383 = vmatprep.subr.mxu0 0.0
    %4384 = vmatpush1.msra.mxu0 %v4236
    %4385 = vmatprep.subr.mxu0 0.0
    %4386 = vmatpush1.msra.mxu0 %v4237
    %4387 = vmatprep.subr.mxu0 0.0
    %4388 = vmatpush1.msra.mxu0 %v4238
    %4389 = vmatprep.subr.mxu0 0.0
    %4390 = vmatpush1.msra.mxu0 %v4239
    %4391 = vmatprep.subr.mxu0 0.0
    %4392 = vmatpush1.msra.mxu0 %v4240
    %4393 = vmatprep.subr.mxu0 0.0
    %4394 = vmatpush1.msra.mxu0 %v4241
    %4395 = vmatprep.subr.mxu0 0.0
    %4396 = vmatpush1.msra.mxu0 %v4242
    %4397 = vmatprep.subr.mxu0 0.0
    %4398 = vmatpush1.msra.mxu0 %v4243
    %4399 = vmatprep.subr.mxu0 0.0
    %4400 = vmatpush1.msra.mxu0 %v4244
    %4401 = vmatprep.subr.mxu0 0.0
    %4402 = vmatpush1.msra.mxu0 %v4245
    %4403 = vmatprep.subr.mxu0 0.0
    %4404 = vmatpush1.msra.mxu0 %v4246
    %4405 = vmatprep.subr.mxu0 0.0
    %4406 = vmatpush1.msra.mxu0 %v4247
    %4407 = vmatprep.subr.mxu0 0.0
    %4408 = vmatpush1.msra.mxu0 %v4248
    %4409 = vmatprep.subr.mxu0 0.0
    %4410 = vmatpush1.msra.mxu0 %v4249
    %4411 = vmatprep.subr.mxu0 0.0
    %4412 = vmatpush1.msra.mxu0 %v4250
    %4413 = vmatprep.subr.mxu0 0.0
    %4414 = vmatpush1.msra.mxu0 %v4251
    %4415 = vmatprep.subr.mxu0 0.0
    %4416 = vmatpush1.msra.mxu0 %v4252
    %4417 = vmatprep.subr.mxu0 0.0
    %4418 = vmatpush1.msra.mxu0 %v4253
    %4419 = vmatprep.subr.mxu0 0.0
    %4420 = vmatpush1.msra.mxu0 %v4254
    %4421 = vmatprep.mubr.f32.mxu0 %v3120
    %4422 = vmatmul.mubr.f32.gmra.mrb[0].mxu0 %v3119
    %v4423 = vpop.f32.mrb[0].mxu0
    %v4424 = vadd.f32 %v4354, %v4423
    %v4425 = vpop.f32.mrb[0].mxu0
    %4426 = vdwg.mxu0
    %v4427 = vadd.f32 %v4424, %v3169
    %v4428 = vtanh.pop %v4427
    %v4431 = vunpack.c.l.s4 1983009808
    %v4432 = vunpack.c.0.s8 %v4431
    %v4433 = vlaneseq
    %v4434 = vshrl.u32 %v4433, 7
    %v4435 = vsub.s32 %v4432, %v4434
    %v4436 = vrot.slane %v4428, %v4435
    %4437 = vrot.lane.b32.xlu0 %v4436, 80
    %v4438 = vpop.permute.xlu0 %4437
    %vm4440 = vcmask 779904
    %4441 = vst.msk [vmem:[%s12] sm:$0x3] %vm4440, %v4438
    %v4442 = vcombine.high %v4436, %v4436
    %4443 = vrot.lane.b32.xlu0 %v4442, 80
    %v4444 = vpop.permute.xlu0 %4443
    %4446 = vst.msk [vmem:[%s13] sm:$0x3] %vm4440, %v4444
    %4447 = vrot.lane.b32.xlu0 %v4436, 64
    %v4448 = vpop.permute.xlu0 %4447
    %4450 = vst.msk [vmem:[%s12 + $0x4] sm:$0x3] %vm4440, %v4448
    %4451 = vrot.lane.b32.xlu0 %v4442, 64
    %v4452 = vpop.permute.xlu0 %4451
    %4454 = vst.msk [vmem:[%s13 + $0x4] sm:$0x3] %vm4440, %v4452
    %4455 = vrot.lane.b32.xlu0 %v4436, 48
    %v4456 = vpop.permute.xlu0 %4455
    %4458 = vst.msk [vmem:[%s12 + $0x8] sm:$0x3] %vm4440, %v4456
    %4459 = vrot.lane.b32.xlu0 %v4442, 48
    %v4460 = vpop.permute.xlu0 %4459
    %4462 = vst.msk [vmem:[%s13 + $0x8] sm:$0x3] %vm4440, %v4460
    %v4463 = vld [vmem:[%s10] sm:$0xff]
    %v4464 = vld [vmem:[%s10 + $0x8] sm:$0xff]
    %v4465 = vld [vmem:[%s10 + $0x10] sm:$0xff]
    %v4466 = vld [vmem:[%s10 + $0x18] sm:$0xff]
    %v4467 = vld [vmem:[%s10 + $0x20] sm:$0xff]
    %v4468 = vld [vmem:[%s10 + $0x28] sm:$0xff]
    %v4469 = vld [vmem:[%s10 + $0x30] sm:$0xff]
    %v4470 = vld [vmem:[%s10 + $0x38] sm:$0xff]
    %v4471 = vld [vmem:[%s10 + $0x40] sm:$0xff]
    %v4472 = vld [vmem:[%s10 + $0x48] sm:$0xff]
    %v4473 = vld [vmem:[%s10 + $0x50] sm:$0xff]
    %v4474 = vld [vmem:[%s10 + $0x58] sm:$0xff]
    %v4475 = vld [vmem:[%s10 + $0x60] sm:$0xff]
    %v4476 = vld [vmem:[%s10 + $0x68] sm:$0xff]
    %v4477 = vld [vmem:[%s10 + $0x70] sm:$0xff]
    %v4478 = vld [vmem:[%s10 + $0x78] sm:$0xff]
    %v4479 = vld [vmem:[%s10 + $0x80] sm:$0xff]
    %v4480 = vld [vmem:[%s10 + $0x88] sm:$0xff]
    %v4481 = vld [vmem:[%s10 + $0x90] sm:$0xff]
    %v4482 = vld [vmem:[%s10 + $0x98] sm:$0xff]
    %v4483 = vld [vmem:[%s10 + $0xa0] sm:$0xff]
    %v4484 = vld [vmem:[%s10 + $0xa8] sm:$0xff]
    %v4485 = vld [vmem:[%s10 + $0xb0] sm:$0xff]
    %v4486 = vld [vmem:[%s10 + $0xb8] sm:$0xff]
    %v4487 = vld [vmem:[%s10 + $0xc0] sm:$0xff]
    %v4488 = vld [vmem:[%s10 + $0xc8] sm:$0xff]
    %v4489 = vld [vmem:[%s10 + $0xd0] sm:$0xff]
    %v4490 = vld [vmem:[%s10 + $0xd8] sm:$0xff]
    %v4491 = vld [vmem:[%s10 + $0xe0] sm:$0xff]
    %v4492 = vld [vmem:[%s10 + $0xe8] sm:$0xff]
    %v4493 = vld [vmem:[%s10 + $0xf0] sm:$0xff]
    %v4494 = vld [vmem:[%s10 + $0xf8] sm:$0xff]
    %v4495 = vld [vmem:[%s3132] sm:$0xff]
    %v4496 = vld [vmem:[%s3132 + $0x8] sm:$0xff]
    %v4497 = vld [vmem:[%s3132 + $0x10] sm:$0xff]
    %v4498 = vld [vmem:[%s3132 + $0x18] sm:$0xff]
    %v4499 = vld [vmem:[%s3132 + $0x20] sm:$0xff]
    %v4500 = vld [vmem:[%s3132 + $0x28] sm:$0xff]
    %v4501 = vld [vmem:[%s3132 + $0x30] sm:$0xff]
    %v4502 = vld [vmem:[%s3132 + $0x38] sm:$0xff]
    %v4503 = vld [vmem:[%s3132 + $0x40] sm:$0xff]
    %v4504 = vld [vmem:[%s3132 + $0x48] sm:$0xff]
    %v4505 = vld [vmem:[%s3132 + $0x50] sm:$0xff]
    %v4506 = vld [vmem:[%s3132 + $0x58] sm:$0xff]
    %v4507 = vld [vmem:[%s3132 + $0x60] sm:$0xff]
    %v4508 = vld [vmem:[%s3132 + $0x68] sm:$0xff]
    %v4509 = vld [vmem:[%s3132 + $0x70] sm:$0xff]
    %v4510 = vld [vmem:[%s3132 + $0x78] sm:$0xff]
    %v4511 = vld [vmem:[%s3132 + $0x80] sm:$0xff]
    %v4512 = vld [vmem:[%s3132 + $0x88] sm:$0xff]
    %v4513 = vld [vmem:[%s3132 + $0x90] sm:$0xff]
    %v4514 = vld [vmem:[%s3132 + $0x98] sm:$0xff]
    %v4515 = vld [vmem:[%s3132 + $0xa0] sm:$0xff]
    %v4516 = vld [vmem:[%s3132 + $0xa8] sm:$0xff]
    %v4517 = vld [vmem:[%s3132 + $0xb0] sm:$0xff]
    %v4518 = vld [vmem:[%s3132 + $0xb8] sm:$0xff]
    %v4519 = vld [vmem:[%s3132 + $0xc0] sm:$0xff]
    %v4520 = vld [vmem:[%s3132 + $0xc8] sm:$0xff]
    %v4521 = vld [vmem:[%s3132 + $0xd0] sm:$0xff]
    %v4522 = vld [vmem:[%s3132 + $0xd8] sm:$0xff]
    %v4523 = vld [vmem:[%s3132 + $0xe0] sm:$0xff]
    %v4524 = vld [vmem:[%s3132 + $0xe8] sm:$0xff]
    %v4525 = vld [vmem:[%s3132 + $0xf0] sm:$0xff]
    %v4526 = vld [vmem:[%s3132 + $0xf8] sm:$0xff]
    %4527 = vmatprep.subr.mxu0 0.0
    %4528 = vmatpush1.msra.mxu0 %v4495
    %4529 = vmatprep.subr.mxu0 0.0
    %4530 = vmatpush1.msra.mxu0 %v4496
    %4531 = vmatprep.subr.mxu0 0.0
    %4532 = vmatpush1.msra.mxu0 %v4497
    %4533 = vmatprep.subr.mxu0 0.0
    %4534 = vmatpush1.msra.mxu0 %v4498
    %4535 = vmatprep.subr.mxu0 0.0
    %4536 = vmatpush1.msra.mxu0 %v4499
    %4537 = vmatprep.subr.mxu0 0.0
    %4538 = vmatpush1.msra.mxu0 %v4500
    %4539 = vmatprep.subr.mxu0 0.0
    %4540 = vmatpush1.msra.mxu0 %v4501
    %4541 = vmatprep.subr.mxu0 0.0
    %4542 = vmatpush1.msra.mxu0 %v4502
    %4543 = vmatprep.subr.mxu0 0.0
    %4544 = vmatpush1.msra.mxu0 %v4503
    %4545 = vmatprep.subr.mxu0 0.0
    %4546 = vmatpush1.msra.mxu0 %v4504
    %4547 = vmatprep.subr.mxu0 0.0
    %4548 = vmatpush1.msra.mxu0 %v4505
    %4549 = vmatprep.subr.mxu0 0.0
    %4550 = vmatpush1.msra.mxu0 %v4506
    %4551 = vmatprep.subr.mxu0 0.0
    %4552 = vmatpush1.msra.mxu0 %v4507
    %4553 = vmatprep.subr.mxu0 0.0
    %4554 = vmatpush1.msra.mxu0 %v4508
    %4555 = vmatprep.subr.mxu0 0.0
    %4556 = vmatpush1.msra.mxu0 %v4509
    %4557 = vmatprep.subr.mxu0 0.0
    %4558 = vmatpush1.msra.mxu0 %v4510
    %4559 = vmatprep.subr.mxu0 0.0
    %4560 = vmatpush1.msra.mxu0 %v4511
    %4561 = vmatprep.subr.mxu0 0.0
    %4562 = vmatpush1.msra.mxu0 %v4512
    %4563 = vmatprep.subr.mxu0 0.0
    %4564 = vmatpush1.msra.mxu0 %v4513
    %4565 = vmatprep.subr.mxu0 0.0
    %4566 = vmatpush1.msra.mxu0 %v4514
    %4567 = vmatprep.subr.mxu0 0.0
    %4568 = vmatpush1.msra.mxu0 %v4515
    %4569 = vmatprep.subr.mxu0 0.0
    %4570 = vmatpush1.msra.mxu0 %v4516
    %4571 = vmatprep.subr.mxu0 0.0
    %4572 = vmatpush1.msra.mxu0 %v4517
    %4573 = vmatprep.subr.mxu0 0.0
    %4574 = vmatpush1.msra.mxu0 %v4518
    %4575 = vmatprep.subr.mxu0 0.0
    %4576 = vmatpush1.msra.mxu0 %v4519
    %4577 = vmatprep.subr.mxu0 0.0
    %4578 = vmatpush1.msra.mxu0 %v4520
    %4579 = vmatprep.subr.mxu0 0.0
    %4580 = vmatpush1.msra.mxu0 %v4521
    %4581 = vmatprep.subr.mxu0 0.0
    %4582 = vmatpush1.msra.mxu0 %v4522
    %4583 = vmatprep.subr.mxu0 0.0
    %4584 = vmatpush1.msra.mxu0 %v4523
    %4585 = vmatprep.subr.mxu0 0.0
    %4586 = vmatpush1.msra.mxu0 %v4524
    %4587 = vmatprep.subr.mxu0 0.0
    %4588 = vmatpush1.msra.mxu0 %v4525
    %4589 = vmatprep.subr.mxu0 0.0
    %4590 = vmatpush1.msra.mxu0 %v4526
    %4591 = vmatprep.mubr.f32.mxu0 %v3122
    %4592 = vmatmul.mubr.f32.gmra.mrb[0].mxu0 %v3121
    %v4593 = vpop.f32.mrb[0].mxu0
    %v4594 = vadd.f32 0.0, %v4593
    %v4595 = vpop.f32.mrb[0].mxu0
    %4596 = vdwg.mxu0
    %4597 = vmatprep.subr.mxu0 0.0
    %4598 = vmatpush1.msra.mxu0 %v4463
    %4599 = vmatprep.subr.mxu0 0.0
    %4600 = vmatpush1.msra.mxu0 %v4464
    %4601 = vmatprep.subr.mxu0 0.0
    %4602 = vmatpush1.msra.mxu0 %v4465
    %4603 = vmatprep.subr.mxu0 0.0
    %4604 = vmatpush1.msra.mxu0 %v4466
    %4605 = vmatprep.subr.mxu0 0.0
    %4606 = vmatpush1.msra.mxu0 %v4467
    %4607 = vmatprep.subr.mxu0 0.0
    %4608 = vmatpush1.msra.mxu0 %v4468
    %4609 = vmatprep.subr.mxu0 0.0
    %4610 = vmatpush1.msra.mxu0 %v4469
    %4611 = vmatprep.subr.mxu0 0.0
    %4612 = vmatpush1.msra.mxu0 %v4470
    %4613 = vmatprep.subr.mxu0 0.0
    %4614 = vmatpush1.msra.mxu0 %v4471
    %4615 = vmatprep.subr.mxu0 0.0
    %4616 = vmatpush1.msra.mxu0 %v4472
    %4617 = vmatprep.subr.mxu0 0.0
    %4618 = vmatpush1.msra.mxu0 %v4473
    %4619 = vmatprep.subr.mxu0 0.0
    %4620 = vmatpush1.msra.mxu0 %v4474
    %4621 = vmatprep.subr.mxu0 0.0
    %4622 = vmatpush1.msra.mxu0 %v4475
    %4623 = vmatprep.subr.mxu0 0.0
    %4624 = vmatpush1.msra.mxu0 %v4476
    %4625 = vmatprep.subr.mxu0 0.0
    %4626 = vmatpush1.msra.mxu0 %v4477
    %4627 = vmatprep.subr.mxu0 0.0
    %4628 = vmatpush1.msra.mxu0 %v4478
    %4629 = vmatprep.subr.mxu0 0.0
    %4630 = vmatpush1.msra.mxu0 %v4479
    %4631 = vmatprep.subr.mxu0 0.0
    %4632 = vmatpush1.msra.mxu0 %v4480
    %4633 = vmatprep.subr.mxu0 0.0
    %4634 = vmatpush1.msra.mxu0 %v4481
    %4635 = vmatprep.subr.mxu0 0.0
    %4636 = vmatpush1.msra.mxu0 %v4482
    %4637 = vmatprep.subr.mxu0 0.0
    %4638 = vmatpush1.msra.mxu0 %v4483
    %4639 = vmatprep.subr.mxu0 0.0
    %4640 = vmatpush1.msra.mxu0 %v4484
    %4641 = vmatprep.subr.mxu0 0.0
    %4642 = vmatpush1.msra.mxu0 %v4485
    %4643 = vmatprep.subr.mxu0 0.0
    %4644 = vmatpush1.msra.mxu0 %v4486
    %4645 = vmatprep.subr.mxu0 0.0
    %4646 = vmatpush1.msra.mxu0 %v4487
    %4647 = vmatprep.subr.mxu0 0.0
    %4648 = vmatpush1.msra.mxu0 %v4488
    %4649 = vmatprep.subr.mxu0 0.0
    %4650 = vmatpush1.msra.mxu0 %v4489
    %4651 = vmatprep.subr.mxu0 0.0
    %4652 = vmatpush1.msra.mxu0 %v4490
    %4653 = vmatprep.subr.mxu0 0.0
    %4654 = vmatpush1.msra.mxu0 %v4491
    %4655 = vmatprep.subr.mxu0 0.0
    %4656 = vmatpush1.msra.mxu0 %v4492
    %4657 = vmatprep.subr.mxu0 0.0
    %4658 = vmatpush1.msra.mxu0 %v4493
    %4659 = vmatprep.subr.mxu0 0.0
    %4660 = vmatpush1.msra.mxu0 %v4494
    %4661 = vmatprep.mubr.f32.mxu0 %v3120
    %4662 = vmatmul.mubr.f32.gmra.mrb[0].mxu0 %v3119
    %v4663 = vpop.f32.mrb[0].mxu0
    %v4664 = vadd.f32 %v4594, %v4663
    %v4665 = vpop.f32.mrb[0].mxu0
    %4666 = vdwg.mxu0
    %v4667 = vadd.f32 %v4664, %v3169
    %v4668 = vtanh.pop %v4667
    %v4671 = vunpack.c.l.s4 1983009808
    %v4672 = vunpack.c.0.s8 %v4671
    %v4673 = vlaneseq
    %v4674 = vshrl.u32 %v4673, 7
    %v4675 = vsub.s32 %v4672, %v4674
    %v4676 = vrot.slane %v4668, %v4675
    %4677 = vrot.lane.b32.xlu0 %v4676, 96
    %v4678 = vpop.permute.xlu0 %4677
    %vm4680 = vcmask 911104
    %4681 = vst.msk [vmem:[%s12] sm:$0x3] %vm4680, %v4678
    %v4682 = vcombine.high %v4676, %v4676
    %4683 = vrot.lane.b32.xlu0 %v4682, 96
    %v4684 = vpop.permute.xlu0 %4683
    %4686 = vst.msk [vmem:[%s13] sm:$0x3] %vm4680, %v4684
    %4687 = vrot.lane.b32.xlu0 %v4676, 80
    %v4688 = vpop.permute.xlu0 %4687
    %4690 = vst.msk [vmem:[%s12 + $0x4] sm:$0x3] %vm4680, %v4688
    %4691 = vrot.lane.b32.xlu0 %v4682, 80
    %v4692 = vpop.permute.xlu0 %4691
    %4694 = vst.msk [vmem:[%s13 + $0x4] sm:$0x3] %vm4680, %v4692
    %4695 = vrot.lane.b32.xlu0 %v4676, 64
    %v4696 = vpop.permute.xlu0 %4695
    %4698 = vst.msk [vmem:[%s12 + $0x8] sm:$0x3] %vm4680, %v4696
    %4699 = vrot.lane.b32.xlu0 %v4682, 64
    %v4700 = vpop.permute.xlu0 %4699
    %4702 = vst.msk [vmem:[%s13 + $0x8] sm:$0x3] %vm4680, %v4700
    %v4703 = vld [vmem:[%s3271] sm:$0xff]
    %v4704 = vld [vmem:[%s3271 + $0x8] sm:$0xff]
    %v4705 = vld [vmem:[%s3271 + $0x10] sm:$0xff]
    %v4706 = vld [vmem:[%s3271 + $0x18] sm:$0xff]
    %v4707 = vld [vmem:[%s3271 + $0x20] sm:$0xff]
    %v4708 = vld [vmem:[%s3271 + $0x28] sm:$0xff]
    %v4709 = vld [vmem:[%s3271 + $0x30] sm:$0xff]
    %v4710 = vld [vmem:[%s3271 + $0x38] sm:$0xff]
    %v4711 = vld [vmem:[%s3271 + $0x40] sm:$0xff]
    %v4712 = vld [vmem:[%s3271 + $0x48] sm:$0xff]
    %v4713 = vld [vmem:[%s3271 + $0x50] sm:$0xff]
    %v4714 = vld [vmem:[%s3271 + $0x58] sm:$0xff]
    %v4715 = vld [vmem:[%s3271 + $0x60] sm:$0xff]
    %v4716 = vld [vmem:[%s3271 + $0x68] sm:$0xff]
    %v4717 = vld [vmem:[%s3271 + $0x70] sm:$0xff]
    %v4718 = vld [vmem:[%s3271 + $0x78] sm:$0xff]
    %v4719 = vld [vmem:[%s3271 + $0x80] sm:$0xff]
    %v4720 = vld [vmem:[%s3271 + $0x88] sm:$0xff]
    %v4721 = vld [vmem:[%s3271 + $0x90] sm:$0xff]
    %v4722 = vld [vmem:[%s3271 + $0x98] sm:$0xff]
    %v4723 = vld [vmem:[%s3271 + $0xa0] sm:$0xff]
    %v4724 = vld [vmem:[%s3271 + $0xa8] sm:$0xff]
    %v4725 = vld [vmem:[%s3271 + $0xb0] sm:$0xff]
    %v4726 = vld [vmem:[%s3271 + $0xb8] sm:$0xff]
    %v4727 = vld [vmem:[%s3271 + $0xc0] sm:$0xff]
    %v4728 = vld [vmem:[%s3271 + $0xc8] sm:$0xff]
    %v4729 = vld [vmem:[%s3271 + $0xd0] sm:$0xff]
    %v4730 = vld [vmem:[%s3271 + $0xd8] sm:$0xff]
    %v4731 = vld [vmem:[%s3271 + $0xe0] sm:$0xff]
    %v4732 = vld [vmem:[%s3271 + $0xe8] sm:$0xff]
    %v4733 = vld [vmem:[%s3271 + $0xf0] sm:$0xff]
    %v4734 = vld [vmem:[%s3271 + $0xf8] sm:$0xff]
    %v4735 = vld [vmem:[%s3304] sm:$0xff]
    %v4736 = vld [vmem:[%s3304 + $0x8] sm:$0xff]
    %v4737 = vld [vmem:[%s3304 + $0x10] sm:$0xff]
    %v4738 = vld [vmem:[%s3304 + $0x18] sm:$0xff]
    %v4739 = vld [vmem:[%s3304 + $0x20] sm:$0xff]
    %v4740 = vld [vmem:[%s3304 + $0x28] sm:$0xff]
    %v4741 = vld [vmem:[%s3304 + $0x30] sm:$0xff]
    %v4742 = vld [vmem:[%s3304 + $0x38] sm:$0xff]
    %v4743 = vld [vmem:[%s3304 + $0x40] sm:$0xff]
    %v4744 = vld [vmem:[%s3304 + $0x48] sm:$0xff]
    %v4745 = vld [vmem:[%s3304 + $0x50] sm:$0xff]
    %v4746 = vld [vmem:[%s3304 + $0x58] sm:$0xff]
    %v4747 = vld [vmem:[%s3304 + $0x60] sm:$0xff]
    %v4748 = vld [vmem:[%s3304 + $0x68] sm:$0xff]
    %v4749 = vld [vmem:[%s3304 + $0x70] sm:$0xff]
    %v4750 = vld [vmem:[%s3304 + $0x78] sm:$0xff]
    %v4751 = vld [vmem:[%s3304 + $0x80] sm:$0xff]
    %v4752 = vld [vmem:[%s3304 + $0x88] sm:$0xff]
    %v4753 = vld [vmem:[%s3304 + $0x90] sm:$0xff]
    %v4754 = vld [vmem:[%s3304 + $0x98] sm:$0xff]
    %v4755 = vld [vmem:[%s3304 + $0xa0] sm:$0xff]
    %v4756 = vld [vmem:[%s3304 + $0xa8] sm:$0xff]
    %v4757 = vld [vmem:[%s3304 + $0xb0] sm:$0xff]
    %v4758 = vld [vmem:[%s3304 + $0xb8] sm:$0xff]
    %v4759 = vld [vmem:[%s3304 + $0xc0] sm:$0xff]
    %v4760 = vld [vmem:[%s3304 + $0xc8] sm:$0xff]
    %v4761 = vld [vmem:[%s3304 + $0xd0] sm:$0xff]
    %v4762 = vld [vmem:[%s3304 + $0xd8] sm:$0xff]
    %v4763 = vld [vmem:[%s3304 + $0xe0] sm:$0xff]
    %v4764 = vld [vmem:[%s3304 + $0xe8] sm:$0xff]
    %v4765 = vld [vmem:[%s3304 + $0xf0] sm:$0xff]
    %v4766 = vld [vmem:[%s3304 + $0xf8] sm:$0xff]
    %4767 = vmatprep.subr.mxu0 0.0
    %4768 = vmatpush1.msra.mxu0 %v4735
    %4769 = vmatprep.subr.mxu0 0.0
    %4770 = vmatpush1.msra.mxu0 %v4736
    %4771 = vmatprep.subr.mxu0 0.0
    %4772 = vmatpush1.msra.mxu0 %v4737
    %4773 = vmatprep.subr.mxu0 0.0
    %4774 = vmatpush1.msra.mxu0 %v4738
    %4775 = vmatprep.subr.mxu0 0.0
    %4776 = vmatpush1.msra.mxu0 %v4739
    %4777 = vmatprep.subr.mxu0 0.0
    %4778 = vmatpush1.msra.mxu0 %v4740
    %4779 = vmatprep.subr.mxu0 0.0
    %4780 = vmatpush1.msra.mxu0 %v4741
    %4781 = vmatprep.subr.mxu0 0.0
    %4782 = vmatpush1.msra.mxu0 %v4742
    %4783 = vmatprep.subr.mxu0 0.0
    %4784 = vmatpush1.msra.mxu0 %v4743
    %4785 = vmatprep.subr.mxu0 0.0
    %4786 = vmatpush1.msra.mxu0 %v4744
    %4787 = vmatprep.subr.mxu0 0.0
    %4788 = vmatpush1.msra.mxu0 %v4745
    %4789 = vmatprep.subr.mxu0 0.0
    %4790 = vmatpush1.msra.mxu0 %v4746
    %4791 = vmatprep.subr.mxu0 0.0
    %4792 = vmatpush1.msra.mxu0 %v4747
    %4793 = vmatprep.subr.mxu0 0.0
    %4794 = vmatpush1.msra.mxu0 %v4748
    %4795 = vmatprep.subr.mxu0 0.0
    %4796 = vmatpush1.msra.mxu0 %v4749
    %4797 = vmatprep.subr.mxu0 0.0
    %4798 = vmatpush1.msra.mxu0 %v4750
    %4799 = vmatprep.subr.mxu0 0.0
    %4800 = vmatpush1.msra.mxu0 %v4751
    %4801 = vmatprep.subr.mxu0 0.0
    %4802 = vmatpush1.msra.mxu0 %v4752
    %4803 = vmatprep.subr.mxu0 0.0
    %4804 = vmatpush1.msra.mxu0 %v4753
    %4805 = vmatprep.subr.mxu0 0.0
    %4806 = vmatpush1.msra.mxu0 %v4754
    %4807 = vmatprep.subr.mxu0 0.0
    %4808 = vmatpush1.msra.mxu0 %v4755
    %4809 = vmatprep.subr.mxu0 0.0
    %4810 = vmatpush1.msra.mxu0 %v4756
    %4811 = vmatprep.subr.mxu0 0.0
    %4812 = vmatpush1.msra.mxu0 %v4757
    %4813 = vmatprep.subr.mxu0 0.0
    %4814 = vmatpush1.msra.mxu0 %v4758
    %4815 = vmatprep.subr.mxu0 0.0
    %4816 = vmatpush1.msra.mxu0 %v4759
    %4817 = vmatprep.subr.mxu0 0.0
    %4818 = vmatpush1.msra.mxu0 %v4760
    %4819 = vmatprep.subr.mxu0 0.0
    %4820 = vmatpush1.msra.mxu0 %v4761
    %4821 = vmatprep.subr.mxu0 0.0
    %4822 = vmatpush1.msra.mxu0 %v4762
    %4823 = vmatprep.subr.mxu0 0.0
    %4824 = vmatpush1.msra.mxu0 %v4763
    %4825 = vmatprep.subr.mxu0 0.0
    %4826 = vmatpush1.msra.mxu0 %v4764
    %4827 = vmatprep.subr.mxu0 0.0
    %4828 = vmatpush1.msra.mxu0 %v4765
    %4829 = vmatprep.subr.mxu0 0.0
    %4830 = vmatpush1.msra.mxu0 %v4766
    %4831 = vmatprep.mubr.f32.mxu0 %v3124
    %4832 = vmatmul.mubr.f32.gmra.mrb[0].mxu0 %v3123
    %v4833 = vpop.f32.mrb[0].mxu0
    %v4834 = vadd.f32 0.0, %v4833
    %v4835 = vpop.f32.mrb[0].mxu0
    %4836 = vdwg.mxu0
    %4837 = vmatprep.subr.mxu0 0.0
    %4838 = vmatpush1.msra.mxu0 %v4703
    %4839 = vmatprep.subr.mxu0 0.0
    %4840 = vmatpush1.msra.mxu0 %v4704
    %4841 = vmatprep.subr.mxu0 0.0
    %4842 = vmatpush1.msra.mxu0 %v4705
    %4843 = vmatprep.subr.mxu0 0.0
    %4844 = vmatpush1.msra.mxu0 %v4706
    %4845 = vmatprep.subr.mxu0 0.0
    %4846 = vmatpush1.msra.mxu0 %v4707
    %4847 = vmatprep.subr.mxu0 0.0
    %4848 = vmatpush1.msra.mxu0 %v4708
    %4849 = vmatprep.subr.mxu0 0.0
    %4850 = vmatpush1.msra.mxu0 %v4709
    %4851 = vmatprep.subr.mxu0 0.0
    %4852 = vmatpush1.msra.mxu0 %v4710
    %4853 = vmatprep.subr.mxu0 0.0
    %4854 = vmatpush1.msra.mxu0 %v4711
    %4855 = vmatprep.subr.mxu0 0.0
    %4856 = vmatpush1.msra.mxu0 %v4712
    %4857 = vmatprep.subr.mxu0 0.0
    %4858 = vmatpush1.msra.mxu0 %v4713
    %4859 = vmatprep.subr.mxu0 0.0
    %4860 = vmatpush1.msra.mxu0 %v4714
    %4861 = vmatprep.subr.mxu0 0.0
    %4862 = vmatpush1.msra.mxu0 %v4715
    %4863 = vmatprep.subr.mxu0 0.0
    %4864 = vmatpush1.msra.mxu0 %v4716
    %4865 = vmatprep.subr.mxu0 0.0
    %4866 = vmatpush1.msra.mxu0 %v4717
    %4867 = vmatprep.subr.mxu0 0.0
    %4868 = vmatpush1.msra.mxu0 %v4718
    %4869 = vmatprep.subr.mxu0 0.0
    %4870 = vmatpush1.msra.mxu0 %v4719
    %4871 = vmatprep.subr.mxu0 0.0
    %4872 = vmatpush1.msra.mxu0 %v4720
    %4873 = vmatprep.subr.mxu0 0.0
    %4874 = vmatpush1.msra.mxu0 %v4721
    %4875 = vmatprep.subr.mxu0 0.0
    %4876 = vmatpush1.msra.mxu0 %v4722
    %4877 = vmatprep.subr.mxu0 0.0
    %4878 = vmatpush1.msra.mxu0 %v4723
    %4879 = vmatprep.subr.mxu0 0.0
    %4880 = vmatpush1.msra.mxu0 %v4724
    %4881 = vmatprep.subr.mxu0 0.0
    %4882 = vmatpush1.msra.mxu0 %v4725
    %4883 = vmatprep.subr.mxu0 0.0
    %4884 = vmatpush1.msra.mxu0 %v4726
    %4885 = vmatprep.subr.mxu0 0.0
    %4886 = vmatpush1.msra.mxu0 %v4727
    %4887 = vmatprep.subr.mxu0 0.0
    %4888 = vmatpush1.msra.mxu0 %v4728
    %4889 = vmatprep.subr.mxu0 0.0
    %4890 = vmatpush1.msra.mxu0 %v4729
    %4891 = vmatprep.subr.mxu0 0.0
    %4892 = vmatpush1.msra.mxu0 %v4730
    %4893 = vmatprep.subr.mxu0 0.0
    %4894 = vmatpush1.msra.mxu0 %v4731
    %4895 = vmatprep.subr.mxu0 0.0
    %4896 = vmatpush1.msra.mxu0 %v4732
    %4897 = vmatprep.subr.mxu0 0.0
    %4898 = vmatpush1.msra.mxu0 %v4733
    %4899 = vmatprep.subr.mxu0 0.0
    %4900 = vmatpush1.msra.mxu0 %v4734
    %4901 = vmatprep.mubr.f32.mxu0 %v3122
    %4902 = vmatmul.mubr.f32.gmra.mrb[0].mxu0 %v3121
    %v4903 = vpop.f32.mrb[0].mxu0
    %v4904 = vadd.f32 %v4834, %v4903
    %v4905 = vpop.f32.mrb[0].mxu0
    %4906 = vdwg.mxu0
    %v4907 = vadd.f32 %v4904, %v3169
    %v4908 = vtanh.pop %v4907
    %v4911 = vunpack.c.l.s4 1983009808
    %v4912 = vunpack.c.0.s8 %v4911
    %v4913 = vlaneseq
    %v4914 = vshrl.u32 %v4913, 7
    %v4915 = vsub.s32 %v4912, %v4914
    %v4916 = vrot.slane %v4908, %v4915
    %4917 = vrot.lane.b32.xlu0 %v4916, 112
    %v4918 = vpop.permute.xlu0 %4917
    %vm4920 = vcmask 1042304
    %4921 = vst.msk [vmem:[%s12] sm:$0x3] %vm4920, %v4918
    %v4922 = vcombine.high %v4916, %v4916
    %4923 = vrot.lane.b32.xlu0 %v4922, 112
    %v4924 = vpop.permute.xlu0 %4923
    %4926 = vst.msk [vmem:[%s13] sm:$0x3] %vm4920, %v4924
    %4927 = vrot.lane.b32.xlu0 %v4916, 96
    %v4928 = vpop.permute.xlu0 %4927
    %4930 = vst.msk [vmem:[%s12 + $0x4] sm:$0x3] %vm4920, %v4928
    %4931 = vrot.lane.b32.xlu0 %v4922, 96
    %v4932 = vpop.permute.xlu0 %4931
    %4934 = vst.msk [vmem:[%s13 + $0x4] sm:$0x3] %vm4920, %v4932
    %4935 = vrot.lane.b32.xlu0 %v4916, 80
    %v4936 = vpop.permute.xlu0 %4935
    %4938 = vst.msk [vmem:[%s12 + $0x8] sm:$0x3] %vm4920, %v4936
    %4939 = vrot.lane.b32.xlu0 %v4922, 80
    %v4940 = vpop.permute.xlu0 %4939
    %4942 = vst.msk [vmem:[%s13 + $0x8] sm:$0x3] %vm4920, %v4940
    %v4943 = vld [vmem:[%s10] sm:$0xff]
    %v4944 = vld [vmem:[%s10 + $0x8] sm:$0xff]
    %v4945 = vld [vmem:[%s10 + $0x10] sm:$0xff]
    %v4946 = vld [vmem:[%s10 + $0x18] sm:$0xff]
    %v4947 = vld [vmem:[%s10 + $0x20] sm:$0xff]
    %v4948 = vld [vmem:[%s10 + $0x28] sm:$0xff]
    %v4949 = vld [vmem:[%s10 + $0x30] sm:$0xff]
    %v4950 = vld [vmem:[%s10 + $0x38] sm:$0xff]
    %v4951 = vld [vmem:[%s10 + $0x40] sm:$0xff]
    %v4952 = vld [vmem:[%s10 + $0x48] sm:$0xff]
    %v4953 = vld [vmem:[%s10 + $0x50] sm:$0xff]
    %v4954 = vld [vmem:[%s10 + $0x58] sm:$0xff]
    %v4955 = vld [vmem:[%s10 + $0x60] sm:$0xff]
    %v4956 = vld [vmem:[%s10 + $0x68] sm:$0xff]
    %v4957 = vld [vmem:[%s10 + $0x70] sm:$0xff]
    %v4958 = vld [vmem:[%s10 + $0x78] sm:$0xff]
    %v4959 = vld [vmem:[%s10 + $0x80] sm:$0xff]
    %v4960 = vld [vmem:[%s10 + $0x88] sm:$0xff]
    %v4961 = vld [vmem:[%s10 + $0x90] sm:$0xff]
    %v4962 = vld [vmem:[%s10 + $0x98] sm:$0xff]
    %v4963 = vld [vmem:[%s10 + $0xa0] sm:$0xff]
    %v4964 = vld [vmem:[%s10 + $0xa8] sm:$0xff]
    %v4965 = vld [vmem:[%s10 + $0xb0] sm:$0xff]
    %v4966 = vld [vmem:[%s10 + $0xb8] sm:$0xff]
    %v4967 = vld [vmem:[%s10 + $0xc0] sm:$0xff]
    %v4968 = vld [vmem:[%s10 + $0xc8] sm:$0xff]
    %v4969 = vld [vmem:[%s10 + $0xd0] sm:$0xff]
    %v4970 = vld [vmem:[%s10 + $0xd8] sm:$0xff]
    %v4971 = vld [vmem:[%s10 + $0xe0] sm:$0xff]
    %v4972 = vld [vmem:[%s10 + $0xe8] sm:$0xff]
    %v4973 = vld [vmem:[%s10 + $0xf0] sm:$0xff]
    %v4974 = vld [vmem:[%s10 + $0xf8] sm:$0xff]
    %v4975 = vld [vmem:[%s3132] sm:$0xff]
    %v4976 = vld [vmem:[%s3132 + $0x8] sm:$0xff]
    %v4977 = vld [vmem:[%s3132 + $0x10] sm:$0xff]
    %v4978 = vld [vmem:[%s3132 + $0x18] sm:$0xff]
    %v4979 = vld [vmem:[%s3132 + $0x20] sm:$0xff]
    %v4980 = vld [vmem:[%s3132 + $0x28] sm:$0xff]
    %v4981 = vld [vmem:[%s3132 + $0x30] sm:$0xff]
    %v4982 = vld [vmem:[%s3132 + $0x38] sm:$0xff]
    %v4983 = vld [vmem:[%s3132 + $0x40] sm:$0xff]
    %v4984 = vld [vmem:[%s3132 + $0x48] sm:$0xff]
    %v4985 = vld [vmem:[%s3132 + $0x50] sm:$0xff]
    %v4986 = vld [vmem:[%s3132 + $0x58] sm:$0xff]
    %v4987 = vld [vmem:[%s3132 + $0x60] sm:$0xff]
    %v4988 = vld [vmem:[%s3132 + $0x68] sm:$0xff]
    %v4989 = vld [vmem:[%s3132 + $0x70] sm:$0xff]
    %v4990 = vld [vmem:[%s3132 + $0x78] sm:$0xff]
    %v4991 = vld [vmem:[%s3132 + $0x80] sm:$0xff]
    %v4992 = vld [vmem:[%s3132 + $0x88] sm:$0xff]
    %v4993 = vld [vmem:[%s3132 + $0x90] sm:$0xff]
    %v4994 = vld [vmem:[%s3132 + $0x98] sm:$0xff]
    %v4995 = vld [vmem:[%s3132 + $0xa0] sm:$0xff]
    %v4996 = vld [vmem:[%s3132 + $0xa8] sm:$0xff]
    %v4997 = vld [vmem:[%s3132 + $0xb0] sm:$0xff]
    %v4998 = vld [vmem:[%s3132 + $0xb8] sm:$0xff]
    %v4999 = vld [vmem:[%s3132 + $0xc0] sm:$0xff]
    %v5000 = vld [vmem:[%s3132 + $0xc8] sm:$0xff]
    %v5001 = vld [vmem:[%s3132 + $0xd0] sm:$0xff]
    %v5002 = vld [vmem:[%s3132 + $0xd8] sm:$0xff]
    %v5003 = vld [vmem:[%s3132 + $0xe0] sm:$0xff]
    %v5004 = vld [vmem:[%s3132 + $0xe8] sm:$0xff]
    %v5005 = vld [vmem:[%s3132 + $0xf0] sm:$0xff]
    %v5006 = vld [vmem:[%s3132 + $0xf8] sm:$0xff]
    %5007 = vmatprep.subr.mxu0 0.0
    %5008 = vmatpush1.msra.mxu0 %v4975
    %5009 = vmatprep.subr.mxu0 0.0
    %5010 = vmatpush1.msra.mxu0 %v4976
    %5011 = vmatprep.subr.mxu0 0.0
    %5012 = vmatpush1.msra.mxu0 %v4977
    %5013 = vmatprep.subr.mxu0 0.0
    %5014 = vmatpush1.msra.mxu0 %v4978
    %5015 = vmatprep.subr.mxu0 0.0
    %5016 = vmatpush1.msra.mxu0 %v4979
    %5017 = vmatprep.subr.mxu0 0.0
    %5018 = vmatpush1.msra.mxu0 %v4980
    %5019 = vmatprep.subr.mxu0 0.0
    %5020 = vmatpush1.msra.mxu0 %v4981
    %5021 = vmatprep.subr.mxu0 0.0
    %5022 = vmatpush1.msra.mxu0 %v4982
    %5023 = vmatprep.subr.mxu0 0.0
    %5024 = vmatpush1.msra.mxu0 %v4983
    %5025 = vmatprep.subr.mxu0 0.0
    %5026 = vmatpush1.msra.mxu0 %v4984
    %5027 = vmatprep.subr.mxu0 0.0
    %5028 = vmatpush1.msra.mxu0 %v4985
    %5029 = vmatprep.subr.mxu0 0.0
    %5030 = vmatpush1.msra.mxu0 %v4986
    %5031 = vmatprep.subr.mxu0 0.0
    %5032 = vmatpush1.msra.mxu0 %v4987
    %5033 = vmatprep.subr.mxu0 0.0
    %5034 = vmatpush1.msra.mxu0 %v4988
    %5035 = vmatprep.subr.mxu0 0.0
    %5036 = vmatpush1.msra.mxu0 %v4989
    %5037 = vmatprep.subr.mxu0 0.0
    %5038 = vmatpush1.msra.mxu0 %v4990
    %5039 = vmatprep.subr.mxu0 0.0
    %5040 = vmatpush1.msra.mxu0 %v4991
    %5041 = vmatprep.subr.mxu0 0.0
    %5042 = vmatpush1.msra.mxu0 %v4992
    %5043 = vmatprep.subr.mxu0 0.0
    %5044 = vmatpush1.msra.mxu0 %v4993
    %5045 = vmatprep.subr.mxu0 0.0
    %5046 = vmatpush1.msra.mxu0 %v4994
    %5047 = vmatprep.subr.mxu0 0.0
    %5048 = vmatpush1.msra.mxu0 %v4995
    %5049 = vmatprep.subr.mxu0 0.0
    %5050 = vmatpush1.msra.mxu0 %v4996
    %5051 = vmatprep.subr.mxu0 0.0
    %5052 = vmatpush1.msra.mxu0 %v4997
    %5053 = vmatprep.subr.mxu0 0.0
    %5054 = vmatpush1.msra.mxu0 %v4998
    %5055 = vmatprep.subr.mxu0 0.0
    %5056 = vmatpush1.msra.mxu0 %v4999
    %5057 = vmatprep.subr.mxu0 0.0
    %5058 = vmatpush1.msra.mxu0 %v5000
    %5059 = vmatprep.subr.mxu0 0.0
    %5060 = vmatpush1.msra.mxu0 %v5001
    %5061 = vmatprep.subr.mxu0 0.0
    %5062 = vmatpush1.msra.mxu0 %v5002
    %5063 = vmatprep.subr.mxu0 0.0
    %5064 = vmatpush1.msra.mxu0 %v5003
    %5065 = vmatprep.subr.mxu0 0.0
    %5066 = vmatpush1.msra.mxu0 %v5004
    %5067 = vmatprep.subr.mxu0 0.0
    %5068 = vmatpush1.msra.mxu0 %v5005
    %5069 = vmatprep.subr.mxu0 0.0
    %5070 = vmatpush1.msra.mxu0 %v5006
    %5071 = vmatprep.mubr.f32.mxu0 %v3124
    %5072 = vmatmul.mubr.f32.gmra.mrb[0].mxu0 %v3123
    %v5073 = vpop.f32.mrb[0].mxu0
    %v5074 = vadd.f32 0.0, %v5073
    %v5075 = vpop.f32.mrb[0].mxu0
    %5076 = vdwg.mxu0
    %5077 = vmatprep.subr.mxu0 0.0
    %5078 = vmatpush1.msra.mxu0 %v4943
    %5079 = vmatprep.subr.mxu0 0.0
    %5080 = vmatpush1.msra.mxu0 %v4944
    %5081 = vmatprep.subr.mxu0 0.0
    %5082 = vmatpush1.msra.mxu0 %v4945
    %5083 = vmatprep.subr.mxu0 0.0
    %5084 = vmatpush1.msra.mxu0 %v4946
    %5085 = vmatprep.subr.mxu0 0.0
    %5086 = vmatpush1.msra.mxu0 %v4947
    %5087 = vmatprep.subr.mxu0 0.0
    %5088 = vmatpush1.msra.mxu0 %v4948
    %5089 = vmatprep.subr.mxu0 0.0
    %5090 = vmatpush1.msra.mxu0 %v4949
    %5091 = vmatprep.subr.mxu0 0.0
    %5092 = vmatpush1.msra.mxu0 %v4950
    %5093 = vmatprep.subr.mxu0 0.0
    %5094 = vmatpush1.msra.mxu0 %v4951
    %5095 = vmatprep.subr.mxu0 0.0
    %5096 = vmatpush1.msra.mxu0 %v4952
    %5097 = vmatprep.subr.mxu0 0.0
    %5098 = vmatpush1.msra.mxu0 %v4953
    %5099 = vmatprep.subr.mxu0 0.0
    %5100 = vmatpush1.msra.mxu0 %v4954
    %5101 = vmatprep.subr.mxu0 0.0
    %5102 = vmatpush1.msra.mxu0 %v4955
    %5103 = vmatprep.subr.mxu0 0.0
    %5104 = vmatpush1.msra.mxu0 %v4956
    %5105 = vmatprep.subr.mxu0 0.0
    %5106 = vmatpush1.msra.mxu0 %v4957
    %5107 = vmatprep.subr.mxu0 0.0
    %5108 = vmatpush1.msra.mxu0 %v4958
    %5109 = vmatprep.subr.mxu0 0.0
    %5110 = vmatpush1.msra.mxu0 %v4959
    %5111 = vmatprep.subr.mxu0 0.0
    %5112 = vmatpush1.msra.mxu0 %v4960
    %5113 = vmatprep.subr.mxu0 0.0
    %5114 = vmatpush1.msra.mxu0 %v4961
    %5115 = vmatprep.subr.mxu0 0.0
    %5116 = vmatpush1.msra.mxu0 %v4962
    %5117 = vmatprep.subr.mxu0 0.0
    %5118 = vmatpush1.msra.mxu0 %v4963
    %5119 = vmatprep.subr.mxu0 0.0
    %5120 = vmatpush1.msra.mxu0 %v4964
    %5121 = vmatprep.subr.mxu0 0.0
    %5122 = vmatpush1.msra.mxu0 %v4965
    %5123 = vmatprep.subr.mxu0 0.0
    %5124 = vmatpush1.msra.mxu0 %v4966
    %5125 = vmatprep.subr.mxu0 0.0
    %5126 = vmatpush1.msra.mxu0 %v4967
    %5127 = vmatprep.subr.mxu0 0.0
    %5128 = vmatpush1.msra.mxu0 %v4968
    %5129 = vmatprep.subr.mxu0 0.0
    %5130 = vmatpush1.msra.mxu0 %v4969
    %5131 = vmatprep.subr.mxu0 0.0
    %5132 = vmatpush1.msra.mxu0 %v4970
    %5133 = vmatprep.subr.mxu0 0.0
    %5134 = vmatpush1.msra.mxu0 %v4971
    %5135 = vmatprep.subr.mxu0 0.0
    %5136 = vmatpush1.msra.mxu0 %v4972
    %5137 = vmatprep.subr.mxu0 0.0
    %5138 = vmatpush1.msra.mxu0 %v4973
    %5139 = vmatprep.subr.mxu0 0.0
    %5140 = vmatpush1.msra.mxu0 %v4974
    %5141 = vmatprep.mubr.f32.mxu0 %v3122
    %5142 = vmatmul.mubr.f32.gmra.mrb[0].mxu0 %v3121
    %v5143 = vpop.f32.mrb[0].mxu0
    %v5144 = vadd.f32 %v5074, %v5143
    %v5145 = vpop.f32.mrb[0].mxu0
    %5146 = vdwg.mxu0
    %v5147 = vadd.f32 %v5144, %v3169
    %v5148 = vtanh.pop %v5147
    %5149 = vst.msk [vmem:[%s12 + $0x2] sm:$0x3] %vm3242, %v5148
    %v5152 = vunpack.c.l.s4 1983009808
    %v5153 = vunpack.c.0.s8 %v5152
    %v5154 = vlaneseq
    %v5155 = vshrl.u32 %v5154, 7
    %v5156 = vsub.s32 %v5153, %v5155
    %v5157 = vrot.slane %v5148, %v5156
    %v5158 = vcombine.high %v5157, %v5157
    %5160 = vst.msk [vmem:[%s13 + $0x2] sm:$0x3] %vm3242, %v5158
    %5161 = vrot.lane.b32.xlu0 %v5157, 112
    %v5162 = vpop.permute.xlu0 %5161
    %5164 = vst.msk [vmem:[%s12 + $0x6] sm:$0x3] %vm3242, %v5162
    %5165 = vrot.lane.b32.xlu0 %v5158, 112
    %v5166 = vpop.permute.xlu0 %5165
    %5168 = vst.msk [vmem:[%s13 + $0x6] sm:$0x3] %vm3242, %v5166
    %5169 = vrot.lane.b32.xlu0 %v5157, 96
    %v5170 = vpop.permute.xlu0 %5169
    %5172 = vst.msk [vmem:[%s12 + $0xa] sm:$0x3] %vm3242, %v5170
    %5173 = vrot.lane.b32.xlu0 %v5158, 96
    %v5174 = vpop.permute.xlu0 %5173
    %5176 = vst.msk [vmem:[%s13 + $0xa] sm:$0x3] %vm3242, %v5174
    %v5177 = vld [vmem:[%s3271] sm:$0xff]
    %v5178 = vld [vmem:[%s3271 + $0x8] sm:$0xff]
    %v5179 = vld [vmem:[%s3271 + $0x10] sm:$0xff]
    %v5180 = vld [vmem:[%s3271 + $0x18] sm:$0xff]
    %v5181 = vld [vmem:[%s3271 + $0x20] sm:$0xff]
    %v5182 = vld [vmem:[%s3271 + $0x28] sm:$0xff]
    %v5183 = vld [vmem:[%s3271 + $0x30] sm:$0xff]
    %v5184 = vld [vmem:[%s3271 + $0x38] sm:$0xff]
    %v5185 = vld [vmem:[%s3271 + $0x40] sm:$0xff]
    %v5186 = vld [vmem:[%s3271 + $0x48] sm:$0xff]
    %v5187 = vld [vmem:[%s3271 + $0x50] sm:$0xff]
    %v5188 = vld [vmem:[%s3271 + $0x58] sm:$0xff]
    %v5189 = vld [vmem:[%s3271 + $0x60] sm:$0xff]
    %v5190 = vld [vmem:[%s3271 + $0x68] sm:$0xff]
    %v5191 = vld [vmem:[%s3271 + $0x70] sm:$0xff]
    %v5192 = vld [vmem:[%s3271 + $0x78] sm:$0xff]
    %v5193 = vld [vmem:[%s3271 + $0x80] sm:$0xff]
    %v5194 = vld [vmem:[%s3271 + $0x88] sm:$0xff]
    %v5195 = vld [vmem:[%s3271 + $0x90] sm:$0xff]
    %v5196 = vld [vmem:[%s3271 + $0x98] sm:$0xff]
    %v5197 = vld [vmem:[%s3271 + $0xa0] sm:$0xff]
    %v5198 = vld [vmem:[%s3271 + $0xa8] sm:$0xff]
    %v5199 = vld [vmem:[%s3271 + $0xb0] sm:$0xff]
    %v5200 = vld [vmem:[%s3271 + $0xb8] sm:$0xff]
    %v5201 = vld [vmem:[%s3271 + $0xc0] sm:$0xff]
    %v5202 = vld [vmem:[%s3271 + $0xc8] sm:$0xff]
    %v5203 = vld [vmem:[%s3271 + $0xd0] sm:$0xff]
    %v5204 = vld [vmem:[%s3271 + $0xd8] sm:$0xff]
    %v5205 = vld [vmem:[%s3271 + $0xe0] sm:$0xff]
    %v5206 = vld [vmem:[%s3271 + $0xe8] sm:$0xff]
    %v5207 = vld [vmem:[%s3271 + $0xf0] sm:$0xff]
    %v5208 = vld [vmem:[%s3271 + $0xf8] sm:$0xff]
    %v5209 = vld [vmem:[%s3304] sm:$0xff]
    %v5210 = vld [vmem:[%s3304 + $0x8] sm:$0xff]
    %v5211 = vld [vmem:[%s3304 + $0x10] sm:$0xff]
    %v5212 = vld [vmem:[%s3304 + $0x18] sm:$0xff]
    %v5213 = vld [vmem:[%s3304 + $0x20] sm:$0xff]
    %v5214 = vld [vmem:[%s3304 + $0x28] sm:$0xff]
    %v5215 = vld [vmem:[%s3304 + $0x30] sm:$0xff]
    %v5216 = vld [vmem:[%s3304 + $0x38] sm:$0xff]
    %v5217 = vld [vmem:[%s3304 + $0x40] sm:$0xff]
    %v5218 = vld [vmem:[%s3304 + $0x48] sm:$0xff]
    %v5219 = vld [vmem:[%s3304 + $0x50] sm:$0xff]
    %v5220 = vld [vmem:[%s3304 + $0x58] sm:$0xff]
    %v5221 = vld [vmem:[%s3304 + $0x60] sm:$0xff]
    %v5222 = vld [vmem:[%s3304 + $0x68] sm:$0xff]
    %v5223 = vld [vmem:[%s3304 + $0x70] sm:$0xff]
    %v5224 = vld [vmem:[%s3304 + $0x78] sm:$0xff]
    %v5225 = vld [vmem:[%s3304 + $0x80] sm:$0xff]
    %v5226 = vld [vmem:[%s3304 + $0x88] sm:$0xff]
    %v5227 = vld [vmem:[%s3304 + $0x90] sm:$0xff]
    %v5228 = vld [vmem:[%s3304 + $0x98] sm:$0xff]
    %v5229 = vld [vmem:[%s3304 + $0xa0] sm:$0xff]
    %v5230 = vld [vmem:[%s3304 + $0xa8] sm:$0xff]
    %v5231 = vld [vmem:[%s3304 + $0xb0] sm:$0xff]
    %v5232 = vld [vmem:[%s3304 + $0xb8] sm:$0xff]
    %v5233 = vld [vmem:[%s3304 + $0xc0] sm:$0xff]
    %v5234 = vld [vmem:[%s3304 + $0xc8] sm:$0xff]
    %v5235 = vld [vmem:[%s3304 + $0xd0] sm:$0xff]
    %v5236 = vld [vmem:[%s3304 + $0xd8] sm:$0xff]
    %v5237 = vld [vmem:[%s3304 + $0xe0] sm:$0xff]
    %v5238 = vld [vmem:[%s3304 + $0xe8] sm:$0xff]
    %v5239 = vld [vmem:[%s3304 + $0xf0] sm:$0xff]
    %v5240 = vld [vmem:[%s3304 + $0xf8] sm:$0xff]
    %5241 = vmatprep.subr.mxu0 0.0
    %5242 = vmatpush1.msra.mxu0 %v5209
    %5243 = vmatprep.subr.mxu0 0.0
    %5244 = vmatpush1.msra.mxu0 %v5210
    %5245 = vmatprep.subr.mxu0 0.0
    %5246 = vmatpush1.msra.mxu0 %v5211
    %5247 = vmatprep.subr.mxu0 0.0
    %5248 = vmatpush1.msra.mxu0 %v5212
    %5249 = vmatprep.subr.mxu0 0.0
    %5250 = vmatpush1.msra.mxu0 %v5213
    %5251 = vmatprep.subr.mxu0 0.0
    %5252 = vmatpush1.msra.mxu0 %v5214
    %5253 = vmatprep.subr.mxu0 0.0
    %5254 = vmatpush1.msra.mxu0 %v5215
    %5255 = vmatprep.subr.mxu0 0.0
    %5256 = vmatpush1.msra.mxu0 %v5216
    %5257 = vmatprep.subr.mxu0 0.0
    %5258 = vmatpush1.msra.mxu0 %v5217
    %5259 = vmatprep.subr.mxu0 0.0
    %5260 = vmatpush1.msra.mxu0 %v5218
    %5261 = vmatprep.subr.mxu0 0.0
    %5262 = vmatpush1.msra.mxu0 %v5219
    %5263 = vmatprep.subr.mxu0 0.0
    %5264 = vmatpush1.msra.mxu0 %v5220
    %5265 = vmatprep.subr.mxu0 0.0
    %5266 = vmatpush1.msra.mxu0 %v5221
    %5267 = vmatprep.subr.mxu0 0.0
    %5268 = vmatpush1.msra.mxu0 %v5222
    %5269 = vmatprep.subr.mxu0 0.0
    %5270 = vmatpush1.msra.mxu0 %v5223
    %5271 = vmatprep.subr.mxu0 0.0
    %5272 = vmatpush1.msra.mxu0 %v5224
    %5273 = vmatprep.subr.mxu0 0.0
    %5274 = vmatpush1.msra.mxu0 %v5225
    %5275 = vmatprep.subr.mxu0 0.0
    %5276 = vmatpush1.msra.mxu0 %v5226
    %5277 = vmatprep.subr.mxu0 0.0
    %5278 = vmatpush1.msra.mxu0 %v5227
    %5279 = vmatprep.subr.mxu0 0.0
    %5280 = vmatpush1.msra.mxu0 %v5228
    %5281 = vmatprep.subr.mxu0 0.0
    %5282 = vmatpush1.msra.mxu0 %v5229
    %5283 = vmatprep.subr.mxu0 0.0
    %5284 = vmatpush1.msra.mxu0 %v5230
    %5285 = vmatprep.subr.mxu0 0.0
    %5286 = vmatpush1.msra.mxu0 %v5231
    %5287 = vmatprep.subr.mxu0 0.0
    %5288 = vmatpush1.msra.mxu0 %v5232
    %5289 = vmatprep.subr.mxu0 0.0
    %5290 = vmatpush1.msra.mxu0 %v5233
    %5291 = vmatprep.subr.mxu0 0.0
    %5292 = vmatpush1.msra.mxu0 %v5234
    %5293 = vmatprep.subr.mxu0 0.0
    %5294 = vmatpush1.msra.mxu0 %v5235
    %5295 = vmatprep.subr.mxu0 0.0
    %5296 = vmatpush1.msra.mxu0 %v5236
    %5297 = vmatprep.subr.mxu0 0.0
    %5298 = vmatpush1.msra.mxu0 %v5237
    %5299 = vmatprep.subr.mxu0 0.0
    %5300 = vmatpush1.msra.mxu0 %v5238
    %5301 = vmatprep.subr.mxu0 0.0
    %5302 = vmatpush1.msra.mxu0 %v5239
    %5303 = vmatprep.subr.mxu0 0.0
    %5304 = vmatpush1.msra.mxu0 %v5240
    %5305 = vmatprep.mubr.f32.mxu0 %v3126
    %5306 = vmatmul.mubr.f32.gmra.mrb[0].mxu0 %v3125
    %v5307 = vpop.f32.mrb[0].mxu0
    %v5308 = vadd.f32 0.0, %v5307
    %v5309 = vpop.f32.mrb[0].mxu0
    %5310 = vdwg.mxu0
    %5311 = vmatprep.subr.mxu0 0.0
    %5312 = vmatpush1.msra.mxu0 %v5177
    %5313 = vmatprep.subr.mxu0 0.0
    %5314 = vmatpush1.msra.mxu0 %v5178
    %5315 = vmatprep.subr.mxu0 0.0
    %5316 = vmatpush1.msra.mxu0 %v5179
    %5317 = vmatprep.subr.mxu0 0.0
    %5318 = vmatpush1.msra.mxu0 %v5180
    %5319 = vmatprep.subr.mxu0 0.0
    %5320 = vmatpush1.msra.mxu0 %v5181
    %5321 = vmatprep.subr.mxu0 0.0
    %5322 = vmatpush1.msra.mxu0 %v5182
    %5323 = vmatprep.subr.mxu0 0.0
    %5324 = vmatpush1.msra.mxu0 %v5183
    %5325 = vmatprep.subr.mxu0 0.0
    %5326 = vmatpush1.msra.mxu0 %v5184
    %5327 = vmatprep.subr.mxu0 0.0
    %5328 = vmatpush1.msra.mxu0 %v5185
    %5329 = vmatprep.subr.mxu0 0.0
    %5330 = vmatpush1.msra.mxu0 %v5186
    %5331 = vmatprep.subr.mxu0 0.0
    %5332 = vmatpush1.msra.mxu0 %v5187
    %5333 = vmatprep.subr.mxu0 0.0
    %5334 = vmatpush1.msra.mxu0 %v5188
    %5335 = vmatprep.subr.mxu0 0.0
    %5336 = vmatpush1.msra.mxu0 %v5189
    %5337 = vmatprep.subr.mxu0 0.0
    %5338 = vmatpush1.msra.mxu0 %v5190
    %5339 = vmatprep.subr.mxu0 0.0
    %5340 = vmatpush1.msra.mxu0 %v5191
    %5341 = vmatprep.subr.mxu0 0.0
    %5342 = vmatpush1.msra.mxu0 %v5192
    %5343 = vmatprep.subr.mxu0 0.0
    %5344 = vmatpush1.msra.mxu0 %v5193
    %5345 = vmatprep.subr.mxu0 0.0
    %5346 = vmatpush1.msra.mxu0 %v5194
    %5347 = vmatprep.subr.mxu0 0.0
    %5348 = vmatpush1.msra.mxu0 %v5195
    %5349 = vmatprep.subr.mxu0 0.0
    %5350 = vmatpush1.msra.mxu0 %v5196
    %5351 = vmatprep.subr.mxu0 0.0
    %5352 = vmatpush1.msra.mxu0 %v5197
    %5353 = vmatprep.subr.mxu0 0.0
    %5354 = vmatpush1.msra.mxu0 %v5198
    %5355 = vmatprep.subr.mxu0 0.0
    %5356 = vmatpush1.msra.mxu0 %v5199
    %5357 = vmatprep.subr.mxu0 0.0
    %5358 = vmatpush1.msra.mxu0 %v5200
    %5359 = vmatprep.subr.mxu0 0.0
    %5360 = vmatpush1.msra.mxu0 %v5201
    %5361 = vmatprep.subr.mxu0 0.0
    %5362 = vmatpush1.msra.mxu0 %v5202
    %5363 = vmatprep.subr.mxu0 0.0
    %5364 = vmatpush1.msra.mxu0 %v5203
    %5365 = vmatprep.subr.mxu0 0.0
    %5366 = vmatpush1.msra.mxu0 %v5204
    %5367 = vmatprep.subr.mxu0 0.0
    %5368 = vmatpush1.msra.mxu0 %v5205
    %5369 = vmatprep.subr.mxu0 0.0
    %5370 = vmatpush1.msra.mxu0 %v5206
    %5371 = vmatprep.subr.mxu0 0.0
    %5372 = vmatpush1.msra.mxu0 %v5207
    %5373 = vmatprep.subr.mxu0 0.0
    %5374 = vmatpush1.msra.mxu0 %v5208
    %5375 = vmatprep.mubr.f32.mxu0 %v3124
    %5376 = vmatmul.mubr.f32.gmra.mrb[0].mxu0 %v3123
    %v5377 = vpop.f32.mrb[0].mxu0
    %v5378 = vadd.f32 %v5308, %v5377
    %v5379 = vpop.f32.mrb[0].mxu0
    %5380 = vdwg.mxu0
    %v5381 = vadd.f32 %v5378, %v3169
    %v5382 = vtanh.pop %v5381
    %v5385 = vunpack.c.l.s4 1983009808
    %v5386 = vunpack.c.0.s8 %v5385
    %v5387 = vlaneseq
    %v5388 = vshrl.u32 %v5387, 7
    %v5389 = vsub.s32 %v5386, %v5388
    %v5390 = vrot.slane %v5382, %v5389
    %5391 = vrot.lane.b32.xlu0 %v5390, 16
    %v5392 = vpop.permute.xlu0 %5391
    %5394 = vst.msk [vmem:[%s12 + $0x2] sm:$0x3] %vm3490, %v5392
    %v5395 = vcombine.high %v5390, %v5390
    %5396 = vrot.lane.b32.xlu0 %v5395, 16
    %v5397 = vpop.permute.xlu0 %5396
    %5399 = vst.msk [vmem:[%s13 + $0x2] sm:$0x3] %vm3490, %v5397
    %5400 = vst.msk [vmem:[%s12 + $0x6] sm:$0x3] %vm3490, %v5382
    %5402 = vst.msk [vmem:[%s13 + $0x6] sm:$0x3] %vm3490, %v5395
    %5403 = vrot.lane.b32.xlu0 %v5390, 112
    %v5404 = vpop.permute.xlu0 %5403
    %5406 = vst.msk [vmem:[%s12 + $0xa] sm:$0x3] %vm3490, %v5404
    %5407 = vrot.lane.b32.xlu0 %v5395, 112
    %v5408 = vpop.permute.xlu0 %5407
    %5410 = vst.msk [vmem:[%s13 + $0xa] sm:$0x3] %vm3490, %v5408
    %v5411 = vld [vmem:[%s10] sm:$0xff]
    %v5412 = vld [vmem:[%s10 + $0x8] sm:$0xff]
    %v5413 = vld [vmem:[%s10 + $0x10] sm:$0xff]
    %v5414 = vld [vmem:[%s10 + $0x18] sm:$0xff]
    %v5415 = vld [vmem:[%s10 + $0x20] sm:$0xff]
    %v5416 = vld [vmem:[%s10 + $0x28] sm:$0xff]
    %v5417 = vld [vmem:[%s10 + $0x30] sm:$0xff]
    %v5418 = vld [vmem:[%s10 + $0x38] sm:$0xff]
    %v5419 = vld [vmem:[%s10 + $0x40] sm:$0xff]
    %v5420 = vld [vmem:[%s10 + $0x48] sm:$0xff]
    %v5421 = vld [vmem:[%s10 + $0x50] sm:$0xff]
    %v5422 = vld [vmem:[%s10 + $0x58] sm:$0xff]
    %v5423 = vld [vmem:[%s10 + $0x60] sm:$0xff]
    %v5424 = vld [vmem:[%s10 + $0x68] sm:$0xff]
    %v5425 = vld [vmem:[%s10 + $0x70] sm:$0xff]
    %v5426 = vld [vmem:[%s10 + $0x78] sm:$0xff]
    %v5427 = vld [vmem:[%s10 + $0x80] sm:$0xff]
    %v5428 = vld [vmem:[%s10 + $0x88] sm:$0xff]
    %v5429 = vld [vmem:[%s10 + $0x90] sm:$0xff]
    %v5430 = vld [vmem:[%s10 + $0x98] sm:$0xff]
    %v5431 = vld [vmem:[%s10 + $0xa0] sm:$0xff]
    %v5432 = vld [vmem:[%s10 + $0xa8] sm:$0xff]
    %v5433 = vld [vmem:[%s10 + $0xb0] sm:$0xff]
    %v5434 = vld [vmem:[%s10 + $0xb8] sm:$0xff]
    %v5435 = vld [vmem:[%s10 + $0xc0] sm:$0xff]
    %v5436 = vld [vmem:[%s10 + $0xc8] sm:$0xff]
    %v5437 = vld [vmem:[%s10 + $0xd0] sm:$0xff]
    %v5438 = vld [vmem:[%s10 + $0xd8] sm:$0xff]
    %v5439 = vld [vmem:[%s10 + $0xe0] sm:$0xff]
    %v5440 = vld [vmem:[%s10 + $0xe8] sm:$0xff]
    %v5441 = vld [vmem:[%s10 + $0xf0] sm:$0xff]
    %v5442 = vld [vmem:[%s10 + $0xf8] sm:$0xff]
    %v5443 = vld [vmem:[%s3132] sm:$0xff]
    %v5444 = vld [vmem:[%s3132 + $0x8] sm:$0xff]
    %v5445 = vld [vmem:[%s3132 + $0x10] sm:$0xff]
    %v5446 = vld [vmem:[%s3132 + $0x18] sm:$0xff]
    %v5447 = vld [vmem:[%s3132 + $0x20] sm:$0xff]
    %v5448 = vld [vmem:[%s3132 + $0x28] sm:$0xff]
    %v5449 = vld [vmem:[%s3132 + $0x30] sm:$0xff]
    %v5450 = vld [vmem:[%s3132 + $0x38] sm:$0xff]
    %v5451 = vld [vmem:[%s3132 + $0x40] sm:$0xff]
    %v5452 = vld [vmem:[%s3132 + $0x48] sm:$0xff]
    %v5453 = vld [vmem:[%s3132 + $0x50] sm:$0xff]
    %v5454 = vld [vmem:[%s3132 + $0x58] sm:$0xff]
    %v5455 = vld [vmem:[%s3132 + $0x60] sm:$0xff]
    %v5456 = vld [vmem:[%s3132 + $0x68] sm:$0xff]
    %v5457 = vld [vmem:[%s3132 + $0x70] sm:$0xff]
    %v5458 = vld [vmem:[%s3132 + $0x78] sm:$0xff]
    %v5459 = vld [vmem:[%s3132 + $0x80] sm:$0xff]
    %v5460 = vld [vmem:[%s3132 + $0x88] sm:$0xff]
    %v5461 = vld [vmem:[%s3132 + $0x90] sm:$0xff]
    %v5462 = vld [vmem:[%s3132 + $0x98] sm:$0xff]
    %v5463 = vld [vmem:[%s3132 + $0xa0] sm:$0xff]
    %v5464 = vld [vmem:[%s3132 + $0xa8] sm:$0xff]
    %v5465 = vld [vmem:[%s3132 + $0xb0] sm:$0xff]
    %v5466 = vld [vmem:[%s3132 + $0xb8] sm:$0xff]
    %v5467 = vld [vmem:[%s3132 + $0xc0] sm:$0xff]
    %v5468 = vld [vmem:[%s3132 + $0xc8] sm:$0xff]
    %v5469 = vld [vmem:[%s3132 + $0xd0] sm:$0xff]
    %v5470 = vld [vmem:[%s3132 + $0xd8] sm:$0xff]
    %v5471 = vld [vmem:[%s3132 + $0xe0] sm:$0xff]
    %v5472 = vld [vmem:[%s3132 + $0xe8] sm:$0xff]
    %v5473 = vld [vmem:[%s3132 + $0xf0] sm:$0xff]
    %v5474 = vld [vmem:[%s3132 + $0xf8] sm:$0xff]
    %5475 = vmatprep.subr.mxu0 0.0
    %5476 = vmatpush1.msra.mxu0 %v5443
    %5477 = vmatprep.subr.mxu0 0.0
    %5478 = vmatpush1.msra.mxu0 %v5444
    %5479 = vmatprep.subr.mxu0 0.0
    %5480 = vmatpush1.msra.mxu0 %v5445
    %5481 = vmatprep.subr.mxu0 0.0
    %5482 = vmatpush1.msra.mxu0 %v5446
    %5483 = vmatprep.subr.mxu0 0.0
    %5484 = vmatpush1.msra.mxu0 %v5447
    %5485 = vmatprep.subr.mxu0 0.0
    %5486 = vmatpush1.msra.mxu0 %v5448
    %5487 = vmatprep.subr.mxu0 0.0
    %5488 = vmatpush1.msra.mxu0 %v5449
    %5489 = vmatprep.subr.mxu0 0.0
    %5490 = vmatpush1.msra.mxu0 %v5450
    %5491 = vmatprep.subr.mxu0 0.0
    %5492 = vmatpush1.msra.mxu0 %v5451
    %5493 = vmatprep.subr.mxu0 0.0
    %5494 = vmatpush1.msra.mxu0 %v5452
    %5495 = vmatprep.subr.mxu0 0.0
    %5496 = vmatpush1.msra.mxu0 %v5453
    %5497 = vmatprep.subr.mxu0 0.0
    %5498 = vmatpush1.msra.mxu0 %v5454
    %5499 = vmatprep.subr.mxu0 0.0
    %5500 = vmatpush1.msra.mxu0 %v5455
    %5501 = vmatprep.subr.mxu0 0.0
    %5502 = vmatpush1.msra.mxu0 %v5456
    %5503 = vmatprep.subr.mxu0 0.0
    %5504 = vmatpush1.msra.mxu0 %v5457
    %5505 = vmatprep.subr.mxu0 0.0
    %5506 = vmatpush1.msra.mxu0 %v5458
    %5507 = vmatprep.subr.mxu0 0.0
    %5508 = vmatpush1.msra.mxu0 %v5459
    %5509 = vmatprep.subr.mxu0 0.0
    %5510 = vmatpush1.msra.mxu0 %v5460
    %5511 = vmatprep.subr.mxu0 0.0
    %5512 = vmatpush1.msra.mxu0 %v5461
    %5513 = vmatprep.subr.mxu0 0.0
    %5514 = vmatpush1.msra.mxu0 %v5462
    %5515 = vmatprep.subr.mxu0 0.0
    %5516 = vmatpush1.msra.mxu0 %v5463
    %5517 = vmatprep.subr.mxu0 0.0
    %5518 = vmatpush1.msra.mxu0 %v5464
    %5519 = vmatprep.subr.mxu0 0.0
    %5520 = vmatpush1.msra.mxu0 %v5465
    %5521 = vmatprep.subr.mxu0 0.0
    %5522 = vmatpush1.msra.mxu0 %v5466
    %5523 = vmatprep.subr.mxu0 0.0
    %5524 = vmatpush1.msra.mxu0 %v5467
    %5525 = vmatprep.subr.mxu0 0.0
    %5526 = vmatpush1.msra.mxu0 %v5468
    %5527 = vmatprep.subr.mxu0 0.0
    %5528 = vmatpush1.msra.mxu0 %v5469
    %5529 = vmatprep.subr.mxu0 0.0
    %5530 = vmatpush1.msra.mxu0 %v5470
    %5531 = vmatprep.subr.mxu0 0.0
    %5532 = vmatpush1.msra.mxu0 %v5471
    %5533 = vmatprep.subr.mxu0 0.0
    %5534 = vmatpush1.msra.mxu0 %v5472
    %5535 = vmatprep.subr.mxu0 0.0
    %5536 = vmatpush1.msra.mxu0 %v5473
    %5537 = vmatprep.subr.mxu0 0.0
    %5538 = vmatpush1.msra.mxu0 %v5474
    %5539 = vmatprep.mubr.f32.mxu0 %v3126
    %5540 = vmatmul.mubr.f32.gmra.mrb[0].mxu0 %v3125
    %v5541 = vpop.f32.mrb[0].mxu0
    %v5542 = vadd.f32 0.0, %v5541
    %v5543 = vpop.f32.mrb[0].mxu0
    %5544 = vdwg.mxu0
    %5545 = vmatprep.subr.mxu0 0.0
    %5546 = vmatpush1.msra.mxu0 %v5411
    %5547 = vmatprep.subr.mxu0 0.0
    %5548 = vmatpush1.msra.mxu0 %v5412
    %5549 = vmatprep.subr.mxu0 0.0
    %5550 = vmatpush1.msra.mxu0 %v5413
    %5551 = vmatprep.subr.mxu0 0.0
    %5552 = vmatpush1.msra.mxu0 %v5414
    %5553 = vmatprep.subr.mxu0 0.0
    %5554 = vmatpush1.msra.mxu0 %v5415
    %5555 = vmatprep.subr.mxu0 0.0
    %5556 = vmatpush1.msra.mxu0 %v5416
    %5557 = vmatprep.subr.mxu0 0.0
    %5558 = vmatpush1.msra.mxu0 %v5417
    %5559 = vmatprep.subr.mxu0 0.0
    %5560 = vmatpush1.msra.mxu0 %v5418
    %5561 = vmatprep.subr.mxu0 0.0
    %5562 = vmatpush1.msra.mxu0 %v5419
    %5563 = vmatprep.subr.mxu0 0.0
    %5564 = vmatpush1.msra.mxu0 %v5420
    %5565 = vmatprep.subr.mxu0 0.0
    %5566 = vmatpush1.msra.mxu0 %v5421
    %5567 = vmatprep.subr.mxu0 0.0
    %5568 = vmatpush1.msra.mxu0 %v5422
    %5569 = vmatprep.subr.mxu0 0.0
    %5570 = vmatpush1.msra.mxu0 %v5423
    %5571 = vmatprep.subr.mxu0 0.0
    %5572 = vmatpush1.msra.mxu0 %v5424
    %5573 = vmatprep.subr.mxu0 0.0
    %5574 = vmatpush1.msra.mxu0 %v5425
    %5575 = vmatprep.subr.mxu0 0.0
    %5576 = vmatpush1.msra.mxu0 %v5426
    %5577 = vmatprep.subr.mxu0 0.0
    %5578 = vmatpush1.msra.mxu0 %v5427
    %5579 = vmatprep.subr.mxu0 0.0
    %5580 = vmatpush1.msra.mxu0 %v5428
    %5581 = vmatprep.subr.mxu0 0.0
    %5582 = vmatpush1.msra.mxu0 %v5429
    %5583 = vmatprep.subr.mxu0 0.0
    %5584 = vmatpush1.msra.mxu0 %v5430
    %5585 = vmatprep.subr.mxu0 0.0
    %5586 = vmatpush1.msra.mxu0 %v5431
    %5587 = vmatprep.subr.mxu0 0.0
    %5588 = vmatpush1.msra.mxu0 %v5432
    %5589 = vmatprep.subr.mxu0 0.0
    %5590 = vmatpush1.msra.mxu0 %v5433
    %5591 = vmatprep.subr.mxu0 0.0
    %5592 = vmatpush1.msra.mxu0 %v5434
    %5593 = vmatprep.subr.mxu0 0.0
    %5594 = vmatpush1.msra.mxu0 %v5435
    %5595 = vmatprep.subr.mxu0 0.0
    %5596 = vmatpush1.msra.mxu0 %v5436
    %5597 = vmatprep.subr.mxu0 0.0
    %5598 = vmatpush1.msra.mxu0 %v5437
    %5599 = vmatprep.subr.mxu0 0.0
    %5600 = vmatpush1.msra.mxu0 %v5438
    %5601 = vmatprep.subr.mxu0 0.0
    %5602 = vmatpush1.msra.mxu0 %v5439
    %5603 = vmatprep.subr.mxu0 0.0
    %5604 = vmatpush1.msra.mxu0 %v5440
    %5605 = vmatprep.subr.mxu0 0.0
    %5606 = vmatpush1.msra.mxu0 %v5441
    %5607 = vmatprep.subr.mxu0 0.0
    %5608 = vmatpush1.msra.mxu0 %v5442
    %5609 = vmatprep.mubr.f32.mxu0 %v3124
    %5610 = vmatmul.mubr.f32.gmra.mrb[0].mxu0 %v3123
    %v5611 = vpop.f32.mrb[0].mxu0
    %v5612 = vadd.f32 %v5542, %v5611
    %v5613 = vpop.f32.mrb[0].mxu0
    %5614 = vdwg.mxu0
    %v5615 = vadd.f32 %v5612, %v3169
    %v5616 = vtanh.pop %v5615
    %v5619 = vunpack.c.l.s4 1983009808
    %v5620 = vunpack.c.0.s8 %v5619
    %v5621 = vlaneseq
    %v5622 = vshrl.u32 %v5621, 7
    %v5623 = vsub.s32 %v5620, %v5622
    %v5624 = vrot.slane %v5616, %v5623
    %5625 = vrot.lane.b32.xlu0 %v5624, 32
    %v5626 = vpop.permute.xlu0 %5625
    %5628 = vst.msk [vmem:[%s12 + $0x2] sm:$0x3] %vm3725, %v5626
    %v5629 = vcombine.high %v5624, %v5624
    %5630 = vrot.lane.b32.xlu0 %v5629, 32
    %v5631 = vpop.permute.xlu0 %5630
    %5633 = vst.msk [vmem:[%s13 + $0x2] sm:$0x3] %vm3725, %v5631
    %5634 = vrot.lane.b32.xlu0 %v5624, 16
    %v5635 = vpop.permute.xlu0 %5634
    %5637 = vst.msk [vmem:[%s12 + $0x6] sm:$0x3] %vm3725, %v5635
    %5638 = vrot.lane.b32.xlu0 %v5629, 16
    %v5639 = vpop.permute.xlu0 %5638
    %5641 = vst.msk [vmem:[%s13 + $0x6] sm:$0x3] %vm3725, %v5639
    %5642 = vst.msk [vmem:[%s12 + $0xa] sm:$0x3] %vm3725, %v5616
    %5644 = vst.msk [vmem:[%s13 + $0xa] sm:$0x3] %vm3725, %v5629
    %v5645 = vld [vmem:[%s3271] sm:$0xff]
    %v5646 = vld [vmem:[%s3271 + $0x8] sm:$0xff]
    %v5647 = vld [vmem:[%s3271 + $0x10] sm:$0xff]
    %v5648 = vld [vmem:[%s3271 + $0x18] sm:$0xff]
    %v5649 = vld [vmem:[%s3271 + $0x20] sm:$0xff]
    %v5650 = vld [vmem:[%s3271 + $0x28] sm:$0xff]
    %v5651 = vld [vmem:[%s3271 + $0x30] sm:$0xff]
    %v5652 = vld [vmem:[%s3271 + $0x38] sm:$0xff]
    %v5653 = vld [vmem:[%s3271 + $0x40] sm:$0xff]
    %v5654 = vld [vmem:[%s3271 + $0x48] sm:$0xff]
    %v5655 = vld [vmem:[%s3271 + $0x50] sm:$0xff]
    %v5656 = vld [vmem:[%s3271 + $0x58] sm:$0xff]
    %v5657 = vld [vmem:[%s3271 + $0x60] sm:$0xff]
    %v5658 = vld [vmem:[%s3271 + $0x68] sm:$0xff]
    %v5659 = vld [vmem:[%s3271 + $0x70] sm:$0xff]
    %v5660 = vld [vmem:[%s3271 + $0x78] sm:$0xff]
    %v5661 = vld [vmem:[%s3271 + $0x80] sm:$0xff]
    %v5662 = vld [vmem:[%s3271 + $0x88] sm:$0xff]
    %v5663 = vld [vmem:[%s3271 + $0x90] sm:$0xff]
    %v5664 = vld [vmem:[%s3271 + $0x98] sm:$0xff]
    %v5665 = vld [vmem:[%s3271 + $0xa0] sm:$0xff]
    %v5666 = vld [vmem:[%s3271 + $0xa8] sm:$0xff]
    %v5667 = vld [vmem:[%s3271 + $0xb0] sm:$0xff]
    %v5668 = vld [vmem:[%s3271 + $0xb8] sm:$0xff]
    %v5669 = vld [vmem:[%s3271 + $0xc0] sm:$0xff]
    %v5670 = vld [vmem:[%s3271 + $0xc8] sm:$0xff]
    %v5671 = vld [vmem:[%s3271 + $0xd0] sm:$0xff]
    %v5672 = vld [vmem:[%s3271 + $0xd8] sm:$0xff]
    %v5673 = vld [vmem:[%s3271 + $0xe0] sm:$0xff]
    %v5674 = vld [vmem:[%s3271 + $0xe8] sm:$0xff]
    %v5675 = vld [vmem:[%s3271 + $0xf0] sm:$0xff]
    %v5676 = vld [vmem:[%s3271 + $0xf8] sm:$0xff]
    %v5677 = vld [vmem:[%s3304] sm:$0xff]
    %v5678 = vld [vmem:[%s3304 + $0x8] sm:$0xff]
    %v5679 = vld [vmem:[%s3304 + $0x10] sm:$0xff]
    %v5680 = vld [vmem:[%s3304 + $0x18] sm:$0xff]
    %v5681 = vld [vmem:[%s3304 + $0x20] sm:$0xff]
    %v5682 = vld [vmem:[%s3304 + $0x28] sm:$0xff]
    %v5683 = vld [vmem:[%s3304 + $0x30] sm:$0xff]
    %v5684 = vld [vmem:[%s3304 + $0x38] sm:$0xff]
    %v5685 = vld [vmem:[%s3304 + $0x40] sm:$0xff]
    %v5686 = vld [vmem:[%s3304 + $0x48] sm:$0xff]
    %v5687 = vld [vmem:[%s3304 + $0x50] sm:$0xff]
    %v5688 = vld [vmem:[%s3304 + $0x58] sm:$0xff]
    %v5689 = vld [vmem:[%s3304 + $0x60] sm:$0xff]
    %v5690 = vld [vmem:[%s3304 + $0x68] sm:$0xff]
    %v5691 = vld [vmem:[%s3304 + $0x70] sm:$0xff]
    %v5692 = vld [vmem:[%s3304 + $0x78] sm:$0xff]
    %v5693 = vld [vmem:[%s3304 + $0x80] sm:$0xff]
    %v5694 = vld [vmem:[%s3304 + $0x88] sm:$0xff]
    %v5695 = vld [vmem:[%s3304 + $0x90] sm:$0xff]
    %v5696 = vld [vmem:[%s3304 + $0x98] sm:$0xff]
    %v5697 = vld [vmem:[%s3304 + $0xa0] sm:$0xff]
    %v5698 = vld [vmem:[%s3304 + $0xa8] sm:$0xff]
    %v5699 = vld [vmem:[%s3304 + $0xb0] sm:$0xff]
    %v5700 = vld [vmem:[%s3304 + $0xb8] sm:$0xff]
    %v5701 = vld [vmem:[%s3304 + $0xc0] sm:$0xff]
    %v5702 = vld [vmem:[%s3304 + $0xc8] sm:$0xff]
    %v5703 = vld [vmem:[%s3304 + $0xd0] sm:$0xff]
    %v5704 = vld [vmem:[%s3304 + $0xd8] sm:$0xff]
    %v5705 = vld [vmem:[%s3304 + $0xe0] sm:$0xff]
    %v5706 = vld [vmem:[%s3304 + $0xe8] sm:$0xff]
    %v5707 = vld [vmem:[%s3304 + $0xf0] sm:$0xff]
    %v5708 = vld [vmem:[%s3304 + $0xf8] sm:$0xff]
    %5709 = vmatprep.subr.mxu0 0.0
    %5710 = vmatpush1.msra.mxu0 %v5677
    %5711 = vmatprep.subr.mxu0 0.0
    %5712 = vmatpush1.msra.mxu0 %v5678
    %5713 = vmatprep.subr.mxu0 0.0
    %5714 = vmatpush1.msra.mxu0 %v5679
    %5715 = vmatprep.subr.mxu0 0.0
    %5716 = vmatpush1.msra.mxu0 %v5680
    %5717 = vmatprep.subr.mxu0 0.0
    %5718 = vmatpush1.msra.mxu0 %v5681
    %5719 = vmatprep.subr.mxu0 0.0
    %5720 = vmatpush1.msra.mxu0 %v5682
    %5721 = vmatprep.subr.mxu0 0.0
    %5722 = vmatpush1.msra.mxu0 %v5683
    %5723 = vmatprep.subr.mxu0 0.0
    %5724 = vmatpush1.msra.mxu0 %v5684
    %5725 = vmatprep.subr.mxu0 0.0
    %5726 = vmatpush1.msra.mxu0 %v5685
    %5727 = vmatprep.subr.mxu0 0.0
    %5728 = vmatpush1.msra.mxu0 %v5686
    %5729 = vmatprep.subr.mxu0 0.0
    %5730 = vmatpush1.msra.mxu0 %v5687
    %5731 = vmatprep.subr.mxu0 0.0
    %5732 = vmatpush1.msra.mxu0 %v5688
    %5733 = vmatprep.subr.mxu0 0.0
    %5734 = vmatpush1.msra.mxu0 %v5689
    %5735 = vmatprep.subr.mxu0 0.0
    %5736 = vmatpush1.msra.mxu0 %v5690
    %5737 = vmatprep.subr.mxu0 0.0
    %5738 = vmatpush1.msra.mxu0 %v5691
    %5739 = vmatprep.subr.mxu0 0.0
    %5740 = vmatpush1.msra.mxu0 %v5692
    %5741 = vmatprep.subr.mxu0 0.0
    %5742 = vmatpush1.msra.mxu0 %v5693
    %5743 = vmatprep.subr.mxu0 0.0
    %5744 = vmatpush1.msra.mxu0 %v5694
    %5745 = vmatprep.subr.mxu0 0.0
    %5746 = vmatpush1.msra.mxu0 %v5695
    %5747 = vmatprep.subr.mxu0 0.0
    %5748 = vmatpush1.msra.mxu0 %v5696
    %5749 = vmatprep.subr.mxu0 0.0
    %5750 = vmatpush1.msra.mxu0 %v5697
    %5751 = vmatprep.subr.mxu0 0.0
    %5752 = vmatpush1.msra.mxu0 %v5698
    %5753 = vmatprep.subr.mxu0 0.0
    %5754 = vmatpush1.msra.mxu0 %v5699
    %5755 = vmatprep.subr.mxu0 0.0
    %5756 = vmatpush1.msra.mxu0 %v5700
    %5757 = vmatprep.subr.mxu0 0.0
    %5758 = vmatpush1.msra.mxu0 %v5701
    %5759 = vmatprep.subr.mxu0 0.0
    %5760 = vmatpush1.msra.mxu0 %v5702
    %5761 = vmatprep.subr.mxu0 0.0
    %5762 = vmatpush1.msra.mxu0 %v5703
    %5763 = vmatprep.subr.mxu0 0.0
    %5764 = vmatpush1.msra.mxu0 %v5704
    %5765 = vmatprep.subr.mxu0 0.0
    %5766 = vmatpush1.msra.mxu0 %v5705
    %5767 = vmatprep.subr.mxu0 0.0
    %5768 = vmatpush1.msra.mxu0 %v5706
    %5769 = vmatprep.subr.mxu0 0.0
    %5770 = vmatpush1.msra.mxu0 %v5707
    %5771 = vmatprep.subr.mxu0 0.0
    %5772 = vmatpush1.msra.mxu0 %v5708
    %5773 = vmatprep.mubr.f32.mxu0 %v3128
    %5774 = vmatmul.mubr.f32.gmra.mrb[0].mxu0 %v3127
    %v5775 = vpop.f32.mrb[0].mxu0
    %v5776 = vadd.f32 0.0, %v5775
    %v5777 = vpop.f32.mrb[0].mxu0
    %5778 = vdwg.mxu0
    %5779 = vmatprep.subr.mxu0 0.0
    %5780 = vmatpush1.msra.mxu0 %v5645
    %5781 = vmatprep.subr.mxu0 0.0
    %5782 = vmatpush1.msra.mxu0 %v5646
    %5783 = vmatprep.subr.mxu0 0.0
    %5784 = vmatpush1.msra.mxu0 %v5647
    %5785 = vmatprep.subr.mxu0 0.0
    %5786 = vmatpush1.msra.mxu0 %v5648
    %5787 = vmatprep.subr.mxu0 0.0
    %5788 = vmatpush1.msra.mxu0 %v5649
    %5789 = vmatprep.subr.mxu0 0.0
    %5790 = vmatpush1.msra.mxu0 %v5650
    %5791 = vmatprep.subr.mxu0 0.0
    %5792 = vmatpush1.msra.mxu0 %v5651
    %5793 = vmatprep.subr.mxu0 0.0
    %5794 = vmatpush1.msra.mxu0 %v5652
    %5795 = vmatprep.subr.mxu0 0.0
    %5796 = vmatpush1.msra.mxu0 %v5653
    %5797 = vmatprep.subr.mxu0 0.0
    %5798 = vmatpush1.msra.mxu0 %v5654
    %5799 = vmatprep.subr.mxu0 0.0
    %5800 = vmatpush1.msra.mxu0 %v5655
    %5801 = vmatprep.subr.mxu0 0.0
    %5802 = vmatpush1.msra.mxu0 %v5656
    %5803 = vmatprep.subr.mxu0 0.0
    %5804 = vmatpush1.msra.mxu0 %v5657
    %5805 = vmatprep.subr.mxu0 0.0
    %5806 = vmatpush1.msra.mxu0 %v5658
    %5807 = vmatprep.subr.mxu0 0.0
    %5808 = vmatpush1.msra.mxu0 %v5659
    %5809 = vmatprep.subr.mxu0 0.0
    %5810 = vmatpush1.msra.mxu0 %v5660
    %5811 = vmatprep.subr.mxu0 0.0
    %5812 = vmatpush1.msra.mxu0 %v5661
    %5813 = vmatprep.subr.mxu0 0.0
    %5814 = vmatpush1.msra.mxu0 %v5662
    %5815 = vmatprep.subr.mxu0 0.0
    %5816 = vmatpush1.msra.mxu0 %v5663
    %5817 = vmatprep.subr.mxu0 0.0
    %5818 = vmatpush1.msra.mxu0 %v5664
    %5819 = vmatprep.subr.mxu0 0.0
    %5820 = vmatpush1.msra.mxu0 %v5665
    %5821 = vmatprep.subr.mxu0 0.0
    %5822 = vmatpush1.msra.mxu0 %v5666
    %5823 = vmatprep.subr.mxu0 0.0
    %5824 = vmatpush1.msra.mxu0 %v5667
    %5825 = vmatprep.subr.mxu0 0.0
    %5826 = vmatpush1.msra.mxu0 %v5668
    %5827 = vmatprep.subr.mxu0 0.0
    %5828 = vmatpush1.msra.mxu0 %v5669
    %5829 = vmatprep.subr.mxu0 0.0
    %5830 = vmatpush1.msra.mxu0 %v5670
    %5831 = vmatprep.subr.mxu0 0.0
    %5832 = vmatpush1.msra.mxu0 %v5671
    %5833 = vmatprep.subr.mxu0 0.0
    %5834 = vmatpush1.msra.mxu0 %v5672
    %5835 = vmatprep.subr.mxu0 0.0
    %5836 = vmatpush1.msra.mxu0 %v5673
    %5837 = vmatprep.subr.mxu0 0.0
    %5838 = vmatpush1.msra.mxu0 %v5674
    %5839 = vmatprep.subr.mxu0 0.0
    %5840 = vmatpush1.msra.mxu0 %v5675
    %5841 = vmatprep.subr.mxu0 0.0
    %5842 = vmatpush1.msra.mxu0 %v5676
    %5843 = vmatprep.mubr.f32.mxu0 %v3126
    %5844 = vmatmul.mubr.f32.gmra.mrb[0].mxu0 %v3125
    %v5845 = vpop.f32.mrb[0].mxu0
    %v5846 = vadd.f32 %v5776, %v5845
    %v5847 = vpop.f32.mrb[0].mxu0
    %5848 = vdwg.mxu0
    %v5849 = vadd.f32 %v5846, %v3169
    %v5850 = vtanh.pop %v5849
    %v5853 = vunpack.c.l.s4 1983009808
    %v5854 = vunpack.c.0.s8 %v5853
    %v5855 = vlaneseq
    %v5856 = vshrl.u32 %v5855, 7
    %v5857 = vsub.s32 %v5854, %v5856
    %v5858 = vrot.slane %v5850, %v5857
    %5859 = vrot.lane.b32.xlu0 %v5858, 48
    %v5860 = vpop.permute.xlu0 %5859
    %5862 = vst.msk [vmem:[%s12 + $0x2] sm:$0x3] %vm3960, %v5860
    %v5863 = vcombine.high %v5858, %v5858
    %5864 = vrot.lane.b32.xlu0 %v5863, 48
    %v5865 = vpop.permute.xlu0 %5864
    %5867 = vst.msk [vmem:[%s13 + $0x2] sm:$0x3] %vm3960, %v5865
    %5868 = vrot.lane.b32.xlu0 %v5858, 32
    %v5869 = vpop.permute.xlu0 %5868
    %5871 = vst.msk [vmem:[%s12 + $0x6] sm:$0x3] %vm3960, %v5869
    %5872 = vrot.lane.b32.xlu0 %v5863, 32
    %v5873 = vpop.permute.xlu0 %5872
    %5875 = vst.msk [vmem:[%s13 + $0x6] sm:$0x3] %vm3960, %v5873
    %5876 = vrot.lane.b32.xlu0 %v5858, 16
    %v5877 = vpop.permute.xlu0 %5876
    %5879 = vst.msk [vmem:[%s12 + $0xa] sm:$0x3] %vm3960, %v5877
    %5880 = vrot.lane.b32.xlu0 %v5863, 16
    %v5881 = vpop.permute.xlu0 %5880
    %5883 = vst.msk [vmem:[%s13 + $0xa] sm:$0x3] %vm3960, %v5881
    %v5884 = vld [vmem:[%s10] sm:$0xff]
    %v5885 = vld [vmem:[%s10 + $0x8] sm:$0xff]
    %v5886 = vld [vmem:[%s10 + $0x10] sm:$0xff]
    %v5887 = vld [vmem:[%s10 + $0x18] sm:$0xff]
    %v5888 = vld [vmem:[%s10 + $0x20] sm:$0xff]
    %v5889 = vld [vmem:[%s10 + $0x28] sm:$0xff]
    %v5890 = vld [vmem:[%s10 + $0x30] sm:$0xff]
    %v5891 = vld [vmem:[%s10 + $0x38] sm:$0xff]
    %v5892 = vld [vmem:[%s10 + $0x40] sm:$0xff]
    %v5893 = vld [vmem:[%s10 + $0x48] sm:$0xff]
    %v5894 = vld [vmem:[%s10 + $0x50] sm:$0xff]
    %v5895 = vld [vmem:[%s10 + $0x58] sm:$0xff]
    %v5896 = vld [vmem:[%s10 + $0x60] sm:$0xff]
    %v5897 = vld [vmem:[%s10 + $0x68] sm:$0xff]
    %v5898 = vld [vmem:[%s10 + $0x70] sm:$0xff]
    %v5899 = vld [vmem:[%s10 + $0x78] sm:$0xff]
    %v5900 = vld [vmem:[%s10 + $0x80] sm:$0xff]
    %v5901 = vld [vmem:[%s10 + $0x88] sm:$0xff]
    %v5902 = vld [vmem:[%s10 + $0x90] sm:$0xff]
    %v5903 = vld [vmem:[%s10 + $0x98] sm:$0xff]
    %v5904 = vld [vmem:[%s10 + $0xa0] sm:$0xff]
    %v5905 = vld [vmem:[%s10 + $0xa8] sm:$0xff]
    %v5906 = vld [vmem:[%s10 + $0xb0] sm:$0xff]
    %v5907 = vld [vmem:[%s10 + $0xb8] sm:$0xff]
    %v5908 = vld [vmem:[%s10 + $0xc0] sm:$0xff]
    %v5909 = vld [vmem:[%s10 + $0xc8] sm:$0xff]
    %v5910 = vld [vmem:[%s10 + $0xd0] sm:$0xff]
    %v5911 = vld [vmem:[%s10 + $0xd8] sm:$0xff]
    %v5912 = vld [vmem:[%s10 + $0xe0] sm:$0xff]
    %v5913 = vld [vmem:[%s10 + $0xe8] sm:$0xff]
    %v5914 = vld [vmem:[%s10 + $0xf0] sm:$0xff]
    %v5915 = vld [vmem:[%s10 + $0xf8] sm:$0xff]
    %v5916 = vld [vmem:[%s3132] sm:$0xff]
    %v5917 = vld [vmem:[%s3132 + $0x8] sm:$0xff]
    %v5918 = vld [vmem:[%s3132 + $0x10] sm:$0xff]
    %v5919 = vld [vmem:[%s3132 + $0x18] sm:$0xff]
    %v5920 = vld [vmem:[%s3132 + $0x20] sm:$0xff]
    %v5921 = vld [vmem:[%s3132 + $0x28] sm:$0xff]
    %v5922 = vld [vmem:[%s3132 + $0x30] sm:$0xff]
    %v5923 = vld [vmem:[%s3132 + $0x38] sm:$0xff]
    %v5924 = vld [vmem:[%s3132 + $0x40] sm:$0xff]
    %v5925 = vld [vmem:[%s3132 + $0x48] sm:$0xff]
    %v5926 = vld [vmem:[%s3132 + $0x50] sm:$0xff]
    %v5927 = vld [vmem:[%s3132 + $0x58] sm:$0xff]
    %v5928 = vld [vmem:[%s3132 + $0x60] sm:$0xff]
    %v5929 = vld [vmem:[%s3132 + $0x68] sm:$0xff]
    %v5930 = vld [vmem:[%s3132 + $0x70] sm:$0xff]
    %v5931 = vld [vmem:[%s3132 + $0x78] sm:$0xff]
    %v5932 = vld [vmem:[%s3132 + $0x80] sm:$0xff]
    %v5933 = vld [vmem:[%s3132 + $0x88] sm:$0xff]
    %v5934 = vld [vmem:[%s3132 + $0x90] sm:$0xff]
    %v5935 = vld [vmem:[%s3132 + $0x98] sm:$0xff]
    %v5936 = vld [vmem:[%s3132 + $0xa0] sm:$0xff]
    %v5937 = vld [vmem:[%s3132 + $0xa8] sm:$0xff]
    %v5938 = vld [vmem:[%s3132 + $0xb0] sm:$0xff]
    %v5939 = vld [vmem:[%s3132 + $0xb8] sm:$0xff]
    %v5940 = vld [vmem:[%s3132 + $0xc0] sm:$0xff]
    %v5941 = vld [vmem:[%s3132 + $0xc8] sm:$0xff]
    %v5942 = vld [vmem:[%s3132 + $0xd0] sm:$0xff]
    %v5943 = vld [vmem:[%s3132 + $0xd8] sm:$0xff]
    %v5944 = vld [vmem:[%s3132 + $0xe0] sm:$0xff]
    %v5945 = vld [vmem:[%s3132 + $0xe8] sm:$0xff]
    %v5946 = vld [vmem:[%s3132 + $0xf0] sm:$0xff]
    %v5947 = vld [vmem:[%s3132 + $0xf8] sm:$0xff]
    %5948 = vmatprep.subr.mxu0 0.0
    %5949 = vmatpush1.msra.mxu0 %v5916
    %5950 = vmatprep.subr.mxu0 0.0
    %5951 = vmatpush1.msra.mxu0 %v5917
    %5952 = vmatprep.subr.mxu0 0.0
    %5953 = vmatpush1.msra.mxu0 %v5918
    %5954 = vmatprep.subr.mxu0 0.0
    %5955 = vmatpush1.msra.mxu0 %v5919
    %5956 = vmatprep.subr.mxu0 0.0
    %5957 = vmatpush1.msra.mxu0 %v5920
    %5958 = vmatprep.subr.mxu0 0.0
    %5959 = vmatpush1.msra.mxu0 %v5921
    %5960 = vmatprep.subr.mxu0 0.0
    %5961 = vmatpush1.msra.mxu0 %v5922
    %5962 = vmatprep.subr.mxu0 0.0
    %5963 = vmatpush1.msra.mxu0 %v5923
    %5964 = vmatprep.subr.mxu0 0.0
    %5965 = vmatpush1.msra.mxu0 %v5924
    %5966 = vmatprep.subr.mxu0 0.0
    %5967 = vmatpush1.msra.mxu0 %v5925
    %5968 = vmatprep.subr.mxu0 0.0
    %5969 = vmatpush1.msra.mxu0 %v5926
    %5970 = vmatprep.subr.mxu0 0.0
    %5971 = vmatpush1.msra.mxu0 %v5927
    %5972 = vmatprep.subr.mxu0 0.0
    %5973 = vmatpush1.msra.mxu0 %v5928
    %5974 = vmatprep.subr.mxu0 0.0
    %5975 = vmatpush1.msra.mxu0 %v5929
    %5976 = vmatprep.subr.mxu0 0.0
    %5977 = vmatpush1.msra.mxu0 %v5930
    %5978 = vmatprep.subr.mxu0 0.0
    %5979 = vmatpush1.msra.mxu0 %v5931
    %5980 = vmatprep.subr.mxu0 0.0
    %5981 = vmatpush1.msra.mxu0 %v5932
    %5982 = vmatprep.subr.mxu0 0.0
    %5983 = vmatpush1.msra.mxu0 %v5933
    %5984 = vmatprep.subr.mxu0 0.0
    %5985 = vmatpush1.msra.mxu0 %v5934
    %5986 = vmatprep.subr.mxu0 0.0
    %5987 = vmatpush1.msra.mxu0 %v5935
    %5988 = vmatprep.subr.mxu0 0.0
    %5989 = vmatpush1.msra.mxu0 %v5936
    %5990 = vmatprep.subr.mxu0 0.0
    %5991 = vmatpush1.msra.mxu0 %v5937
    %5992 = vmatprep.subr.mxu0 0.0
    %5993 = vmatpush1.msra.mxu0 %v5938
    %5994 = vmatprep.subr.mxu0 0.0
    %5995 = vmatpush1.msra.mxu0 %v5939
    %5996 = vmatprep.subr.mxu0 0.0
    %5997 = vmatpush1.msra.mxu0 %v5940
    %5998 = vmatprep.subr.mxu0 0.0
    %5999 = vmatpush1.msra.mxu0 %v5941
    %6000 = vmatprep.subr.mxu0 0.0
    %6001 = vmatpush1.msra.mxu0 %v5942
    %6002 = vmatprep.subr.mxu0 0.0
    %6003 = vmatpush1.msra.mxu0 %v5943
    %6004 = vmatprep.subr.mxu0 0.0
    %6005 = vmatpush1.msra.mxu0 %v5944
    %6006 = vmatprep.subr.mxu0 0.0
    %6007 = vmatpush1.msra.mxu0 %v5945
    %6008 = vmatprep.subr.mxu0 0.0
    %6009 = vmatpush1.msra.mxu0 %v5946
    %6010 = vmatprep.subr.mxu0 0.0
    %6011 = vmatpush1.msra.mxu0 %v5947
    %6012 = vmatprep.mubr.f32.mxu0 %v3128
    %6013 = vmatmul.mubr.f32.gmra.mrb[0].mxu0 %v3127
    %v6014 = vpop.f32.mrb[0].mxu0
    %v6015 = vadd.f32 0.0, %v6014
    %v6016 = vpop.f32.mrb[0].mxu0
    %6017 = vdwg.mxu0
    %6018 = vmatprep.subr.mxu0 0.0
    %6019 = vmatpush1.msra.mxu0 %v5884
    %6020 = vmatprep.subr.mxu0 0.0
    %6021 = vmatpush1.msra.mxu0 %v5885
    %6022 = vmatprep.subr.mxu0 0.0
    %6023 = vmatpush1.msra.mxu0 %v5886
    %6024 = vmatprep.subr.mxu0 0.0
    %6025 = vmatpush1.msra.mxu0 %v5887
    %6026 = vmatprep.subr.mxu0 0.0
    %6027 = vmatpush1.msra.mxu0 %v5888
    %6028 = vmatprep.subr.mxu0 0.0
    %6029 = vmatpush1.msra.mxu0 %v5889
    %6030 = vmatprep.subr.mxu0 0.0
    %6031 = vmatpush1.msra.mxu0 %v5890
    %6032 = vmatprep.subr.mxu0 0.0
    %6033 = vmatpush1.msra.mxu0 %v5891
    %6034 = vmatprep.subr.mxu0 0.0
    %6035 = vmatpush1.msra.mxu0 %v5892
    %6036 = vmatprep.subr.mxu0 0.0
    %6037 = vmatpush1.msra.mxu0 %v5893
    %6038 = vmatprep.subr.mxu0 0.0
    %6039 = vmatpush1.msra.mxu0 %v5894
    %6040 = vmatprep.subr.mxu0 0.0
    %6041 = vmatpush1.msra.mxu0 %v5895
    %6042 = vmatprep.subr.mxu0 0.0
    %6043 = vmatpush1.msra.mxu0 %v5896
    %6044 = vmatprep.subr.mxu0 0.0
    %6045 = vmatpush1.msra.mxu0 %v5897
    %6046 = vmatprep.subr.mxu0 0.0
    %6047 = vmatpush1.msra.mxu0 %v5898
    %6048 = vmatprep.subr.mxu0 0.0
    %6049 = vmatpush1.msra.mxu0 %v5899
    %6050 = vmatprep.subr.mxu0 0.0
    %6051 = vmatpush1.msra.mxu0 %v5900
    %6052 = vmatprep.subr.mxu0 0.0
    %6053 = vmatpush1.msra.mxu0 %v5901
    %6054 = vmatprep.subr.mxu0 0.0
    %6055 = vmatpush1.msra.mxu0 %v5902
    %6056 = vmatprep.subr.mxu0 0.0
    %6057 = vmatpush1.msra.mxu0 %v5903
    %6058 = vmatprep.subr.mxu0 0.0
    %6059 = vmatpush1.msra.mxu0 %v5904
    %6060 = vmatprep.subr.mxu0 0.0
    %6061 = vmatpush1.msra.mxu0 %v5905
    %6062 = vmatprep.subr.mxu0 0.0
    %6063 = vmatpush1.msra.mxu0 %v5906
    %6064 = vmatprep.subr.mxu0 0.0
    %6065 = vmatpush1.msra.mxu0 %v5907
    %6066 = vmatprep.subr.mxu0 0.0
    %6067 = vmatpush1.msra.mxu0 %v5908
    %6068 = vmatprep.subr.mxu0 0.0
    %6069 = vmatpush1.msra.mxu0 %v5909
    %6070 = vmatprep.subr.mxu0 0.0
    %6071 = vmatpush1.msra.mxu0 %v5910
    %6072 = vmatprep.subr.mxu0 0.0
    %6073 = vmatpush1.msra.mxu0 %v5911
    %6074 = vmatprep.subr.mxu0 0.0
    %6075 = vmatpush1.msra.mxu0 %v5912
    %6076 = vmatprep.subr.mxu0 0.0
    %6077 = vmatpush1.msra.mxu0 %v5913
    %6078 = vmatprep.subr.mxu0 0.0
    %6079 = vmatpush1.msra.mxu0 %v5914
    %6080 = vmatprep.subr.mxu0 0.0
    %6081 = vmatpush1.msra.mxu0 %v5915
    %6082 = vmatprep.mubr.f32.mxu0 %v3126
    %6083 = vmatmul.mubr.f32.gmra.mrb[0].mxu0 %v3125
    %v6084 = vpop.f32.mrb[0].mxu0
    %v6085 = vadd.f32 %v6015, %v6084
    %v6086 = vpop.f32.mrb[0].mxu0
    %6087 = vdwg.mxu0
    %v6088 = vadd.f32 %v6085, %v3169
    %v6089 = vtanh.pop %v6088
    %v6092 = vunpack.c.l.s4 1983009808
    %v6093 = vunpack.c.0.s8 %v6092
    %v6094 = vlaneseq
    %v6095 = vshrl.u32 %v6094, 7
    %v6096 = vsub.s32 %v6093, %v6095
    %v6097 = vrot.slane %v6089, %v6096
    %6098 = vrot.lane.b32.xlu0 %v6097, 64
    %v6099 = vpop.permute.xlu0 %6098
    %6101 = vst.msk [vmem:[%s12 + $0x2] sm:$0x3] %vm4200, %v6099
    %v6102 = vcombine.high %v6097, %v6097
    %6103 = vrot.lane.b32.xlu0 %v6102, 64
    %v6104 = vpop.permute.xlu0 %6103
    %6106 = vst.msk [vmem:[%s13 + $0x2] sm:$0x3] %vm4200, %v6104
    %6107 = vrot.lane.b32.xlu0 %v6097, 48
    %v6108 = vpop.permute.xlu0 %6107
    %6110 = vst.msk [vmem:[%s12 + $0x6] sm:$0x3] %vm4200, %v6108
    %6111 = vrot.lane.b32.xlu0 %v6102, 48
    %v6112 = vpop.permute.xlu0 %6111
    %6114 = vst.msk [vmem:[%s13 + $0x6] sm:$0x3] %vm4200, %v6112
    %6115 = vrot.lane.b32.xlu0 %v6097, 32
    %v6116 = vpop.permute.xlu0 %6115
    %6118 = vst.msk [vmem:[%s12 + $0xa] sm:$0x3] %vm4200, %v6116
    %6119 = vrot.lane.b32.xlu0 %v6102, 32
    %v6120 = vpop.permute.xlu0 %6119
    %6122 = vst.msk [vmem:[%s13 + $0xa] sm:$0x3] %vm4200, %v6120
    %v6123 = vld [vmem:[%s3271] sm:$0xff]
    %v6124 = vld [vmem:[%s3271 + $0x8] sm:$0xff]
    %v6125 = vld [vmem:[%s3271 + $0x10] sm:$0xff]
    %v6126 = vld [vmem:[%s3271 + $0x18] sm:$0xff]
    %v6127 = vld [vmem:[%s3271 + $0x20] sm:$0xff]
    %v6128 = vld [vmem:[%s3271 + $0x28] sm:$0xff]
    %v6129 = vld [vmem:[%s3271 + $0x30] sm:$0xff]
    %v6130 = vld [vmem:[%s3271 + $0x38] sm:$0xff]
    %v6131 = vld [vmem:[%s3271 + $0x40] sm:$0xff]
    %v6132 = vld [vmem:[%s3271 + $0x48] sm:$0xff]
    %v6133 = vld [vmem:[%s3271 + $0x50] sm:$0xff]
    %v6134 = vld [vmem:[%s3271 + $0x58] sm:$0xff]
    %v6135 = vld [vmem:[%s3271 + $0x60] sm:$0xff]
    %v6136 = vld [vmem:[%s3271 + $0x68] sm:$0xff]
    %v6137 = vld [vmem:[%s3271 + $0x70] sm:$0xff]
    %v6138 = vld [vmem:[%s3271 + $0x78] sm:$0xff]
    %v6139 = vld [vmem:[%s3271 + $0x80] sm:$0xff]
    %v6140 = vld [vmem:[%s3271 + $0x88] sm:$0xff]
    %v6141 = vld [vmem:[%s3271 + $0x90] sm:$0xff]
    %v6142 = vld [vmem:[%s3271 + $0x98] sm:$0xff]
    %v6143 = vld [vmem:[%s3271 + $0xa0] sm:$0xff]
    %v6144 = vld [vmem:[%s3271 + $0xa8] sm:$0xff]
    %v6145 = vld [vmem:[%s3271 + $0xb0] sm:$0xff]
    %v6146 = vld [vmem:[%s3271 + $0xb8] sm:$0xff]
    %v6147 = vld [vmem:[%s3271 + $0xc0] sm:$0xff]
    %v6148 = vld [vmem:[%s3271 + $0xc8] sm:$0xff]
    %v6149 = vld [vmem:[%s3271 + $0xd0] sm:$0xff]
    %v6150 = vld [vmem:[%s3271 + $0xd8] sm:$0xff]
    %v6151 = vld [vmem:[%s3271 + $0xe0] sm:$0xff]
    %v6152 = vld [vmem:[%s3271 + $0xe8] sm:$0xff]
    %v6153 = vld [vmem:[%s3271 + $0xf0] sm:$0xff]
    %v6154 = vld [vmem:[%s3271 + $0xf8] sm:$0xff]
    %v6155 = vld [vmem:[%s3304] sm:$0xff]
    %v6156 = vld [vmem:[%s3304 + $0x8] sm:$0xff]
    %v6157 = vld [vmem:[%s3304 + $0x10] sm:$0xff]
    %v6158 = vld [vmem:[%s3304 + $0x18] sm:$0xff]
    %v6159 = vld [vmem:[%s3304 + $0x20] sm:$0xff]
    %v6160 = vld [vmem:[%s3304 + $0x28] sm:$0xff]
    %v6161 = vld [vmem:[%s3304 + $0x30] sm:$0xff]
    %v6162 = vld [vmem:[%s3304 + $0x38] sm:$0xff]
    %v6163 = vld [vmem:[%s3304 + $0x40] sm:$0xff]
    %v6164 = vld [vmem:[%s3304 + $0x48] sm:$0xff]
    %v6165 = vld [vmem:[%s3304 + $0x50] sm:$0xff]
    %v6166 = vld [vmem:[%s3304 + $0x58] sm:$0xff]
    %v6167 = vld [vmem:[%s3304 + $0x60] sm:$0xff]
    %v6168 = vld [vmem:[%s3304 + $0x68] sm:$0xff]
    %v6169 = vld [vmem:[%s3304 + $0x70] sm:$0xff]
    %v6170 = vld [vmem:[%s3304 + $0x78] sm:$0xff]
    %v6171 = vld [vmem:[%s3304 + $0x80] sm:$0xff]
    %v6172 = vld [vmem:[%s3304 + $0x88] sm:$0xff]
    %v6173 = vld [vmem:[%s3304 + $0x90] sm:$0xff]
    %v6174 = vld [vmem:[%s3304 + $0x98] sm:$0xff]
    %v6175 = vld [vmem:[%s3304 + $0xa0] sm:$0xff]
    %v6176 = vld [vmem:[%s3304 + $0xa8] sm:$0xff]
    %v6177 = vld [vmem:[%s3304 + $0xb0] sm:$0xff]
    %v6178 = vld [vmem:[%s3304 + $0xb8] sm:$0xff]
    %v6179 = vld [vmem:[%s3304 + $0xc0] sm:$0xff]
    %v6180 = vld [vmem:[%s3304 + $0xc8] sm:$0xff]
    %v6181 = vld [vmem:[%s3304 + $0xd0] sm:$0xff]
    %v6182 = vld [vmem:[%s3304 + $0xd8] sm:$0xff]
    %v6183 = vld [vmem:[%s3304 + $0xe0] sm:$0xff]
    %v6184 = vld [vmem:[%s3304 + $0xe8] sm:$0xff]
    %v6185 = vld [vmem:[%s3304 + $0xf0] sm:$0xff]
    %v6186 = vld [vmem:[%s3304 + $0xf8] sm:$0xff]
    %6187 = vmatprep.subr.mxu0 0.0
    %6188 = vmatpush1.msra.mxu0 %v6155
    %6189 = vmatprep.subr.mxu0 0.0
    %6190 = vmatpush1.msra.mxu0 %v6156
    %6191 = vmatprep.subr.mxu0 0.0
    %6192 = vmatpush1.msra.mxu0 %v6157
    %6193 = vmatprep.subr.mxu0 0.0
    %6194 = vmatpush1.msra.mxu0 %v6158
    %6195 = vmatprep.subr.mxu0 0.0
    %6196 = vmatpush1.msra.mxu0 %v6159
    %6197 = vmatprep.subr.mxu0 0.0
    %6198 = vmatpush1.msra.mxu0 %v6160
    %6199 = vmatprep.subr.mxu0 0.0
    %6200 = vmatpush1.msra.mxu0 %v6161
    %6201 = vmatprep.subr.mxu0 0.0
    %6202 = vmatpush1.msra.mxu0 %v6162
    %6203 = vmatprep.subr.mxu0 0.0
    %6204 = vmatpush1.msra.mxu0 %v6163
    %6205 = vmatprep.subr.mxu0 0.0
    %6206 = vmatpush1.msra.mxu0 %v6164
    %6207 = vmatprep.subr.mxu0 0.0
    %6208 = vmatpush1.msra.mxu0 %v6165
    %6209 = vmatprep.subr.mxu0 0.0
    %6210 = vmatpush1.msra.mxu0 %v6166
    %6211 = vmatprep.subr.mxu0 0.0
    %6212 = vmatpush1.msra.mxu0 %v6167
    %6213 = vmatprep.subr.mxu0 0.0
    %6214 = vmatpush1.msra.mxu0 %v6168
    %6215 = vmatprep.subr.mxu0 0.0
    %6216 = vmatpush1.msra.mxu0 %v6169
    %6217 = vmatprep.subr.mxu0 0.0
    %6218 = vmatpush1.msra.mxu0 %v6170
    %6219 = vmatprep.subr.mxu0 0.0
    %6220 = vmatpush1.msra.mxu0 %v6171
    %6221 = vmatprep.subr.mxu0 0.0
    %6222 = vmatpush1.msra.mxu0 %v6172
    %6223 = vmatprep.subr.mxu0 0.0
    %6224 = vmatpush1.msra.mxu0 %v6173
    %6225 = vmatprep.subr.mxu0 0.0
    %6226 = vmatpush1.msra.mxu0 %v6174
    %6227 = vmatprep.subr.mxu0 0.0
    %6228 = vmatpush1.msra.mxu0 %v6175
    %6229 = vmatprep.subr.mxu0 0.0
    %6230 = vmatpush1.msra.mxu0 %v6176
    %6231 = vmatprep.subr.mxu0 0.0
    %6232 = vmatpush1.msra.mxu0 %v6177
    %6233 = vmatprep.subr.mxu0 0.0
    %6234 = vmatpush1.msra.mxu0 %v6178
    %6235 = vmatprep.subr.mxu0 0.0
    %6236 = vmatpush1.msra.mxu0 %v6179
    %6237 = vmatprep.subr.mxu0 0.0
    %6238 = vmatpush1.msra.mxu0 %v6180
    %6239 = vmatprep.subr.mxu0 0.0
    %6240 = vmatpush1.msra.mxu0 %v6181
    %6241 = vmatprep.subr.mxu0 0.0
    %6242 = vmatpush1.msra.mxu0 %v6182
    %6243 = vmatprep.subr.mxu0 0.0
    %6244 = vmatpush1.msra.mxu0 %v6183
    %6245 = vmatprep.subr.mxu0 0.0
    %6246 = vmatpush1.msra.mxu0 %v6184
    %6247 = vmatprep.subr.mxu0 0.0
    %6248 = vmatpush1.msra.mxu0 %v6185
    %6249 = vmatprep.subr.mxu0 0.0
    %6250 = vmatpush1.msra.mxu0 %v6186
    %6251 = vmatprep.mubr.f32.mxu0 %v3130
    %6252 = vmatmul.mubr.f32.gmra.mrb[0].mxu0 %v3129
    %v6253 = vpop.f32.mrb[0].mxu0
    %v6254 = vadd.f32 0.0, %v6253
    %v6255 = vpop.f32.mrb[0].mxu0
    %6256 = vdwg.mxu0
    %6257 = vmatprep.subr.mxu0 0.0
    %6258 = vmatpush1.msra.mxu0 %v6123
    %6259 = vmatprep.subr.mxu0 0.0
    %6260 = vmatpush1.msra.mxu0 %v6124
    %6261 = vmatprep.subr.mxu0 0.0
    %6262 = vmatpush1.msra.mxu0 %v6125
    %6263 = vmatprep.subr.mxu0 0.0
    %6264 = vmatpush1.msra.mxu0 %v6126
    %6265 = vmatprep.subr.mxu0 0.0
    %6266 = vmatpush1.msra.mxu0 %v6127
    %6267 = vmatprep.subr.mxu0 0.0
    %6268 = vmatpush1.msra.mxu0 %v6128
    %6269 = vmatprep.subr.mxu0 0.0
    %6270 = vmatpush1.msra.mxu0 %v6129
    %6271 = vmatprep.subr.mxu0 0.0
    %6272 = vmatpush1.msra.mxu0 %v6130
    %6273 = vmatprep.subr.mxu0 0.0
    %6274 = vmatpush1.msra.mxu0 %v6131
    %6275 = vmatprep.subr.mxu0 0.0
    %6276 = vmatpush1.msra.mxu0 %v6132
    %6277 = vmatprep.subr.mxu0 0.0
    %6278 = vmatpush1.msra.mxu0 %v6133
    %6279 = vmatprep.subr.mxu0 0.0
    %6280 = vmatpush1.msra.mxu0 %v6134
    %6281 = vmatprep.subr.mxu0 0.0
    %6282 = vmatpush1.msra.mxu0 %v6135
    %6283 = vmatprep.subr.mxu0 0.0
    %6284 = vmatpush1.msra.mxu0 %v6136
    %6285 = vmatprep.subr.mxu0 0.0
    %6286 = vmatpush1.msra.mxu0 %v6137
    %6287 = vmatprep.subr.mxu0 0.0
    %6288 = vmatpush1.msra.mxu0 %v6138
    %6289 = vmatprep.subr.mxu0 0.0
    %6290 = vmatpush1.msra.mxu0 %v6139
    %6291 = vmatprep.subr.mxu0 0.0
    %6292 = vmatpush1.msra.mxu0 %v6140
    %6293 = vmatprep.subr.mxu0 0.0
    %6294 = vmatpush1.msra.mxu0 %v6141
    %6295 = vmatprep.subr.mxu0 0.0
    %6296 = vmatpush1.msra.mxu0 %v6142
    %6297 = vmatprep.subr.mxu0 0.0
    %6298 = vmatpush1.msra.mxu0 %v6143
    %6299 = vmatprep.subr.mxu0 0.0
    %6300 = vmatpush1.msra.mxu0 %v6144
    %6301 = vmatprep.subr.mxu0 0.0
    %6302 = vmatpush1.msra.mxu0 %v6145
    %6303 = vmatprep.subr.mxu0 0.0
    %6304 = vmatpush1.msra.mxu0 %v6146
    %6305 = vmatprep.subr.mxu0 0.0
    %6306 = vmatpush1.msra.mxu0 %v6147
    %6307 = vmatprep.subr.mxu0 0.0
    %6308 = vmatpush1.msra.mxu0 %v6148
    %6309 = vmatprep.subr.mxu0 0.0
    %6310 = vmatpush1.msra.mxu0 %v6149
    %6311 = vmatprep.subr.mxu0 0.0
    %6312 = vmatpush1.msra.mxu0 %v6150
    %6313 = vmatprep.subr.mxu0 0.0
    %6314 = vmatpush1.msra.mxu0 %v6151
    %6315 = vmatprep.subr.mxu0 0.0
    %6316 = vmatpush1.msra.mxu0 %v6152
    %6317 = vmatprep.subr.mxu0 0.0
    %6318 = vmatpush1.msra.mxu0 %v6153
    %6319 = vmatprep.subr.mxu0 0.0
    %6320 = vmatpush1.msra.mxu0 %v6154
    %6321 = vmatprep.mubr.f32.mxu0 %v3128
    %6322 = vmatmul.mubr.f32.gmra.mrb[0].mxu0 %v3127
    %v6323 = vpop.f32.mrb[0].mxu0
    %v6324 = vadd.f32 %v6254, %v6323
    %v6325 = vpop.f32.mrb[0].mxu0
    %6326 = vdwg.mxu0
    %v6327 = vadd.f32 %v6324, %v3169
    %v6328 = vtanh.pop %v6327
    %v6331 = vunpack.c.l.s4 1983009808
    %v6332 = vunpack.c.0.s8 %v6331
    %v6333 = vlaneseq
    %v6334 = vshrl.u32 %v6333, 7
    %v6335 = vsub.s32 %v6332, %v6334
    %v6336 = vrot.slane %v6328, %v6335
    %6337 = vrot.lane.b32.xlu0 %v6336, 80
    %v6338 = vpop.permute.xlu0 %6337
    %6340 = vst.msk [vmem:[%s12 + $0x2] sm:$0x3] %vm4440, %v6338
    %v6341 = vcombine.high %v6336, %v6336
    %6342 = vrot.lane.b32.xlu0 %v6341, 80
    %v6343 = vpop.permute.xlu0 %6342
    %6345 = vst.msk [vmem:[%s13 + $0x2] sm:$0x3] %vm4440, %v6343
    %6346 = vrot.lane.b32.xlu0 %v6336, 64
    %v6347 = vpop.permute.xlu0 %6346
    %6349 = vst.msk [vmem:[%s12 + $0x6] sm:$0x3] %vm4440, %v6347
    %6350 = vrot.lane.b32.xlu0 %v6341, 64
    %v6351 = vpop.permute.xlu0 %6350
    %6353 = vst.msk [vmem:[%s13 + $0x6] sm:$0x3] %vm4440, %v6351
    %6354 = vrot.lane.b32.xlu0 %v6336, 48
    %v6355 = vpop.permute.xlu0 %6354
    %6357 = vst.msk [vmem:[%s12 + $0xa] sm:$0x3] %vm4440, %v6355
    %6358 = vrot.lane.b32.xlu0 %v6341, 48
    %v6359 = vpop.permute.xlu0 %6358
    %6361 = vst.msk [vmem:[%s13 + $0xa] sm:$0x3] %vm4440, %v6359
    %v6362 = vld [vmem:[%s10] sm:$0xff]
    %v6363 = vld [vmem:[%s10 + $0x8] sm:$0xff]
    %v6364 = vld [vmem:[%s10 + $0x10] sm:$0xff]
    %v6365 = vld [vmem:[%s10 + $0x18] sm:$0xff]
    %v6366 = vld [vmem:[%s10 + $0x20] sm:$0xff]
    %v6367 = vld [vmem:[%s10 + $0x28] sm:$0xff]
    %v6368 = vld [vmem:[%s10 + $0x30] sm:$0xff]
    %v6369 = vld [vmem:[%s10 + $0x38] sm:$0xff]
    %v6370 = vld [vmem:[%s10 + $0x40] sm:$0xff]
    %v6371 = vld [vmem:[%s10 + $0x48] sm:$0xff]
    %v6372 = vld [vmem:[%s10 + $0x50] sm:$0xff]
    %v6373 = vld [vmem:[%s10 + $0x58] sm:$0xff]
    %v6374 = vld [vmem:[%s10 + $0x60] sm:$0xff]
    %v6375 = vld [vmem:[%s10 + $0x68] sm:$0xff]
    %v6376 = vld [vmem:[%s10 + $0x70] sm:$0xff]
    %v6377 = vld [vmem:[%s10 + $0x78] sm:$0xff]
    %v6378 = vld [vmem:[%s10 + $0x80] sm:$0xff]
    %v6379 = vld [vmem:[%s10 + $0x88] sm:$0xff]
    %v6380 = vld [vmem:[%s10 + $0x90] sm:$0xff]
    %v6381 = vld [vmem:[%s10 + $0x98] sm:$0xff]
    %v6382 = vld [vmem:[%s10 + $0xa0] sm:$0xff]
    %v6383 = vld [vmem:[%s10 + $0xa8] sm:$0xff]
    %v6384 = vld [vmem:[%s10 + $0xb0] sm:$0xff]
    %v6385 = vld [vmem:[%s10 + $0xb8] sm:$0xff]
    %v6386 = vld [vmem:[%s10 + $0xc0] sm:$0xff]
    %v6387 = vld [vmem:[%s10 + $0xc8] sm:$0xff]
    %v6388 = vld [vmem:[%s10 + $0xd0] sm:$0xff]
    %v6389 = vld [vmem:[%s10 + $0xd8] sm:$0xff]
    %v6390 = vld [vmem:[%s10 + $0xe0] sm:$0xff]
    %v6391 = vld [vmem:[%s10 + $0xe8] sm:$0xff]
    %v6392 = vld [vmem:[%s10 + $0xf0] sm:$0xff]
    %v6393 = vld [vmem:[%s10 + $0xf8] sm:$0xff]
    %v6394 = vld [vmem:[%s3132] sm:$0xff]
    %v6395 = vld [vmem:[%s3132 + $0x8] sm:$0xff]
    %v6396 = vld [vmem:[%s3132 + $0x10] sm:$0xff]
    %v6397 = vld [vmem:[%s3132 + $0x18] sm:$0xff]
    %v6398 = vld [vmem:[%s3132 + $0x20] sm:$0xff]
    %v6399 = vld [vmem:[%s3132 + $0x28] sm:$0xff]
    %v6400 = vld [vmem:[%s3132 + $0x30] sm:$0xff]
    %v6401 = vld [vmem:[%s3132 + $0x38] sm:$0xff]
    %v6402 = vld [vmem:[%s3132 + $0x40] sm:$0xff]
    %v6403 = vld [vmem:[%s3132 + $0x48] sm:$0xff]
    %v6404 = vld [vmem:[%s3132 + $0x50] sm:$0xff]
    %v6405 = vld [vmem:[%s3132 + $0x58] sm:$0xff]
    %v6406 = vld [vmem:[%s3132 + $0x60] sm:$0xff]
    %v6407 = vld [vmem:[%s3132 + $0x68] sm:$0xff]
    %v6408 = vld [vmem:[%s3132 + $0x70] sm:$0xff]
    %v6409 = vld [vmem:[%s3132 + $0x78] sm:$0xff]
    %v6410 = vld [vmem:[%s3132 + $0x80] sm:$0xff]
    %v6411 = vld [vmem:[%s3132 + $0x88] sm:$0xff]
    %v6412 = vld [vmem:[%s3132 + $0x90] sm:$0xff]
    %v6413 = vld [vmem:[%s3132 + $0x98] sm:$0xff]
    %v6414 = vld [vmem:[%s3132 + $0xa0] sm:$0xff]
    %v6415 = vld [vmem:[%s3132 + $0xa8] sm:$0xff]
    %v6416 = vld [vmem:[%s3132 + $0xb0] sm:$0xff]
    %v6417 = vld [vmem:[%s3132 + $0xb8] sm:$0xff]
    %v6418 = vld [vmem:[%s3132 + $0xc0] sm:$0xff]
    %v6419 = vld [vmem:[%s3132 + $0xc8] sm:$0xff]
    %v6420 = vld [vmem:[%s3132 + $0xd0] sm:$0xff]
    %v6421 = vld [vmem:[%s3132 + $0xd8] sm:$0xff]
    %v6422 = vld [vmem:[%s3132 + $0xe0] sm:$0xff]
    %v6423 = vld [vmem:[%s3132 + $0xe8] sm:$0xff]
    %v6424 = vld [vmem:[%s3132 + $0xf0] sm:$0xff]
    %v6425 = vld [vmem:[%s3132 + $0xf8] sm:$0xff]
    %6426 = vmatprep.subr.mxu0 0.0
    %6427 = vmatpush1.msra.mxu0 %v6394
    %6428 = vmatprep.subr.mxu0 0.0
    %6429 = vmatpush1.msra.mxu0 %v6395
    %6430 = vmatprep.subr.mxu0 0.0
    %6431 = vmatpush1.msra.mxu0 %v6396
    %6432 = vmatprep.subr.mxu0 0.0
    %6433 = vmatpush1.msra.mxu0 %v6397
    %6434 = vmatprep.subr.mxu0 0.0
    %6435 = vmatpush1.msra.mxu0 %v6398
    %6436 = vmatprep.subr.mxu0 0.0
    %6437 = vmatpush1.msra.mxu0 %v6399
    %6438 = vmatprep.subr.mxu0 0.0
    %6439 = vmatpush1.msra.mxu0 %v6400
    %6440 = vmatprep.subr.mxu0 0.0
    %6441 = vmatpush1.msra.mxu0 %v6401
    %6442 = vmatprep.subr.mxu0 0.0
    %6443 = vmatpush1.msra.mxu0 %v6402
    %6444 = vmatprep.subr.mxu0 0.0
    %6445 = vmatpush1.msra.mxu0 %v6403
    %6446 = vmatprep.subr.mxu0 0.0
    %6447 = vmatpush1.msra.mxu0 %v6404
    %6448 = vmatprep.subr.mxu0 0.0
    %6449 = vmatpush1.msra.mxu0 %v6405
    %6450 = vmatprep.subr.mxu0 0.0
    %6451 = vmatpush1.msra.mxu0 %v6406
    %6452 = vmatprep.subr.mxu0 0.0
    %6453 = vmatpush1.msra.mxu0 %v6407
    %6454 = vmatprep.subr.mxu0 0.0
    %6455 = vmatpush1.msra.mxu0 %v6408
    %6456 = vmatprep.subr.mxu0 0.0
    %6457 = vmatpush1.msra.mxu0 %v6409
    %6458 = vmatprep.subr.mxu0 0.0
    %6459 = vmatpush1.msra.mxu0 %v6410
    %6460 = vmatprep.subr.mxu0 0.0
    %6461 = vmatpush1.msra.mxu0 %v6411
    %6462 = vmatprep.subr.mxu0 0.0
    %6463 = vmatpush1.msra.mxu0 %v6412
    %6464 = vmatprep.subr.mxu0 0.0
    %6465 = vmatpush1.msra.mxu0 %v6413
    %6466 = vmatprep.subr.mxu0 0.0
    %6467 = vmatpush1.msra.mxu0 %v6414
    %6468 = vmatprep.subr.mxu0 0.0
    %6469 = vmatpush1.msra.mxu0 %v6415
    %6470 = vmatprep.subr.mxu0 0.0
    %6471 = vmatpush1.msra.mxu0 %v6416
    %6472 = vmatprep.subr.mxu0 0.0
    %6473 = vmatpush1.msra.mxu0 %v6417
    %6474 = vmatprep.subr.mxu0 0.0
    %6475 = vmatpush1.msra.mxu0 %v6418
    %6476 = vmatprep.subr.mxu0 0.0
    %6477 = vmatpush1.msra.mxu0 %v6419
    %6478 = vmatprep.subr.mxu0 0.0
    %6479 = vmatpush1.msra.mxu0 %v6420
    %6480 = vmatprep.subr.mxu0 0.0
    %6481 = vmatpush1.msra.mxu0 %v6421
    %6482 = vmatprep.subr.mxu0 0.0
    %6483 = vmatpush1.msra.mxu0 %v6422
    %6484 = vmatprep.subr.mxu0 0.0
    %6485 = vmatpush1.msra.mxu0 %v6423
    %6486 = vmatprep.subr.mxu0 0.0
    %6487 = vmatpush1.msra.mxu0 %v6424
    %6488 = vmatprep.subr.mxu0 0.0
    %6489 = vmatpush1.msra.mxu0 %v6425
    %6490 = vmatprep.mubr.f32.mxu0 %v3130
    %6491 = vmatmul.mubr.f32.gmra.mrb[0].mxu0 %v3129
    %v6492 = vpop.f32.mrb[0].mxu0
    %v6493 = vadd.f32 0.0, %v6492
    %v6494 = vpop.f32.mrb[0].mxu0
    %6495 = vdwg.mxu0
    %6496 = vmatprep.subr.mxu0 0.0
    %6497 = vmatpush1.msra.mxu0 %v6362
    %6498 = vmatprep.subr.mxu0 0.0
    %6499 = vmatpush1.msra.mxu0 %v6363
    %6500 = vmatprep.subr.mxu0 0.0
    %6501 = vmatpush1.msra.mxu0 %v6364
    %6502 = vmatprep.subr.mxu0 0.0
    %6503 = vmatpush1.msra.mxu0 %v6365
    %6504 = vmatprep.subr.mxu0 0.0
    %6505 = vmatpush1.msra.mxu0 %v6366
    %6506 = vmatprep.subr.mxu0 0.0
    %6507 = vmatpush1.msra.mxu0 %v6367
    %6508 = vmatprep.subr.mxu0 0.0
    %6509 = vmatpush1.msra.mxu0 %v6368
    %6510 = vmatprep.subr.mxu0 0.0
    %6511 = vmatpush1.msra.mxu0 %v6369
    %6512 = vmatprep.subr.mxu0 0.0
    %6513 = vmatpush1.msra.mxu0 %v6370
    %6514 = vmatprep.subr.mxu0 0.0
    %6515 = vmatpush1.msra.mxu0 %v6371
    %6516 = vmatprep.subr.mxu0 0.0
    %6517 = vmatpush1.msra.mxu0 %v6372
    %6518 = vmatprep.subr.mxu0 0.0
    %6519 = vmatpush1.msra.mxu0 %v6373
    %6520 = vmatprep.subr.mxu0 0.0
    %6521 = vmatpush1.msra.mxu0 %v6374
    %6522 = vmatprep.subr.mxu0 0.0
    %6523 = vmatpush1.msra.mxu0 %v6375
    %6524 = vmatprep.subr.mxu0 0.0
    %6525 = vmatpush1.msra.mxu0 %v6376
    %6526 = vmatprep.subr.mxu0 0.0
    %6527 = vmatpush1.msra.mxu0 %v6377
    %6528 = vmatprep.subr.mxu0 0.0
    %6529 = vmatpush1.msra.mxu0 %v6378
    %6530 = vmatprep.subr.mxu0 0.0
    %6531 = vmatpush1.msra.mxu0 %v6379
    %6532 = vmatprep.subr.mxu0 0.0
    %6533 = vmatpush1.msra.mxu0 %v6380
    %6534 = vmatprep.subr.mxu0 0.0
    %6535 = vmatpush1.msra.mxu0 %v6381
    %6536 = vmatprep.subr.mxu0 0.0
    %6537 = vmatpush1.msra.mxu0 %v6382
    %6538 = vmatprep.subr.mxu0 0.0
    %6539 = vmatpush1.msra.mxu0 %v6383
    %6540 = vmatprep.subr.mxu0 0.0
    %6541 = vmatpush1.msra.mxu0 %v6384
    %6542 = vmatprep.subr.mxu0 0.0
    %6543 = vmatpush1.msra.mxu0 %v6385
    %6544 = vmatprep.subr.mxu0 0.0
    %6545 = vmatpush1.msra.mxu0 %v6386
    %6546 = vmatprep.subr.mxu0 0.0
    %6547 = vmatpush1.msra.mxu0 %v6387
    %6548 = vmatprep.subr.mxu0 0.0
    %6549 = vmatpush1.msra.mxu0 %v6388
    %6550 = vmatprep.subr.mxu0 0.0
    %6551 = vmatpush1.msra.mxu0 %v6389
    %6552 = vmatprep.subr.mxu0 0.0
    %6553 = vmatpush1.msra.mxu0 %v6390
    %6554 = vmatprep.subr.mxu0 0.0
    %6555 = vmatpush1.msra.mxu0 %v6391
    %6556 = vmatprep.subr.mxu0 0.0
    %6557 = vmatpush1.msra.mxu0 %v6392
    %6558 = vmatprep.subr.mxu0 0.0
    %6559 = vmatpush1.msra.mxu0 %v6393
    %6560 = vmatprep.mubr.f32.mxu0 %v3128
    %6561 = vmatmul.mubr.f32.gmra.mrb[0].mxu0 %v3127
    %v6562 = vpop.f32.mrb[0].mxu0
    %v6563 = vadd.f32 %v6493, %v6562
    %v6564 = vpop.f32.mrb[0].mxu0
    %6565 = vdwg.mxu0
    %v6566 = vadd.f32 %v6563, %v3169
    %v6567 = vtanh.pop %v6566
    %v6570 = vunpack.c.l.s4 1983009808
    %v6571 = vunpack.c.0.s8 %v6570
    %v6572 = vlaneseq
    %v6573 = vshrl.u32 %v6572, 7
    %v6574 = vsub.s32 %v6571, %v6573
    %v6575 = vrot.slane %v6567, %v6574
    %6576 = vrot.lane.b32.xlu0 %v6575, 96
    %v6577 = vpop.permute.xlu0 %6576
    %6579 = vst.msk [vmem:[%s12 + $0x2] sm:$0x3] %vm4680, %v6577
    %v6580 = vcombine.high %v6575, %v6575
    %6581 = vrot.lane.b32.xlu0 %v6580, 96
    %v6582 = vpop.permute.xlu0 %6581
    %6584 = vst.msk [vmem:[%s13 + $0x2] sm:$0x3] %vm4680, %v6582
    %6585 = vrot.lane.b32.xlu0 %v6575, 80
    %v6586 = vpop.permute.xlu0 %6585
    %6588 = vst.msk [vmem:[%s12 + $0x6] sm:$0x3] %vm4680, %v6586
    %6589 = vrot.lane.b32.xlu0 %v6580, 80
    %v6590 = vpop.permute.xlu0 %6589
    %6592 = vst.msk [vmem:[%s13 + $0x6] sm:$0x3] %vm4680, %v6590
    %6593 = vrot.lane.b32.xlu0 %v6575, 64
    %v6594 = vpop.permute.xlu0 %6593
    %6596 = vst.msk [vmem:[%s12 + $0xa] sm:$0x3] %vm4680, %v6594
    %6597 = vrot.lane.b32.xlu0 %v6580, 64
    %v6598 = vpop.permute.xlu0 %6597
    %6600 = vst.msk [vmem:[%s13 + $0xa] sm:$0x3] %vm4680, %v6598
    %v6601 = vld [vmem:[%s3271] sm:$0xff]
    %v6602 = vld [vmem:[%s3271 + $0x8] sm:$0xff]
    %v6603 = vld [vmem:[%s3271 + $0x10] sm:$0xff]
    %v6604 = vld [vmem:[%s3271 + $0x18] sm:$0xff]
    %v6605 = vld [vmem:[%s3271 + $0x20] sm:$0xff]
    %v6606 = vld [vmem:[%s3271 + $0x28] sm:$0xff]
    %v6607 = vld [vmem:[%s3271 + $0x30] sm:$0xff]
    %v6608 = vld [vmem:[%s3271 + $0x38] sm:$0xff]
    %v6609 = vld [vmem:[%s3271 + $0x40] sm:$0xff]
    %v6610 = vld [vmem:[%s3271 + $0x48] sm:$0xff]
    %v6611 = vld [vmem:[%s3271 + $0x50] sm:$0xff]
    %v6612 = vld [vmem:[%s3271 + $0x58] sm:$0xff]
    %v6613 = vld [vmem:[%s3271 + $0x60] sm:$0xff]
    %v6614 = vld [vmem:[%s3271 + $0x68] sm:$0xff]
    %v6615 = vld [vmem:[%s3271 + $0x70] sm:$0xff]
    %v6616 = vld [vmem:[%s3271 + $0x78] sm:$0xff]
    %v6617 = vld [vmem:[%s3271 + $0x80] sm:$0xff]
    %v6618 = vld [vmem:[%s3271 + $0x88] sm:$0xff]
    %v6619 = vld [vmem:[%s3271 + $0x90] sm:$0xff]
    %v6620 = vld [vmem:[%s3271 + $0x98] sm:$0xff]
    %v6621 = vld [vmem:[%s3271 + $0xa0] sm:$0xff]
    %v6622 = vld [vmem:[%s3271 + $0xa8] sm:$0xff]
    %v6623 = vld [vmem:[%s3271 + $0xb0] sm:$0xff]
    %v6624 = vld [vmem:[%s3271 + $0xb8] sm:$0xff]
    %v6625 = vld [vmem:[%s3271 + $0xc0] sm:$0xff]
    %v6626 = vld [vmem:[%s3271 + $0xc8] sm:$0xff]
    %v6627 = vld [vmem:[%s3271 + $0xd0] sm:$0xff]
    %v6628 = vld [vmem:[%s3271 + $0xd8] sm:$0xff]
    %v6629 = vld [vmem:[%s3271 + $0xe0] sm:$0xff]
    %v6630 = vld [vmem:[%s3271 + $0xe8] sm:$0xff]
    %v6631 = vld [vmem:[%s3271 + $0xf0] sm:$0xff]
    %v6632 = vld [vmem:[%s3271 + $0xf8] sm:$0xff]
    %6633 = vmatprep.subr.mxu0 0.0
    %6634 = vmatpush1.msra.mxu0 %v6601
    %6635 = vmatprep.subr.mxu0 0.0
    %6636 = vmatpush1.msra.mxu0 %v6602
    %6637 = vmatprep.subr.mxu0 0.0
    %6638 = vmatpush1.msra.mxu0 %v6603
    %6639 = vmatprep.subr.mxu0 0.0
    %6640 = vmatpush1.msra.mxu0 %v6604
    %6641 = vmatprep.subr.mxu0 0.0
    %6642 = vmatpush1.msra.mxu0 %v6605
    %6643 = vmatprep.subr.mxu0 0.0
    %6644 = vmatpush1.msra.mxu0 %v6606
    %6645 = vmatprep.subr.mxu0 0.0
    %6646 = vmatpush1.msra.mxu0 %v6607
    %6647 = vmatprep.subr.mxu0 0.0
    %6648 = vmatpush1.msra.mxu0 %v6608
    %6649 = vmatprep.subr.mxu0 0.0
    %6650 = vmatpush1.msra.mxu0 %v6609
    %6651 = vmatprep.subr.mxu0 0.0
    %6652 = vmatpush1.msra.mxu0 %v6610
    %6653 = vmatprep.subr.mxu0 0.0
    %6654 = vmatpush1.msra.mxu0 %v6611
    %6655 = vmatprep.subr.mxu0 0.0
    %6656 = vmatpush1.msra.mxu0 %v6612
    %6657 = vmatprep.subr.mxu0 0.0
    %6658 = vmatpush1.msra.mxu0 %v6613
    %6659 = vmatprep.subr.mxu0 0.0
    %6660 = vmatpush1.msra.mxu0 %v6614
    %6661 = vmatprep.subr.mxu0 0.0
    %6662 = vmatpush1.msra.mxu0 %v6615
    %6663 = vmatprep.subr.mxu0 0.0
    %6664 = vmatpush1.msra.mxu0 %v6616
    %6665 = vmatprep.subr.mxu0 0.0
    %6666 = vmatpush1.msra.mxu0 %v6617
    %6667 = vmatprep.subr.mxu0 0.0
    %6668 = vmatpush1.msra.mxu0 %v6618
    %6669 = vmatprep.subr.mxu0 0.0
    %6670 = vmatpush1.msra.mxu0 %v6619
    %6671 = vmatprep.subr.mxu0 0.0
    %6672 = vmatpush1.msra.mxu0 %v6620
    %6673 = vmatprep.subr.mxu0 0.0
    %6674 = vmatpush1.msra.mxu0 %v6621
    %6675 = vmatprep.subr.mxu0 0.0
    %6676 = vmatpush1.msra.mxu0 %v6622
    %6677 = vmatprep.subr.mxu0 0.0
    %6678 = vmatpush1.msra.mxu0 %v6623
    %6679 = vmatprep.subr.mxu0 0.0
    %6680 = vmatpush1.msra.mxu0 %v6624
    %6681 = vmatprep.subr.mxu0 0.0
    %6682 = vmatpush1.msra.mxu0 %v6625
    %6683 = vmatprep.subr.mxu0 0.0
    %6684 = vmatpush1.msra.mxu0 %v6626
    %6685 = vmatprep.subr.mxu0 0.0
    %6686 = vmatpush1.msra.mxu0 %v6627
    %6687 = vmatprep.subr.mxu0 0.0
    %6688 = vmatpush1.msra.mxu0 %v6628
    %6689 = vmatprep.subr.mxu0 0.0
    %6690 = vmatpush1.msra.mxu0 %v6629
    %6691 = vmatprep.subr.mxu0 0.0
    %6692 = vmatpush1.msra.mxu0 %v6630
    %6693 = vmatprep.subr.mxu0 0.0
    %6694 = vmatpush1.msra.mxu0 %v6631
    %6695 = vmatprep.subr.mxu0 0.0
    %6696 = vmatpush1.msra.mxu0 %v6632
    %6697 = vmatprep.mubr.f32.mxu0 %v3130
    %6698 = vmatmul.mubr.f32.gmra.mrb[0].mxu0 %v3129
    %v6699 = vpop.f32.mrb[0].mxu0
    %v6700 = vadd.f32 %v3169, %v6699
    %v6701 = vpop.f32.mrb[0].mxu0
    %6702 = vdwg.mxu0
    %v6703 = vtanh.pop %v6700
    %v6706 = vunpack.c.l.s4 1983009808
    %v6707 = vunpack.c.0.s8 %v6706
    %v6708 = vlaneseq
    %v6709 = vshrl.u32 %v6708, 7
    %v6710 = vsub.s32 %v6707, %v6709
    %v6711 = vrot.slane %v6703, %v6710
    %6712 = vrot.lane.b32.xlu0 %v6711, 112
    %v6713 = vpop.permute.xlu0 %6712
    %6715 = vst.msk [vmem:[%s12 + $0x2] sm:$0x3] %vm4920, %v6713
    %v6716 = vcombine.high %v6711, %v6711
    %6717 = vrot.lane.b32.xlu0 %v6716, 112
    %v6718 = vpop.permute.xlu0 %6717
    %6720 = vst.msk [vmem:[%s13 + $0x2] sm:$0x3] %vm4920, %v6718
    %6721 = vrot.lane.b32.xlu0 %v6711, 96
    %v6722 = vpop.permute.xlu0 %6721
    %6724 = vst.msk [vmem:[%s12 + $0x6] sm:$0x3] %vm4920, %v6722
    %6725 = vrot.lane.b32.xlu0 %v6716, 96
    %v6726 = vpop.permute.xlu0 %6725
    %6728 = vst.msk [vmem:[%s13 + $0x6] sm:$0x3] %vm4920, %v6726
    %6729 = vrot.lane.b32.xlu0 %v6711, 80
    %v6730 = vpop.permute.xlu0 %6729
    %6732 = vst.msk [vmem:[%s12 + $0xa] sm:$0x3] %vm4920, %v6730
    %6733 = vrot.lane.b32.xlu0 %v6716, 80
    %v6734 = vpop.permute.xlu0 %6733
    %6736 = vst.msk [vmem:[%s13 + $0xa] sm:$0x3] %vm4920, %v6734
    // Predicated region
    $region50: #{model_forward.1} parent=1 // pred_check
      _
    $region51: #{model_forward.1} parent=1 // pred_check_branch
      %6738 = sbr.rel (0) target = $region53
    $region52: #{model_forward.1} parent=1 // pred_region
      _
    $region53: #{model_forward.1} parent=1 // pred_fallthru
      _
    // Predicated region
    $region54: #{model_forward.1} parent=1 // pred_check
      _
    $region55: #{model_forward.1} parent=1 // pred_check_branch
      %6740 = sbr.rel (0) target = $region57
    $region56: #{model_forward.1} parent=1 // pred_region
      _
    $region57: #{model_forward.1} parent=1 // pred_fallthru
      _
    // Predicated region
    $region58: #{model_forward.1} parent=1 // pred_check
      _
    $region59: #{model_forward.1} parent=1 // pred_check_branch
      %6742 = sbr.rel (0) target = $region61
    $region60: #{model_forward.1} parent=1 // pred_region
      %s6744 = ssub.s32 32, 32
      %6745 = vsyncadd [#allocation4], %s6744
      %s6747 = sshll.u32 [#allocation3], 4
      %s6748 = int_to_ptr.vmem [resolvable:$true] %s6747
      %6750 = dma.vmem_to_hbm [thread:$0]  %s6748, 32, %s14, [#allocation4]
    $region61: #{model_forward.1} parent=1 // pred_fallthru
      _
    // Predicated region
    $region62: #{model_forward.1} parent=1 // pred_check
      _
    $region63: #{model_forward.1} parent=1 // pred_check_branch
      %6752 = sbr.rel (0) target = $region65
    $region64: #{model_forward.1} parent=1 // pred_region
      %s6754 = ssub.s32 32, 32
      %6755 = vsyncadd [#allocation6], %s6754
      %s6757 = sshll.u32 [#allocation5], 4
      %s6758 = int_to_ptr.vmem [resolvable:$true] %s6757
      %6760 = dma.vmem_to_hbm [thread:$0]  %s6758, 32, %s15, [#allocation6]
    $region65: #{model_forward.1} parent=1 // pred_fallthru
      _
    // Predicated region
    $region66: #{model_forward.1} parent=1 // pred_check
      _
    $region67: #{model_forward.1} parent=1 // pred_check_branch
      %6762 = sbr.rel (0) target = $region69
    $region68: #{model_forward.1} parent=1 // pred_region
      _
    $region69: #{model_forward.1} parent=1 // pred_fallthru
      _
    // Predicated region
    $region70: #{model_forward.1} parent=1 // pred_check
      _
    $region71: #{model_forward.1} parent=1 // pred_check_branch
      %6764 = sbr.rel (0) target = $region73
    $region72: #{model_forward.1} parent=1 // pred_region
      _
    $region73: #{model_forward.1} parent=1 // pred_fallthru
      _
    // Predicated region
    $region74: #{model_forward.1} parent=1 // pred_check
      _
    $region75: #{model_forward.1} parent=1 // pred_check_branch
      %6766 = sbr.rel (0) target = $region77
    $region76: #{model_forward.1} parent=1 // pred_region
      %6767 = dma.done [#allocation4], 32
    $region77: #{model_forward.1} parent=1 // pred_fallthru
      _
    // Predicated region
    $region78: #{model_forward.1} parent=1 // pred_check
      _
    $region79: #{model_forward.1} parent=1 // pred_check_branch
      %6769 = sbr.rel (0) target = $region81
    $region80: #{model_forward.1} parent=1 // pred_region
      %6770 = dma.done [#allocation6], 32
    $region81: #{model_forward.1} parent=1 // pred_fallthru
      _
    %6771 = vsyncpa [#allocation4], 1
    %6772 = vsyncpa [#allocation6], 1

</llo_original>
